<compile_context>
chip_gen: v7x
topology: tpu7x:2x2x1
jax: 0.10.0
libtpu: 0.0.40
codegen_flags: <defaults>
</compile_context>

<pallas_src>
import functools
import numpy as np
import jax
import jax.numpy as jnp
from jax import lax
from jax.experimental import pallas as pl
from jax.experimental.pallas import tpu as pltpu

EPS = 1e-5  # BatchNorm eps


def _round_up(x, m):
    return (x + m - 1) // m * m


# ---------------------------------------------------------------------------
# Kernels
# ---------------------------------------------------------------------------
def _deconv_kernel(x_ref, w_ref, b_ref, o_ref, *, wp, cin, n, fuse_k):
    """Sub-pixel ConvTranspose2d(3, s=2, p=1, op=1) + folded BN + ReLU.

    x_ref: (1, Nf, Cin)     flattened row-major zero-padded input (rows r = i*wp + j,
                            with trailing zero rows so shifted slices stay in-range).
    w_ref: (4*Cin, 4*Cout)  tap-major (K) x phase-major (N) combined BN-scaled weight;
                            taps correspond to flat-row shifts {0, 1, wp, wp+1};
                            (tap, phase) blocks not used by a phase are zero.
    b_ref: (1, 4*Cout)      folded bias tiled over the 4 output phases.
    o_ref: (1, N, 4*Cout)   lane-dense output; phase p = 2*qy+qx occupies lanes
                            [p*Cout, (p+1)*Cout).
    """
    x = x_ref[0]
    w = w_ref[...]
    shifts = (0, 1, wp, wp + 1)
    if fuse_k:
        # Cin % 128 == 0: 128-aligned lane concat -> one MXU matmul, K = 4*Cin.
        lhs = jnp.concatenate([x[s:s + n, :] for s in shifts], axis=1)
        y = jnp.dot(lhs, w, preferred_element_type=jnp.float32)
    else:
        y = jnp.dot(x[0:n, :], w[0:cin, :], preferred_element_type=jnp.float32)
        for t in range(1, 4):
            s = shifts[t]
            y = y + jnp.dot(x[s:s + n, :], w[t * cin:(t + 1) * cin, :],
                            preferred_element_type=jnp.float32)
    y = y + b_ref[...]
    o_ref[0] = jnp.maximum(y, 0.0).astype(o_ref.dtype)


def _conv_acc(x, w, wq, cin, n):
    """9-tap stride-2 3x3 conv on space-to-depth phases -> (n, Cout) f32."""
    acc = None
    t = 0
    for ky in range(3):
        for kx in range(3):
            ph = (ky % 2) * 2 + (kx % 2)
            s = (ky // 2) * wq + (kx // 2)
            part = jnp.dot(x[ph, s:s + n, :], w[t * cin:(t + 1) * cin, :],
                           preferred_element_type=jnp.float32)
            acc = part if acc is None else acc + part
            t += 1
    return acc


def _conv_kernel(x_ref, w_ref, b_ref, o_ref, *, wq, cin, n, relu):
    y = _conv_acc(x_ref[0], w_ref[...], wq, cin, n) + b_ref[...]
    if relu:
        y = jnp.maximum(y, 0.0)
    o_ref[0] = y.astype(o_ref.dtype)


def _conv_pool_kernel(x_ref, w_ref, b_ref, p_ref, o_ref, *, wq, cin, n):
    """Conv2d(s=2) + folded BN (no ReLU) with AvgPool folded in as a matmul."""
    y = _conv_acc(x_ref[0], w_ref[...], wq, cin, n)          # (n, Cout) f32
    pooled = jnp.dot(p_ref[...], y, preferred_element_type=jnp.float32)
    o_ref[0] = (pooled + b_ref[...]).astype(o_ref.dtype)


# ---------------------------------------------------------------------------
# Layer wrappers (thin XLA glue: pad / flatten / depth<->space, ~1x traffic)
# ---------------------------------------------------------------------------
def deconv_layer(x_img, w_packed, bias4, *, cout):
    """(B, H, W, Cin) bf16 -> (B, 2H, 2W, Cout) bf16."""
    B, H, W, cin = x_img.shape
    hp, wp = H + 1, W + 1                 # one zero row/col on the bottom/right
    n = hp * wp
    nf = _round_up(n + wp + 1, 8)
    xp = jnp.pad(x_img, ((0, 0), (0, 1), (0, 1), (0, 0)))
    xf = jnp.pad(xp.reshape(B, n, cin), ((0, 0), (0, nf - n), (0, 0)))
    fuse_k = (cin % 128 == 0)
    kernel = functools.partial(_deconv_kernel, wp=wp, cin=cin, n=n, fuse_k=fuse_k)
    out = pl.pallas_call(
        kernel,
        out_shape=jax.ShapeDtypeStruct((B, n, 4 * cout), jnp.bfloat16),
        grid=(B,),
        in_specs=[
            pl.BlockSpec((1, nf, cin), lambda b: (b, 0, 0)),
            pl.BlockSpec((4 * cin, 4 * cout), lambda b: (0, 0)),
            pl.BlockSpec((1, 4 * cout), lambda b: (0, 0)),
        ],
        out_specs=pl.BlockSpec((1, n, 4 * cout), lambda b: (b, 0, 0)),
        compiler_params=pltpu.CompilerParams(dimension_semantics=("parallel",)),
    )(xf, w_packed, bias4)
    # depth-to-space: lanes split as (qy, qx, c); interleave phases into (2H, 2W).
    y = out.reshape(B, hp, wp, 2, 2, cout)[:, :H, :W]
    return y.transpose(0, 1, 3, 2, 4, 5).reshape(B, 2 * H, 2 * W, cout)


def _conv_phases(x_img, cin):
    """pad 1 + space-to-depth -> (B, 4, n, cin) flattened parity phases."""
    B, H, W, _ = x_img.shape
    ho, wo = H // 2, W // 2
    hq, wq = ho + 1, wo + 1
    n = hq * wq
    nf = _round_up(n + wq + 1, 8)
    xp = jnp.pad(x_img, ((0, 0), (1, 1), (1, 1), (0, 0)))
    ph = jnp.stack([xp[:, p::2, q::2, :] for p in (0, 1) for q in (0, 1)], axis=1)
    ph = jnp.pad(ph.reshape(B, 4, n, cin), ((0, 0), (0, 0), (0, nf - n), (0, 0)))
    return ph, ho, wo, hq, wq, n, nf


def conv_layer(x_img, w_packed, bias, *, cout, relu=True):
    """Conv2d(3, s=2, p=1) + folded BN (+ReLU): (B,H,W,Cin) -> (B,H/2,W/2,Cout)."""
    B, H, W, cin = x_img.shape
    ph, ho, wo, hq, wq, n, nf = _conv_phases(x_img, cin)
    kernel = functools.partial(_conv_kernel, wq=wq, cin=cin, n=n, relu=relu)
    out = pl.pallas_call(
        kernel,
        out_shape=jax.ShapeDtypeStruct((B, n, cout), jnp.bfloat16),
        grid=(B,),
        in_specs=[
            pl.BlockSpec((1, 4, nf, cin), lambda b: (b, 0, 0, 0)),
            pl.BlockSpec((9 * cin, cout), lambda b: (0, 0)),
            pl.BlockSpec((1, cout), lambda b: (0, 0)),
        ],
        out_specs=pl.BlockSpec((1, n, cout), lambda b: (b, 0, 0)),
        compiler_params=pltpu.CompilerParams(dimension_semantics=("parallel",)),
    )(ph, w_packed, bias)
    return out.reshape(B, hq, wq, cout)[:, :ho, :wo, :]


def conv_pool_layer(x_img, w_packed, bias, *, cout, pool=7):
    """Conv2d(3, s=2, p=1) + folded BN + fused AvgPool2d(pool) -> (B, npool, Cout) f32."""
    B, H, W, cin = x_img.shape
    ph, ho, wo, hq, wq, n, nf = _conv_phases(x_img, cin)
    hpool, wpool = ho // pool, wo // pool
    npool = hpool * wpool
    # Average pooling expressed as an (npool, n) matmul over the flat conv rows.
    pmat = np.zeros((npool, n), np.float32)
    for oi in range(hpool):
        for oj in range(wpool):
            for a in range(pool):
                for b2 in range(pool):
                    pmat[oi * wpool + oj,
                         (oi * pool + a) * wq + (oj * pool + b2)] = 1.0 / (pool * pool)
    pmat = jnp.asarray(pmat)
    kernel = functools.partial(_conv_pool_kernel, wq=wq, cin=cin, n=n)
    out = pl.pallas_call(
        kernel,
        out_shape=jax.ShapeDtypeStruct((B, npool, cout), jnp.float32),
        grid=(B,),
        in_specs=[
            pl.BlockSpec((1, 4, nf, cin), lambda b: (b, 0, 0, 0)),
            pl.BlockSpec((9 * cin, cout), lambda b: (0, 0)),
            pl.BlockSpec((1, cout), lambda b: (0, 0)),
            pl.BlockSpec((npool, n), lambda b: (0, 0)),
        ],
        out_specs=pl.BlockSpec((1, npool, cout), lambda b: (b, 0, 0)),
        compiler_params=pltpu.CompilerParams(dimension_semantics=("parallel",)),
    )(ph, w_packed, bias, pmat)
    return out


# ---------------------------------------------------------------------------
# Model forward (inference semantics)
# ---------------------------------------------------------------------------
def motion_attention_64_forward(x_nchw, params):
    """Eval-mode forward of Motion_attention_64. Returns (encoding, mi=None)."""
    # TODO(synk): training-mode branch (batch-statistic BatchNorm + deconvRecon
    # motion-image head) not implemented; eval semantics reproduced (mi = None).
    B = x_nchw.shape[0]
    x = jnp.transpose(x_nchw, (0, 2, 3, 1)).astype(jnp.bfloat16)   # NCHW -> NHWC

    for name, cout in (("deconv1", 128), ("deconv2", 64), ("deconv3", 32)):
        w, b = params[name]
        x = deconv_layer(x, w, b, cout=cout)

    w, b = params["conv1"]
    x = conv_layer(x, w, b, cout=64, relu=True)

    w, b = params["conv2"]
    x = conv_pool_layer(x, w, b, cout=128, pool=7)                 # (B, npool, 128)

    # flatten in PyTorch NCHW order (channel-major) to match .view(B, -1)
    x = jnp.transpose(x, (0, 2, 1)).reshape(B, -1)
    return x.astype(jnp.float32), None


# ---------------------------------------------------------------------------
# Parameter init: fold conv-bias + eval BatchNorm; pack weights per kernel tap.
# ---------------------------------------------------------------------------
# deconv sub-pixel decomposition (output phases q = (qy, qx), taps = flat-row
# shifts {0, 1, wp, wp+1} of the zero-padded input):
#   q=(0,0): x[i,j]*w(1,1)
#   q=(0,1): x[i,j]*w(1,2) + x[i,j+1]*w(1,0)
#   q=(1,0): x[i,j]*w(2,1) + x[i+1,j]*w(0,1)
#   q=(1,1): x[i,j]*w(2,2) + x[i,j+1]*w(2,0) + x[i+1,j]*w(0,2) + x[i+1,j+1]*w(0,0)
# Combined-weight table indexed [phase][tap]; None => zero block.
_DECONV_TAP_W = (
    ((1, 1), None,   None,   None),     # p = 0  (qy=0, qx=0)
    ((1, 2), (1, 0), None,   None),     # p = 1  (qy=0, qx=1)
    ((2, 1), None,   (0, 1), None),     # p = 2  (qy=1, qx=0)
    ((2, 2), (2, 0), (0, 2), (0, 0)),   # p = 3  (qy=1, qx=1)
)


def _pack_deconv_weight(w_s, cin, cout):
    """(Cin, Cout, 3, 3) BN-scaled -> (4*Cin, 4*Cout) tap-major x phase-major."""
    tap_blocks = []
    for t in range(4):
        cols = []
        for p in range(4):
            wk = _DECONV_TAP_W[p][t]
            if wk is None:
                cols.append(jnp.zeros((cin, cout), jnp.float32))
            else:
                cols.append(w_s[:, :, wk[0], wk[1]])
            # unused (tap, phase) blocks stay exactly zero -> no numeric effect
        tap_blocks.append(jnp.concatenate(cols, axis=1))     # (Cin, 4*Cout)
    return jnp.concatenate(tap_blocks, axis=0)               # (4*Cin, 4*Cout)


def _bn_fold(key, cout, conv_bias):
    kg, kb, km, kv = jax.random.split(key, 4)
    gamma = 1.0 + 0.1 * jax.random.normal(kg, (cout,), jnp.float32)
    beta = 0.1 * jax.random.normal(kb, (cout,), jnp.float32)
    mean = 0.1 * jax.random.normal(km, (cout,), jnp.float32)
    var = 1.0 + 0.1 * jax.random.uniform(kv, (cout,), jnp.float32)
    scale = gamma / jnp.sqrt(var + EPS)
    bias = beta + (conv_bias - mean) * scale
    return scale, bias


def init_params(key):
    params, ref_params = {}, {}
    dchan = [256, 128, 64, 32]
    keys = jax.random.split(key, 5)
    # ConvTranspose2d: PyTorch weight layout (Cin, Cout, kH, kW)
    for i, name in enumerate(("deconv1", "deconv2", "deconv3")):
        cin, cout = dchan[i], dchan[i + 1]
        kw, kb, kbn = jax.random.split(keys[i], 3)
        w_pt = jax.random.normal(kw, (cin, cout, 3, 3), jnp.float32) / np.sqrt(9.0 * cin)
        cbias = 0.05 * jax.random.normal(kb, (cout,), jnp.float32)
        scale, bias = _bn_fold(kbn, cout, cbias)
        w_s = w_pt * scale[None, :, None, None]                      # fold BN scale
        packed = _pack_deconv_weight(w_s, cin, cout).astype(jnp.bfloat16)
        bias4 = jnp.tile(bias.reshape(1, cout), (1, 4))              # phase-major bias
        params[name] = (packed, bias4)
        # reference weights: flipped HWIO for lax conv_transpose identity,
        # bf16-rounded identically to the kernel weights.
        w_hwio = jnp.flip(w_s, axis=(2, 3)).transpose(2, 3, 0, 1)
        ref_params[name] = (w_hwio.astype(jnp.bfloat16).astype(jnp.float32), bias)
    # Conv2d: PyTorch weight layout (Cout, Cin, kH, kW)
    for j, (name, cin, cout) in enumerate((("conv1", 32, 64), ("conv2", 64, 128))):
        kw, kb, kbn = jax.random.split(keys[3 + j], 3)
        w_pt = jax.random.normal(kw, (cout, cin, 3, 3), jnp.float32) / np.sqrt(9.0 * cin)
        cbias = 0.05 * jax.random.normal(kb, (cout,), jnp.float32)
        scale, bias = _bn_fold(kbn, cout, cbias)
        w_s = w_pt * scale[:, None, None, None]
        packed = jnp.concatenate([w_s[:, :, ky, kx].T
                                  for ky in range(3) for kx in range(3)],
                                 axis=0).astype(jnp.bfloat16)        # (9*Cin, Cout)
        params[name] = (packed, bias.reshape(1, cout))
        w_hwio = w_s.transpose(2, 3, 1, 0)
        ref_params[name] = (w_hwio.astype(jnp.bfloat16).astype(jnp.float32), bias)
    return params, ref_params


# ---------------------------------------------------------------------------
# Pure-JAX f32 reference (same folded / bf16-rounded weights)
# ---------------------------------------------------------------------------
def ref_forward(x_nchw, ref_params):
    dn = ("NHWC", "HWIO", "NHWC")
    hp = lax.Precision.HIGHEST
    x = jnp.transpose(x_nchw, (0, 2, 3, 1))
    for name in ("deconv1", "deconv2", "deconv3"):
        w, b = ref_params[name]
        x = lax.conv_general_dilated(x, w, (1, 1), ((1, 2), (1, 2)),
                                     lhs_dilation=(2, 2),
                                     dimension_numbers=dn, precision=hp)
        x = jnp.maximum(x + b, 0.0)
    w, b = ref_params["conv1"]
    x = lax.conv_general_dilated(x, w, (2, 2), ((1, 1), (1, 1)),
                                 dimension_numbers=dn, precision=hp)
    x = jnp.maximum(x + b, 0.0)
    w, b = ref_params["conv2"]
    x = lax.conv_general_dilated(x, w, (2, 2), ((1, 1), (1, 1)),
                                 dimension_numbers=dn, precision=hp)
    x = x + b
    B, H, W, C = x.shape
    P = 7
    Ho, Wo = H // P, W // P
    x = x[:, :Ho * P, :Wo * P, :].reshape(B, Ho, P, Wo, P, C).mean(axis=(2, 4))
    return jnp.transpose(x, (0, 3, 1, 2)).reshape(B, -1)


# ---------------------------------------------------------------------------
if __name__ == "__main__":
    key = jax.random.PRNGKey(0)
    kx, kp = jax.random.split(key)
    # Module fixes channels: input must have 256 channels.  Small 4x4 spatial:
    # 4x4 -> (deconvs) 32x32 -> (conv1) 16x16 -> (conv2) 8x8 -> AvgPool(7) -> 1x1.
    B, C, H, W = 2, 256, 4, 4
    x = jax.random.normal(kx, (B, C, H, W), jnp.float32)
    params, ref_params = init_params(kp)

    fwd = jax.jit(motion_attention_64_forward)
    enc, mi = fwd(x, params)
    enc = jax.block_until_ready(enc)
    assert mi is None
    assert enc.shape == (B, 128), enc.shape

    ref = ref_forward(x, ref_params)
    # bf16 activations (f32 accumulation) vs f32 reference -> relaxed tolerance.
    np.testing.assert_allclose(np.asarray(enc), np.asarray(ref),
                               rtol=2e-2, atol=2e-2)
    print("KERNEL_OK")
</pallas_src>

<mosaic_0001>
module attributes {stable_mosaic.version = 11 : i64} {
  func.func @_deconv_kernel(%arg0: i32, %arg1: memref<1x32x256xbf16, #tpu.memory_space<vmem>>, %arg2: memref<1024x512xbf16, #tpu.memory_space<vmem>>, %arg3: memref<1x512xf32, #tpu.memory_space<vmem>>, %arg4: memref<1x25x512xbf16, #tpu.memory_space<vmem>>) attributes {dimension_semantics = [#tpu.dimension_semantics<parallel>], iteration_bounds = array<i64: 2>, scalar_prefetch = 0 : i64, scratch_operands = 0 : i64, tpu.core_type = #tpu.core_type<tc>, window_params = [{transform_indices = @transform_0, window_bounds = array<i64: 1, 32, 256>}, {pipeline_mode = #tpu.pipeline_mode<synchronous>, transform_indices = @transform_1, window_bounds = array<i64: 1024, 512>}, {pipeline_mode = #tpu.pipeline_mode<synchronous>, transform_indices = @transform_2, window_bounds = array<i64: 1, 512>}, {transform_indices = @transform_3, window_bounds = array<i64: 1, 25, 512>}]} {
    %c0 = arith.constant 0 : index
    %c0_0 = arith.constant 0 : index
    %c0_1 = arith.constant 0 : index
    %0 = vector.load %arg1[%c0, %c0_0, %c0_1] : memref<1x32x256xbf16, #tpu.memory_space<vmem>>, vector<1x32x256xbf16>
    %1 = vector.shape_cast %0 : vector<1x32x256xbf16> to vector<32x256xbf16>
    %c0_2 = arith.constant 0 : index
    %c0_3 = arith.constant 0 : index
    %2 = vector.load %arg2[%c0_2, %c0_3] : memref<1024x512xbf16, #tpu.memory_space<vmem>>, vector<1024x512xbf16>
    %3 = vector.extract_strided_slice %1 {offsets = [0, 0], sizes = [25, 256], strides = [1, 1]} : vector<32x256xbf16> to vector<25x256xbf16>
    %4 = vector.extract_strided_slice %1 {offsets = [1, 0], sizes = [25, 256], strides = [1, 1]} : vector<32x256xbf16> to vector<25x256xbf16>
    %5 = vector.extract_strided_slice %1 {offsets = [5, 0], sizes = [25, 256], strides = [1, 1]} : vector<32x256xbf16> to vector<25x256xbf16>
    %6 = vector.extract_strided_slice %1 {offsets = [6, 0], sizes = [25, 256], strides = [1, 1]} : vector<32x256xbf16> to vector<25x256xbf16>
    %7 = tpu.concatenate %3, %4, %5, %6 in 1 : vector<25x256xbf16>, vector<25x256xbf16>, vector<25x256xbf16>, vector<25x256xbf16> -> vector<25x1024xbf16>
    %cst = arith.constant dense<0.000000e+00> : vector<25x512xf32>
    %8 = tpu.matmul %7, %2, %cst {dimension_numbers = #tpu.dot_dimension_numbers<[1], [0], [0], [1], [0, 0, 1, 1], [], []>} : vector<25x1024xbf16>, vector<1024x512xbf16>, vector<25x512xf32> -> vector<25x512xf32>
    %c0_4 = arith.constant 0 : index
    %c0_5 = arith.constant 0 : index
    %9 = vector.load %arg3[%c0_4, %c0_5] : memref<1x512xf32, #tpu.memory_space<vmem>>, vector<1x512xf32>
    %10 = vector.broadcast %9 : vector<1x512xf32> to vector<25x512xf32>
    %11 = arith.addf %8, %10 : vector<25x512xf32>
    %cst_6 = arith.constant 0.000000e+00 : f32
    %12 = vector.broadcast %cst_6 : f32 to vector<25x512xf32>
    %13 = arith.maximumf %11, %12 : vector<25x512xf32>
    %14 = arith.truncf %13 : vector<25x512xf32> to vector<25x512xbf16>
    %c0_7 = arith.constant 0 : index
    %c0_8 = arith.constant 0 : index
    %c0_9 = arith.constant 0 : index
    %15 = vector.load %arg4[%c0_7, %c0_8, %c0_9] : memref<1x25x512xbf16, #tpu.memory_space<vmem>>, vector<1x25x512xbf16>
    %16 = vector.shape_cast %15 : vector<1x25x512xbf16> to vector<25x512xbf16>
    %17 = vector.shape_cast %14 : vector<25x512xbf16> to vector<1x25x512xbf16>
    tpu.vector_store %arg4[%c0_7, %c0_8, %c0_9], %17 {strides = array<i32>} : memref<1x25x512xbf16, #tpu.memory_space<vmem>>, vector<1x25x512xbf16>,
    return
  }
  func.func @transform_0(%arg0: i32) -> (i32, i32, i32) {
    %c0_i32 = arith.constant 0 : i32
    %c0_i32_0 = arith.constant 0 : i32
    %c0_i32_1 = arith.constant 0 : i32
    return %arg0, %c0_i32, %c0_i32_0 : i32, i32, i32
  }
  func.func @transform_1(%arg0: i32) -> (i32, i32) {
    %c0_i32 = arith.constant 0 : i32
    %c0_i32_0 = arith.constant 0 : i32
    %c0_i32_1 = arith.constant 0 : i32
    return %c0_i32, %c0_i32_0 : i32, i32
  }
  func.func @transform_2(%arg0: i32) -> (i32, i32) {
    %c0_i32 = arith.constant 0 : i32
    %c0_i32_0 = arith.constant 0 : i32
    %c0_i32_1 = arith.constant 0 : i32
    return %c0_i32, %c0_i32_0 : i32, i32
  }
  func.func @transform_3(%arg0: i32) -> (i32, i32, i32) {
    %c0_i32 = arith.constant 0 : i32
    %c0_i32_0 = arith.constant 0 : i32
    %c0_i32_1 = arith.constant 0 : i32
    return %arg0, %c0_i32, %c0_i32_0 : i32, i32, i32
  }
}

module attributes {stable_mosaic.version = 11 : i64} {
  func.func @_deconv_kernel(%arg0: i32, %arg1: memref<1x96x128xbf16, #tpu.memory_space<vmem>>, %arg2: memref<512x256xbf16, #tpu.memory_space<vmem>>, %arg3: memref<1x256xf32, #tpu.memory_space<vmem>>, %arg4: memref<1x81x256xbf16, #tpu.memory_space<vmem>>) attributes {dimension_semantics = [#tpu.dimension_semantics<parallel>], iteration_bounds = array<i64: 2>, scalar_prefetch = 0 : i64, scratch_operands = 0 : i64, tpu.core_type = #tpu.core_type<tc>, window_params = [{transform_indices = @transform_0, window_bounds = array<i64: 1, 96, 128>}, {pipeline_mode = #tpu.pipeline_mode<synchronous>, transform_indices = @transform_1, window_bounds = array<i64: 512, 256>}, {pipeline_mode = #tpu.pipeline_mode<synchronous>, transform_indices = @transform_2, window_bounds = array<i64: 1, 256>}, {transform_indices = @transform_3, window_bounds = array<i64: 1, 81, 256>}]} {
    %c0 = arith.constant 0 : index
    %c0_0 = arith.constant 0 : index
    %c0_1 = arith.constant 0 : index
    %0 = vector.load %arg1[%c0, %c0_0, %c0_1] : memref<1x96x128xbf16, #tpu.memory_space<vmem>>, vector<1x96x128xbf16>
    %1 = vector.shape_cast %0 : vector<1x96x128xbf16> to vector<96x128xbf16>
    %c0_2 = arith.constant 0 : index
    %c0_3 = arith.constant 0 : index
    %2 = vector.load %arg2[%c0_2, %c0_3] : memref<512x256xbf16, #tpu.memory_space<vmem>>, vector<512x256xbf16>
    %3 = vector.extract_strided_slice %1 {offsets = [0, 0], sizes = [81, 128], strides = [1, 1]} : vector<96x128xbf16> to vector<81x128xbf16>
    %4 = vector.extract_strided_slice %1 {offsets = [1, 0], sizes = [81, 128], strides = [1, 1]} : vector<96x128xbf16> to vector<81x128xbf16>
    %5 = vector.extract_strided_slice %1 {offsets = [9, 0], sizes = [81, 128], strides = [1, 1]} : vector<96x128xbf16> to vector<81x128xbf16>
    %6 = vector.extract_strided_slice %1 {offsets = [10, 0], sizes = [81, 128], strides = [1, 1]} : vector<96x128xbf16> to vector<81x128xbf16>
    %7 = tpu.concatenate %3, %4, %5, %6 in 1 : vector<81x128xbf16>, vector<81x128xbf16>, vector<81x128xbf16>, vector<81x128xbf16> -> vector<81x512xbf16>
    %cst = arith.constant dense<0.000000e+00> : vector<81x256xf32>
    %8 = tpu.matmul %7, %2, %cst {dimension_numbers = #tpu.dot_dimension_numbers<[1], [0], [0], [1], [0, 0, 1, 1], [], []>} : vector<81x512xbf16>, vector<512x256xbf16>, vector<81x256xf32> -> vector<81x256xf32>
    %c0_4 = arith.constant 0 : index
    %c0_5 = arith.constant 0 : index
    %9 = vector.load %arg3[%c0_4, %c0_5] : memref<1x256xf32, #tpu.memory_space<vmem>>, vector<1x256xf32>
    %10 = vector.broadcast %9 : vector<1x256xf32> to vector<81x256xf32>
    %11 = arith.addf %8, %10 : vector<81x256xf32>
    %cst_6 = arith.constant 0.000000e+00 : f32
    %12 = vector.broadcast %cst_6 : f32 to vector<81x256xf32>
    %13 = arith.maximumf %11, %12 : vector<81x256xf32>
    %14 = arith.truncf %13 : vector<81x256xf32> to vector<81x256xbf16>
    %c0_7 = arith.constant 0 : index
    %c0_8 = arith.constant 0 : index
    %c0_9 = arith.constant 0 : index
    %15 = vector.load %arg4[%c0_7, %c0_8, %c0_9] : memref<1x81x256xbf16, #tpu.memory_space<vmem>>, vector<1x81x256xbf16>
    %16 = vector.shape_cast %15 : vector<1x81x256xbf16> to vector<81x256xbf16>
    %17 = vector.shape_cast %14 : vector<81x256xbf16> to vector<1x81x256xbf16>
    tpu.vector_store %arg4[%c0_7, %c0_8, %c0_9], %17 {strides = array<i32>} : memref<1x81x256xbf16, #tpu.memory_space<vmem>>, vector<1x81x256xbf16>,
    return
  }
  func.func @transform_0(%arg0: i32) -> (i32, i32, i32) {
    %c0_i32 = arith.constant 0 : i32
    %c0_i32_0 = arith.constant 0 : i32
    %c0_i32_1 = arith.constant 0 : i32
    return %arg0, %c0_i32, %c0_i32_0 : i32, i32, i32
  }
  func.func @transform_1(%arg0: i32) -> (i32, i32) {
    %c0_i32 = arith.constant 0 : i32
    %c0_i32_0 = arith.constant 0 : i32
    %c0_i32_1 = arith.constant 0 : i32
    return %c0_i32, %c0_i32_0 : i32, i32
  }
  func.func @transform_2(%arg0: i32) -> (i32, i32) {
    %c0_i32 = arith.constant 0 : i32
    %c0_i32_0 = arith.constant 0 : i32
    %c0_i32_1 = arith.constant 0 : i32
    return %c0_i32, %c0_i32_0 : i32, i32
  }
  func.func @transform_3(%arg0: i32) -> (i32, i32, i32) {
    %c0_i32 = arith.constant 0 : i32
    %c0_i32_0 = arith.constant 0 : i32
    %c0_i32_1 = arith.constant 0 : i32
    return %arg0, %c0_i32, %c0_i32_0 : i32, i32, i32
  }
}

module attributes {stable_mosaic.version = 11 : i64} {
  func.func @_deconv_kernel(%arg0: i32, %arg1: memref<1x312x64xbf16, #tpu.memory_space<vmem>>, %arg2: memref<256x128xbf16, #tpu.memory_space<vmem>>, %arg3: memref<1x128xf32, #tpu.memory_space<vmem>>, %arg4: memref<1x289x128xbf16, #tpu.memory_space<vmem>>) attributes {dimension_semantics = [#tpu.dimension_semantics<parallel>], iteration_bounds = array<i64: 2>, scalar_prefetch = 0 : i64, scratch_operands = 0 : i64, tpu.core_type = #tpu.core_type<tc>, window_params = [{transform_indices = @transform_0, window_bounds = array<i64: 1, 312, 64>}, {pipeline_mode = #tpu.pipeline_mode<synchronous>, transform_indices = @transform_1, window_bounds = array<i64: 256, 128>}, {pipeline_mode = #tpu.pipeline_mode<synchronous>, transform_indices = @transform_2, window_bounds = array<i64: 1, 128>}, {transform_indices = @transform_3, window_bounds = array<i64: 1, 289, 128>}]} {
    %c0 = arith.constant 0 : index
    %c0_0 = arith.constant 0 : index
    %c0_1 = arith.constant 0 : index
    %0 = vector.load %arg1[%c0, %c0_0, %c0_1] : memref<1x312x64xbf16, #tpu.memory_space<vmem>>, vector<1x312x64xbf16>
    %1 = vector.shape_cast %0 : vector<1x312x64xbf16> to vector<312x64xbf16>
    %c0_2 = arith.constant 0 : index
    %c0_3 = arith.constant 0 : index
    %2 = vector.load %arg2[%c0_2, %c0_3] : memref<256x128xbf16, #tpu.memory_space<vmem>>, vector<256x128xbf16>
    %3 = vector.extract_strided_slice %1 {offsets = [0, 0], sizes = [289, 64], strides = [1, 1]} : vector<312x64xbf16> to vector<289x64xbf16>
    %4 = vector.extract_strided_slice %2 {offsets = [0, 0], sizes = [64, 128], strides = [1, 1]} : vector<256x128xbf16> to vector<64x128xbf16>
    %cst = arith.constant dense<0.000000e+00> : vector<289x128xf32>
    %5 = tpu.matmul %3, %4, %cst {dimension_numbers = #tpu.dot_dimension_numbers<[1], [0], [0], [1], [0, 0, 1, 1], [], []>} : vector<289x64xbf16>, vector<64x128xbf16>, vector<289x128xf32> -> vector<289x128xf32>
    %6 = vector.extract_strided_slice %1 {offsets = [1, 0], sizes = [289, 64], strides = [1, 1]} : vector<312x64xbf16> to vector<289x64xbf16>
    %7 = vector.extract_strided_slice %2 {offsets = [64, 0], sizes = [64, 128], strides = [1, 1]} : vector<256x128xbf16> to vector<64x128xbf16>
    %cst_4 = arith.constant dense<0.000000e+00> : vector<289x128xf32>
    %8 = tpu.matmul %6, %7, %cst_4 {dimension_numbers = #tpu.dot_dimension_numbers<[1], [0], [0], [1], [0, 0, 1, 1], [], []>} : vector<289x64xbf16>, vector<64x128xbf16>, vector<289x128xf32> -> vector<289x128xf32>
    %9 = arith.addf %5, %8 : vector<289x128xf32>
    %10 = vector.extract_strided_slice %1 {offsets = [17, 0], sizes = [289, 64], strides = [1, 1]} : vector<312x64xbf16> to vector<289x64xbf16>
    %11 = vector.extract_strided_slice %2 {offsets = [128, 0], sizes = [64, 128], strides = [1, 1]} : vector<256x128xbf16> to vector<64x128xbf16>
    %cst_5 = arith.constant dense<0.000000e+00> : vector<289x128xf32>
    %12 = tpu.matmul %10, %11, %cst_5 {dimension_numbers = #tpu.dot_dimension_numbers<[1], [0], [0], [1], [0, 0, 1, 1], [], []>} : vector<289x64xbf16>, vector<64x128xbf16>, vector<289x128xf32> -> vector<289x128xf32>
    %13 = arith.addf %9, %12 : vector<289x128xf32>
    %14 = vector.extract_strided_slice %1 {offsets = [18, 0], sizes = [289, 64], strides = [1, 1]} : vector<312x64xbf16> to vector<289x64xbf16>
    %15 = vector.extract_strided_slice %2 {offsets = [192, 0], sizes = [64, 128], strides = [1, 1]} : vector<256x128xbf16> to vector<64x128xbf16>
    %cst_6 = arith.constant dense<0.000000e+00> : vector<289x128xf32>
    %16 = tpu.matmul %14, %15, %cst_6 {dimension_numbers = #tpu.dot_dimension_numbers<[1], [0], [0], [1], [0, 0, 1, 1], [], []>} : vector<289x64xbf16>, vector<64x128xbf16>, vector<289x128xf32> -> vector<289x128xf32>
    %17 = arith.addf %13, %16 : vector<289x128xf32>
    %c0_7 = arith.constant 0 : index
    %c0_8 = arith.constant 0 : index
    %18 = vector.load %arg3[%c0_7, %c0_8] : memref<1x128xf32, #tpu.memory_space<vmem>>, vector<1x128xf32>
    %19 = vector.broadcast %18 : vector<1x128xf32> to vector<289x128xf32>
    %20 = arith.addf %17, %19 : vector<289x128xf32>
    %cst_9 = arith.constant 0.000000e+00 : f32
    %21 = vector.broadcast %cst_9 : f32 to vector<289x128xf32>
    %22 = arith.maximumf %20, %21 : vector<289x128xf32>
    %23 = arith.truncf %22 : vector<289x128xf32> to vector<289x128xbf16>
    %c0_10 = arith.constant 0 : index
    %c0_11 = arith.constant 0 : index
    %c0_12 = arith.constant 0 : index
    %24 = vector.load %arg4[%c0_10, %c0_11, %c0_12] : memref<1x289x128xbf16, #tpu.memory_space<vmem>>, vector<1x289x128xbf16>
    %25 = vector.shape_cast %24 : vector<1x289x128xbf16> to vector<289x128xbf16>
    %26 = vector.shape_cast %23 : vector<289x128xbf16> to vector<1x289x128xbf16>
    tpu.vector_store %arg4[%c0_10, %c0_11, %c0_12], %26 {strides = array<i32>} : memref<1x289x128xbf16, #tpu.memory_space<vmem>>, vector<1x289x128xbf16>,
    return
  }
  func.func @transform_0(%arg0: i32) -> (i32, i32, i32) {
    %c0_i32 = arith.constant 0 : i32
    %c0_i32_0 = arith.constant 0 : i32
    %c0_i32_1 = arith.constant 0 : i32
    return %arg0, %c0_i32, %c0_i32_0 : i32, i32, i32
  }
  func.func @transform_1(%arg0: i32) -> (i32, i32) {
    %c0_i32 = arith.constant 0 : i32
    %c0_i32_0 = arith.constant 0 : i32
    %c0_i32_1 = arith.constant 0 : i32
    return %c0_i32, %c0_i32_0 : i32, i32
  }
  func.func @transform_2(%arg0: i32) -> (i32, i32) {
    %c0_i32 = arith.constant 0 : i32
    %c0_i32_0 = arith.constant 0 : i32
    %c0_i32_1 = arith.constant 0 : i32
    return %c0_i32, %c0_i32_0 : i32, i32
  }
  func.func @transform_3(%arg0: i32) -> (i32, i32, i32) {
    %c0_i32 = arith.constant 0 : i32
    %c0_i32_0 = arith.constant 0 : i32
    %c0_i32_1 = arith.constant 0 : i32
    return %arg0, %c0_i32, %c0_i32_0 : i32, i32, i32
  }
}

module attributes {stable_mosaic.version = 11 : i64} {
  func.func @_conv_kernel(%arg0: i32, %arg1: memref<1x4x312x32xbf16, #tpu.memory_space<vmem>>, %arg2: memref<288x64xbf16, #tpu.memory_space<vmem>>, %arg3: memref<1x64xf32, #tpu.memory_space<vmem>>, %arg4: memref<1x289x64xbf16, #tpu.memory_space<vmem>>) attributes {dimension_semantics = [#tpu.dimension_semantics<parallel>], iteration_bounds = array<i64: 2>, scalar_prefetch = 0 : i64, scratch_operands = 0 : i64, tpu.core_type = #tpu.core_type<tc>, window_params = [{transform_indices = @transform_0, window_bounds = array<i64: 1, 4, 312, 32>}, {pipeline_mode = #tpu.pipeline_mode<synchronous>, transform_indices = @transform_1, window_bounds = array<i64: 288, 64>}, {pipeline_mode = #tpu.pipeline_mode<synchronous>, transform_indices = @transform_2, window_bounds = array<i64: 1, 64>}, {transform_indices = @transform_3, window_bounds = array<i64: 1, 289, 64>}]} {
    %c0 = arith.constant 0 : index
    %c0_0 = arith.constant 0 : index
    %c0_1 = arith.constant 0 : index
    %c0_2 = arith.constant 0 : index
    %0 = vector.load %arg1[%c0, %c0_0, %c0_1, %c0_2] : memref<1x4x312x32xbf16, #tpu.memory_space<vmem>>, vector<1x4x312x32xbf16>
    %1 = vector.shape_cast %0 : vector<1x4x312x32xbf16> to vector<4x312x32xbf16>
    %c0_3 = arith.constant 0 : index
    %c0_4 = arith.constant 0 : index
    %2 = vector.load %arg2[%c0_3, %c0_4] : memref<288x64xbf16, #tpu.memory_space<vmem>>, vector<288x64xbf16>
    %3 = vector.extract_strided_slice %1 {offsets = [0, 0, 0], sizes = [1, 289, 32], strides = [1, 1, 1]} : vector<4x312x32xbf16> to vector<1x289x32xbf16>
    %4 = vector.shape_cast %3 : vector<1x289x32xbf16> to vector<289x32xbf16>
    %5 = vector.extract_strided_slice %2 {offsets = [0, 0], sizes = [32, 64], strides = [1, 1]} : vector<288x64xbf16> to vector<32x64xbf16>
    %cst = arith.constant dense<0.000000e+00> : vector<289x64xf32>
    %6 = tpu.matmul %4, %5, %cst {dimension_numbers = #tpu.dot_dimension_numbers<[1], [0], [0], [1], [0, 0, 1, 1], [], []>} : vector<289x32xbf16>, vector<32x64xbf16>, vector<289x64xf32> -> vector<289x64xf32>
    %7 = vector.extract_strided_slice %1 {offsets = [1, 0, 0], sizes = [1, 289, 32], strides = [1, 1, 1]} : vector<4x312x32xbf16> to vector<1x289x32xbf16>
    %8 = vector.shape_cast %7 : vector<1x289x32xbf16> to vector<289x32xbf16>
    %9 = vector.extract_strided_slice %2 {offsets = [32, 0], sizes = [32, 64], strides = [1, 1]} : vector<288x64xbf16> to vector<32x64xbf16>
    %cst_5 = arith.constant dense<0.000000e+00> : vector<289x64xf32>
    %10 = tpu.matmul %8, %9, %cst_5 {dimension_numbers = #tpu.dot_dimension_numbers<[1], [0], [0], [1], [0, 0, 1, 1], [], []>} : vector<289x32xbf16>, vector<32x64xbf16>, vector<289x64xf32> -> vector<289x64xf32>
    %11 = arith.addf %6, %10 : vector<289x64xf32>
    %12 = vector.extract_strided_slice %1 {offsets = [0, 1, 0], sizes = [1, 289, 32], strides = [1, 1, 1]} : vector<4x312x32xbf16> to vector<1x289x32xbf16>
    %13 = vector.shape_cast %12 : vector<1x289x32xbf16> to vector<289x32xbf16>
    %14 = vector.extract_strided_slice %2 {offsets = [64, 0], sizes = [32, 64], strides = [1, 1]} : vector<288x64xbf16> to vector<32x64xbf16>
    %cst_6 = arith.constant dense<0.000000e+00> : vector<289x64xf32>
    %15 = tpu.matmul %13, %14, %cst_6 {dimension_numbers = #tpu.dot_dimension_numbers<[1], [0], [0], [1], [0, 0, 1, 1], [], []>} : vector<289x32xbf16>, vector<32x64xbf16>, vector<289x64xf32> -> vector<289x64xf32>
    %16 = arith.addf %11, %15 : vector<289x64xf32>
    %17 = vector.extract_strided_slice %1 {offsets = [2, 0, 0], sizes = [1, 289, 32], strides = [1, 1, 1]} : vector<4x312x32xbf16> to vector<1x289x32xbf16>
    %18 = vector.shape_cast %17 : vector<1x289x32xbf16> to vector<289x32xbf16>
    %19 = vector.extract_strided_slice %2 {offsets = [96, 0], sizes = [32, 64], strides = [1, 1]} : vector<288x64xbf16> to vector<32x64xbf16>
    %cst_7 = arith.constant dense<0.000000e+00> : vector<289x64xf32>
    %20 = tpu.matmul %18, %19, %cst_7 {dimension_numbers = #tpu.dot_dimension_numbers<[1], [0], [0], [1], [0, 0, 1, 1], [], []>} : vector<289x32xbf16>, vector<32x64xbf16>, vector<289x64xf32> -> vector<289x64xf32>
    %21 = arith.addf %16, %20 : vector<289x64xf32>
    %22 = vector.extract_strided_slice %1 {offsets = [3, 0, 0], sizes = [1, 289, 32], strides = [1, 1, 1]} : vector<4x312x32xbf16> to vector<1x289x32xbf16>
    %23 = vector.shape_cast %22 : vector<1x289x32xbf16> to vector<289x32xbf16>
    %24 = vector.extract_strided_slice %2 {offsets = [128, 0], sizes = [32, 64], strides = [1, 1]} : vector<288x64xbf16> to vector<32x64xbf16>
    %cst_8 = arith.constant dense<0.000000e+00> : vector<289x64xf32>
    %25 = tpu.matmul %23, %24, %cst_8 {dimension_numbers = #tpu.dot_dimension_numbers<[1], [0], [0], [1], [0, 0, 1, 1], [], []>} : vector<289x32xbf16>, vector<32x64xbf16>, vector<289x64xf32> -> vector<289x64xf32>
    %26 = arith.addf %21, %25 : vector<289x64xf32>
    %27 = vector.extract_strided_slice %1 {offsets = [2, 1, 0], sizes = [1, 289, 32], strides = [1, 1, 1]} : vector<4x312x32xbf16> to vector<1x289x32xbf16>
    %28 = vector.shape_cast %27 : vector<1x289x32xbf16> to vector<289x32xbf16>
    %29 = vector.extract_strided_slice %2 {offsets = [160, 0], sizes = [32, 64], strides = [1, 1]} : vector<288x64xbf16> to vector<32x64xbf16>
    %cst_9 = arith.constant dense<0.000000e+00> : vector<289x64xf32>
    %30 = tpu.matmul %28, %29, %cst_9 {dimension_numbers = #tpu.dot_dimension_numbers<[1], [0], [0], [1], [0, 0, 1, 1], [], []>} : vector<289x32xbf16>, vector<32x64xbf16>, vector<289x64xf32> -> vector<289x64xf32>
    %31 = arith.addf %26, %30 : vector<289x64xf32>
    %32 = vector.extract_strided_slice %1 {offsets = [0, 17, 0], sizes = [1, 289, 32], strides = [1, 1, 1]} : vector<4x312x32xbf16> to vector<1x289x32xbf16>
    %33 = vector.shape_cast %32 : vector<1x289x32xbf16> to vector<289x32xbf16>
    %34 = vector.extract_strided_slice %2 {offsets = [192, 0], sizes = [32, 64], strides = [1, 1]} : vector<288x64xbf16> to vector<32x64xbf16>
    %cst_10 = arith.constant dense<0.000000e+00> : vector<289x64xf32>
    %35 = tpu.matmul %33, %34, %cst_10 {dimension_numbers = #tpu.dot_dimension_numbers<[1], [0], [0], [1], [0, 0, 1, 1], [], []>} : vector<289x32xbf16>, vector<32x64xbf16>, vector<289x64xf32> -> vector<289x64xf32>
    %36 = arith.addf %31, %35 : vector<289x64xf32>
    %37 = vector.extract_strided_slice %1 {offsets = [1, 17, 0], sizes = [1, 289, 32], strides = [1, 1, 1]} : vector<4x312x32xbf16> to vector<1x289x32xbf16>
    %38 = vector.shape_cast %37 : vector<1x289x32xbf16> to vector<289x32xbf16>
    %39 = vector.extract_strided_slice %2 {offsets = [224, 0], sizes = [32, 64], strides = [1, 1]} : vector<288x64xbf16> to vector<32x64xbf16>
    %cst_11 = arith.constant dense<0.000000e+00> : vector<289x64xf32>
    %40 = tpu.matmul %38, %39, %cst_11 {dimension_numbers = #tpu.dot_dimension_numbers<[1], [0], [0], [1], [0, 0, 1, 1], [], []>} : vector<289x32xbf16>, vector<32x64xbf16>, vector<289x64xf32> -> vector<289x64xf32>
    %41 = arith.addf %36, %40 : vector<289x64xf32>
    %42 = vector.extract_strided_slice %1 {offsets = [0, 18, 0], sizes = [1, 289, 32], strides = [1, 1, 1]} : vector<4x312x32xbf16> to vector<1x289x32xbf16>
    %43 = vector.shape_cast %42 : vector<1x289x32xbf16> to vector<289x32xbf16>
    %44 = vector.extract_strided_slice %2 {offsets = [256, 0], sizes = [32, 64], strides = [1, 1]} : vector<288x64xbf16> to vector<32x64xbf16>
    %cst_12 = arith.constant dense<0.000000e+00> : vector<289x64xf32>
    %45 = tpu.matmul %43, %44, %cst_12 {dimension_numbers = #tpu.dot_dimension_numbers<[1], [0], [0], [1], [0, 0, 1, 1], [], []>} : vector<289x32xbf16>, vector<32x64xbf16>, vector<289x64xf32> -> vector<289x64xf32>
    %46 = arith.addf %41, %45 : vector<289x64xf32>
    %c0_13 = arith.constant 0 : index
    %c0_14 = arith.constant 0 : index
    %47 = vector.load %arg3[%c0_13, %c0_14] : memref<1x64xf32, #tpu.memory_space<vmem>>, vector<1x64xf32>
    %48 = vector.broadcast %47 : vector<1x64xf32> to vector<289x64xf32>
    %49 = arith.addf %46, %48 : vector<289x64xf32>
    %cst_15 = arith.constant 0.000000e+00 : f32
    %50 = vector.broadcast %cst_15 : f32 to vector<289x64xf32>
    %51 = arith.maximumf %49, %50 : vector<289x64xf32>
    %52 = arith.truncf %51 : vector<289x64xf32> to vector<289x64xbf16>
    %c0_16 = arith.constant 0 : index
    %c0_17 = arith.constant 0 : index
    %c0_18 = arith.constant 0 : index
    %53 = vector.load %arg4[%c0_16, %c0_17, %c0_18] : memref<1x289x64xbf16, #tpu.memory_space<vmem>>, vector<1x289x64xbf16>
    %54 = vector.shape_cast %53 : vector<1x289x64xbf16> to vector<289x64xbf16>
    %55 = vector.shape_cast %52 : vector<289x64xbf16> to vector<1x289x64xbf16>
    tpu.vector_store %arg4[%c0_16, %c0_17, %c0_18], %55 {strides = array<i32>} : memref<1x289x64xbf16, #tpu.memory_space<vmem>>, vector<1x289x64xbf16>,
    return
  }
  func.func @transform_0(%arg0: i32) -> (i32, i32, i32, i32) {
    %c0_i32 = arith.constant 0 : i32
    %c0_i32_0 = arith.constant 0 : i32
    %c0_i32_1 = arith.constant 0 : i32
    %c0_i32_2 = arith.constant 0 : i32
    return %arg0, %c0_i32, %c0_i32_0, %c0_i32_1 : i32, i32, i32, i32
  }
  func.func @transform_1(%arg0: i32) -> (i32, i32) {
    %c0_i32 = arith.constant 0 : i32
    %c0_i32_0 = arith.constant 0 : i32
    %c0_i32_1 = arith.constant 0 : i32
    return %c0_i32, %c0_i32_0 : i32, i32
  }
  func.func @transform_2(%arg0: i32) -> (i32, i32) {
    %c0_i32 = arith.constant 0 : i32
    %c0_i32_0 = arith.constant 0 : i32
    %c0_i32_1 = arith.constant 0 : i32
    return %c0_i32, %c0_i32_0 : i32, i32
  }
  func.func @transform_3(%arg0: i32) -> (i32, i32, i32) {
    %c0_i32 = arith.constant 0 : i32
    %c0_i32_0 = arith.constant 0 : i32
    %c0_i32_1 = arith.constant 0 : i32
    return %arg0, %c0_i32, %c0_i32_0 : i32, i32, i32
  }
}

module attributes {stable_mosaic.version = 11 : i64} {
  func.func @_conv_pool_kernel(%arg0: i32, %arg1: memref<1x4x96x64xbf16, #tpu.memory_space<vmem>>, %arg2: memref<576x128xbf16, #tpu.memory_space<vmem>>, %arg3: memref<1x128xf32, #tpu.memory_space<vmem>>, %arg4: memref<1x81xf32, #tpu.memory_space<vmem>>, %arg5: memref<1x1x128xf32, #tpu.memory_space<vmem>>) attributes {dimension_semantics = [#tpu.dimension_semantics<parallel>], iteration_bounds = array<i64: 2>, scalar_prefetch = 0 : i64, scratch_operands = 0 : i64, tpu.core_type = #tpu.core_type<tc>, window_params = [{transform_indices = @transform_0, window_bounds = array<i64: 1, 4, 96, 64>}, {pipeline_mode = #tpu.pipeline_mode<synchronous>, transform_indices = @transform_1, window_bounds = array<i64: 576, 128>}, {pipeline_mode = #tpu.pipeline_mode<synchronous>, transform_indices = @transform_2, window_bounds = array<i64: 1, 128>}, {pipeline_mode = #tpu.pipeline_mode<synchronous>, transform_indices = @transform_3, window_bounds = array<i64: 1, 81>}, {transform_indices = @transform_4, window_bounds = array<i64: 1, 1, 128>}]} {
    %c0 = arith.constant 0 : index
    %c0_0 = arith.constant 0 : index
    %c0_1 = arith.constant 0 : index
    %c0_2 = arith.constant 0 : index
    %0 = vector.load %arg1[%c0, %c0_0, %c0_1, %c0_2] : memref<1x4x96x64xbf16, #tpu.memory_space<vmem>>, vector<1x4x96x64xbf16>
    %1 = vector.shape_cast %0 : vector<1x4x96x64xbf16> to vector<4x96x64xbf16>
    %c0_3 = arith.constant 0 : index
    %c0_4 = arith.constant 0 : index
    %2 = vector.load %arg2[%c0_3, %c0_4] : memref<576x128xbf16, #tpu.memory_space<vmem>>, vector<576x128xbf16>
    %3 = vector.extract_strided_slice %1 {offsets = [0, 0, 0], sizes = [1, 81, 64], strides = [1, 1, 1]} : vector<4x96x64xbf16> to vector<1x81x64xbf16>
    %4 = vector.shape_cast %3 : vector<1x81x64xbf16> to vector<81x64xbf16>
    %5 = vector.extract_strided_slice %2 {offsets = [0, 0], sizes = [64, 128], strides = [1, 1]} : vector<576x128xbf16> to vector<64x128xbf16>
    %cst = arith.constant dense<0.000000e+00> : vector<81x128xf32>
    %6 = tpu.matmul %4, %5, %cst {dimension_numbers = #tpu.dot_dimension_numbers<[1], [0], [0], [1], [0, 0, 1, 1], [], []>} : vector<81x64xbf16>, vector<64x128xbf16>, vector<81x128xf32> -> vector<81x128xf32>
    %7 = vector.extract_strided_slice %1 {offsets = [1, 0, 0], sizes = [1, 81, 64], strides = [1, 1, 1]} : vector<4x96x64xbf16> to vector<1x81x64xbf16>
    %8 = vector.shape_cast %7 : vector<1x81x64xbf16> to vector<81x64xbf16>
    %9 = vector.extract_strided_slice %2 {offsets = [64, 0], sizes = [64, 128], strides = [1, 1]} : vector<576x128xbf16> to vector<64x128xbf16>
    %cst_5 = arith.constant dense<0.000000e+00> : vector<81x128xf32>
    %10 = tpu.matmul %8, %9, %cst_5 {dimension_numbers = #tpu.dot_dimension_numbers<[1], [0], [0], [1], [0, 0, 1, 1], [], []>} : vector<81x64xbf16>, vector<64x128xbf16>, vector<81x128xf32> -> vector<81x128xf32>
    %11 = arith.addf %6, %10 : vector<81x128xf32>
    %12 = vector.extract_strided_slice %1 {offsets = [0, 1, 0], sizes = [1, 81, 64], strides = [1, 1, 1]} : vector<4x96x64xbf16> to vector<1x81x64xbf16>
    %13 = vector.shape_cast %12 : vector<1x81x64xbf16> to vector<81x64xbf16>
    %14 = vector.extract_strided_slice %2 {offsets = [128, 0], sizes = [64, 128], strides = [1, 1]} : vector<576x128xbf16> to vector<64x128xbf16>
    %cst_6 = arith.constant dense<0.000000e+00> : vector<81x128xf32>
    %15 = tpu.matmul %13, %14, %cst_6 {dimension_numbers = #tpu.dot_dimension_numbers<[1], [0], [0], [1], [0, 0, 1, 1], [], []>} : vector<81x64xbf16>, vector<64x128xbf16>, vector<81x128xf32> -> vector<81x128xf32>
    %16 = arith.addf %11, %15 : vector<81x128xf32>
    %17 = vector.extract_strided_slice %1 {offsets = [2, 0, 0], sizes = [1, 81, 64], strides = [1, 1, 1]} : vector<4x96x64xbf16> to vector<1x81x64xbf16>
    %18 = vector.shape_cast %17 : vector<1x81x64xbf16> to vector<81x64xbf16>
    %19 = vector.extract_strided_slice %2 {offsets = [192, 0], sizes = [64, 128], strides = [1, 1]} : vector<576x128xbf16> to vector<64x128xbf16>
    %cst_7 = arith.constant dense<0.000000e+00> : vector<81x128xf32>
    %20 = tpu.matmul %18, %19, %cst_7 {dimension_numbers = #tpu.dot_dimension_numbers<[1], [0], [0], [1], [0, 0, 1, 1], [], []>} : vector<81x64xbf16>, vector<64x128xbf16>, vector<81x128xf32> -> vector<81x128xf32>
    %21 = arith.addf %16, %20 : vector<81x128xf32>
    %22 = vector.extract_strided_slice %1 {offsets = [3, 0, 0], sizes = [1, 81, 64], strides = [1, 1, 1]} : vector<4x96x64xbf16> to vector<1x81x64xbf16>
    %23 = vector.shape_cast %22 : vector<1x81x64xbf16> to vector<81x64xbf16>
    %24 = vector.extract_strided_slice %2 {offsets = [256, 0], sizes = [64, 128], strides = [1, 1]} : vector<576x128xbf16> to vector<64x128xbf16>
    %cst_8 = arith.constant dense<0.000000e+00> : vector<81x128xf32>
    %25 = tpu.matmul %23, %24, %cst_8 {dimension_numbers = #tpu.dot_dimension_numbers<[1], [0], [0], [1], [0, 0, 1, 1], [], []>} : vector<81x64xbf16>, vector<64x128xbf16>, vector<81x128xf32> -> vector<81x128xf32>
    %26 = arith.addf %21, %25 : vector<81x128xf32>
    %27 = vector.extract_strided_slice %1 {offsets = [2, 1, 0], sizes = [1, 81, 64], strides = [1, 1, 1]} : vector<4x96x64xbf16> to vector<1x81x64xbf16>
    %28 = vector.shape_cast %27 : vector<1x81x64xbf16> to vector<81x64xbf16>
    %29 = vector.extract_strided_slice %2 {offsets = [320, 0], sizes = [64, 128], strides = [1, 1]} : vector<576x128xbf16> to vector<64x128xbf16>
    %cst_9 = arith.constant dense<0.000000e+00> : vector<81x128xf32>
    %30 = tpu.matmul %28, %29, %cst_9 {dimension_numbers = #tpu.dot_dimension_numbers<[1], [0], [0], [1], [0, 0, 1, 1], [], []>} : vector<81x64xbf16>, vector<64x128xbf16>, vector<81x128xf32> -> vector<81x128xf32>
    %31 = arith.addf %26, %30 : vector<81x128xf32>
    %32 = vector.extract_strided_slice %1 {offsets = [0, 9, 0], sizes = [1, 81, 64], strides = [1, 1, 1]} : vector<4x96x64xbf16> to vector<1x81x64xbf16>
    %33 = vector.shape_cast %32 : vector<1x81x64xbf16> to vector<81x64xbf16>
    %34 = vector.extract_strided_slice %2 {offsets = [384, 0], sizes = [64, 128], strides = [1, 1]} : vector<576x128xbf16> to vector<64x128xbf16>
    %cst_10 = arith.constant dense<0.000000e+00> : vector<81x128xf32>
    %35 = tpu.matmul %33, %34, %cst_10 {dimension_numbers = #tpu.dot_dimension_numbers<[1], [0], [0], [1], [0, 0, 1, 1], [], []>} : vector<81x64xbf16>, vector<64x128xbf16>, vector<81x128xf32> -> vector<81x128xf32>
    %36 = arith.addf %31, %35 : vector<81x128xf32>
    %37 = vector.extract_strided_slice %1 {offsets = [1, 9, 0], sizes = [1, 81, 64], strides = [1, 1, 1]} : vector<4x96x64xbf16> to vector<1x81x64xbf16>
    %38 = vector.shape_cast %37 : vector<1x81x64xbf16> to vector<81x64xbf16>
    %39 = vector.extract_strided_slice %2 {offsets = [448, 0], sizes = [64, 128], strides = [1, 1]} : vector<576x128xbf16> to vector<64x128xbf16>
    %cst_11 = arith.constant dense<0.000000e+00> : vector<81x128xf32>
    %40 = tpu.matmul %38, %39, %cst_11 {dimension_numbers = #tpu.dot_dimension_numbers<[1], [0], [0], [1], [0, 0, 1, 1], [], []>} : vector<81x64xbf16>, vector<64x128xbf16>, vector<81x128xf32> -> vector<81x128xf32>
    %41 = arith.addf %36, %40 : vector<81x128xf32>
    %42 = vector.extract_strided_slice %1 {offsets = [0, 10, 0], sizes = [1, 81, 64], strides = [1, 1, 1]} : vector<4x96x64xbf16> to vector<1x81x64xbf16>
    %43 = vector.shape_cast %42 : vector<1x81x64xbf16> to vector<81x64xbf16>
    %44 = vector.extract_strided_slice %2 {offsets = [512, 0], sizes = [64, 128], strides = [1, 1]} : vector<576x128xbf16> to vector<64x128xbf16>
    %cst_12 = arith.constant dense<0.000000e+00> : vector<81x128xf32>
    %45 = tpu.matmul %43, %44, %cst_12 {dimension_numbers = #tpu.dot_dimension_numbers<[1], [0], [0], [1], [0, 0, 1, 1], [], []>} : vector<81x64xbf16>, vector<64x128xbf16>, vector<81x128xf32> -> vector<81x128xf32>
    %46 = arith.addf %41, %45 : vector<81x128xf32>
    %c0_13 = arith.constant 0 : index
    %c0_14 = arith.constant 0 : index
    %47 = vector.load %arg4[%c0_13, %c0_14] : memref<1x81xf32, #tpu.memory_space<vmem>>, vector<1x81xf32>
    %cst_15 = arith.constant dense<0.000000e+00> : vector<1x128xf32>
    %48 = tpu.matmul %47, %46, %cst_15 {dimension_numbers = #tpu.dot_dimension_numbers<[1], [0], [0], [1], [0, 0, 1, 1], [], []>} : vector<1x81xf32>, vector<81x128xf32>, vector<1x128xf32> -> vector<1x128xf32>
    %c0_16 = arith.constant 0 : index
    %c0_17 = arith.constant 0 : index
    %49 = vector.load %arg3[%c0_16, %c0_17] : memref<1x128xf32, #tpu.memory_space<vmem>>, vector<1x128xf32>
    %50 = arith.addf %48, %49 : vector<1x128xf32>
    %c0_18 = arith.constant 0 : index
    %c0_19 = arith.constant 0 : index
    %c0_20 = arith.constant 0 : index
    %51 = vector.load %arg5[%c0_18, %c0_19, %c0_20] : memref<1x1x128xf32, #tpu.memory_space<vmem>>, vector<1x1x128xf32>
    %52 = vector.shape_cast %51 : vector<1x1x128xf32> to vector<1x128xf32>
    %53 = vector.shape_cast %50 : vector<1x128xf32> to vector<1x1x128xf32>
    tpu.vector_store %arg5[%c0_18, %c0_19, %c0_20], %53 {strides = array<i32>} : memref<1x1x128xf32, #tpu.memory_space<vmem>>, vector<1x1x128xf32>,
    return
  }
  func.func @transform_0(%arg0: i32) -> (i32, i32, i32, i32) {
    %c0_i32 = arith.constant 0 : i32
    %c0_i32_0 = arith.constant 0 : i32
    %c0_i32_1 = arith.constant 0 : i32
    %c0_i32_2 = arith.constant 0 : i32
    return %arg0, %c0_i32, %c0_i32_0, %c0_i32_1 : i32, i32, i32, i32
  }
  func.func @transform_1(%arg0: i32) -> (i32, i32) {
    %c0_i32 = arith.constant 0 : i32
    %c0_i32_0 = arith.constant 0 : i32
    %c0_i32_1 = arith.constant 0 : i32
    return %c0_i32, %c0_i32_0 : i32, i32
  }
  func.func @transform_2(%arg0: i32) -> (i32, i32) {
    %c0_i32 = arith.constant 0 : i32
    %c0_i32_0 = arith.constant 0 : i32
    %c0_i32_1 = arith.constant 0 : i32
    return %c0_i32, %c0_i32_0 : i32, i32
  }
  func.func @transform_3(%arg0: i32) -> (i32, i32) {
    %c0_i32 = arith.constant 0 : i32
    %c0_i32_0 = arith.constant 0 : i32
    %c0_i32_1 = arith.constant 0 : i32
    return %c0_i32, %c0_i32_0 : i32, i32
  }
  func.func @transform_4(%arg0: i32) -> (i32, i32, i32) {
    %c0_i32 = arith.constant 0 : i32
    %c0_i32_0 = arith.constant 0 : i32
    %c0_i32_1 = arith.constant 0 : i32
    return %arg0, %c0_i32, %c0_i32_0 : i32, i32, i32
  }
}

</mosaic_0001>

<llo_original>
// kernel: motion_attention_64_forward.6
$region0: #{motion_attention_64_forward.6}
  #allocation0 [shape = 'u32[]', space=smem, size = 0x4, offset = 0x4, fixed_abs, tag = 'smem constant byte address 0x4 - core index']
  #allocation1 [shape = 'u32[144,128]{1,0:T(1,128)}', space=vmem, size = 0x12000, scoped, tag = 'internal scratch']
  %s0 = inlined_call_operand.vmem [shape: bf16[2,96,128], index: 0, kind: input, shape index: {}]
  %s1 = inlined_call_operand.vmem [shape: bf16[512,256], index: 1, kind: input, shape index: {}]
  %s2 = inlined_call_operand.vmem [shape: f32[1,256], index: 2, kind: input, shape index: {}]
  %s3 = inlined_call_operand.vmem [shape: bf16[2,81,256], index: 3, kind: output, shape index: {}]
  %s4 = sld [smem:[#allocation0]]
  $region45: #{motion_attention_64_forward.6} parent=0
    _
  %s6 = ssub.s32 1, %s4
  %s7 = scalar_select 0, %s6, %s4
  loop: start=0, step=1, limit=4
  $region2: #{motion_attention_64_forward.6} parent=0 // loop_pre_header
    _
  $region3: #{motion_attention_64_forward.6} parent=0 // loop_header
    %s9 = sphi 0, %s13
    %p10 = scmp.ge.s32.totalorder %s9, 4
    %s19 = sphi 0, %s21
    %s22 = sphi 0, %s19
    %s23 = sphi 0, %s22
    %s39 = sphi 0, %s23
    %s43 = sphi 0, %s43
    %s45 = sphi 0, %s43
    %s46 = sphi 0, %s45
    %s60 = sphi 0, %s46
    %s64 = sphi 0, %s64
    %s66 = sphi 0, %s64
    %s67 = sphi 0, %s66
    %s81 = sphi 0, %s67
    %s87 = sphi 0, %s89
    %s90 = sphi 0, %s87
    %s91 = sphi 0, %s90
    %s107 = sphi 0, %s91
  $region4: #{motion_attention_64_forward.6} parent=0 // loop_header_branch
    %12 = sbr.rel (%p10) target = $region8
  $region5: #{motion_attention_64_forward.6} parent=0 // loop_body
    %s14 = ssub.s32 %s9, 1
    %s15 = ssub.s32 %s9, 2
    %s16 = sadd.s32 %s9, 1
    %s17 = ssub.s32 %s9, %s16
    %p18 = scmp.eq.s32.totalorder %s17, 0
    %s20 = sadd.s32 %s19, 1
    %s21 = scalar_select %p18, %s19, %s20
    %p24 = pneg %p18
    %p25 = scmp.eq.s32.totalorder %s9, 1
    %p26 = por %p24, %p25
    %p27 = scmp.ne.s32.totalorder %s19, %s22
    %p28 = scmp.eq.s32.totalorder %s9, 0
    %p29 = por %p27, %p28
    %p30 = scmp.ne.s32.totalorder %s19, %s22
    %p31 = scmp.eq.s32.totalorder %s14, 1
    %p32 = por %p30, %p31
    %p33 = scmp.ne.s32.totalorder %s22, %s23
    %p34 = scmp.eq.s32.totalorder %s14, 0
    %p35 = por %p33, %p34
    %p36 = scmp.ne.s32.totalorder %s22, %s23
    %p37 = scmp.eq.s32.totalorder %s15, 1
    %p38 = por %p36, %p37
    %p40 = scmp.ne.s32.totalorder %s23, %s39
    %p41 = scmp.eq.s32.totalorder %s15, 0
    %p42 = por %p40, %p41
    %s44 = sadd.s32 %s43, 1
    %p47 = scmp.eq.s32.totalorder %s9, 1
    %p48 = scmp.ne.s32.totalorder %s43, %s45
    %p49 = scmp.eq.s32.totalorder %s9, 0
    %p50 = por %p48, %p49
    %p51 = scmp.ne.s32.totalorder %s43, %s45
    %p52 = scmp.eq.s32.totalorder %s14, 1
    %p53 = por %p51, %p52
    %p54 = scmp.ne.s32.totalorder %s45, %s46
    %p55 = scmp.eq.s32.totalorder %s14, 0
    %p56 = por %p54, %p55
    %p57 = scmp.ne.s32.totalorder %s45, %s46
    %p58 = scmp.eq.s32.totalorder %s15, 1
    %p59 = por %p57, %p58
    %p61 = scmp.ne.s32.totalorder %s46, %s60
    %p62 = scmp.eq.s32.totalorder %s15, 0
    %p63 = por %p61, %p62
    %s65 = sadd.s32 %s64, 1
    %p68 = scmp.eq.s32.totalorder %s9, 1
    %p69 = scmp.ne.s32.totalorder %s64, %s66
    %p70 = scmp.eq.s32.totalorder %s9, 0
    %p71 = por %p69, %p70
    %p72 = scmp.ne.s32.totalorder %s64, %s66
    %p73 = scmp.eq.s32.totalorder %s14, 1
    %p74 = por %p72, %p73
    %p75 = scmp.ne.s32.totalorder %s66, %s67
    %p76 = scmp.eq.s32.totalorder %s14, 0
    %p77 = por %p75, %p76
    %p78 = scmp.ne.s32.totalorder %s66, %s67
    %p79 = scmp.eq.s32.totalorder %s15, 1
    %p80 = por %p78, %p79
    %p82 = scmp.ne.s32.totalorder %s67, %s81
    %p83 = scmp.eq.s32.totalorder %s15, 0
    %p84 = por %p82, %p83
    %s85 = ssub.s32 %s9, %s16
    %p86 = scmp.eq.s32.totalorder %s85, 0
    %s88 = sadd.s32 %s87, 1
    %s89 = scalar_select %p86, %s87, %s88
    %p92 = pneg %p86
    %p93 = scmp.eq.s32.totalorder %s9, 1
    %p94 = por %p92, %p93
    %p95 = scmp.ne.s32.totalorder %s87, %s90
    %p96 = scmp.eq.s32.totalorder %s9, 0
    %p97 = por %p95, %p96
    %p98 = scmp.ne.s32.totalorder %s87, %s90
    %p99 = scmp.eq.s32.totalorder %s14, 1
    %p100 = por %p98, %p99
    %p101 = scmp.ne.s32.totalorder %s90, %s91
    %p102 = scmp.eq.s32.totalorder %s14, 0
    %p103 = por %p101, %p102
    %p104 = scmp.ne.s32.totalorder %s90, %s91
    %p105 = scmp.eq.s32.totalorder %s15, 1
    %p106 = por %p104, %p105
    %p108 = scmp.ne.s32.totalorder %s91, %s107
    %p109 = scmp.eq.s32.totalorder %s15, 0
    %p110 = por %p108, %p109
    %p111 = scmp.le.s32.totalorder 1, %s9
    %p112 = scmp.lt.s32.totalorder %s9, 3
    %p113 = pnand %p111, %p112
    %p114 = pneg %p113
    // Predicated region
    $region9: #{motion_attention_64_forward.6} parent=5 // pred_check
      _
    $region10: #{motion_attention_64_forward.6} parent=5 // pred_check_branch
      %116 = sbr.rel (%p113) target = $region12
    $region11: #{motion_attention_64_forward.6} parent=5 // pred_region
      %s117 = ssub.s32 %s9, 1
      // Predicated region
      $region13: #{motion_attention_64_forward.6} parent=11 // pred_check
        %p118 = pneg %p56
      $region14: #{motion_attention_64_forward.6} parent=11 // pred_check_branch
        %120 = sbr.rel (%p118) target = $region16
      $region15: #{motion_attention_64_forward.6} parent=11 // pred_region
        _
      $region16: #{motion_attention_64_forward.6} parent=11 // pred_fallthru
        _
      // Predicated region
      $region17: #{motion_attention_64_forward.6} parent=11 // pred_check
        %p121 = pneg %p77
      $region18: #{motion_attention_64_forward.6} parent=11 // pred_check_branch
        %123 = sbr.rel (%p121) target = $region20
      $region19: #{motion_attention_64_forward.6} parent=11 // pred_region
        _
      $region20: #{motion_attention_64_forward.6} parent=11 // pred_fallthru
        _
    $region12: #{motion_attention_64_forward.6} parent=5 // pred_fallthru
      _
    %p124 = scmp.lt.s32.totalorder %s9, 2
    // Predicated region
    $region21: #{motion_attention_64_forward.6} parent=5 // pred_check
      %p125 = pneg %p124
    $region22: #{motion_attention_64_forward.6} parent=5 // pred_check_branch
      %127 = sbr.rel (%p125) target = $region24
    $region23: #{motion_attention_64_forward.6} parent=5 // pred_region
      // Predicated region
      $region25: #{motion_attention_64_forward.6} parent=23 // pred_check
        %p128 = pneg %p29
      $region26: #{motion_attention_64_forward.6} parent=23 // pred_check_branch
        %130 = sbr.rel (%p128) target = $region28
      $region27: #{motion_attention_64_forward.6} parent=23 // pred_region
        %p131 = scmp.lt.s32.totalorder %s9, 1
        %s132 = scalar_select %p131, %s9, 1
        %s133 = smul.addr %s132, 12
        %s134 = smul.addr %s133, 4
        %s135 = scalar_lea.vmem %s0, %s134
      $region28: #{motion_attention_64_forward.6} parent=23 // pred_fallthru
        _
    $region24: #{motion_attention_64_forward.6} parent=5 // pred_fallthru
      _
    %p136 = scmp.le.s32.totalorder 1, %s9
    %p137 = scmp.lt.s32.totalorder %s9, 3
    %p138 = pnand %p136, %p137
    %p139 = pneg %p138
    // Predicated region
    $region29: #{motion_attention_64_forward.6} parent=5 // pred_check
      _
    $region30: #{motion_attention_64_forward.6} parent=5 // pred_check_branch
      %141 = sbr.rel (%p138) target = $region32
    $region31: #{motion_attention_64_forward.6} parent=5 // pred_region
      %s142 = ssub.s32 %s9, 1
      %p143 = scmp.lt.s32.totalorder %s14, 1
      %s144 = scalar_select %p143, %s14, 1
      %s145 = smul.addr %s144, 12
      %s146 = smul.addr %s145, 4
      %s147 = scalar_lea.vmem %s0, %s146
      %p148 = pneg %p35
      %p149 = pneg %p32
      %p150 = pneg %p56
      %p151 = pneg %p53
      %p152 = pneg %p77
      %p153 = pneg %p74
      %p154 = pneg %p103
      %p155 = pneg %p100
      %p156 = scmp.lt.s32.totalorder %s14, 1
      %s157 = scalar_select %p156, %s14, 1
      %s158 = smul.addr %s157, 22
      %s159 = smul.addr %s158, 4
      %s160 = scalar_lea.vmem %s3, %s159
      %p161 = scmp.lt.s32.totalorder %s14, 1
      %s162 = scalar_select %p161, %s14, 1
      %s163 = smul.addr %s162, 12
      %s164 = smul.addr %s163, 4
      %s165 = scalar_lea.vmem %s0, %s164
      %p166 = scmp.lt.s32.totalorder %s14, 1
      %s167 = scalar_select %p166, %s14, 1
      %s168 = smul.addr %s167, 22
      %s169 = smul.addr %s168, 4
      %s170 = scalar_lea.vmem %s3, %s169
      %v171 = vld [vmem:[%s165] sm:$0xf]
      %v172 = vld [vmem:[%s165 + $0x4] sm:$0xf]
      %v173 = vld [vmem:[%s165 + $0x8] sm:$0xf]
      %v174 = vld [vmem:[%s165 + $0xc] sm:$0xf]
      %v175 = vld [vmem:[%s165 + $0x10] sm:$0xf]
      %v176 = vld [vmem:[%s165 + $0x14] sm:$0xf]
      %v177 = vld [vmem:[%s165 + $0x18] sm:$0xf]
      %v178 = vld [vmem:[%s165 + $0x1c] sm:$0xf]
      %v179 = vld [vmem:[%s165 + $0x20] sm:$0xf]
      %v180 = vld [vmem:[%s165 + $0x24] sm:$0xf]
      %v181 = vld [vmem:[%s165 + $0x28] sm:$0xf]
      %v182 = vld [vmem:[%s165 + $0x2c] sm:$0xf]
      %v183 = vld [vmem:[%s1] sm:$0xff]
      %v184 = vld [vmem:[%s1 + $0x8] sm:$0xff]
      %v185 = vld [vmem:[%s1 + $0x10] sm:$0xff]
      %v186 = vld [vmem:[%s1 + $0x18] sm:$0xff]
      %v187 = vld [vmem:[%s1 + $0x20] sm:$0xff]
      %v188 = vld [vmem:[%s1 + $0x28] sm:$0xff]
      %v189 = vld [vmem:[%s1 + $0x30] sm:$0xff]
      %v190 = vld [vmem:[%s1 + $0x38] sm:$0xff]
      %v191 = vld [vmem:[%s1 + $0x40] sm:$0xff]
      %v192 = vld [vmem:[%s1 + $0x48] sm:$0xff]
      %v193 = vld [vmem:[%s1 + $0x50] sm:$0xff]
      %v194 = vld [vmem:[%s1 + $0x58] sm:$0xff]
      %v195 = vld [vmem:[%s1 + $0x60] sm:$0xff]
      %v196 = vld [vmem:[%s1 + $0x68] sm:$0xff]
      %v197 = vld [vmem:[%s1 + $0x70] sm:$0xff]
      %v198 = vld [vmem:[%s1 + $0x78] sm:$0xff]
      %v199 = vld [vmem:[%s1 + $0x80] sm:$0xff]
      %v200 = vld [vmem:[%s1 + $0x88] sm:$0xff]
      %v201 = vld [vmem:[%s1 + $0x90] sm:$0xff]
      %v202 = vld [vmem:[%s1 + $0x98] sm:$0xff]
      %v203 = vld [vmem:[%s1 + $0xa0] sm:$0xff]
      %v204 = vld [vmem:[%s1 + $0xa8] sm:$0xff]
      %v205 = vld [vmem:[%s1 + $0xb0] sm:$0xff]
      %v206 = vld [vmem:[%s1 + $0xb8] sm:$0xff]
      %v207 = vld [vmem:[%s1 + $0xc0] sm:$0xff]
      %v208 = vld [vmem:[%s1 + $0xc8] sm:$0xff]
      %v209 = vld [vmem:[%s1 + $0xd0] sm:$0xff]
      %v210 = vld [vmem:[%s1 + $0xd8] sm:$0xff]
      %v211 = vld [vmem:[%s1 + $0xe0] sm:$0xff]
      %v212 = vld [vmem:[%s1 + $0xe8] sm:$0xff]
      %v213 = vld [vmem:[%s1 + $0xf0] sm:$0xff]
      %v214 = vld [vmem:[%s1 + $0xf8] sm:$0xff]
      %v215 = vld [vmem:[%s1 + $0x100] sm:$0xff]
      %v216 = vld [vmem:[%s1 + $0x108] sm:$0xff]
      %v217 = vld [vmem:[%s1 + $0x110] sm:$0xff]
      %v218 = vld [vmem:[%s1 + $0x118] sm:$0xff]
      %v219 = vld [vmem:[%s1 + $0x120] sm:$0xff]
      %v220 = vld [vmem:[%s1 + $0x128] sm:$0xff]
      %v221 = vld [vmem:[%s1 + $0x130] sm:$0xff]
      %v222 = vld [vmem:[%s1 + $0x138] sm:$0xff]
      %v223 = vld [vmem:[%s1 + $0x140] sm:$0xff]
      %v224 = vld [vmem:[%s1 + $0x148] sm:$0xff]
      %v225 = vld [vmem:[%s1 + $0x150] sm:$0xff]
      %v226 = vld [vmem:[%s1 + $0x158] sm:$0xff]
      %v227 = vld [vmem:[%s1 + $0x160] sm:$0xff]
      %v228 = vld [vmem:[%s1 + $0x168] sm:$0xff]
      %v229 = vld [vmem:[%s1 + $0x170] sm:$0xff]
      %v230 = vld [vmem:[%s1 + $0x178] sm:$0xff]
      %v231 = vld [vmem:[%s1 + $0x180] sm:$0xff]
      %v232 = vld [vmem:[%s1 + $0x188] sm:$0xff]
      %v233 = vld [vmem:[%s1 + $0x190] sm:$0xff]
      %v234 = vld [vmem:[%s1 + $0x198] sm:$0xff]
      %v235 = vld [vmem:[%s1 + $0x1a0] sm:$0xff]
      %v236 = vld [vmem:[%s1 + $0x1a8] sm:$0xff]
      %v237 = vld [vmem:[%s1 + $0x1b0] sm:$0xff]
      %v238 = vld [vmem:[%s1 + $0x1b8] sm:$0xff]
      %v239 = vld [vmem:[%s1 + $0x1c0] sm:$0xff]
      %v240 = vld [vmem:[%s1 + $0x1c8] sm:$0xff]
      %v241 = vld [vmem:[%s1 + $0x1d0] sm:$0xff]
      %v242 = vld [vmem:[%s1 + $0x1d8] sm:$0xff]
      %v243 = vld [vmem:[%s1 + $0x1e0] sm:$0xff]
      %v244 = vld [vmem:[%s1 + $0x1e8] sm:$0xff]
      %v245 = vld [vmem:[%s1 + $0x1f0] sm:$0xff]
      %v246 = vld [vmem:[%s1 + $0x1f8] sm:$0xff]
      %v258 = vunpack.c.l.b16 %v171
      %v259 = vunpack.c.l.b16 %v172
      %v260 = vunpack.c.l.b16 %v173
      %v261 = vunpack.c.l.b16 %v174
      %v262 = vunpack.c.l.b16 %v175
      %v263 = vunpack.c.l.b16 %v176
      %v264 = vunpack.c.l.b16 %v177
      %v265 = vunpack.c.l.b16 %v178
      %v266 = vunpack.c.l.b16 %v179
      %v267 = vunpack.c.l.b16 %v180
      %v268 = vunpack.c.l.b16 %v181
      %v269 = vpack.c.b16 %v259, %v258
      %v270 = vpack.c.b16 %v261, %v260
      %v271 = vpack.c.b16 %v263, %v262
      %v272 = vpack.c.b16 %v265, %v264
      %v273 = vpack.c.b16 %v267, %v266
      %v274 = vpack.c.b16 %v268, %v268
      %vm281 = vsmask.f32 7424
      %v283 = vshrl.u32 %v269, 16
      %v285 = vshll.u32 %v269, 16
      %v287 = vrot.slane %v285, 1
      %v288 = vor.u32 %v283, %v287
      %v290 = vshll.u32 %v270, 16
      %v292 = vrot.slane %v290, 1
      %v293 = vsel %vm281, %v288, %v292
      %v294 = vshrl.u32 %v270, 16
      %v296 = vor.u32 %v294, %v292
      %v298 = vshll.u32 %v271, 16
      %v300 = vrot.slane %v298, 1
      %v301 = vsel %vm281, %v296, %v300
      %v302 = vshrl.u32 %v271, 16
      %v304 = vor.u32 %v302, %v300
      %v306 = vshll.u32 %v272, 16
      %v308 = vrot.slane %v306, 1
      %v309 = vsel %vm281, %v304, %v308
      %v310 = vshrl.u32 %v272, 16
      %v312 = vor.u32 %v310, %v308
      %v314 = vshll.u32 %v273, 16
      %v316 = vrot.slane %v314, 1
      %v317 = vsel %vm281, %v312, %v316
      %v318 = vshrl.u32 %v273, 16
      %v320 = vor.u32 %v318, %v316
      %v322 = vshll.u32 %v274, 16
      %v324 = vrot.slane %v322, 1
      %v325 = vsel %vm281, %v320, %v324
      %v326 = vshrl.u32 %v274, 16
      %v335 = vunpack.c.l.b16 %v182
      %v336 = vpack.c.b16 %v260, %v259
      %v337 = vpack.c.b16 %v262, %v261
      %v338 = vpack.c.b16 %v264, %v263
      %v339 = vpack.c.b16 %v266, %v265
      %v340 = vpack.c.b16 %v268, %v267
      %v341 = vpack.c.b16 %v335, %v335
      %v343 = vshrl.u32 %v336, 16
      %v345 = vshll.u32 %v336, 16
      %v347 = vrot.slane %v345, 1
      %v348 = vor.u32 %v343, %v347
      %v350 = vshll.u32 %v337, 16
      %v352 = vrot.slane %v350, 1
      %v353 = vsel %vm281, %v348, %v352
      %v354 = vshrl.u32 %v337, 16
      %v356 = vor.u32 %v354, %v352
      %v358 = vshll.u32 %v338, 16
      %v360 = vrot.slane %v358, 1
      %v361 = vsel %vm281, %v356, %v360
      %v362 = vshrl.u32 %v338, 16
      %v364 = vor.u32 %v362, %v360
      %v366 = vshll.u32 %v339, 16
      %v368 = vrot.slane %v366, 1
      %v369 = vsel %vm281, %v364, %v368
      %v370 = vshrl.u32 %v339, 16
      %v372 = vor.u32 %v370, %v368
      %v374 = vshll.u32 %v340, 16
      %v376 = vrot.slane %v374, 1
      %v377 = vsel %vm281, %v372, %v376
      %v378 = vshrl.u32 %v340, 16
      %v380 = vor.u32 %v378, %v376
      %v382 = vshll.u32 %v341, 16
      %v384 = vrot.slane %v382, 1
      %v385 = vsel %vm281, %v380, %v384
      %v386 = vshrl.u32 %v341, 16
      %vm394 = vcmask 1046528
      %v395 = vrot.slane %v336, 1
      %v396 = vrot.slane %v337, 1
      %v397 = vsel %vm394, %v395, %v396
      %v398 = vrot.slane %v338, 1
      %v399 = vsel %vm394, %v396, %v398
      %v400 = vrot.slane %v339, 1
      %v401 = vsel %vm394, %v398, %v400
      %v402 = vrot.slane %v340, 1
      %v403 = vsel %vm394, %v400, %v402
      %v404 = vrot.slane %v341, 1
      %v405 = vsel %vm394, %v402, %v404
      %v412 = vld [vmem:[%s2] sm:$0x3]
      %v414 = vlaneseq
      %v415 = vshrl.u32 %v414, 7
      %v416 = vsub.s32 0, %v415
      %v417 = vrot.slane %v412, %v416
      %v418 = vlaneseq
      %v419 = vshrl.u32 %v418, 7
      %v420 = vsub.s32 1, %v419
      %v421 = vrot.slane %v412, %v420
      %v488 = vunpack.c.l.b16 %v183
      %v489 = vunpack.c.h.b16 %v183
      %v490 = vunpack.c.l.b16 %v184
      %v491 = vunpack.c.h.b16 %v184
      %v492 = vunpack.c.l.b16 %v185
      %v493 = vunpack.c.h.b16 %v185
      %v494 = vunpack.c.l.b16 %v186
      %v495 = vunpack.c.h.b16 %v186
      %v496 = vunpack.c.l.b16 %v187
      %v497 = vunpack.c.h.b16 %v187
      %v498 = vunpack.c.l.b16 %v188
      %v499 = vunpack.c.h.b16 %v188
      %v500 = vunpack.c.l.b16 %v189
      %v501 = vunpack.c.h.b16 %v189
      %v502 = vunpack.c.l.b16 %v190
      %v503 = vunpack.c.h.b16 %v190
      %v504 = vunpack.c.l.b16 %v191
      %v505 = vunpack.c.h.b16 %v191
      %v506 = vunpack.c.l.b16 %v192
      %v507 = vunpack.c.h.b16 %v192
      %v508 = vunpack.c.l.b16 %v193
      %v509 = vunpack.c.h.b16 %v193
      %v510 = vunpack.c.l.b16 %v194
      %v511 = vunpack.c.h.b16 %v194
      %v512 = vunpack.c.l.b16 %v195
      %v513 = vunpack.c.h.b16 %v195
      %v514 = vunpack.c.l.b16 %v196
      %v515 = vunpack.c.h.b16 %v196
      %v516 = vunpack.c.l.b16 %v197
      %v517 = vunpack.c.h.b16 %v197
      %v518 = vunpack.c.l.b16 %v198
      %v519 = vunpack.c.h.b16 %v198
      %v520 = vunpack.c.l.b16 %v199
      %v521 = vunpack.c.h.b16 %v199
      %v522 = vunpack.c.l.b16 %v200
      %v523 = vunpack.c.h.b16 %v200
      %v524 = vunpack.c.l.b16 %v201
      %v525 = vunpack.c.h.b16 %v201
      %v526 = vunpack.c.l.b16 %v202
      %v527 = vunpack.c.h.b16 %v202
      %v528 = vunpack.c.l.b16 %v203
      %v529 = vunpack.c.h.b16 %v203
      %v530 = vunpack.c.l.b16 %v204
      %v531 = vunpack.c.h.b16 %v204
      %v532 = vunpack.c.l.b16 %v205
      %v533 = vunpack.c.h.b16 %v205
      %v534 = vunpack.c.l.b16 %v206
      %v535 = vunpack.c.h.b16 %v206
      %v536 = vunpack.c.l.b16 %v207
      %v537 = vunpack.c.h.b16 %v207
      %v538 = vunpack.c.l.b16 %v208
      %v539 = vunpack.c.h.b16 %v208
      %v540 = vunpack.c.l.b16 %v209
      %v541 = vunpack.c.h.b16 %v209
      %v542 = vunpack.c.l.b16 %v210
      %v543 = vunpack.c.h.b16 %v210
      %v544 = vunpack.c.l.b16 %v211
      %v545 = vunpack.c.h.b16 %v211
      %v546 = vunpack.c.l.b16 %v212
      %v547 = vunpack.c.h.b16 %v212
      %v548 = vunpack.c.l.b16 %v213
      %v549 = vunpack.c.h.b16 %v213
      %v550 = vunpack.c.l.b16 %v214
      %v551 = vunpack.c.h.b16 %v214
      %v552 = vunpack.c.l.b16 %v215
      %v553 = vunpack.c.h.b16 %v215
      %v554 = vunpack.c.l.b16 %v216
      %v555 = vunpack.c.h.b16 %v216
      %v556 = vunpack.c.l.b16 %v217
      %v557 = vunpack.c.h.b16 %v217
      %v558 = vunpack.c.l.b16 %v218
      %v559 = vunpack.c.h.b16 %v218
      %v560 = vunpack.c.l.b16 %v219
      %v561 = vunpack.c.h.b16 %v219
      %v562 = vunpack.c.l.b16 %v220
      %v563 = vunpack.c.h.b16 %v220
      %v564 = vunpack.c.l.b16 %v221
      %v565 = vunpack.c.h.b16 %v221
      %v566 = vunpack.c.l.b16 %v222
      %v567 = vunpack.c.h.b16 %v222
      %v568 = vunpack.c.l.b16 %v223
      %v569 = vunpack.c.h.b16 %v223
      %v570 = vunpack.c.l.b16 %v224
      %v571 = vunpack.c.h.b16 %v224
      %v572 = vunpack.c.l.b16 %v225
      %v573 = vunpack.c.h.b16 %v225
      %v574 = vunpack.c.l.b16 %v226
      %v575 = vunpack.c.h.b16 %v226
      %v576 = vunpack.c.l.b16 %v227
      %v577 = vunpack.c.h.b16 %v227
      %v578 = vunpack.c.l.b16 %v228
      %v579 = vunpack.c.h.b16 %v228
      %v580 = vunpack.c.l.b16 %v229
      %v581 = vunpack.c.h.b16 %v229
      %v582 = vunpack.c.l.b16 %v230
      %v583 = vunpack.c.h.b16 %v230
      %v584 = vunpack.c.l.b16 %v231
      %v585 = vunpack.c.h.b16 %v231
      %v586 = vunpack.c.l.b16 %v232
      %v587 = vunpack.c.h.b16 %v232
      %v588 = vunpack.c.l.b16 %v233
      %v589 = vunpack.c.h.b16 %v233
      %v590 = vunpack.c.l.b16 %v234
      %v591 = vunpack.c.h.b16 %v234
      %v592 = vunpack.c.l.b16 %v235
      %v593 = vunpack.c.h.b16 %v235
      %v594 = vunpack.c.l.b16 %v236
      %v595 = vunpack.c.h.b16 %v236
      %v596 = vunpack.c.l.b16 %v237
      %v597 = vunpack.c.h.b16 %v237
      %v598 = vunpack.c.l.b16 %v238
      %v599 = vunpack.c.h.b16 %v238
      %v600 = vunpack.c.l.b16 %v239
      %v601 = vunpack.c.h.b16 %v239
      %v602 = vunpack.c.l.b16 %v240
      %v603 = vunpack.c.h.b16 %v240
      %v604 = vunpack.c.l.b16 %v241
      %v605 = vunpack.c.h.b16 %v241
      %v606 = vunpack.c.l.b16 %v242
      %v607 = vunpack.c.h.b16 %v242
      %v608 = vunpack.c.l.b16 %v243
      %v609 = vunpack.c.h.b16 %v243
      %v610 = vunpack.c.l.b16 %v244
      %v611 = vunpack.c.h.b16 %v244
      %v612 = vunpack.c.l.b16 %v245
      %v613 = vunpack.c.h.b16 %v245
      %v614 = vunpack.c.l.b16 %v246
      %v615 = vunpack.c.h.b16 %v246
      %v616 = vpack.c.b16 %v490, %v488
      %v617 = vpack.c.b16 %v491, %v489
      %v618 = vpack.c.b16 %v494, %v492
      %v619 = vpack.c.b16 %v495, %v493
      %v620 = vpack.c.b16 %v498, %v496
      %v621 = vpack.c.b16 %v499, %v497
      %v622 = vpack.c.b16 %v502, %v500
      %v623 = vpack.c.b16 %v503, %v501
      %v624 = vpack.c.b16 %v506, %v504
      %v625 = vpack.c.b16 %v507, %v505
      %v626 = vpack.c.b16 %v510, %v508
      %v627 = vpack.c.b16 %v511, %v509
      %v628 = vpack.c.b16 %v514, %v512
      %v629 = vpack.c.b16 %v515, %v513
      %v630 = vpack.c.b16 %v518, %v516
      %v631 = vpack.c.b16 %v519, %v517
      %v632 = vpack.c.b16 %v522, %v520
      %v633 = vpack.c.b16 %v523, %v521
      %v634 = vpack.c.b16 %v526, %v524
      %v635 = vpack.c.b16 %v527, %v525
      %v636 = vpack.c.b16 %v530, %v528
      %v637 = vpack.c.b16 %v531, %v529
      %v638 = vpack.c.b16 %v534, %v532
      %v639 = vpack.c.b16 %v535, %v533
      %v640 = vpack.c.b16 %v538, %v536
      %v641 = vpack.c.b16 %v539, %v537
      %v642 = vpack.c.b16 %v542, %v540
      %v643 = vpack.c.b16 %v543, %v541
      %v644 = vpack.c.b16 %v546, %v544
      %v645 = vpack.c.b16 %v547, %v545
      %v646 = vpack.c.b16 %v550, %v548
      %v647 = vpack.c.b16 %v551, %v549
      %v648 = vpack.c.b16 %v554, %v552
      %v649 = vpack.c.b16 %v555, %v553
      %v650 = vpack.c.b16 %v558, %v556
      %v651 = vpack.c.b16 %v559, %v557
      %v652 = vpack.c.b16 %v562, %v560
      %v653 = vpack.c.b16 %v563, %v561
      %v654 = vpack.c.b16 %v566, %v564
      %v655 = vpack.c.b16 %v567, %v565
      %v656 = vpack.c.b16 %v570, %v568
      %v657 = vpack.c.b16 %v571, %v569
      %v658 = vpack.c.b16 %v574, %v572
      %v659 = vpack.c.b16 %v575, %v573
      %v660 = vpack.c.b16 %v578, %v576
      %v661 = vpack.c.b16 %v579, %v577
      %v662 = vpack.c.b16 %v582, %v580
      %v663 = vpack.c.b16 %v583, %v581
      %v664 = vpack.c.b16 %v586, %v584
      %v665 = vpack.c.b16 %v587, %v585
      %v666 = vpack.c.b16 %v590, %v588
      %v667 = vpack.c.b16 %v591, %v589
      %v668 = vpack.c.b16 %v594, %v592
      %v669 = vpack.c.b16 %v595, %v593
      %v670 = vpack.c.b16 %v598, %v596
      %v671 = vpack.c.b16 %v599, %v597
      %v672 = vpack.c.b16 %v602, %v600
      %v673 = vpack.c.b16 %v603, %v601
      %v674 = vpack.c.b16 %v606, %v604
      %v675 = vpack.c.b16 %v607, %v605
      %v676 = vpack.c.b16 %v610, %v608
      %v677 = vpack.c.b16 %v611, %v609
      %v678 = vpack.c.b16 %v614, %v612
      %v679 = vpack.c.b16 %v615, %v613
      %744 = vmatprep.subr.bf16.mxu0 %v617
      %745 = vmatpush1.bf16.msra.mxu0 %v616
      %746 = vmatprep.subr.bf16.mxu0 %v619
      %747 = vmatpush1.bf16.msra.mxu0 %v618
      %748 = vmatprep.subr.bf16.mxu0 %v621
      %749 = vmatpush1.bf16.msra.mxu0 %v620
      %750 = vmatprep.subr.bf16.mxu0 %v623
      %751 = vmatpush1.bf16.msra.mxu0 %v622
      %752 = vmatprep.subr.bf16.mxu0 %v625
      %753 = vmatpush1.bf16.msra.mxu0 %v624
      %754 = vmatprep.subr.bf16.mxu0 %v627
      %755 = vmatpush1.bf16.msra.mxu0 %v626
      %756 = vmatprep.subr.bf16.mxu0 %v629
      %757 = vmatpush1.bf16.msra.mxu0 %v628
      %758 = vmatprep.subr.bf16.mxu0 %v631
      %759 = vmatpush1.bf16.msra.mxu0 %v630
      %760 = vmatprep.subr.bf16.mxu0 %v633
      %761 = vmatpush1.bf16.msra.mxu0 %v632
      %762 = vmatprep.subr.bf16.mxu0 %v635
      %763 = vmatpush1.bf16.msra.mxu0 %v634
      %764 = vmatprep.subr.bf16.mxu0 %v637
      %765 = vmatpush1.bf16.msra.mxu0 %v636
      %766 = vmatprep.subr.bf16.mxu0 %v639
      %767 = vmatpush1.bf16.msra.mxu0 %v638
      %768 = vmatprep.subr.bf16.mxu0 %v641
      %769 = vmatpush1.bf16.msra.mxu0 %v640
      %770 = vmatprep.subr.bf16.mxu0 %v643
      %771 = vmatpush1.bf16.msra.mxu0 %v642
      %772 = vmatprep.subr.bf16.mxu0 %v645
      %773 = vmatpush1.bf16.msra.mxu0 %v644
      %774 = vmatprep.subr.bf16.mxu0 %v647
      %775 = vmatpush1.bf16.msra.mxu0 %v646
      %776 = vmatprep.mubr.bf16.mxu0 %v293
      %777 = vmatmul.mubr.bf16.gmra.mrb[0].mxu0 %v269
      %v778 = vpop.f32.mrb[0].mxu0
      %v779 = vadd.f32 %v417, %v778
      %v780 = vpop.f32.mrb[0].mxu0
      %v781 = vadd.f32 %v421, %v780
      %v782 = vpop.f32.mrb[0].mxu0
      %v783 = vadd.f32 %v417, %v782
      %v784 = vpop.f32.mrb[0].mxu0
      %v785 = vadd.f32 %v421, %v784
      %786 = vmatprep.mubr.bf16.mxu0 %v301
      %787 = vmatmul.mubr.bf16.gmra.mrb[0].mxu0 %v270
      %v788 = vpop.f32.mrb[0].mxu0
      %v789 = vadd.f32 %v417, %v788
      %v790 = vpop.f32.mrb[0].mxu0
      %v791 = vadd.f32 %v421, %v790
      %v792 = vpop.f32.mrb[0].mxu0
      %v793 = vadd.f32 %v417, %v792
      %v794 = vpop.f32.mrb[0].mxu0
      %v795 = vadd.f32 %v421, %v794
      %796 = vmatprep.mubr.bf16.mxu0 %v309
      %797 = vmatmul.mubr.bf16.gmra.mrb[0].mxu0 %v271
      %v798 = vpop.f32.mrb[0].mxu0
      %v799 = vadd.f32 %v417, %v798
      %v800 = vpop.f32.mrb[0].mxu0
      %v801 = vadd.f32 %v421, %v800
      %v802 = vpop.f32.mrb[0].mxu0
      %v803 = vadd.f32 %v417, %v802
      %v804 = vpop.f32.mrb[0].mxu0
      %v805 = vadd.f32 %v421, %v804
      %806 = vmatprep.mubr.bf16.mxu0 %v317
      %807 = vmatmul.mubr.bf16.gmra.mrb[0].mxu0 %v272
      %v808 = vpop.f32.mrb[0].mxu0
      %v809 = vadd.f32 %v417, %v808
      %v810 = vpop.f32.mrb[0].mxu0
      %v811 = vadd.f32 %v421, %v810
      %v812 = vpop.f32.mrb[0].mxu0
      %v813 = vadd.f32 %v417, %v812
      %v814 = vpop.f32.mrb[0].mxu0
      %v815 = vadd.f32 %v421, %v814
      %816 = vmatprep.mubr.bf16.mxu0 %v325
      %817 = vmatmul.mubr.bf16.gmra.mrb[0].mxu0 %v273
      %v818 = vpop.f32.mrb[0].mxu0
      %v819 = vadd.f32 %v417, %v818
      %v820 = vpop.f32.mrb[0].mxu0
      %v821 = vadd.f32 %v421, %v820
      %v822 = vpop.f32.mrb[0].mxu0
      %v823 = vadd.f32 %v417, %v822
      %v824 = vpop.f32.mrb[0].mxu0
      %v825 = vadd.f32 %v421, %v824
      %826 = vmatprep.mubr.bf16.mxu0 %v326
      %827 = vmatmul.mubr.bf16.gmra.mrb[0].mxu0 %v274
      %v828 = vpop.f32.mrb[0].mxu0
      %v829 = vadd.f32 %v417, %v828
      %v830 = vpop.f32.mrb[0].mxu0
      %v831 = vadd.f32 %v421, %v830
      %v832 = vpop.f32.mrb[0].mxu0
      %v833 = vpop.f32.mrb[0].mxu0
      %834 = vdwg.mxu0
      %835 = vmatprep.subr.bf16.mxu0 %v649
      %836 = vmatpush1.bf16.msra.mxu0 %v648
      %837 = vmatprep.subr.bf16.mxu0 %v651
      %838 = vmatpush1.bf16.msra.mxu0 %v650
      %839 = vmatprep.subr.bf16.mxu0 %v653
      %840 = vmatpush1.bf16.msra.mxu0 %v652
      %841 = vmatprep.subr.bf16.mxu0 %v655
      %842 = vmatpush1.bf16.msra.mxu0 %v654
      %843 = vmatprep.subr.bf16.mxu0 %v657
      %844 = vmatpush1.bf16.msra.mxu0 %v656
      %845 = vmatprep.subr.bf16.mxu0 %v659
      %846 = vmatpush1.bf16.msra.mxu0 %v658
      %847 = vmatprep.subr.bf16.mxu0 %v661
      %848 = vmatpush1.bf16.msra.mxu0 %v660
      %849 = vmatprep.subr.bf16.mxu0 %v663
      %850 = vmatpush1.bf16.msra.mxu0 %v662
      %851 = vmatprep.subr.bf16.mxu0 %v665
      %852 = vmatpush1.bf16.msra.mxu0 %v664
      %853 = vmatprep.subr.bf16.mxu0 %v667
      %854 = vmatpush1.bf16.msra.mxu0 %v666
      %855 = vmatprep.subr.bf16.mxu0 %v669
      %856 = vmatpush1.bf16.msra.mxu0 %v668
      %857 = vmatprep.subr.bf16.mxu0 %v671
      %858 = vmatpush1.bf16.msra.mxu0 %v670
      %859 = vmatprep.subr.bf16.mxu0 %v673
      %860 = vmatpush1.bf16.msra.mxu0 %v672
      %861 = vmatprep.subr.bf16.mxu0 %v675
      %862 = vmatpush1.bf16.msra.mxu0 %v674
      %863 = vmatprep.subr.bf16.mxu0 %v677
      %864 = vmatpush1.bf16.msra.mxu0 %v676
      %865 = vmatprep.subr.bf16.mxu0 %v679
      %866 = vmatpush1.bf16.msra.mxu0 %v678
      %867 = vmatprep.mubr.bf16.mxu0 %v397
      %868 = vmatmul.mubr.bf16.gmra.mrb[0].mxu0 %v353
      %v869 = vpop.f32.mrb[0].mxu0
      %v870 = vadd.f32 %v779, %v869
      %v871 = vpop.f32.mrb[0].mxu0
      %v872 = vadd.f32 %v781, %v871
      %v873 = vpop.f32.mrb[0].mxu0
      %v874 = vadd.f32 %v783, %v873
      %v875 = vpop.f32.mrb[0].mxu0
      %v876 = vadd.f32 %v785, %v875
      %877 = vmatprep.mubr.bf16.mxu0 %v399
      %878 = vmatmul.mubr.bf16.gmra.mrb[0].mxu0 %v361
      %v879 = vpop.f32.mrb[0].mxu0
      %v880 = vadd.f32 %v789, %v879
      %v881 = vpop.f32.mrb[0].mxu0
      %v882 = vadd.f32 %v791, %v881
      %v883 = vpop.f32.mrb[0].mxu0
      %v884 = vadd.f32 %v793, %v883
      %v885 = vpop.f32.mrb[0].mxu0
      %v886 = vadd.f32 %v795, %v885
      %887 = vmatprep.mubr.bf16.mxu0 %v401
      %888 = vmatmul.mubr.bf16.gmra.mrb[0].mxu0 %v369
      %v889 = vpop.f32.mrb[0].mxu0
      %v890 = vadd.f32 %v799, %v889
      %v891 = vpop.f32.mrb[0].mxu0
      %v892 = vadd.f32 %v801, %v891
      %v893 = vpop.f32.mrb[0].mxu0
      %v894 = vadd.f32 %v803, %v893
      %v895 = vpop.f32.mrb[0].mxu0
      %v896 = vadd.f32 %v805, %v895
      %897 = vmatprep.mubr.bf16.mxu0 %v403
      %898 = vmatmul.mubr.bf16.gmra.mrb[0].mxu0 %v377
      %v899 = vpop.f32.mrb[0].mxu0
      %v900 = vadd.f32 %v809, %v899
      %v901 = vpop.f32.mrb[0].mxu0
      %v902 = vadd.f32 %v811, %v901
      %v903 = vpop.f32.mrb[0].mxu0
      %v904 = vadd.f32 %v813, %v903
      %v905 = vpop.f32.mrb[0].mxu0
      %v906 = vadd.f32 %v815, %v905
      %907 = vmatprep.mubr.bf16.mxu0 %v405
      %908 = vmatmul.mubr.bf16.gmra.mrb[0].mxu0 %v385
      %v909 = vpop.f32.mrb[0].mxu0
      %v910 = vadd.f32 %v819, %v909
      %v911 = vpop.f32.mrb[0].mxu0
      %v912 = vadd.f32 %v821, %v911
      %v913 = vpop.f32.mrb[0].mxu0
      %v914 = vadd.f32 %v823, %v913
      %v915 = vpop.f32.mrb[0].mxu0
      %v916 = vadd.f32 %v825, %v915
      %917 = vmatprep.mubr.bf16.mxu0 %v404
      %918 = vmatmul.mubr.bf16.gmra.mrb[0].mxu0 %v386
      %v919 = vpop.f32.mrb[0].mxu0
      %v920 = vadd.f32 %v829, %v919
      %v921 = vpop.f32.mrb[0].mxu0
      %v922 = vadd.f32 %v831, %v921
      %v923 = vpop.f32.mrb[0].mxu0
      %v924 = vpop.f32.mrb[0].mxu0
      %925 = vdwg.mxu0
      %v926 = vmax.f32 %v870, 0.0
      %v927 = vmax.f32 %v872, 0.0
      %v928 = vmax.f32 %v874, 0.0
      %v929 = vmax.f32 %v876, 0.0
      %v930 = vmax.f32 %v880, 0.0
      %v931 = vmax.f32 %v882, 0.0
      %v932 = vmax.f32 %v884, 0.0
      %v933 = vmax.f32 %v886, 0.0
      %v934 = vmax.f32 %v890, 0.0
      %v935 = vmax.f32 %v892, 0.0
      %v936 = vmax.f32 %v894, 0.0
      %v937 = vmax.f32 %v896, 0.0
      %v938 = vmax.f32 %v900, 0.0
      %v939 = vmax.f32 %v902, 0.0
      %v940 = vmax.f32 %v904, 0.0
      %v941 = vmax.f32 %v906, 0.0
      %v942 = vmax.f32 %v910, 0.0
      %v943 = vmax.f32 %v912, 0.0
      %v944 = vmax.f32 %v914, 0.0
      %v945 = vmax.f32 %v916, 0.0
      %v946 = vmax.f32 %v920, 0.0
      %v947 = vmax.f32 %v922, 0.0
      %v948 = vpack.c.bf16 %v928, %v926
      %v949 = vpack.c.bf16 %v929, %v927
      %v950 = vpack.c.bf16 %v932, %v930
      %v951 = vpack.c.bf16 %v933, %v931
      %v952 = vpack.c.bf16 %v936, %v934
      %v953 = vpack.c.bf16 %v937, %v935
      %v954 = vpack.c.bf16 %v940, %v938
      %v955 = vpack.c.bf16 %v941, %v939
      %v956 = vpack.c.bf16 %v944, %v942
      %v957 = vpack.c.bf16 %v945, %v943
      %v958 = vpack.c.bf16 %v946, %v946
      %v959 = vpack.c.bf16 %v947, %v947
      %v972 = vunpack.c.l.b16 %v948
      %v973 = vunpack.c.l.b16 %v949
      %v974 = vunpack.c.h.b16 %v948
      %v975 = vunpack.c.h.b16 %v949
      %v976 = vunpack.c.l.b16 %v950
      %v977 = vunpack.c.l.b16 %v951
      %v978 = vunpack.c.h.b16 %v950
      %v979 = vunpack.c.h.b16 %v951
      %v980 = vunpack.c.l.b16 %v952
      %v981 = vunpack.c.l.b16 %v953
      %v982 = vunpack.c.h.b16 %v952
      %v983 = vunpack.c.h.b16 %v953
      %v984 = vunpack.c.l.b16 %v954
      %v985 = vunpack.c.l.b16 %v955
      %v986 = vunpack.c.h.b16 %v954
      %v987 = vunpack.c.h.b16 %v955
      %v988 = vunpack.c.l.b16 %v956
      %v989 = vunpack.c.l.b16 %v957
      %v990 = vunpack.c.h.b16 %v956
      %v991 = vunpack.c.h.b16 %v957
      %v992 = vunpack.c.l.b16 %v958
      %v993 = vunpack.c.l.b16 %v959
      %v994 = vpack.c.b16 %v973, %v972
      %v995 = vpack.c.b16 %v975, %v974
      %v996 = vpack.c.b16 %v977, %v976
      %v997 = vpack.c.b16 %v979, %v978
      %v998 = vpack.c.b16 %v981, %v980
      %v999 = vpack.c.b16 %v983, %v982
      %v1000 = vpack.c.b16 %v985, %v984
      %v1001 = vpack.c.b16 %v987, %v986
      %v1002 = vpack.c.b16 %v989, %v988
      %v1003 = vpack.c.b16 %v991, %v990
      %v1004 = vpack.c.b16 %v993, %v992
      %1016 = vst [vmem:[%s170] sm:$0xff] %v994
      %1017 = vst [vmem:[%s170 + $0x8] sm:$0xff] %v995
      %1018 = vst [vmem:[%s170 + $0x10] sm:$0xff] %v996
      %1019 = vst [vmem:[%s170 + $0x18] sm:$0xff] %v997
      %1020 = vst [vmem:[%s170 + $0x20] sm:$0xff] %v998
      %1021 = vst [vmem:[%s170 + $0x28] sm:$0xff] %v999
      %1022 = vst [vmem:[%s170 + $0x30] sm:$0xff] %v1000
      %1023 = vst [vmem:[%s170 + $0x38] sm:$0xff] %v1001
      %1024 = vst [vmem:[%s170 + $0x40] sm:$0xff] %v1002
      %1025 = vst [vmem:[%s170 + $0x48] sm:$0xff] %v1003
      %vm1026 = vcmask 1040384
      %vm1027 = vsmask.f32 256
      %vm1028 = vmand %vm1026, %vm1027
      %vm1029 = vcmask 1044484
      %vm1030 = vsmask.f32 4352
      %vm1031 = vmand %vm1029, %vm1030
      %vm1032 = vmor %vm1031, %vm1028
      %v1033 = vld [vmem:[%s170 + $0x50] sm:$0x11]
      %v1034 = vsel %vm1032, %v1004, %v1033
      %1035 = vst [vmem:[%s170 + $0x50] sm:$0x11] %v1034
      %p1036 = scmp.lt.s32.totalorder %s14, 1
      %s1037 = scalar_select %p1036, %s14, 1
      %s1038 = smul.addr %s1037, 22
      %s1039 = smul.addr %s1038, 4
      %s1040 = scalar_lea.vmem %s3, %s1039
      // Predicated region
      $region33: #{motion_attention_64_forward.6} parent=31 // pred_check
        %p1041 = pneg %p100
      $region34: #{motion_attention_64_forward.6} parent=31 // pred_check_branch
        %1043 = sbr.rel (%p1041) target = $region36
      $region35: #{motion_attention_64_forward.6} parent=31 // pred_region
        _
      $region36: #{motion_attention_64_forward.6} parent=31 // pred_fallthru
        _
    $region32: #{motion_attention_64_forward.6} parent=5 // pred_fallthru
      _
    %p1044 = scmp.le.s32.totalorder 2, %s9
    // Predicated region
    $region37: #{motion_attention_64_forward.6} parent=5 // pred_check
      %p1045 = pneg %p1044
    $region38: #{motion_attention_64_forward.6} parent=5 // pred_check_branch
      %1047 = sbr.rel (%p1045) target = $region40
    $region39: #{motion_attention_64_forward.6} parent=5 // pred_region
      %s1048 = ssub.s32 %s9, 2
      // Predicated region
      $region41: #{motion_attention_64_forward.6} parent=39 // pred_check
        %p1049 = pneg %p106
      $region42: #{motion_attention_64_forward.6} parent=39 // pred_check_branch
        %1051 = sbr.rel (%p1049) target = $region44
      $region43: #{motion_attention_64_forward.6} parent=39 // pred_region
        %p1052 = scmp.lt.s32.totalorder %s15, 1
        %s1053 = scalar_select %p1052, %s15, 1
        %s1054 = smul.addr %s1053, 22
        %s1055 = smul.addr %s1054, 4
        %s1056 = scalar_lea.vmem %s3, %s1055
      $region44: #{motion_attention_64_forward.6} parent=39 // pred_fallthru
        _
    $region40: #{motion_attention_64_forward.6} parent=5 // pred_fallthru
      _
  $region6: #{motion_attention_64_forward.6} parent=0 // loop_footer
    %s13 = sadd.s32 1, %s9
  $region7: #{motion_attention_64_forward.6} parent=0 // loop_footer_branch
    %8 = sbr.rel target = $region3
  $region8: #{motion_attention_64_forward.6} parent=0 // loop_exit
    _

// kernel: motion_attention_64_forward.5
$region0: #{motion_attention_64_forward.5}
  #allocation0 [shape = 'u32[]', space=smem, size = 0x4, offset = 0x4, fixed_abs, tag = 'smem constant byte address 0x4 - core index']
  #allocation1 [shape = 'u32[144,128]{1,0:T(1,128)}', space=vmem, size = 0x12000, scoped, tag = 'internal scratch']
  %s0 = inlined_call_operand.vmem [shape: bf16[2,32,256], index: 0, kind: input, shape index: {}]
  %s1 = inlined_call_operand.hbm [shape: bf16[1024,512], index: 1, kind: input, shape index: {}]
  %s2 = inlined_call_operand.hbm [shape: f32[1,512], index: 2, kind: input, shape index: {}]
  %s3 = inlined_call_operand.vmem [shape: bf16[2,25,512], index: 3, kind: output, shape index: {}]
  %s4 = sld [smem:[#allocation0]]
  $region53: #{motion_attention_64_forward.5} parent=0
    _
  %s6 = ssub.s32 1, %s4
  %s7 = scalar_select 0, %s6, %s4
  $region1: #{motion_attention_64_forward.5} parent=0
    #allocation2 [shape = 'u8[1048576]{0}', space=vmem, size = 0x100000, scoped, tag = 'input window, operand 1, single buffered']
    #allocation3 [shape = 's32[2]{0}', space=sflag, size = 0x8, scoped, tag = 'scoped memory for motion_attention_64_forward.5']
    #allocation4 [shape = 'u8[2048]{0}', space=vmem, size = 0x800, scoped, tag = 'input window, operand 2, single buffered']
    #allocation5 [shape = 's32[1]{0}', space=sflag, size = 0x4, scoped, tag = 'scoped memory for motion_attention_64_forward.5']
    %8 = vsyncpa [#allocation3], 0
    %9 = vsyncpa [#allocation5], 0
    loop: start=0, step=1, limit=4
    $region2: #{motion_attention_64_forward.5} parent=1 // loop_pre_header
      _
    $region3: #{motion_attention_64_forward.5} parent=1 // loop_header
      %s11 = sphi 0, %s15
      %p12 = scmp.ge.s32.totalorder %s11, 4
      %s21 = sphi 0, %s23
      %s24 = sphi 0, %s21
      %s25 = sphi 0, %s24
      %s41 = sphi 0, %s25
      %s45 = sphi 0, %s45
      %s47 = sphi 0, %s45
      %s48 = sphi 0, %s47
      %s62 = sphi 0, %s48
      %s66 = sphi 0, %s66
      %s68 = sphi 0, %s66
      %s69 = sphi 0, %s68
      %s83 = sphi 0, %s69
      %s89 = sphi 0, %s91
      %s92 = sphi 0, %s89
      %s93 = sphi 0, %s92
      %s109 = sphi 0, %s93
    $region4: #{motion_attention_64_forward.5} parent=1 // loop_header_branch
      %14 = sbr.rel (%p12) target = $region8
    $region5: #{motion_attention_64_forward.5} parent=1 // loop_body
      %s16 = ssub.s32 %s11, 1
      %s17 = ssub.s32 %s11, 2
      %s18 = sadd.s32 %s11, 1
      %s19 = ssub.s32 %s11, %s18
      %p20 = scmp.eq.s32.totalorder %s19, 0
      %s22 = sadd.s32 %s21, 1
      %s23 = scalar_select %p20, %s21, %s22
      %p26 = pneg %p20
      %p27 = scmp.eq.s32.totalorder %s11, 1
      %p28 = por %p26, %p27
      %p29 = scmp.ne.s32.totalorder %s21, %s24
      %p30 = scmp.eq.s32.totalorder %s11, 0
      %p31 = por %p29, %p30
      %p32 = scmp.ne.s32.totalorder %s21, %s24
      %p33 = scmp.eq.s32.totalorder %s16, 1
      %p34 = por %p32, %p33
      %p35 = scmp.ne.s32.totalorder %s24, %s25
      %p36 = scmp.eq.s32.totalorder %s16, 0
      %p37 = por %p35, %p36
      %p38 = scmp.ne.s32.totalorder %s24, %s25
      %p39 = scmp.eq.s32.totalorder %s17, 1
      %p40 = por %p38, %p39
      %p42 = scmp.ne.s32.totalorder %s25, %s41
      %p43 = scmp.eq.s32.totalorder %s17, 0
      %p44 = por %p42, %p43
      %s46 = sadd.s32 %s45, 1
      %p49 = scmp.eq.s32.totalorder %s11, 1
      %p50 = scmp.ne.s32.totalorder %s45, %s47
      %p51 = scmp.eq.s32.totalorder %s11, 0
      %p52 = por %p50, %p51
      %p53 = scmp.ne.s32.totalorder %s45, %s47
      %p54 = scmp.eq.s32.totalorder %s16, 1
      %p55 = por %p53, %p54
      %p56 = scmp.ne.s32.totalorder %s47, %s48
      %p57 = scmp.eq.s32.totalorder %s16, 0
      %p58 = por %p56, %p57
      %p59 = scmp.ne.s32.totalorder %s47, %s48
      %p60 = scmp.eq.s32.totalorder %s17, 1
      %p61 = por %p59, %p60
      %p63 = scmp.ne.s32.totalorder %s48, %s62
      %p64 = scmp.eq.s32.totalorder %s17, 0
      %p65 = por %p63, %p64
      %s67 = sadd.s32 %s66, 1
      %p70 = scmp.eq.s32.totalorder %s11, 1
      %p71 = scmp.ne.s32.totalorder %s66, %s68
      %p72 = scmp.eq.s32.totalorder %s11, 0
      %p73 = por %p71, %p72
      %p74 = scmp.ne.s32.totalorder %s66, %s68
      %p75 = scmp.eq.s32.totalorder %s16, 1
      %p76 = por %p74, %p75
      %p77 = scmp.ne.s32.totalorder %s68, %s69
      %p78 = scmp.eq.s32.totalorder %s16, 0
      %p79 = por %p77, %p78
      %p80 = scmp.ne.s32.totalorder %s68, %s69
      %p81 = scmp.eq.s32.totalorder %s17, 1
      %p82 = por %p80, %p81
      %p84 = scmp.ne.s32.totalorder %s69, %s83
      %p85 = scmp.eq.s32.totalorder %s17, 0
      %p86 = por %p84, %p85
      %s87 = ssub.s32 %s11, %s18
      %p88 = scmp.eq.s32.totalorder %s87, 0
      %s90 = sadd.s32 %s89, 1
      %s91 = scalar_select %p88, %s89, %s90
      %p94 = pneg %p88
      %p95 = scmp.eq.s32.totalorder %s11, 1
      %p96 = por %p94, %p95
      %p97 = scmp.ne.s32.totalorder %s89, %s92
      %p98 = scmp.eq.s32.totalorder %s11, 0
      %p99 = por %p97, %p98
      %p100 = scmp.ne.s32.totalorder %s89, %s92
      %p101 = scmp.eq.s32.totalorder %s16, 1
      %p102 = por %p100, %p101
      %p103 = scmp.ne.s32.totalorder %s92, %s93
      %p104 = scmp.eq.s32.totalorder %s16, 0
      %p105 = por %p103, %p104
      %p106 = scmp.ne.s32.totalorder %s92, %s93
      %p107 = scmp.eq.s32.totalorder %s17, 1
      %p108 = por %p106, %p107
      %p110 = scmp.ne.s32.totalorder %s93, %s109
      %p111 = scmp.eq.s32.totalorder %s17, 0
      %p112 = por %p110, %p111
      %p113 = scmp.le.s32.totalorder 1, %s11
      %p114 = scmp.lt.s32.totalorder %s11, 3
      %p115 = pnand %p113, %p114
      %p116 = pneg %p115
      // Predicated region
      $region9: #{motion_attention_64_forward.5} parent=5 // pred_check
        _
      $region10: #{motion_attention_64_forward.5} parent=5 // pred_check_branch
        %118 = sbr.rel (%p115) target = $region12
      $region11: #{motion_attention_64_forward.5} parent=5 // pred_region
        %s119 = ssub.s32 %s11, 1
        // Predicated region
        $region13: #{motion_attention_64_forward.5} parent=11 // pred_check
          %p120 = pneg %p58
        $region14: #{motion_attention_64_forward.5} parent=11 // pred_check_branch
          %122 = sbr.rel (%p120) target = $region16
        $region15: #{motion_attention_64_forward.5} parent=11 // pred_region
          %s124 = ssub.s32 32768, 32768
          %125 = vsyncadd [#allocation3], %s124
          %s126 = sshll.u32 [#allocation2], 4
          %s127 = int_to_ptr.vmem [resolvable:$true] %s126
          %132 = dma.hbm_to_vmem [thread:$0]  %s1, 32768, %s127, [#allocation3], 256, 256, 16
        $region16: #{motion_attention_64_forward.5} parent=11 // pred_fallthru
          _
        // Predicated region
        $region17: #{motion_attention_64_forward.5} parent=11 // pred_check
          %p133 = pneg %p79
        $region18: #{motion_attention_64_forward.5} parent=11 // pred_check_branch
          %135 = sbr.rel (%p133) target = $region20
        $region19: #{motion_attention_64_forward.5} parent=11 // pred_region
          %s137 = ssub.s32 64, 64
          %138 = vsyncadd [#allocation5], %s137
          %s140 = sshll.u32 [#allocation4], 4
          %s141 = int_to_ptr.vmem [resolvable:$true] %s140
          %143 = dma.hbm_to_vmem [thread:$0]  %s2, 64, %s141, [#allocation5]
        $region20: #{motion_attention_64_forward.5} parent=11 // pred_fallthru
          _
      $region12: #{motion_attention_64_forward.5} parent=5 // pred_fallthru
        _
      %p144 = scmp.lt.s32.totalorder %s11, 2
      // Predicated region
      $region21: #{motion_attention_64_forward.5} parent=5 // pred_check
        %p145 = pneg %p144
      $region22: #{motion_attention_64_forward.5} parent=5 // pred_check_branch
        %147 = sbr.rel (%p145) target = $region24
      $region23: #{motion_attention_64_forward.5} parent=5 // pred_region
        // Predicated region
        $region25: #{motion_attention_64_forward.5} parent=23 // pred_check
          %p148 = pneg %p31
        $region26: #{motion_attention_64_forward.5} parent=23 // pred_check_branch
          %150 = sbr.rel (%p148) target = $region28
        $region27: #{motion_attention_64_forward.5} parent=23 // pred_region
          %p151 = scmp.lt.s32.totalorder %s11, 1
          %s152 = scalar_select %p151, %s11, 1
          %s153 = smul.addr %s152, 8
          %s154 = smul.addr %s153, 4
          %s155 = scalar_lea.vmem %s0, %s154
        $region28: #{motion_attention_64_forward.5} parent=23 // pred_fallthru
          _
      $region24: #{motion_attention_64_forward.5} parent=5 // pred_fallthru
        _
      %p156 = scmp.le.s32.totalorder 1, %s11
      %p157 = scmp.lt.s32.totalorder %s11, 3
      %p158 = pnand %p156, %p157
      %p159 = pneg %p158
      // Predicated region
      $region29: #{motion_attention_64_forward.5} parent=5 // pred_check
        _
      $region30: #{motion_attention_64_forward.5} parent=5 // pred_check_branch
        %161 = sbr.rel (%p158) target = $region32
      $region31: #{motion_attention_64_forward.5} parent=5 // pred_region
        %s162 = ssub.s32 %s11, 1
        // Predicated region
        $region33: #{motion_attention_64_forward.5} parent=31 // pred_check
          %p163 = pneg %p58
        $region34: #{motion_attention_64_forward.5} parent=31 // pred_check_branch
          %165 = sbr.rel (%p163) target = $region36
        $region35: #{motion_attention_64_forward.5} parent=31 // pred_region
          %166 = dma.done [#allocation3], 32768
        $region36: #{motion_attention_64_forward.5} parent=31 // pred_fallthru
          _
        // Predicated region
        $region37: #{motion_attention_64_forward.5} parent=31 // pred_check
          %p167 = pneg %p79
        $region38: #{motion_attention_64_forward.5} parent=31 // pred_check_branch
          %169 = sbr.rel (%p167) target = $region40
        $region39: #{motion_attention_64_forward.5} parent=31 // pred_region
          %170 = dma.done [#allocation5], 64
        $region40: #{motion_attention_64_forward.5} parent=31 // pred_fallthru
          _
        %p171 = scmp.lt.s32.totalorder %s16, 1
        %s172 = scalar_select %p171, %s16, 1
        %s173 = smul.addr %s172, 8
        %s174 = smul.addr %s173, 4
        %s175 = scalar_lea.vmem %s0, %s174
        %p176 = pneg %p37
        %p177 = pneg %p34
        %p178 = pneg %p58
        %p179 = pneg %p55
        %p180 = pneg %p79
        %p181 = pneg %p76
        %p182 = pneg %p105
        %p183 = pneg %p102
        %p184 = scmp.lt.s32.totalorder %s16, 1
        %s185 = scalar_select %p184, %s16, 1
        %s186 = smul.addr %s185, 16
        %s187 = smul.addr %s186, 4
        %s188 = scalar_lea.vmem %s3, %s187
        %p189 = scmp.lt.s32.totalorder %s16, 1
        %s190 = scalar_select %p189, %s16, 1
        %s191 = smul.addr %s190, 8
        %s192 = smul.addr %s191, 4
        %s193 = scalar_lea.vmem %s0, %s192
        %p194 = scmp.lt.s32.totalorder %s16, 1
        %s195 = scalar_select %p194, %s16, 1
        %s196 = smul.addr %s195, 16
        %s197 = smul.addr %s196, 4
        %s198 = scalar_lea.vmem %s3, %s197
        %v199 = vld [vmem:[%s193] sm:$0xff]
        %v200 = vld [vmem:[%s193 + $0x8] sm:$0xff]
        %v201 = vld [vmem:[%s193 + $0x10] sm:$0xff]
        %v202 = vld [vmem:[%s193 + $0x18] sm:$0xff]
        %v203 = vld [vmem:[#allocation2] sm:$0xff]
        %v204 = vld [vmem:[#allocation2 + $0x8] sm:$0xff]
        %v205 = vld [vmem:[#allocation2 + $0x10] sm:$0xff]
        %v206 = vld [vmem:[#allocation2 + $0x18] sm:$0xff]
        %v207 = vld [vmem:[#allocation2 + $0x20] sm:$0xff]
        %v208 = vld [vmem:[#allocation2 + $0x28] sm:$0xff]
        %v209 = vld [vmem:[#allocation2 + $0x30] sm:$0xff]
        %v210 = vld [vmem:[#allocation2 + $0x38] sm:$0xff]
        %v211 = vld [vmem:[#allocation2 + $0x40] sm:$0xff]
        %v212 = vld [vmem:[#allocation2 + $0x48] sm:$0xff]
        %v213 = vld [vmem:[#allocation2 + $0x50] sm:$0xff]
        %v214 = vld [vmem:[#allocation2 + $0x58] sm:$0xff]
        %v215 = vld [vmem:[#allocation2 + $0x60] sm:$0xff]
        %v216 = vld [vmem:[#allocation2 + $0x68] sm:$0xff]
        %v217 = vld [vmem:[#allocation2 + $0x70] sm:$0xff]
        %v218 = vld [vmem:[#allocation2 + $0x78] sm:$0xff]
        %v219 = vld [vmem:[#allocation2 + $0x80] sm:$0xff]
        %v220 = vld [vmem:[#allocation2 + $0x88] sm:$0xff]
        %v221 = vld [vmem:[#allocation2 + $0x90] sm:$0xff]
        %v222 = vld [vmem:[#allocation2 + $0x98] sm:$0xff]
        %v223 = vld [vmem:[#allocation2 + $0xa0] sm:$0xff]
        %v224 = vld [vmem:[#allocation2 + $0xa8] sm:$0xff]
        %v225 = vld [vmem:[#allocation2 + $0xb0] sm:$0xff]
        %v226 = vld [vmem:[#allocation2 + $0xb8] sm:$0xff]
        %v227 = vld [vmem:[#allocation2 + $0xc0] sm:$0xff]
        %v228 = vld [vmem:[#allocation2 + $0xc8] sm:$0xff]
        %v229 = vld [vmem:[#allocation2 + $0xd0] sm:$0xff]
        %v230 = vld [vmem:[#allocation2 + $0xd8] sm:$0xff]
        %v231 = vld [vmem:[#allocation2 + $0xe0] sm:$0xff]
        %v232 = vld [vmem:[#allocation2 + $0xe8] sm:$0xff]
        %v233 = vld [vmem:[#allocation2 + $0xf0] sm:$0xff]
        %v234 = vld [vmem:[#allocation2 + $0xf8] sm:$0xff]
        %v235 = vld [vmem:[#allocation2 + $0x100] sm:$0xff]
        %v236 = vld [vmem:[#allocation2 + $0x108] sm:$0xff]
        %v237 = vld [vmem:[#allocation2 + $0x110] sm:$0xff]
        %v238 = vld [vmem:[#allocation2 + $0x118] sm:$0xff]
        %v239 = vld [vmem:[#allocation2 + $0x120] sm:$0xff]
        %v240 = vld [vmem:[#allocation2 + $0x128] sm:$0xff]
        %v241 = vld [vmem:[#allocation2 + $0x130] sm:$0xff]
        %v242 = vld [vmem:[#allocation2 + $0x138] sm:$0xff]
        %v243 = vld [vmem:[#allocation2 + $0x140] sm:$0xff]
        %v244 = vld [vmem:[#allocation2 + $0x148] sm:$0xff]
        %v245 = vld [vmem:[#allocation2 + $0x150] sm:$0xff]
        %v246 = vld [vmem:[#allocation2 + $0x158] sm:$0xff]
        %v247 = vld [vmem:[#allocation2 + $0x160] sm:$0xff]
        %v248 = vld [vmem:[#allocation2 + $0x168] sm:$0xff]
        %v249 = vld [vmem:[#allocation2 + $0x170] sm:$0xff]
        %v250 = vld [vmem:[#allocation2 + $0x178] sm:$0xff]
        %v251 = vld [vmem:[#allocation2 + $0x180] sm:$0xff]
        %v252 = vld [vmem:[#allocation2 + $0x188] sm:$0xff]
        %v253 = vld [vmem:[#allocation2 + $0x190] sm:$0xff]
        %v254 = vld [vmem:[#allocation2 + $0x198] sm:$0xff]
        %v255 = vld [vmem:[#allocation2 + $0x1a0] sm:$0xff]
        %v256 = vld [vmem:[#allocation2 + $0x1a8] sm:$0xff]
        %v257 = vld [vmem:[#allocation2 + $0x1b0] sm:$0xff]
        %v258 = vld [vmem:[#allocation2 + $0x1b8] sm:$0xff]
        %v259 = vld [vmem:[#allocation2 + $0x1c0] sm:$0xff]
        %v260 = vld [vmem:[#allocation2 + $0x1c8] sm:$0xff]
        %v261 = vld [vmem:[#allocation2 + $0x1d0] sm:$0xff]
        %v262 = vld [vmem:[#allocation2 + $0x1d8] sm:$0xff]
        %v263 = vld [vmem:[#allocation2 + $0x1e0] sm:$0xff]
        %v264 = vld [vmem:[#allocation2 + $0x1e8] sm:$0xff]
        %v265 = vld [vmem:[#allocation2 + $0x1f0] sm:$0xff]
        %v266 = vld [vmem:[#allocation2 + $0x1f8] sm:$0xff]
        %v267 = vld [vmem:[#allocation2 + $0x200] sm:$0xff]
        %v268 = vld [vmem:[#allocation2 + $0x208] sm:$0xff]
        %v269 = vld [vmem:[#allocation2 + $0x210] sm:$0xff]
        %v270 = vld [vmem:[#allocation2 + $0x218] sm:$0xff]
        %v271 = vld [vmem:[#allocation2 + $0x220] sm:$0xff]
        %v272 = vld [vmem:[#allocation2 + $0x228] sm:$0xff]
        %v273 = vld [vmem:[#allocation2 + $0x230] sm:$0xff]
        %v274 = vld [vmem:[#allocation2 + $0x238] sm:$0xff]
        %v275 = vld [vmem:[#allocation2 + $0x240] sm:$0xff]
        %v276 = vld [vmem:[#allocation2 + $0x248] sm:$0xff]
        %v277 = vld [vmem:[#allocation2 + $0x250] sm:$0xff]
        %v278 = vld [vmem:[#allocation2 + $0x258] sm:$0xff]
        %v279 = vld [vmem:[#allocation2 + $0x260] sm:$0xff]
        %v280 = vld [vmem:[#allocation2 + $0x268] sm:$0xff]
        %v281 = vld [vmem:[#allocation2 + $0x270] sm:$0xff]
        %v282 = vld [vmem:[#allocation2 + $0x278] sm:$0xff]
        %v283 = vld [vmem:[#allocation2 + $0x280] sm:$0xff]
        %v284 = vld [vmem:[#allocation2 + $0x288] sm:$0xff]
        %v285 = vld [vmem:[#allocation2 + $0x290] sm:$0xff]
        %v286 = vld [vmem:[#allocation2 + $0x298] sm:$0xff]
        %v287 = vld [vmem:[#allocation2 + $0x2a0] sm:$0xff]
        %v288 = vld [vmem:[#allocation2 + $0x2a8] sm:$0xff]
        %v289 = vld [vmem:[#allocation2 + $0x2b0] sm:$0xff]
        %v290 = vld [vmem:[#allocation2 + $0x2b8] sm:$0xff]
        %v291 = vld [vmem:[#allocation2 + $0x2c0] sm:$0xff]
        %v292 = vld [vmem:[#allocation2 + $0x2c8] sm:$0xff]
        %v293 = vld [vmem:[#allocation2 + $0x2d0] sm:$0xff]
        %v294 = vld [vmem:[#allocation2 + $0x2d8] sm:$0xff]
        %v295 = vld [vmem:[#allocation2 + $0x2e0] sm:$0xff]
        %v296 = vld [vmem:[#allocation2 + $0x2e8] sm:$0xff]
        %v297 = vld [vmem:[#allocation2 + $0x2f0] sm:$0xff]
        %v298 = vld [vmem:[#allocation2 + $0x2f8] sm:$0xff]
        %v299 = vld [vmem:[#allocation2 + $0x300] sm:$0xff]
        %v300 = vld [vmem:[#allocation2 + $0x308] sm:$0xff]
        %v301 = vld [vmem:[#allocation2 + $0x310] sm:$0xff]
        %v302 = vld [vmem:[#allocation2 + $0x318] sm:$0xff]
        %v303 = vld [vmem:[#allocation2 + $0x320] sm:$0xff]
        %v304 = vld [vmem:[#allocation2 + $0x328] sm:$0xff]
        %v305 = vld [vmem:[#allocation2 + $0x330] sm:$0xff]
        %v306 = vld [vmem:[#allocation2 + $0x338] sm:$0xff]
        %v307 = vld [vmem:[#allocation2 + $0x340] sm:$0xff]
        %v308 = vld [vmem:[#allocation2 + $0x348] sm:$0xff]
        %v309 = vld [vmem:[#allocation2 + $0x350] sm:$0xff]
        %v310 = vld [vmem:[#allocation2 + $0x358] sm:$0xff]
        %v311 = vld [vmem:[#allocation2 + $0x360] sm:$0xff]
        %v312 = vld [vmem:[#allocation2 + $0x368] sm:$0xff]
        %v313 = vld [vmem:[#allocation2 + $0x370] sm:$0xff]
        %v314 = vld [vmem:[#allocation2 + $0x378] sm:$0xff]
        %v315 = vld [vmem:[#allocation2 + $0x380] sm:$0xff]
        %v316 = vld [vmem:[#allocation2 + $0x388] sm:$0xff]
        %v317 = vld [vmem:[#allocation2 + $0x390] sm:$0xff]
        %v318 = vld [vmem:[#allocation2 + $0x398] sm:$0xff]
        %v319 = vld [vmem:[#allocation2 + $0x3a0] sm:$0xff]
        %v320 = vld [vmem:[#allocation2 + $0x3a8] sm:$0xff]
        %v321 = vld [vmem:[#allocation2 + $0x3b0] sm:$0xff]
        %v322 = vld [vmem:[#allocation2 + $0x3b8] sm:$0xff]
        %v323 = vld [vmem:[#allocation2 + $0x3c0] sm:$0xff]
        %v324 = vld [vmem:[#allocation2 + $0x3c8] sm:$0xff]
        %v325 = vld [vmem:[#allocation2 + $0x3d0] sm:$0xff]
        %v326 = vld [vmem:[#allocation2 + $0x3d8] sm:$0xff]
        %v327 = vld [vmem:[#allocation2 + $0x3e0] sm:$0xff]
        %v328 = vld [vmem:[#allocation2 + $0x3e8] sm:$0xff]
        %v329 = vld [vmem:[#allocation2 + $0x3f0] sm:$0xff]
        %v330 = vld [vmem:[#allocation2 + $0x3f8] sm:$0xff]
        %v331 = vld [vmem:[#allocation2 + $0x400] sm:$0xff]
        %v332 = vld [vmem:[#allocation2 + $0x408] sm:$0xff]
        %v333 = vld [vmem:[#allocation2 + $0x410] sm:$0xff]
        %v334 = vld [vmem:[#allocation2 + $0x418] sm:$0xff]
        %v335 = vld [vmem:[#allocation2 + $0x420] sm:$0xff]
        %v336 = vld [vmem:[#allocation2 + $0x428] sm:$0xff]
        %v337 = vld [vmem:[#allocation2 + $0x430] sm:$0xff]
        %v338 = vld [vmem:[#allocation2 + $0x438] sm:$0xff]
        %v339 = vld [vmem:[#allocation2 + $0x440] sm:$0xff]
        %v340 = vld [vmem:[#allocation2 + $0x448] sm:$0xff]
        %v341 = vld [vmem:[#allocation2 + $0x450] sm:$0xff]
        %v342 = vld [vmem:[#allocation2 + $0x458] sm:$0xff]
        %v343 = vld [vmem:[#allocation2 + $0x460] sm:$0xff]
        %v344 = vld [vmem:[#allocation2 + $0x468] sm:$0xff]
        %v345 = vld [vmem:[#allocation2 + $0x470] sm:$0xff]
        %v346 = vld [vmem:[#allocation2 + $0x478] sm:$0xff]
        %v347 = vld [vmem:[#allocation2 + $0x480] sm:$0xff]
        %v348 = vld [vmem:[#allocation2 + $0x488] sm:$0xff]
        %v349 = vld [vmem:[#allocation2 + $0x490] sm:$0xff]
        %v350 = vld [vmem:[#allocation2 + $0x498] sm:$0xff]
        %v351 = vld [vmem:[#allocation2 + $0x4a0] sm:$0xff]
        %v352 = vld [vmem:[#allocation2 + $0x4a8] sm:$0xff]
        %v353 = vld [vmem:[#allocation2 + $0x4b0] sm:$0xff]
        %v354 = vld [vmem:[#allocation2 + $0x4b8] sm:$0xff]
        %v355 = vld [vmem:[#allocation2 + $0x4c0] sm:$0xff]
        %v356 = vld [vmem:[#allocation2 + $0x4c8] sm:$0xff]
        %v357 = vld [vmem:[#allocation2 + $0x4d0] sm:$0xff]
        %v358 = vld [vmem:[#allocation2 + $0x4d8] sm:$0xff]
        %v359 = vld [vmem:[#allocation2 + $0x4e0] sm:$0xff]
        %v360 = vld [vmem:[#allocation2 + $0x4e8] sm:$0xff]
        %v361 = vld [vmem:[#allocation2 + $0x4f0] sm:$0xff]
        %v362 = vld [vmem:[#allocation2 + $0x4f8] sm:$0xff]
        %v363 = vld [vmem:[#allocation2 + $0x500] sm:$0xff]
        %v364 = vld [vmem:[#allocation2 + $0x508] sm:$0xff]
        %v365 = vld [vmem:[#allocation2 + $0x510] sm:$0xff]
        %v366 = vld [vmem:[#allocation2 + $0x518] sm:$0xff]
        %v367 = vld [vmem:[#allocation2 + $0x520] sm:$0xff]
        %v368 = vld [vmem:[#allocation2 + $0x528] sm:$0xff]
        %v369 = vld [vmem:[#allocation2 + $0x530] sm:$0xff]
        %v370 = vld [vmem:[#allocation2 + $0x538] sm:$0xff]
        %v371 = vld [vmem:[#allocation2 + $0x540] sm:$0xff]
        %v372 = vld [vmem:[#allocation2 + $0x548] sm:$0xff]
        %v373 = vld [vmem:[#allocation2 + $0x550] sm:$0xff]
        %v374 = vld [vmem:[#allocation2 + $0x558] sm:$0xff]
        %v375 = vld [vmem:[#allocation2 + $0x560] sm:$0xff]
        %v376 = vld [vmem:[#allocation2 + $0x568] sm:$0xff]
        %v377 = vld [vmem:[#allocation2 + $0x570] sm:$0xff]
        %v378 = vld [vmem:[#allocation2 + $0x578] sm:$0xff]
        %v379 = vld [vmem:[#allocation2 + $0x580] sm:$0xff]
        %v380 = vld [vmem:[#allocation2 + $0x588] sm:$0xff]
        %v381 = vld [vmem:[#allocation2 + $0x590] sm:$0xff]
        %v382 = vld [vmem:[#allocation2 + $0x598] sm:$0xff]
        %v383 = vld [vmem:[#allocation2 + $0x5a0] sm:$0xff]
        %v384 = vld [vmem:[#allocation2 + $0x5a8] sm:$0xff]
        %v385 = vld [vmem:[#allocation2 + $0x5b0] sm:$0xff]
        %v386 = vld [vmem:[#allocation2 + $0x5b8] sm:$0xff]
        %v387 = vld [vmem:[#allocation2 + $0x5c0] sm:$0xff]
        %v388 = vld [vmem:[#allocation2 + $0x5c8] sm:$0xff]
        %v389 = vld [vmem:[#allocation2 + $0x5d0] sm:$0xff]
        %v390 = vld [vmem:[#allocation2 + $0x5d8] sm:$0xff]
        %v391 = vld [vmem:[#allocation2 + $0x5e0] sm:$0xff]
        %v392 = vld [vmem:[#allocation2 + $0x5e8] sm:$0xff]
        %v393 = vld [vmem:[#allocation2 + $0x5f0] sm:$0xff]
        %v394 = vld [vmem:[#allocation2 + $0x5f8] sm:$0xff]
        %v395 = vld [vmem:[#allocation2 + $0x600] sm:$0xff]
        %v396 = vld [vmem:[#allocation2 + $0x608] sm:$0xff]
        %v397 = vld [vmem:[#allocation2 + $0x610] sm:$0xff]
        %v398 = vld [vmem:[#allocation2 + $0x618] sm:$0xff]
        %v399 = vld [vmem:[#allocation2 + $0x620] sm:$0xff]
        %v400 = vld [vmem:[#allocation2 + $0x628] sm:$0xff]
        %v401 = vld [vmem:[#allocation2 + $0x630] sm:$0xff]
        %v402 = vld [vmem:[#allocation2 + $0x638] sm:$0xff]
        %v403 = vld [vmem:[#allocation2 + $0x640] sm:$0xff]
        %v404 = vld [vmem:[#allocation2 + $0x648] sm:$0xff]
        %v405 = vld [vmem:[#allocation2 + $0x650] sm:$0xff]
        %v406 = vld [vmem:[#allocation2 + $0x658] sm:$0xff]
        %v407 = vld [vmem:[#allocation2 + $0x660] sm:$0xff]
        %v408 = vld [vmem:[#allocation2 + $0x668] sm:$0xff]
        %v409 = vld [vmem:[#allocation2 + $0x670] sm:$0xff]
        %v410 = vld [vmem:[#allocation2 + $0x678] sm:$0xff]
        %v411 = vld [vmem:[#allocation2 + $0x680] sm:$0xff]
        %v412 = vld [vmem:[#allocation2 + $0x688] sm:$0xff]
        %v413 = vld [vmem:[#allocation2 + $0x690] sm:$0xff]
        %v414 = vld [vmem:[#allocation2 + $0x698] sm:$0xff]
        %v415 = vld [vmem:[#allocation2 + $0x6a0] sm:$0xff]
        %v416 = vld [vmem:[#allocation2 + $0x6a8] sm:$0xff]
        %v417 = vld [vmem:[#allocation2 + $0x6b0] sm:$0xff]
        %v418 = vld [vmem:[#allocation2 + $0x6b8] sm:$0xff]
        %v419 = vld [vmem:[#allocation2 + $0x6c0] sm:$0xff]
        %v420 = vld [vmem:[#allocation2 + $0x6c8] sm:$0xff]
        %v421 = vld [vmem:[#allocation2 + $0x6d0] sm:$0xff]
        %v422 = vld [vmem:[#allocation2 + $0x6d8] sm:$0xff]
        %v423 = vld [vmem:[#allocation2 + $0x6e0] sm:$0xff]
        %v424 = vld [vmem:[#allocation2 + $0x6e8] sm:$0xff]
        %v425 = vld [vmem:[#allocation2 + $0x6f0] sm:$0xff]
        %v426 = vld [vmem:[#allocation2 + $0x6f8] sm:$0xff]
        %v427 = vld [vmem:[#allocation2 + $0x700] sm:$0xff]
        %v428 = vld [vmem:[#allocation2 + $0x708] sm:$0xff]
        %v429 = vld [vmem:[#allocation2 + $0x710] sm:$0xff]
        %v430 = vld [vmem:[#allocation2 + $0x718] sm:$0xff]
        %v431 = vld [vmem:[#allocation2 + $0x720] sm:$0xff]
        %v432 = vld [vmem:[#allocation2 + $0x728] sm:$0xff]
        %v433 = vld [vmem:[#allocation2 + $0x730] sm:$0xff]
        %v434 = vld [vmem:[#allocation2 + $0x738] sm:$0xff]
        %v435 = vld [vmem:[#allocation2 + $0x740] sm:$0xff]
        %v436 = vld [vmem:[#allocation2 + $0x748] sm:$0xff]
        %v437 = vld [vmem:[#allocation2 + $0x750] sm:$0xff]
        %v438 = vld [vmem:[#allocation2 + $0x758] sm:$0xff]
        %v439 = vld [vmem:[#allocation2 + $0x760] sm:$0xff]
        %v440 = vld [vmem:[#allocation2 + $0x768] sm:$0xff]
        %v441 = vld [vmem:[#allocation2 + $0x770] sm:$0xff]
        %v442 = vld [vmem:[#allocation2 + $0x778] sm:$0xff]
        %v443 = vld [vmem:[#allocation2 + $0x780] sm:$0xff]
        %v444 = vld [vmem:[#allocation2 + $0x788] sm:$0xff]
        %v445 = vld [vmem:[#allocation2 + $0x790] sm:$0xff]
        %v446 = vld [vmem:[#allocation2 + $0x798] sm:$0xff]
        %v447 = vld [vmem:[#allocation2 + $0x7a0] sm:$0xff]
        %v448 = vld [vmem:[#allocation2 + $0x7a8] sm:$0xff]
        %v449 = vld [vmem:[#allocation2 + $0x7b0] sm:$0xff]
        %v450 = vld [vmem:[#allocation2 + $0x7b8] sm:$0xff]
        %v451 = vld [vmem:[#allocation2 + $0x7c0] sm:$0xff]
        %v452 = vld [vmem:[#allocation2 + $0x7c8] sm:$0xff]
        %v453 = vld [vmem:[#allocation2 + $0x7d0] sm:$0xff]
        %v454 = vld [vmem:[#allocation2 + $0x7d8] sm:$0xff]
        %v455 = vld [vmem:[#allocation2 + $0x7e0] sm:$0xff]
        %v456 = vld [vmem:[#allocation2 + $0x7e8] sm:$0xff]
        %v457 = vld [vmem:[#allocation2 + $0x7f0] sm:$0xff]
        %v458 = vld [vmem:[#allocation2 + $0x7f8] sm:$0xff]
        %v463 = vunpack.c.l.b16 %v199
        %v464 = vunpack.c.h.b16 %v199
        %v465 = vunpack.c.l.b16 %v200
        %v466 = vunpack.c.h.b16 %v200
        %v467 = vunpack.c.l.b16 %v201
        %v468 = vunpack.c.h.b16 %v201
        %v469 = vunpack.c.l.b16 %v202
        %v470 = vunpack.c.h.b16 %v202
        %v471 = vpack.c.b16 %v465, %v463
        %v472 = vpack.c.b16 %v466, %v464
        %v473 = vpack.c.b16 %v469, %v467
        %v474 = vpack.c.b16 %v470, %v468
        %vm479 = vsmask.f32 7424
        %v481 = vshrl.u32 %v471, 16
        %v483 = vshll.u32 %v471, 16
        %v485 = vrot.slane %v483, 1
        %v486 = vor.u32 %v481, %v485
        %v488 = vshll.u32 %v473, 16
        %v490 = vrot.slane %v488, 1
        %v491 = vsel %vm479, %v486, %v490
        %v493 = vshrl.u32 %v472, 16
        %v495 = vshll.u32 %v472, 16
        %v497 = vrot.slane %v495, 1
        %v498 = vor.u32 %v493, %v497
        %v500 = vshll.u32 %v474, 16
        %v502 = vrot.slane %v500, 1
        %v503 = vsel %vm479, %v498, %v502
        %v504 = vshrl.u32 %v473, 16
        %v506 = vor.u32 %v504, %v490
        %v507 = vshrl.u32 %v474, 16
        %v509 = vor.u32 %v507, %v502
        %vm514 = vsmask.f32 5376
        %v515 = vrot.slane %v481, 2
        %v516 = vrot.slane %v483, 3
        %v517 = vor.u32 %v515, %v516
        %v518 = vrot.slane %v504, 2
        %v519 = vrot.slane %v488, 3
        %v520 = vor.u32 %v518, %v519
        %v521 = vsel %vm514, %v517, %v520
        %v522 = vrot.slane %v493, 2
        %v523 = vrot.slane %v495, 3
        %v524 = vor.u32 %v522, %v523
        %v525 = vrot.slane %v507, 2
        %v526 = vrot.slane %v500, 3
        %v527 = vor.u32 %v525, %v526
        %v528 = vsel %vm514, %v524, %v527
        %vm533 = vcmask 1044480
        %v534 = vrot.slane %v471, 3
        %v535 = vrot.slane %v473, 3
        %v536 = vsel %vm533, %v534, %v535
        %v537 = vrot.slane %v472, 3
        %v538 = vrot.slane %v474, 3
        %v539 = vsel %vm533, %v537, %v538
        %v544 = vld [vmem:[#allocation4] sm:$0xf]
        %v546 = vlaneseq
        %v547 = vshrl.u32 %v546, 7
        %v548 = vsub.s32 0, %v547
        %v549 = vrot.slane %v544, %v548
        %v550 = vlaneseq
        %v551 = vshrl.u32 %v550, 7
        %v552 = vsub.s32 1, %v551
        %v553 = vrot.slane %v544, %v552
        %v554 = vlaneseq
        %v555 = vshrl.u32 %v554, 7
        %v556 = vsub.s32 2, %v555
        %v557 = vrot.slane %v544, %v556
        %v558 = vlaneseq
        %v559 = vshrl.u32 %v558, 7
        %v560 = vsub.s32 3, %v559
        %v561 = vrot.slane %v544, %v560
        %v822 = vunpack.c.l.b16 %v203
        %v823 = vunpack.c.h.b16 %v203
        %v824 = vunpack.c.l.b16 %v204
        %v825 = vunpack.c.h.b16 %v204
        %v826 = vunpack.c.l.b16 %v205
        %v827 = vunpack.c.h.b16 %v205
        %v828 = vunpack.c.l.b16 %v206
        %v829 = vunpack.c.h.b16 %v206
        %v830 = vunpack.c.l.b16 %v207
        %v831 = vunpack.c.h.b16 %v207
        %v832 = vunpack.c.l.b16 %v208
        %v833 = vunpack.c.h.b16 %v208
        %v834 = vunpack.c.l.b16 %v209
        %v835 = vunpack.c.h.b16 %v209
        %v836 = vunpack.c.l.b16 %v210
        %v837 = vunpack.c.h.b16 %v210
        %v838 = vunpack.c.l.b16 %v211
        %v839 = vunpack.c.h.b16 %v211
        %v840 = vunpack.c.l.b16 %v212
        %v841 = vunpack.c.h.b16 %v212
        %v842 = vunpack.c.l.b16 %v213
        %v843 = vunpack.c.h.b16 %v213
        %v844 = vunpack.c.l.b16 %v214
        %v845 = vunpack.c.h.b16 %v214
        %v846 = vunpack.c.l.b16 %v215
        %v847 = vunpack.c.h.b16 %v215
        %v848 = vunpack.c.l.b16 %v216
        %v849 = vunpack.c.h.b16 %v216
        %v850 = vunpack.c.l.b16 %v217
        %v851 = vunpack.c.h.b16 %v217
        %v852 = vunpack.c.l.b16 %v218
        %v853 = vunpack.c.h.b16 %v218
        %v854 = vunpack.c.l.b16 %v219
        %v855 = vunpack.c.h.b16 %v219
        %v856 = vunpack.c.l.b16 %v220
        %v857 = vunpack.c.h.b16 %v220
        %v858 = vunpack.c.l.b16 %v221
        %v859 = vunpack.c.h.b16 %v221
        %v860 = vunpack.c.l.b16 %v222
        %v861 = vunpack.c.h.b16 %v222
        %v862 = vunpack.c.l.b16 %v223
        %v863 = vunpack.c.h.b16 %v223
        %v864 = vunpack.c.l.b16 %v224
        %v865 = vunpack.c.h.b16 %v224
        %v866 = vunpack.c.l.b16 %v225
        %v867 = vunpack.c.h.b16 %v225
        %v868 = vunpack.c.l.b16 %v226
        %v869 = vunpack.c.h.b16 %v226
        %v870 = vunpack.c.l.b16 %v227
        %v871 = vunpack.c.h.b16 %v227
        %v872 = vunpack.c.l.b16 %v228
        %v873 = vunpack.c.h.b16 %v228
        %v874 = vunpack.c.l.b16 %v229
        %v875 = vunpack.c.h.b16 %v229
        %v876 = vunpack.c.l.b16 %v230
        %v877 = vunpack.c.h.b16 %v230
        %v878 = vunpack.c.l.b16 %v231
        %v879 = vunpack.c.h.b16 %v231
        %v880 = vunpack.c.l.b16 %v232
        %v881 = vunpack.c.h.b16 %v232
        %v882 = vunpack.c.l.b16 %v233
        %v883 = vunpack.c.h.b16 %v233
        %v884 = vunpack.c.l.b16 %v234
        %v885 = vunpack.c.h.b16 %v234
        %v886 = vunpack.c.l.b16 %v235
        %v887 = vunpack.c.h.b16 %v235
        %v888 = vunpack.c.l.b16 %v236
        %v889 = vunpack.c.h.b16 %v236
        %v890 = vunpack.c.l.b16 %v237
        %v891 = vunpack.c.h.b16 %v237
        %v892 = vunpack.c.l.b16 %v238
        %v893 = vunpack.c.h.b16 %v238
        %v894 = vunpack.c.l.b16 %v239
        %v895 = vunpack.c.h.b16 %v239
        %v896 = vunpack.c.l.b16 %v240
        %v897 = vunpack.c.h.b16 %v240
        %v898 = vunpack.c.l.b16 %v241
        %v899 = vunpack.c.h.b16 %v241
        %v900 = vunpack.c.l.b16 %v242
        %v901 = vunpack.c.h.b16 %v242
        %v902 = vunpack.c.l.b16 %v243
        %v903 = vunpack.c.h.b16 %v243
        %v904 = vunpack.c.l.b16 %v244
        %v905 = vunpack.c.h.b16 %v244
        %v906 = vunpack.c.l.b16 %v245
        %v907 = vunpack.c.h.b16 %v245
        %v908 = vunpack.c.l.b16 %v246
        %v909 = vunpack.c.h.b16 %v246
        %v910 = vunpack.c.l.b16 %v247
        %v911 = vunpack.c.h.b16 %v247
        %v912 = vunpack.c.l.b16 %v248
        %v913 = vunpack.c.h.b16 %v248
        %v914 = vunpack.c.l.b16 %v249
        %v915 = vunpack.c.h.b16 %v249
        %v916 = vunpack.c.l.b16 %v250
        %v917 = vunpack.c.h.b16 %v250
        %v918 = vunpack.c.l.b16 %v251
        %v919 = vunpack.c.h.b16 %v251
        %v920 = vunpack.c.l.b16 %v252
        %v921 = vunpack.c.h.b16 %v252
        %v922 = vunpack.c.l.b16 %v253
        %v923 = vunpack.c.h.b16 %v253
        %v924 = vunpack.c.l.b16 %v254
        %v925 = vunpack.c.h.b16 %v254
        %v926 = vunpack.c.l.b16 %v255
        %v927 = vunpack.c.h.b16 %v255
        %v928 = vunpack.c.l.b16 %v256
        %v929 = vunpack.c.h.b16 %v256
        %v930 = vunpack.c.l.b16 %v257
        %v931 = vunpack.c.h.b16 %v257
        %v932 = vunpack.c.l.b16 %v258
        %v933 = vunpack.c.h.b16 %v258
        %v934 = vunpack.c.l.b16 %v259
        %v935 = vunpack.c.h.b16 %v259
        %v936 = vunpack.c.l.b16 %v260
        %v937 = vunpack.c.h.b16 %v260
        %v938 = vunpack.c.l.b16 %v261
        %v939 = vunpack.c.h.b16 %v261
        %v940 = vunpack.c.l.b16 %v262
        %v941 = vunpack.c.h.b16 %v262
        %v942 = vunpack.c.l.b16 %v263
        %v943 = vunpack.c.h.b16 %v263
        %v944 = vunpack.c.l.b16 %v264
        %v945 = vunpack.c.h.b16 %v264
        %v946 = vunpack.c.l.b16 %v265
        %v947 = vunpack.c.h.b16 %v265
        %v948 = vunpack.c.l.b16 %v266
        %v949 = vunpack.c.h.b16 %v266
        %v950 = vunpack.c.l.b16 %v267
        %v951 = vunpack.c.h.b16 %v267
        %v952 = vunpack.c.l.b16 %v268
        %v953 = vunpack.c.h.b16 %v268
        %v954 = vunpack.c.l.b16 %v269
        %v955 = vunpack.c.h.b16 %v269
        %v956 = vunpack.c.l.b16 %v270
        %v957 = vunpack.c.h.b16 %v270
        %v958 = vunpack.c.l.b16 %v271
        %v959 = vunpack.c.h.b16 %v271
        %v960 = vunpack.c.l.b16 %v272
        %v961 = vunpack.c.h.b16 %v272
        %v962 = vunpack.c.l.b16 %v273
        %v963 = vunpack.c.h.b16 %v273
        %v964 = vunpack.c.l.b16 %v274
        %v965 = vunpack.c.h.b16 %v274
        %v966 = vunpack.c.l.b16 %v275
        %v967 = vunpack.c.h.b16 %v275
        %v968 = vunpack.c.l.b16 %v276
        %v969 = vunpack.c.h.b16 %v276
        %v970 = vunpack.c.l.b16 %v277
        %v971 = vunpack.c.h.b16 %v277
        %v972 = vunpack.c.l.b16 %v278
        %v973 = vunpack.c.h.b16 %v278
        %v974 = vunpack.c.l.b16 %v279
        %v975 = vunpack.c.h.b16 %v279
        %v976 = vunpack.c.l.b16 %v280
        %v977 = vunpack.c.h.b16 %v280
        %v978 = vunpack.c.l.b16 %v281
        %v979 = vunpack.c.h.b16 %v281
        %v980 = vunpack.c.l.b16 %v282
        %v981 = vunpack.c.h.b16 %v282
        %v982 = vunpack.c.l.b16 %v283
        %v983 = vunpack.c.h.b16 %v283
        %v984 = vunpack.c.l.b16 %v284
        %v985 = vunpack.c.h.b16 %v284
        %v986 = vunpack.c.l.b16 %v285
        %v987 = vunpack.c.h.b16 %v285
        %v988 = vunpack.c.l.b16 %v286
        %v989 = vunpack.c.h.b16 %v286
        %v990 = vunpack.c.l.b16 %v287
        %v991 = vunpack.c.h.b16 %v287
        %v992 = vunpack.c.l.b16 %v288
        %v993 = vunpack.c.h.b16 %v288
        %v994 = vunpack.c.l.b16 %v289
        %v995 = vunpack.c.h.b16 %v289
        %v996 = vunpack.c.l.b16 %v290
        %v997 = vunpack.c.h.b16 %v290
        %v998 = vunpack.c.l.b16 %v291
        %v999 = vunpack.c.h.b16 %v291
        %v1000 = vunpack.c.l.b16 %v292
        %v1001 = vunpack.c.h.b16 %v292
        %v1002 = vunpack.c.l.b16 %v293
        %v1003 = vunpack.c.h.b16 %v293
        %v1004 = vunpack.c.l.b16 %v294
        %v1005 = vunpack.c.h.b16 %v294
        %v1006 = vunpack.c.l.b16 %v295
        %v1007 = vunpack.c.h.b16 %v295
        %v1008 = vunpack.c.l.b16 %v296
        %v1009 = vunpack.c.h.b16 %v296
        %v1010 = vunpack.c.l.b16 %v297
        %v1011 = vunpack.c.h.b16 %v297
        %v1012 = vunpack.c.l.b16 %v298
        %v1013 = vunpack.c.h.b16 %v298
        %v1014 = vunpack.c.l.b16 %v299
        %v1015 = vunpack.c.h.b16 %v299
        %v1016 = vunpack.c.l.b16 %v300
        %v1017 = vunpack.c.h.b16 %v300
        %v1018 = vunpack.c.l.b16 %v301
        %v1019 = vunpack.c.h.b16 %v301
        %v1020 = vunpack.c.l.b16 %v302
        %v1021 = vunpack.c.h.b16 %v302
        %v1022 = vunpack.c.l.b16 %v303
        %v1023 = vunpack.c.h.b16 %v303
        %v1024 = vunpack.c.l.b16 %v304
        %v1025 = vunpack.c.h.b16 %v304
        %v1026 = vunpack.c.l.b16 %v305
        %v1027 = vunpack.c.h.b16 %v305
        %v1028 = vunpack.c.l.b16 %v306
        %v1029 = vunpack.c.h.b16 %v306
        %v1030 = vunpack.c.l.b16 %v307
        %v1031 = vunpack.c.h.b16 %v307
        %v1032 = vunpack.c.l.b16 %v308
        %v1033 = vunpack.c.h.b16 %v308
        %v1034 = vunpack.c.l.b16 %v309
        %v1035 = vunpack.c.h.b16 %v309
        %v1036 = vunpack.c.l.b16 %v310
        %v1037 = vunpack.c.h.b16 %v310
        %v1038 = vunpack.c.l.b16 %v311
        %v1039 = vunpack.c.h.b16 %v311
        %v1040 = vunpack.c.l.b16 %v312
        %v1041 = vunpack.c.h.b16 %v312
        %v1042 = vunpack.c.l.b16 %v313
        %v1043 = vunpack.c.h.b16 %v313
        %v1044 = vunpack.c.l.b16 %v314
        %v1045 = vunpack.c.h.b16 %v314
        %v1046 = vunpack.c.l.b16 %v315
        %v1047 = vunpack.c.h.b16 %v315
        %v1048 = vunpack.c.l.b16 %v316
        %v1049 = vunpack.c.h.b16 %v316
        %v1050 = vunpack.c.l.b16 %v317
        %v1051 = vunpack.c.h.b16 %v317
        %v1052 = vunpack.c.l.b16 %v318
        %v1053 = vunpack.c.h.b16 %v318
        %v1054 = vunpack.c.l.b16 %v319
        %v1055 = vunpack.c.h.b16 %v319
        %v1056 = vunpack.c.l.b16 %v320
        %v1057 = vunpack.c.h.b16 %v320
        %v1058 = vunpack.c.l.b16 %v321
        %v1059 = vunpack.c.h.b16 %v321
        %v1060 = vunpack.c.l.b16 %v322
        %v1061 = vunpack.c.h.b16 %v322
        %v1062 = vunpack.c.l.b16 %v323
        %v1063 = vunpack.c.h.b16 %v323
        %v1064 = vunpack.c.l.b16 %v324
        %v1065 = vunpack.c.h.b16 %v324
        %v1066 = vunpack.c.l.b16 %v325
        %v1067 = vunpack.c.h.b16 %v325
        %v1068 = vunpack.c.l.b16 %v326
        %v1069 = vunpack.c.h.b16 %v326
        %v1070 = vunpack.c.l.b16 %v327
        %v1071 = vunpack.c.h.b16 %v327
        %v1072 = vunpack.c.l.b16 %v328
        %v1073 = vunpack.c.h.b16 %v328
        %v1074 = vunpack.c.l.b16 %v329
        %v1075 = vunpack.c.h.b16 %v329
        %v1076 = vunpack.c.l.b16 %v330
        %v1077 = vunpack.c.h.b16 %v330
        %v1078 = vunpack.c.l.b16 %v331
        %v1079 = vunpack.c.h.b16 %v331
        %v1080 = vunpack.c.l.b16 %v332
        %v1081 = vunpack.c.h.b16 %v332
        %v1082 = vunpack.c.l.b16 %v333
        %v1083 = vunpack.c.h.b16 %v333
        %v1084 = vunpack.c.l.b16 %v334
        %v1085 = vunpack.c.h.b16 %v334
        %v1086 = vunpack.c.l.b16 %v335
        %v1087 = vunpack.c.h.b16 %v335
        %v1088 = vunpack.c.l.b16 %v336
        %v1089 = vunpack.c.h.b16 %v336
        %v1090 = vunpack.c.l.b16 %v337
        %v1091 = vunpack.c.h.b16 %v337
        %v1092 = vunpack.c.l.b16 %v338
        %v1093 = vunpack.c.h.b16 %v338
        %v1094 = vunpack.c.l.b16 %v339
        %v1095 = vunpack.c.h.b16 %v339
        %v1096 = vunpack.c.l.b16 %v340
        %v1097 = vunpack.c.h.b16 %v340
        %v1098 = vunpack.c.l.b16 %v341
        %v1099 = vunpack.c.h.b16 %v341
        %v1100 = vunpack.c.l.b16 %v342
        %v1101 = vunpack.c.h.b16 %v342
        %v1102 = vunpack.c.l.b16 %v343
        %v1103 = vunpack.c.h.b16 %v343
        %v1104 = vunpack.c.l.b16 %v344
        %v1105 = vunpack.c.h.b16 %v344
        %v1106 = vunpack.c.l.b16 %v345
        %v1107 = vunpack.c.h.b16 %v345
        %v1108 = vunpack.c.l.b16 %v346
        %v1109 = vunpack.c.h.b16 %v346
        %v1110 = vunpack.c.l.b16 %v347
        %v1111 = vunpack.c.h.b16 %v347
        %v1112 = vunpack.c.l.b16 %v348
        %v1113 = vunpack.c.h.b16 %v348
        %v1114 = vunpack.c.l.b16 %v349
        %v1115 = vunpack.c.h.b16 %v349
        %v1116 = vunpack.c.l.b16 %v350
        %v1117 = vunpack.c.h.b16 %v350
        %v1118 = vunpack.c.l.b16 %v351
        %v1119 = vunpack.c.h.b16 %v351
        %v1120 = vunpack.c.l.b16 %v352
        %v1121 = vunpack.c.h.b16 %v352
        %v1122 = vunpack.c.l.b16 %v353
        %v1123 = vunpack.c.h.b16 %v353
        %v1124 = vunpack.c.l.b16 %v354
        %v1125 = vunpack.c.h.b16 %v354
        %v1126 = vunpack.c.l.b16 %v355
        %v1127 = vunpack.c.h.b16 %v355
        %v1128 = vunpack.c.l.b16 %v356
        %v1129 = vunpack.c.h.b16 %v356
        %v1130 = vunpack.c.l.b16 %v357
        %v1131 = vunpack.c.h.b16 %v357
        %v1132 = vunpack.c.l.b16 %v358
        %v1133 = vunpack.c.h.b16 %v358
        %v1134 = vunpack.c.l.b16 %v359
        %v1135 = vunpack.c.h.b16 %v359
        %v1136 = vunpack.c.l.b16 %v360
        %v1137 = vunpack.c.h.b16 %v360
        %v1138 = vunpack.c.l.b16 %v361
        %v1139 = vunpack.c.h.b16 %v361
        %v1140 = vunpack.c.l.b16 %v362
        %v1141 = vunpack.c.h.b16 %v362
        %v1142 = vunpack.c.l.b16 %v363
        %v1143 = vunpack.c.h.b16 %v363
        %v1144 = vunpack.c.l.b16 %v364
        %v1145 = vunpack.c.h.b16 %v364
        %v1146 = vunpack.c.l.b16 %v365
        %v1147 = vunpack.c.h.b16 %v365
        %v1148 = vunpack.c.l.b16 %v366
        %v1149 = vunpack.c.h.b16 %v366
        %v1150 = vunpack.c.l.b16 %v367
        %v1151 = vunpack.c.h.b16 %v367
        %v1152 = vunpack.c.l.b16 %v368
        %v1153 = vunpack.c.h.b16 %v368
        %v1154 = vunpack.c.l.b16 %v369
        %v1155 = vunpack.c.h.b16 %v369
        %v1156 = vunpack.c.l.b16 %v370
        %v1157 = vunpack.c.h.b16 %v370
        %v1158 = vunpack.c.l.b16 %v371
        %v1159 = vunpack.c.h.b16 %v371
        %v1160 = vunpack.c.l.b16 %v372
        %v1161 = vunpack.c.h.b16 %v372
        %v1162 = vunpack.c.l.b16 %v373
        %v1163 = vunpack.c.h.b16 %v373
        %v1164 = vunpack.c.l.b16 %v374
        %v1165 = vunpack.c.h.b16 %v374
        %v1166 = vunpack.c.l.b16 %v375
        %v1167 = vunpack.c.h.b16 %v375
        %v1168 = vunpack.c.l.b16 %v376
        %v1169 = vunpack.c.h.b16 %v376
        %v1170 = vunpack.c.l.b16 %v377
        %v1171 = vunpack.c.h.b16 %v377
        %v1172 = vunpack.c.l.b16 %v378
        %v1173 = vunpack.c.h.b16 %v378
        %v1174 = vunpack.c.l.b16 %v379
        %v1175 = vunpack.c.h.b16 %v379
        %v1176 = vunpack.c.l.b16 %v380
        %v1177 = vunpack.c.h.b16 %v380
        %v1178 = vunpack.c.l.b16 %v381
        %v1179 = vunpack.c.h.b16 %v381
        %v1180 = vunpack.c.l.b16 %v382
        %v1181 = vunpack.c.h.b16 %v382
        %v1182 = vunpack.c.l.b16 %v383
        %v1183 = vunpack.c.h.b16 %v383
        %v1184 = vunpack.c.l.b16 %v384
        %v1185 = vunpack.c.h.b16 %v384
        %v1186 = vunpack.c.l.b16 %v385
        %v1187 = vunpack.c.h.b16 %v385
        %v1188 = vunpack.c.l.b16 %v386
        %v1189 = vunpack.c.h.b16 %v386
        %v1190 = vunpack.c.l.b16 %v387
        %v1191 = vunpack.c.h.b16 %v387
        %v1192 = vunpack.c.l.b16 %v388
        %v1193 = vunpack.c.h.b16 %v388
        %v1194 = vunpack.c.l.b16 %v389
        %v1195 = vunpack.c.h.b16 %v389
        %v1196 = vunpack.c.l.b16 %v390
        %v1197 = vunpack.c.h.b16 %v390
        %v1198 = vunpack.c.l.b16 %v391
        %v1199 = vunpack.c.h.b16 %v391
        %v1200 = vunpack.c.l.b16 %v392
        %v1201 = vunpack.c.h.b16 %v392
        %v1202 = vunpack.c.l.b16 %v393
        %v1203 = vunpack.c.h.b16 %v393
        %v1204 = vunpack.c.l.b16 %v394
        %v1205 = vunpack.c.h.b16 %v394
        %v1206 = vunpack.c.l.b16 %v395
        %v1207 = vunpack.c.h.b16 %v395
        %v1208 = vunpack.c.l.b16 %v396
        %v1209 = vunpack.c.h.b16 %v396
        %v1210 = vunpack.c.l.b16 %v397
        %v1211 = vunpack.c.h.b16 %v397
        %v1212 = vunpack.c.l.b16 %v398
        %v1213 = vunpack.c.h.b16 %v398
        %v1214 = vunpack.c.l.b16 %v399
        %v1215 = vunpack.c.h.b16 %v399
        %v1216 = vunpack.c.l.b16 %v400
        %v1217 = vunpack.c.h.b16 %v400
        %v1218 = vunpack.c.l.b16 %v401
        %v1219 = vunpack.c.h.b16 %v401
        %v1220 = vunpack.c.l.b16 %v402
        %v1221 = vunpack.c.h.b16 %v402
        %v1222 = vunpack.c.l.b16 %v403
        %v1223 = vunpack.c.h.b16 %v403
        %v1224 = vunpack.c.l.b16 %v404
        %v1225 = vunpack.c.h.b16 %v404
        %v1226 = vunpack.c.l.b16 %v405
        %v1227 = vunpack.c.h.b16 %v405
        %v1228 = vunpack.c.l.b16 %v406
        %v1229 = vunpack.c.h.b16 %v406
        %v1230 = vunpack.c.l.b16 %v407
        %v1231 = vunpack.c.h.b16 %v407
        %v1232 = vunpack.c.l.b16 %v408
        %v1233 = vunpack.c.h.b16 %v408
        %v1234 = vunpack.c.l.b16 %v409
        %v1235 = vunpack.c.h.b16 %v409
        %v1236 = vunpack.c.l.b16 %v410
        %v1237 = vunpack.c.h.b16 %v410
        %v1238 = vunpack.c.l.b16 %v411
        %v1239 = vunpack.c.h.b16 %v411
        %v1240 = vunpack.c.l.b16 %v412
        %v1241 = vunpack.c.h.b16 %v412
        %v1242 = vunpack.c.l.b16 %v413
        %v1243 = vunpack.c.h.b16 %v413
        %v1244 = vunpack.c.l.b16 %v414
        %v1245 = vunpack.c.h.b16 %v414
        %v1246 = vunpack.c.l.b16 %v415
        %v1247 = vunpack.c.h.b16 %v415
        %v1248 = vunpack.c.l.b16 %v416
        %v1249 = vunpack.c.h.b16 %v416
        %v1250 = vunpack.c.l.b16 %v417
        %v1251 = vunpack.c.h.b16 %v417
        %v1252 = vunpack.c.l.b16 %v418
        %v1253 = vunpack.c.h.b16 %v418
        %v1254 = vunpack.c.l.b16 %v419
        %v1255 = vunpack.c.h.b16 %v419
        %v1256 = vunpack.c.l.b16 %v420
        %v1257 = vunpack.c.h.b16 %v420
        %v1258 = vunpack.c.l.b16 %v421
        %v1259 = vunpack.c.h.b16 %v421
        %v1260 = vunpack.c.l.b16 %v422
        %v1261 = vunpack.c.h.b16 %v422
        %v1262 = vunpack.c.l.b16 %v423
        %v1263 = vunpack.c.h.b16 %v423
        %v1264 = vunpack.c.l.b16 %v424
        %v1265 = vunpack.c.h.b16 %v424
        %v1266 = vunpack.c.l.b16 %v425
        %v1267 = vunpack.c.h.b16 %v425
        %v1268 = vunpack.c.l.b16 %v426
        %v1269 = vunpack.c.h.b16 %v426
        %v1270 = vunpack.c.l.b16 %v427
        %v1271 = vunpack.c.h.b16 %v427
        %v1272 = vunpack.c.l.b16 %v428
        %v1273 = vunpack.c.h.b16 %v428
        %v1274 = vunpack.c.l.b16 %v429
        %v1275 = vunpack.c.h.b16 %v429
        %v1276 = vunpack.c.l.b16 %v430
        %v1277 = vunpack.c.h.b16 %v430
        %v1278 = vunpack.c.l.b16 %v431
        %v1279 = vunpack.c.h.b16 %v431
        %v1280 = vunpack.c.l.b16 %v432
        %v1281 = vunpack.c.h.b16 %v432
        %v1282 = vunpack.c.l.b16 %v433
        %v1283 = vunpack.c.h.b16 %v433
        %v1284 = vunpack.c.l.b16 %v434
        %v1285 = vunpack.c.h.b16 %v434
        %v1286 = vunpack.c.l.b16 %v435
        %v1287 = vunpack.c.h.b16 %v435
        %v1288 = vunpack.c.l.b16 %v436
        %v1289 = vunpack.c.h.b16 %v436
        %v1290 = vunpack.c.l.b16 %v437
        %v1291 = vunpack.c.h.b16 %v437
        %v1292 = vunpack.c.l.b16 %v438
        %v1293 = vunpack.c.h.b16 %v438
        %v1294 = vunpack.c.l.b16 %v439
        %v1295 = vunpack.c.h.b16 %v439
        %v1296 = vunpack.c.l.b16 %v440
        %v1297 = vunpack.c.h.b16 %v440
        %v1298 = vunpack.c.l.b16 %v441
        %v1299 = vunpack.c.h.b16 %v441
        %v1300 = vunpack.c.l.b16 %v442
        %v1301 = vunpack.c.h.b16 %v442
        %v1302 = vunpack.c.l.b16 %v443
        %v1303 = vunpack.c.h.b16 %v443
        %v1304 = vunpack.c.l.b16 %v444
        %v1305 = vunpack.c.h.b16 %v444
        %v1306 = vunpack.c.l.b16 %v445
        %v1307 = vunpack.c.h.b16 %v445
        %v1308 = vunpack.c.l.b16 %v446
        %v1309 = vunpack.c.h.b16 %v446
        %v1310 = vunpack.c.l.b16 %v447
        %v1311 = vunpack.c.h.b16 %v447
        %v1312 = vunpack.c.l.b16 %v448
        %v1313 = vunpack.c.h.b16 %v448
        %v1314 = vunpack.c.l.b16 %v449
        %v1315 = vunpack.c.h.b16 %v449
        %v1316 = vunpack.c.l.b16 %v450
        %v1317 = vunpack.c.h.b16 %v450
        %v1318 = vunpack.c.l.b16 %v451
        %v1319 = vunpack.c.h.b16 %v451
        %v1320 = vunpack.c.l.b16 %v452
        %v1321 = vunpack.c.h.b16 %v452
        %v1322 = vunpack.c.l.b16 %v453
        %v1323 = vunpack.c.h.b16 %v453
        %v1324 = vunpack.c.l.b16 %v454
        %v1325 = vunpack.c.h.b16 %v454
        %v1326 = vunpack.c.l.b16 %v455
        %v1327 = vunpack.c.h.b16 %v455
        %v1328 = vunpack.c.l.b16 %v456
        %v1329 = vunpack.c.h.b16 %v456
        %v1330 = vunpack.c.l.b16 %v457
        %v1331 = vunpack.c.h.b16 %v457
        %v1332 = vunpack.c.l.b16 %v458
        %v1333 = vunpack.c.h.b16 %v458
        %v1334 = vpack.c.b16 %v826, %v822
        %v1335 = vpack.c.b16 %v827, %v823
        %v1336 = vpack.c.b16 %v828, %v824
        %v1337 = vpack.c.b16 %v829, %v825
        %v1338 = vpack.c.b16 %v834, %v830
        %v1339 = vpack.c.b16 %v835, %v831
        %v1340 = vpack.c.b16 %v836, %v832
        %v1341 = vpack.c.b16 %v837, %v833
        %v1342 = vpack.c.b16 %v842, %v838
        %v1343 = vpack.c.b16 %v843, %v839
        %v1344 = vpack.c.b16 %v844, %v840
        %v1345 = vpack.c.b16 %v845, %v841
        %v1346 = vpack.c.b16 %v850, %v846
        %v1347 = vpack.c.b16 %v851, %v847
        %v1348 = vpack.c.b16 %v852, %v848
        %v1349 = vpack.c.b16 %v853, %v849
        %v1350 = vpack.c.b16 %v858, %v854
        %v1351 = vpack.c.b16 %v859, %v855
        %v1352 = vpack.c.b16 %v860, %v856
        %v1353 = vpack.c.b16 %v861, %v857
        %v1354 = vpack.c.b16 %v866, %v862
        %v1355 = vpack.c.b16 %v867, %v863
        %v1356 = vpack.c.b16 %v868, %v864
        %v1357 = vpack.c.b16 %v869, %v865
        %v1358 = vpack.c.b16 %v874, %v870
        %v1359 = vpack.c.b16 %v875, %v871
        %v1360 = vpack.c.b16 %v876, %v872
        %v1361 = vpack.c.b16 %v877, %v873
        %v1362 = vpack.c.b16 %v882, %v878
        %v1363 = vpack.c.b16 %v883, %v879
        %v1364 = vpack.c.b16 %v884, %v880
        %v1365 = vpack.c.b16 %v885, %v881
        %v1366 = vpack.c.b16 %v890, %v886
        %v1367 = vpack.c.b16 %v891, %v887
        %v1368 = vpack.c.b16 %v892, %v888
        %v1369 = vpack.c.b16 %v893, %v889
        %v1370 = vpack.c.b16 %v898, %v894
        %v1371 = vpack.c.b16 %v899, %v895
        %v1372 = vpack.c.b16 %v900, %v896
        %v1373 = vpack.c.b16 %v901, %v897
        %v1374 = vpack.c.b16 %v906, %v902
        %v1375 = vpack.c.b16 %v907, %v903
        %v1376 = vpack.c.b16 %v908, %v904
        %v1377 = vpack.c.b16 %v909, %v905
        %v1378 = vpack.c.b16 %v914, %v910
        %v1379 = vpack.c.b16 %v915, %v911
        %v1380 = vpack.c.b16 %v916, %v912
        %v1381 = vpack.c.b16 %v917, %v913
        %v1382 = vpack.c.b16 %v922, %v918
        %v1383 = vpack.c.b16 %v923, %v919
        %v1384 = vpack.c.b16 %v924, %v920
        %v1385 = vpack.c.b16 %v925, %v921
        %v1386 = vpack.c.b16 %v930, %v926
        %v1387 = vpack.c.b16 %v931, %v927
        %v1388 = vpack.c.b16 %v932, %v928
        %v1389 = vpack.c.b16 %v933, %v929
        %v1390 = vpack.c.b16 %v938, %v934
        %v1391 = vpack.c.b16 %v939, %v935
        %v1392 = vpack.c.b16 %v940, %v936
        %v1393 = vpack.c.b16 %v941, %v937
        %v1394 = vpack.c.b16 %v946, %v942
        %v1395 = vpack.c.b16 %v947, %v943
        %v1396 = vpack.c.b16 %v948, %v944
        %v1397 = vpack.c.b16 %v949, %v945
        %v1398 = vpack.c.b16 %v954, %v950
        %v1399 = vpack.c.b16 %v955, %v951
        %v1400 = vpack.c.b16 %v956, %v952
        %v1401 = vpack.c.b16 %v957, %v953
        %v1402 = vpack.c.b16 %v962, %v958
        %v1403 = vpack.c.b16 %v963, %v959
        %v1404 = vpack.c.b16 %v964, %v960
        %v1405 = vpack.c.b16 %v965, %v961
        %v1406 = vpack.c.b16 %v970, %v966
        %v1407 = vpack.c.b16 %v971, %v967
        %v1408 = vpack.c.b16 %v972, %v968
        %v1409 = vpack.c.b16 %v973, %v969
        %v1410 = vpack.c.b16 %v978, %v974
        %v1411 = vpack.c.b16 %v979, %v975
        %v1412 = vpack.c.b16 %v980, %v976
        %v1413 = vpack.c.b16 %v981, %v977
        %v1414 = vpack.c.b16 %v986, %v982
        %v1415 = vpack.c.b16 %v987, %v983
        %v1416 = vpack.c.b16 %v988, %v984
        %v1417 = vpack.c.b16 %v989, %v985
        %v1418 = vpack.c.b16 %v994, %v990
        %v1419 = vpack.c.b16 %v995, %v991
        %v1420 = vpack.c.b16 %v996, %v992
        %v1421 = vpack.c.b16 %v997, %v993
        %v1422 = vpack.c.b16 %v1002, %v998
        %v1423 = vpack.c.b16 %v1003, %v999
        %v1424 = vpack.c.b16 %v1004, %v1000
        %v1425 = vpack.c.b16 %v1005, %v1001
        %v1426 = vpack.c.b16 %v1010, %v1006
        %v1427 = vpack.c.b16 %v1011, %v1007
        %v1428 = vpack.c.b16 %v1012, %v1008
        %v1429 = vpack.c.b16 %v1013, %v1009
        %v1430 = vpack.c.b16 %v1018, %v1014
        %v1431 = vpack.c.b16 %v1019, %v1015
        %v1432 = vpack.c.b16 %v1020, %v1016
        %v1433 = vpack.c.b16 %v1021, %v1017
        %v1434 = vpack.c.b16 %v1026, %v1022
        %v1435 = vpack.c.b16 %v1027, %v1023
        %v1436 = vpack.c.b16 %v1028, %v1024
        %v1437 = vpack.c.b16 %v1029, %v1025
        %v1438 = vpack.c.b16 %v1034, %v1030
        %v1439 = vpack.c.b16 %v1035, %v1031
        %v1440 = vpack.c.b16 %v1036, %v1032
        %v1441 = vpack.c.b16 %v1037, %v1033
        %v1442 = vpack.c.b16 %v1042, %v1038
        %v1443 = vpack.c.b16 %v1043, %v1039
        %v1444 = vpack.c.b16 %v1044, %v1040
        %v1445 = vpack.c.b16 %v1045, %v1041
        %v1446 = vpack.c.b16 %v1050, %v1046
        %v1447 = vpack.c.b16 %v1051, %v1047
        %v1448 = vpack.c.b16 %v1052, %v1048
        %v1449 = vpack.c.b16 %v1053, %v1049
        %v1450 = vpack.c.b16 %v1058, %v1054
        %v1451 = vpack.c.b16 %v1059, %v1055
        %v1452 = vpack.c.b16 %v1060, %v1056
        %v1453 = vpack.c.b16 %v1061, %v1057
        %v1454 = vpack.c.b16 %v1066, %v1062
        %v1455 = vpack.c.b16 %v1067, %v1063
        %v1456 = vpack.c.b16 %v1068, %v1064
        %v1457 = vpack.c.b16 %v1069, %v1065
        %v1458 = vpack.c.b16 %v1074, %v1070
        %v1459 = vpack.c.b16 %v1075, %v1071
        %v1460 = vpack.c.b16 %v1076, %v1072
        %v1461 = vpack.c.b16 %v1077, %v1073
        %v1462 = vpack.c.b16 %v1082, %v1078
        %v1463 = vpack.c.b16 %v1083, %v1079
        %v1464 = vpack.c.b16 %v1084, %v1080
        %v1465 = vpack.c.b16 %v1085, %v1081
        %v1466 = vpack.c.b16 %v1090, %v1086
        %v1467 = vpack.c.b16 %v1091, %v1087
        %v1468 = vpack.c.b16 %v1092, %v1088
        %v1469 = vpack.c.b16 %v1093, %v1089
        %v1470 = vpack.c.b16 %v1098, %v1094
        %v1471 = vpack.c.b16 %v1099, %v1095
        %v1472 = vpack.c.b16 %v1100, %v1096
        %v1473 = vpack.c.b16 %v1101, %v1097
        %v1474 = vpack.c.b16 %v1106, %v1102
        %v1475 = vpack.c.b16 %v1107, %v1103
        %v1476 = vpack.c.b16 %v1108, %v1104
        %v1477 = vpack.c.b16 %v1109, %v1105
        %v1478 = vpack.c.b16 %v1114, %v1110
        %v1479 = vpack.c.b16 %v1115, %v1111
        %v1480 = vpack.c.b16 %v1116, %v1112
        %v1481 = vpack.c.b16 %v1117, %v1113
        %v1482 = vpack.c.b16 %v1122, %v1118
        %v1483 = vpack.c.b16 %v1123, %v1119
        %v1484 = vpack.c.b16 %v1124, %v1120
        %v1485 = vpack.c.b16 %v1125, %v1121
        %v1486 = vpack.c.b16 %v1130, %v1126
        %v1487 = vpack.c.b16 %v1131, %v1127
        %v1488 = vpack.c.b16 %v1132, %v1128
        %v1489 = vpack.c.b16 %v1133, %v1129
        %v1490 = vpack.c.b16 %v1138, %v1134
        %v1491 = vpack.c.b16 %v1139, %v1135
        %v1492 = vpack.c.b16 %v1140, %v1136
        %v1493 = vpack.c.b16 %v1141, %v1137
        %v1494 = vpack.c.b16 %v1146, %v1142
        %v1495 = vpack.c.b16 %v1147, %v1143
        %v1496 = vpack.c.b16 %v1148, %v1144
        %v1497 = vpack.c.b16 %v1149, %v1145
        %v1498 = vpack.c.b16 %v1154, %v1150
        %v1499 = vpack.c.b16 %v1155, %v1151
        %v1500 = vpack.c.b16 %v1156, %v1152
        %v1501 = vpack.c.b16 %v1157, %v1153
        %v1502 = vpack.c.b16 %v1162, %v1158
        %v1503 = vpack.c.b16 %v1163, %v1159
        %v1504 = vpack.c.b16 %v1164, %v1160
        %v1505 = vpack.c.b16 %v1165, %v1161
        %v1506 = vpack.c.b16 %v1170, %v1166
        %v1507 = vpack.c.b16 %v1171, %v1167
        %v1508 = vpack.c.b16 %v1172, %v1168
        %v1509 = vpack.c.b16 %v1173, %v1169
        %v1510 = vpack.c.b16 %v1178, %v1174
        %v1511 = vpack.c.b16 %v1179, %v1175
        %v1512 = vpack.c.b16 %v1180, %v1176
        %v1513 = vpack.c.b16 %v1181, %v1177
        %v1514 = vpack.c.b16 %v1186, %v1182
        %v1515 = vpack.c.b16 %v1187, %v1183
        %v1516 = vpack.c.b16 %v1188, %v1184
        %v1517 = vpack.c.b16 %v1189, %v1185
        %v1518 = vpack.c.b16 %v1194, %v1190
        %v1519 = vpack.c.b16 %v1195, %v1191
        %v1520 = vpack.c.b16 %v1196, %v1192
        %v1521 = vpack.c.b16 %v1197, %v1193
        %v1522 = vpack.c.b16 %v1202, %v1198
        %v1523 = vpack.c.b16 %v1203, %v1199
        %v1524 = vpack.c.b16 %v1204, %v1200
        %v1525 = vpack.c.b16 %v1205, %v1201
        %v1526 = vpack.c.b16 %v1210, %v1206
        %v1527 = vpack.c.b16 %v1211, %v1207
        %v1528 = vpack.c.b16 %v1212, %v1208
        %v1529 = vpack.c.b16 %v1213, %v1209
        %v1530 = vpack.c.b16 %v1218, %v1214
        %v1531 = vpack.c.b16 %v1219, %v1215
        %v1532 = vpack.c.b16 %v1220, %v1216
        %v1533 = vpack.c.b16 %v1221, %v1217
        %v1534 = vpack.c.b16 %v1226, %v1222
        %v1535 = vpack.c.b16 %v1227, %v1223
        %v1536 = vpack.c.b16 %v1228, %v1224
        %v1537 = vpack.c.b16 %v1229, %v1225
        %v1538 = vpack.c.b16 %v1234, %v1230
        %v1539 = vpack.c.b16 %v1235, %v1231
        %v1540 = vpack.c.b16 %v1236, %v1232
        %v1541 = vpack.c.b16 %v1237, %v1233
        %v1542 = vpack.c.b16 %v1242, %v1238
        %v1543 = vpack.c.b16 %v1243, %v1239
        %v1544 = vpack.c.b16 %v1244, %v1240
        %v1545 = vpack.c.b16 %v1245, %v1241
        %v1546 = vpack.c.b16 %v1250, %v1246
        %v1547 = vpack.c.b16 %v1251, %v1247
        %v1548 = vpack.c.b16 %v1252, %v1248
        %v1549 = vpack.c.b16 %v1253, %v1249
        %v1550 = vpack.c.b16 %v1258, %v1254
        %v1551 = vpack.c.b16 %v1259, %v1255
        %v1552 = vpack.c.b16 %v1260, %v1256
        %v1553 = vpack.c.b16 %v1261, %v1257
        %v1554 = vpack.c.b16 %v1266, %v1262
        %v1555 = vpack.c.b16 %v1267, %v1263
        %v1556 = vpack.c.b16 %v1268, %v1264
        %v1557 = vpack.c.b16 %v1269, %v1265
        %v1558 = vpack.c.b16 %v1274, %v1270
        %v1559 = vpack.c.b16 %v1275, %v1271
        %v1560 = vpack.c.b16 %v1276, %v1272
        %v1561 = vpack.c.b16 %v1277, %v1273
        %v1562 = vpack.c.b16 %v1282, %v1278
        %v1563 = vpack.c.b16 %v1283, %v1279
        %v1564 = vpack.c.b16 %v1284, %v1280
        %v1565 = vpack.c.b16 %v1285, %v1281
        %v1566 = vpack.c.b16 %v1290, %v1286
        %v1567 = vpack.c.b16 %v1291, %v1287
        %v1568 = vpack.c.b16 %v1292, %v1288
        %v1569 = vpack.c.b16 %v1293, %v1289
        %v1570 = vpack.c.b16 %v1298, %v1294
        %v1571 = vpack.c.b16 %v1299, %v1295
        %v1572 = vpack.c.b16 %v1300, %v1296
        %v1573 = vpack.c.b16 %v1301, %v1297
        %v1574 = vpack.c.b16 %v1306, %v1302
        %v1575 = vpack.c.b16 %v1307, %v1303
        %v1576 = vpack.c.b16 %v1308, %v1304
        %v1577 = vpack.c.b16 %v1309, %v1305
        %v1578 = vpack.c.b16 %v1314, %v1310
        %v1579 = vpack.c.b16 %v1315, %v1311
        %v1580 = vpack.c.b16 %v1316, %v1312
        %v1581 = vpack.c.b16 %v1317, %v1313
        %v1582 = vpack.c.b16 %v1322, %v1318
        %v1583 = vpack.c.b16 %v1323, %v1319
        %v1584 = vpack.c.b16 %v1324, %v1320
        %v1585 = vpack.c.b16 %v1325, %v1321
        %v1586 = vpack.c.b16 %v1330, %v1326
        %v1587 = vpack.c.b16 %v1331, %v1327
        %v1588 = vpack.c.b16 %v1332, %v1328
        %v1589 = vpack.c.b16 %v1333, %v1329
        %1846 = vmatprep.subr.bf16.mxu0 %v1335
        %1847 = vmatpush1.bf16.msra.mxu0 %v1334
        %1848 = vmatprep.subr.bf16.mxu0 %v1339
        %1849 = vmatpush1.bf16.msra.mxu0 %v1338
        %1850 = vmatprep.subr.bf16.mxu0 %v1343
        %1851 = vmatpush1.bf16.msra.mxu0 %v1342
        %1852 = vmatprep.subr.bf16.mxu0 %v1347
        %1853 = vmatpush1.bf16.msra.mxu0 %v1346
        %1854 = vmatprep.subr.bf16.mxu0 %v1351
        %1855 = vmatpush1.bf16.msra.mxu0 %v1350
        %1856 = vmatprep.subr.bf16.mxu0 %v1355
        %1857 = vmatpush1.bf16.msra.mxu0 %v1354
        %1858 = vmatprep.subr.bf16.mxu0 %v1359
        %1859 = vmatpush1.bf16.msra.mxu0 %v1358
        %1860 = vmatprep.subr.bf16.mxu0 %v1363
        %1861 = vmatpush1.bf16.msra.mxu0 %v1362
        %1862 = vmatprep.subr.bf16.mxu0 %v1367
        %1863 = vmatpush1.bf16.msra.mxu0 %v1366
        %1864 = vmatprep.subr.bf16.mxu0 %v1371
        %1865 = vmatpush1.bf16.msra.mxu0 %v1370
        %1866 = vmatprep.subr.bf16.mxu0 %v1375
        %1867 = vmatpush1.bf16.msra.mxu0 %v1374
        %1868 = vmatprep.subr.bf16.mxu0 %v1379
        %1869 = vmatpush1.bf16.msra.mxu0 %v1378
        %1870 = vmatprep.subr.bf16.mxu0 %v1383
        %1871 = vmatpush1.bf16.msra.mxu0 %v1382
        %1872 = vmatprep.subr.bf16.mxu0 %v1387
        %1873 = vmatpush1.bf16.msra.mxu0 %v1386
        %1874 = vmatprep.subr.bf16.mxu0 %v1391
        %1875 = vmatpush1.bf16.msra.mxu0 %v1390
        %1876 = vmatprep.subr.bf16.mxu0 %v1395
        %1877 = vmatpush1.bf16.msra.mxu0 %v1394
        %1878 = vmatprep.mubr.bf16.mxu0 %v472
        %1879 = vmatmul.mubr.bf16.gmra.mrb[0].mxu0 %v471
        %v1880 = vpop.f32.mrb[0].mxu0
        %v1881 = vadd.f32 %v549, %v1880
        %v1882 = vpop.f32.mrb[0].mxu0
        %v1883 = vadd.f32 %v553, %v1882
        %v1884 = vpop.f32.mrb[0].mxu0
        %v1885 = vadd.f32 %v549, %v1884
        %v1886 = vpop.f32.mrb[0].mxu0
        %v1887 = vadd.f32 %v553, %v1886
        %1888 = vmatprep.mubr.bf16.mxu0 %v474
        %1889 = vmatmul.mubr.bf16.gmra.mrb[0].mxu0 %v473
        %v1890 = vpop.f32.mrb[0].mxu0
        %v1891 = vadd.f32 %v549, %v1890
        %v1892 = vpop.f32.mrb[0].mxu0
        %v1893 = vadd.f32 %v553, %v1892
        %v1894 = vpop.f32.mrb[0].mxu0
        %v1895 = vadd.f32 %v549, %v1894
        %v1896 = vpop.f32.mrb[0].mxu0
        %v1897 = vadd.f32 %v553, %v1896
        %1898 = vdwg.mxu0
        %1899 = vmatprep.subr.bf16.mxu0 %v1399
        %1900 = vmatpush1.bf16.msra.mxu0 %v1398
        %1901 = vmatprep.subr.bf16.mxu0 %v1403
        %1902 = vmatpush1.bf16.msra.mxu0 %v1402
        %1903 = vmatprep.subr.bf16.mxu0 %v1407
        %1904 = vmatpush1.bf16.msra.mxu0 %v1406
        %1905 = vmatprep.subr.bf16.mxu0 %v1411
        %1906 = vmatpush1.bf16.msra.mxu0 %v1410
        %1907 = vmatprep.subr.bf16.mxu0 %v1415
        %1908 = vmatpush1.bf16.msra.mxu0 %v1414
        %1909 = vmatprep.subr.bf16.mxu0 %v1419
        %1910 = vmatpush1.bf16.msra.mxu0 %v1418
        %1911 = vmatprep.subr.bf16.mxu0 %v1423
        %1912 = vmatpush1.bf16.msra.mxu0 %v1422
        %1913 = vmatprep.subr.bf16.mxu0 %v1427
        %1914 = vmatpush1.bf16.msra.mxu0 %v1426
        %1915 = vmatprep.subr.bf16.mxu0 %v1431
        %1916 = vmatpush1.bf16.msra.mxu0 %v1430
        %1917 = vmatprep.subr.bf16.mxu0 %v1435
        %1918 = vmatpush1.bf16.msra.mxu0 %v1434
        %1919 = vmatprep.subr.bf16.mxu0 %v1439
        %1920 = vmatpush1.bf16.msra.mxu0 %v1438
        %1921 = vmatprep.subr.bf16.mxu0 %v1443
        %1922 = vmatpush1.bf16.msra.mxu0 %v1442
        %1923 = vmatprep.subr.bf16.mxu0 %v1447
        %1924 = vmatpush1.bf16.msra.mxu0 %v1446
        %1925 = vmatprep.subr.bf16.mxu0 %v1451
        %1926 = vmatpush1.bf16.msra.mxu0 %v1450
        %1927 = vmatprep.subr.bf16.mxu0 %v1455
        %1928 = vmatpush1.bf16.msra.mxu0 %v1454
        %1929 = vmatprep.subr.bf16.mxu0 %v1459
        %1930 = vmatpush1.bf16.msra.mxu0 %v1458
        %1931 = vmatprep.mubr.bf16.mxu0 %v503
        %1932 = vmatmul.mubr.bf16.gmra.mrb[0].mxu0 %v491
        %v1933 = vpop.f32.mrb[0].mxu0
        %v1934 = vadd.f32 %v1881, %v1933
        %v1935 = vpop.f32.mrb[0].mxu0
        %v1936 = vadd.f32 %v1883, %v1935
        %v1937 = vpop.f32.mrb[0].mxu0
        %v1938 = vadd.f32 %v1885, %v1937
        %v1939 = vpop.f32.mrb[0].mxu0
        %v1940 = vadd.f32 %v1887, %v1939
        %1941 = vmatprep.mubr.bf16.mxu0 %v509
        %1942 = vmatmul.mubr.bf16.gmra.mrb[0].mxu0 %v506
        %v1943 = vpop.f32.mrb[0].mxu0
        %v1944 = vadd.f32 %v1891, %v1943
        %v1945 = vpop.f32.mrb[0].mxu0
        %v1946 = vadd.f32 %v1893, %v1945
        %v1947 = vpop.f32.mrb[0].mxu0
        %v1948 = vadd.f32 %v1895, %v1947
        %v1949 = vpop.f32.mrb[0].mxu0
        %v1950 = vadd.f32 %v1897, %v1949
        %1951 = vdwg.mxu0
        %1952 = vmatprep.subr.bf16.mxu0 %v1463
        %1953 = vmatpush1.bf16.msra.mxu0 %v1462
        %1954 = vmatprep.subr.bf16.mxu0 %v1467
        %1955 = vmatpush1.bf16.msra.mxu0 %v1466
        %1956 = vmatprep.subr.bf16.mxu0 %v1471
        %1957 = vmatpush1.bf16.msra.mxu0 %v1470
        %1958 = vmatprep.subr.bf16.mxu0 %v1475
        %1959 = vmatpush1.bf16.msra.mxu0 %v1474
        %1960 = vmatprep.subr.bf16.mxu0 %v1479
        %1961 = vmatpush1.bf16.msra.mxu0 %v1478
        %1962 = vmatprep.subr.bf16.mxu0 %v1483
        %1963 = vmatpush1.bf16.msra.mxu0 %v1482
        %1964 = vmatprep.subr.bf16.mxu0 %v1487
        %1965 = vmatpush1.bf16.msra.mxu0 %v1486
        %1966 = vmatprep.subr.bf16.mxu0 %v1491
        %1967 = vmatpush1.bf16.msra.mxu0 %v1490
        %1968 = vmatprep.subr.bf16.mxu0 %v1495
        %1969 = vmatpush1.bf16.msra.mxu0 %v1494
        %1970 = vmatprep.subr.bf16.mxu0 %v1499
        %1971 = vmatpush1.bf16.msra.mxu0 %v1498
        %1972 = vmatprep.subr.bf16.mxu0 %v1503
        %1973 = vmatpush1.bf16.msra.mxu0 %v1502
        %1974 = vmatprep.subr.bf16.mxu0 %v1507
        %1975 = vmatpush1.bf16.msra.mxu0 %v1506
        %1976 = vmatprep.subr.bf16.mxu0 %v1511
        %1977 = vmatpush1.bf16.msra.mxu0 %v1510
        %1978 = vmatprep.subr.bf16.mxu0 %v1515
        %1979 = vmatpush1.bf16.msra.mxu0 %v1514
        %1980 = vmatprep.subr.bf16.mxu0 %v1519
        %1981 = vmatpush1.bf16.msra.mxu0 %v1518
        %1982 = vmatprep.subr.bf16.mxu0 %v1523
        %1983 = vmatpush1.bf16.msra.mxu0 %v1522
        %1984 = vmatprep.mubr.bf16.mxu0 %v528
        %1985 = vmatmul.mubr.bf16.gmra.mrb[0].mxu0 %v521
        %v1986 = vpop.f32.mrb[0].mxu0
        %v1987 = vadd.f32 %v1934, %v1986
        %v1988 = vpop.f32.mrb[0].mxu0
        %v1989 = vadd.f32 %v1936, %v1988
        %v1990 = vpop.f32.mrb[0].mxu0
        %v1991 = vadd.f32 %v1938, %v1990
        %v1992 = vpop.f32.mrb[0].mxu0
        %v1993 = vadd.f32 %v1940, %v1992
        %1994 = vmatprep.mubr.bf16.mxu0 %v527
        %1995 = vmatmul.mubr.bf16.gmra.mrb[0].mxu0 %v520
        %v1996 = vpop.f32.mrb[0].mxu0
        %v1997 = vadd.f32 %v1944, %v1996
        %v1998 = vpop.f32.mrb[0].mxu0
        %v1999 = vadd.f32 %v1946, %v1998
        %v2000 = vpop.f32.mrb[0].mxu0
        %v2001 = vadd.f32 %v1948, %v2000
        %v2002 = vpop.f32.mrb[0].mxu0
        %v2003 = vadd.f32 %v1950, %v2002
        %2004 = vdwg.mxu0
        %2005 = vmatprep.subr.bf16.mxu0 %v1527
        %2006 = vmatpush1.bf16.msra.mxu0 %v1526
        %2007 = vmatprep.subr.bf16.mxu0 %v1531
        %2008 = vmatpush1.bf16.msra.mxu0 %v1530
        %2009 = vmatprep.subr.bf16.mxu0 %v1535
        %2010 = vmatpush1.bf16.msra.mxu0 %v1534
        %2011 = vmatprep.subr.bf16.mxu0 %v1539
        %2012 = vmatpush1.bf16.msra.mxu0 %v1538
        %2013 = vmatprep.subr.bf16.mxu0 %v1543
        %2014 = vmatpush1.bf16.msra.mxu0 %v1542
        %2015 = vmatprep.subr.bf16.mxu0 %v1547
        %2016 = vmatpush1.bf16.msra.mxu0 %v1546
        %2017 = vmatprep.subr.bf16.mxu0 %v1551
        %2018 = vmatpush1.bf16.msra.mxu0 %v1550
        %2019 = vmatprep.subr.bf16.mxu0 %v1555
        %2020 = vmatpush1.bf16.msra.mxu0 %v1554
        %2021 = vmatprep.subr.bf16.mxu0 %v1559
        %2022 = vmatpush1.bf16.msra.mxu0 %v1558
        %2023 = vmatprep.subr.bf16.mxu0 %v1563
        %2024 = vmatpush1.bf16.msra.mxu0 %v1562
        %2025 = vmatprep.subr.bf16.mxu0 %v1567
        %2026 = vmatpush1.bf16.msra.mxu0 %v1566
        %2027 = vmatprep.subr.bf16.mxu0 %v1571
        %2028 = vmatpush1.bf16.msra.mxu0 %v1570
        %2029 = vmatprep.subr.bf16.mxu0 %v1575
        %2030 = vmatpush1.bf16.msra.mxu0 %v1574
        %2031 = vmatprep.subr.bf16.mxu0 %v1579
        %2032 = vmatpush1.bf16.msra.mxu0 %v1578
        %2033 = vmatprep.subr.bf16.mxu0 %v1583
        %2034 = vmatpush1.bf16.msra.mxu0 %v1582
        %2035 = vmatprep.subr.bf16.mxu0 %v1587
        %2036 = vmatpush1.bf16.msra.mxu0 %v1586
        %2037 = vmatprep.mubr.bf16.mxu0 %v539
        %2038 = vmatmul.mubr.bf16.gmra.mrb[0].mxu0 %v536
        %v2039 = vpop.f32.mrb[0].mxu0
        %v2040 = vadd.f32 %v1987, %v2039
        %v2041 = vpop.f32.mrb[0].mxu0
        %v2042 = vadd.f32 %v1989, %v2041
        %v2043 = vpop.f32.mrb[0].mxu0
        %v2044 = vadd.f32 %v1991, %v2043
        %v2045 = vpop.f32.mrb[0].mxu0
        %v2046 = vadd.f32 %v1993, %v2045
        %2047 = vmatprep.mubr.bf16.mxu0 %v538
        %2048 = vmatmul.mubr.bf16.gmra.mrb[0].mxu0 %v535
        %v2049 = vpop.f32.mrb[0].mxu0
        %v2050 = vadd.f32 %v1997, %v2049
        %v2051 = vpop.f32.mrb[0].mxu0
        %v2052 = vadd.f32 %v1999, %v2051
        %v2053 = vpop.f32.mrb[0].mxu0
        %v2054 = vadd.f32 %v2001, %v2053
        %v2055 = vpop.f32.mrb[0].mxu0
        %v2056 = vadd.f32 %v2003, %v2055
        %2057 = vdwg.mxu0
        %2058 = vmatprep.subr.bf16.mxu0 %v1337
        %2059 = vmatpush1.bf16.msra.mxu0 %v1336
        %2060 = vmatprep.subr.bf16.mxu0 %v1341
        %2061 = vmatpush1.bf16.msra.mxu0 %v1340
        %2062 = vmatprep.subr.bf16.mxu0 %v1345
        %2063 = vmatpush1.bf16.msra.mxu0 %v1344
        %2064 = vmatprep.subr.bf16.mxu0 %v1349
        %2065 = vmatpush1.bf16.msra.mxu0 %v1348
        %2066 = vmatprep.subr.bf16.mxu0 %v1353
        %2067 = vmatpush1.bf16.msra.mxu0 %v1352
        %2068 = vmatprep.subr.bf16.mxu0 %v1357
        %2069 = vmatpush1.bf16.msra.mxu0 %v1356
        %2070 = vmatprep.subr.bf16.mxu0 %v1361
        %2071 = vmatpush1.bf16.msra.mxu0 %v1360
        %2072 = vmatprep.subr.bf16.mxu0 %v1365
        %2073 = vmatpush1.bf16.msra.mxu0 %v1364
        %2074 = vmatprep.subr.bf16.mxu0 %v1369
        %2075 = vmatpush1.bf16.msra.mxu0 %v1368
        %2076 = vmatprep.subr.bf16.mxu0 %v1373
        %2077 = vmatpush1.bf16.msra.mxu0 %v1372
        %2078 = vmatprep.subr.bf16.mxu0 %v1377
        %2079 = vmatpush1.bf16.msra.mxu0 %v1376
        %2080 = vmatprep.subr.bf16.mxu0 %v1381
        %2081 = vmatpush1.bf16.msra.mxu0 %v1380
        %2082 = vmatprep.subr.bf16.mxu0 %v1385
        %2083 = vmatpush1.bf16.msra.mxu0 %v1384
        %2084 = vmatprep.subr.bf16.mxu0 %v1389
        %2085 = vmatpush1.bf16.msra.mxu0 %v1388
        %2086 = vmatprep.subr.bf16.mxu0 %v1393
        %2087 = vmatpush1.bf16.msra.mxu0 %v1392
        %2088 = vmatprep.subr.bf16.mxu0 %v1397
        %2089 = vmatpush1.bf16.msra.mxu0 %v1396
        %2090 = vmatprep.mubr.bf16.mxu0 %v472
        %2091 = vmatmul.mubr.bf16.gmra.mrb[0].mxu0 %v471
        %v2092 = vpop.f32.mrb[0].mxu0
        %v2093 = vadd.f32 %v557, %v2092
        %v2094 = vpop.f32.mrb[0].mxu0
        %v2095 = vadd.f32 %v561, %v2094
        %v2096 = vpop.f32.mrb[0].mxu0
        %v2097 = vadd.f32 %v557, %v2096
        %v2098 = vpop.f32.mrb[0].mxu0
        %v2099 = vadd.f32 %v561, %v2098
        %2100 = vmatprep.mubr.bf16.mxu0 %v474
        %2101 = vmatmul.mubr.bf16.gmra.mrb[0].mxu0 %v473
        %v2102 = vpop.f32.mrb[0].mxu0
        %v2103 = vadd.f32 %v557, %v2102
        %v2104 = vpop.f32.mrb[0].mxu0
        %v2105 = vadd.f32 %v561, %v2104
        %v2106 = vpop.f32.mrb[0].mxu0
        %v2107 = vadd.f32 %v557, %v2106
        %v2108 = vpop.f32.mrb[0].mxu0
        %v2109 = vadd.f32 %v561, %v2108
        %2110 = vdwg.mxu0
        %2111 = vmatprep.subr.bf16.mxu0 %v1401
        %2112 = vmatpush1.bf16.msra.mxu0 %v1400
        %2113 = vmatprep.subr.bf16.mxu0 %v1405
        %2114 = vmatpush1.bf16.msra.mxu0 %v1404
        %2115 = vmatprep.subr.bf16.mxu0 %v1409
        %2116 = vmatpush1.bf16.msra.mxu0 %v1408
        %2117 = vmatprep.subr.bf16.mxu0 %v1413
        %2118 = vmatpush1.bf16.msra.mxu0 %v1412
        %2119 = vmatprep.subr.bf16.mxu0 %v1417
        %2120 = vmatpush1.bf16.msra.mxu0 %v1416
        %2121 = vmatprep.subr.bf16.mxu0 %v1421
        %2122 = vmatpush1.bf16.msra.mxu0 %v1420
        %2123 = vmatprep.subr.bf16.mxu0 %v1425
        %2124 = vmatpush1.bf16.msra.mxu0 %v1424
        %2125 = vmatprep.subr.bf16.mxu0 %v1429
        %2126 = vmatpush1.bf16.msra.mxu0 %v1428
        %2127 = vmatprep.subr.bf16.mxu0 %v1433
        %2128 = vmatpush1.bf16.msra.mxu0 %v1432
        %2129 = vmatprep.subr.bf16.mxu0 %v1437
        %2130 = vmatpush1.bf16.msra.mxu0 %v1436
        %2131 = vmatprep.subr.bf16.mxu0 %v1441
        %2132 = vmatpush1.bf16.msra.mxu0 %v1440
        %2133 = vmatprep.subr.bf16.mxu0 %v1445
        %2134 = vmatpush1.bf16.msra.mxu0 %v1444
        %2135 = vmatprep.subr.bf16.mxu0 %v1449
        %2136 = vmatpush1.bf16.msra.mxu0 %v1448
        %2137 = vmatprep.subr.bf16.mxu0 %v1453
        %2138 = vmatpush1.bf16.msra.mxu0 %v1452
        %2139 = vmatprep.subr.bf16.mxu0 %v1457
        %2140 = vmatpush1.bf16.msra.mxu0 %v1456
        %2141 = vmatprep.subr.bf16.mxu0 %v1461
        %2142 = vmatpush1.bf16.msra.mxu0 %v1460
        %2143 = vmatprep.mubr.bf16.mxu0 %v503
        %2144 = vmatmul.mubr.bf16.gmra.mrb[0].mxu0 %v491
        %v2145 = vpop.f32.mrb[0].mxu0
        %v2146 = vadd.f32 %v2093, %v2145
        %v2147 = vpop.f32.mrb[0].mxu0
        %v2148 = vadd.f32 %v2095, %v2147
        %v2149 = vpop.f32.mrb[0].mxu0
        %v2150 = vadd.f32 %v2097, %v2149
        %v2151 = vpop.f32.mrb[0].mxu0
        %v2152 = vadd.f32 %v2099, %v2151
        %2153 = vmatprep.mubr.bf16.mxu0 %v509
        %2154 = vmatmul.mubr.bf16.gmra.mrb[0].mxu0 %v506
        %v2155 = vpop.f32.mrb[0].mxu0
        %v2156 = vadd.f32 %v2103, %v2155
        %v2157 = vpop.f32.mrb[0].mxu0
        %v2158 = vadd.f32 %v2105, %v2157
        %v2159 = vpop.f32.mrb[0].mxu0
        %v2160 = vadd.f32 %v2107, %v2159
        %v2161 = vpop.f32.mrb[0].mxu0
        %v2162 = vadd.f32 %v2109, %v2161
        %2163 = vdwg.mxu0
        %2164 = vmatprep.subr.bf16.mxu0 %v1465
        %2165 = vmatpush1.bf16.msra.mxu0 %v1464
        %2166 = vmatprep.subr.bf16.mxu0 %v1469
        %2167 = vmatpush1.bf16.msra.mxu0 %v1468
        %2168 = vmatprep.subr.bf16.mxu0 %v1473
        %2169 = vmatpush1.bf16.msra.mxu0 %v1472
        %2170 = vmatprep.subr.bf16.mxu0 %v1477
        %2171 = vmatpush1.bf16.msra.mxu0 %v1476
        %2172 = vmatprep.subr.bf16.mxu0 %v1481
        %2173 = vmatpush1.bf16.msra.mxu0 %v1480
        %2174 = vmatprep.subr.bf16.mxu0 %v1485
        %2175 = vmatpush1.bf16.msra.mxu0 %v1484
        %2176 = vmatprep.subr.bf16.mxu0 %v1489
        %2177 = vmatpush1.bf16.msra.mxu0 %v1488
        %2178 = vmatprep.subr.bf16.mxu0 %v1493
        %2179 = vmatpush1.bf16.msra.mxu0 %v1492
        %2180 = vmatprep.subr.bf16.mxu0 %v1497
        %2181 = vmatpush1.bf16.msra.mxu0 %v1496
        %2182 = vmatprep.subr.bf16.mxu0 %v1501
        %2183 = vmatpush1.bf16.msra.mxu0 %v1500
        %2184 = vmatprep.subr.bf16.mxu0 %v1505
        %2185 = vmatpush1.bf16.msra.mxu0 %v1504
        %2186 = vmatprep.subr.bf16.mxu0 %v1509
        %2187 = vmatpush1.bf16.msra.mxu0 %v1508
        %2188 = vmatprep.subr.bf16.mxu0 %v1513
        %2189 = vmatpush1.bf16.msra.mxu0 %v1512
        %2190 = vmatprep.subr.bf16.mxu0 %v1517
        %2191 = vmatpush1.bf16.msra.mxu0 %v1516
        %2192 = vmatprep.subr.bf16.mxu0 %v1521
        %2193 = vmatpush1.bf16.msra.mxu0 %v1520
        %2194 = vmatprep.subr.bf16.mxu0 %v1525
        %2195 = vmatpush1.bf16.msra.mxu0 %v1524
        %2196 = vmatprep.mubr.bf16.mxu0 %v528
        %2197 = vmatmul.mubr.bf16.gmra.mrb[0].mxu0 %v521
        %v2198 = vpop.f32.mrb[0].mxu0
        %v2199 = vadd.f32 %v2146, %v2198
        %v2200 = vpop.f32.mrb[0].mxu0
        %v2201 = vadd.f32 %v2148, %v2200
        %v2202 = vpop.f32.mrb[0].mxu0
        %v2203 = vadd.f32 %v2150, %v2202
        %v2204 = vpop.f32.mrb[0].mxu0
        %v2205 = vadd.f32 %v2152, %v2204
        %2206 = vmatprep.mubr.bf16.mxu0 %v527
        %2207 = vmatmul.mubr.bf16.gmra.mrb[0].mxu0 %v520
        %v2208 = vpop.f32.mrb[0].mxu0
        %v2209 = vadd.f32 %v2156, %v2208
        %v2210 = vpop.f32.mrb[0].mxu0
        %v2211 = vadd.f32 %v2158, %v2210
        %v2212 = vpop.f32.mrb[0].mxu0
        %v2213 = vadd.f32 %v2160, %v2212
        %v2214 = vpop.f32.mrb[0].mxu0
        %v2215 = vadd.f32 %v2162, %v2214
        %2216 = vdwg.mxu0
        %2217 = vmatprep.subr.bf16.mxu0 %v1529
        %2218 = vmatpush1.bf16.msra.mxu0 %v1528
        %2219 = vmatprep.subr.bf16.mxu0 %v1533
        %2220 = vmatpush1.bf16.msra.mxu0 %v1532
        %2221 = vmatprep.subr.bf16.mxu0 %v1537
        %2222 = vmatpush1.bf16.msra.mxu0 %v1536
        %2223 = vmatprep.subr.bf16.mxu0 %v1541
        %2224 = vmatpush1.bf16.msra.mxu0 %v1540
        %2225 = vmatprep.subr.bf16.mxu0 %v1545
        %2226 = vmatpush1.bf16.msra.mxu0 %v1544
        %2227 = vmatprep.subr.bf16.mxu0 %v1549
        %2228 = vmatpush1.bf16.msra.mxu0 %v1548
        %2229 = vmatprep.subr.bf16.mxu0 %v1553
        %2230 = vmatpush1.bf16.msra.mxu0 %v1552
        %2231 = vmatprep.subr.bf16.mxu0 %v1557
        %2232 = vmatpush1.bf16.msra.mxu0 %v1556
        %2233 = vmatprep.subr.bf16.mxu0 %v1561
        %2234 = vmatpush1.bf16.msra.mxu0 %v1560
        %2235 = vmatprep.subr.bf16.mxu0 %v1565
        %2236 = vmatpush1.bf16.msra.mxu0 %v1564
        %2237 = vmatprep.subr.bf16.mxu0 %v1569
        %2238 = vmatpush1.bf16.msra.mxu0 %v1568
        %2239 = vmatprep.subr.bf16.mxu0 %v1573
        %2240 = vmatpush1.bf16.msra.mxu0 %v1572
        %2241 = vmatprep.subr.bf16.mxu0 %v1577
        %2242 = vmatpush1.bf16.msra.mxu0 %v1576
        %2243 = vmatprep.subr.bf16.mxu0 %v1581
        %2244 = vmatpush1.bf16.msra.mxu0 %v1580
        %2245 = vmatprep.subr.bf16.mxu0 %v1585
        %2246 = vmatpush1.bf16.msra.mxu0 %v1584
        %2247 = vmatprep.subr.bf16.mxu0 %v1589
        %2248 = vmatpush1.bf16.msra.mxu0 %v1588
        %2249 = vmatprep.mubr.bf16.mxu0 %v539
        %2250 = vmatmul.mubr.bf16.gmra.mrb[0].mxu0 %v536
        %v2251 = vpop.f32.mrb[0].mxu0
        %v2252 = vadd.f32 %v2199, %v2251
        %v2253 = vpop.f32.mrb[0].mxu0
        %v2254 = vadd.f32 %v2201, %v2253
        %v2255 = vpop.f32.mrb[0].mxu0
        %v2256 = vadd.f32 %v2203, %v2255
        %v2257 = vpop.f32.mrb[0].mxu0
        %v2258 = vadd.f32 %v2205, %v2257
        %2259 = vmatprep.mubr.bf16.mxu0 %v538
        %2260 = vmatmul.mubr.bf16.gmra.mrb[0].mxu0 %v535
        %v2261 = vpop.f32.mrb[0].mxu0
        %v2262 = vadd.f32 %v2209, %v2261
        %v2263 = vpop.f32.mrb[0].mxu0
        %v2264 = vadd.f32 %v2211, %v2263
        %v2265 = vpop.f32.mrb[0].mxu0
        %v2266 = vadd.f32 %v2213, %v2265
        %v2267 = vpop.f32.mrb[0].mxu0
        %v2268 = vadd.f32 %v2215, %v2267
        %2269 = vdwg.mxu0
        %v2270 = vmax.f32 %v2040, 0.0
        %v2271 = vmax.f32 %v2042, 0.0
        %v2272 = vmax.f32 %v2252, 0.0
        %v2273 = vmax.f32 %v2254, 0.0
        %v2274 = vmax.f32 %v2044, 0.0
        %v2275 = vmax.f32 %v2046, 0.0
        %v2276 = vmax.f32 %v2256, 0.0
        %v2277 = vmax.f32 %v2258, 0.0
        %v2278 = vmax.f32 %v2050, 0.0
        %v2279 = vmax.f32 %v2052, 0.0
        %v2280 = vmax.f32 %v2262, 0.0
        %v2281 = vmax.f32 %v2264, 0.0
        %v2282 = vmax.f32 %v2054, 0.0
        %v2283 = vmax.f32 %v2056, 0.0
        %v2284 = vmax.f32 %v2266, 0.0
        %v2285 = vmax.f32 %v2268, 0.0
        %v2286 = vpack.c.bf16 %v2274, %v2270
        %v2287 = vpack.c.bf16 %v2275, %v2271
        %v2288 = vpack.c.bf16 %v2276, %v2272
        %v2289 = vpack.c.bf16 %v2277, %v2273
        %v2290 = vpack.c.bf16 %v2282, %v2278
        %v2291 = vpack.c.bf16 %v2283, %v2279
        %v2292 = vpack.c.bf16 %v2284, %v2280
        %v2293 = vpack.c.bf16 %v2285, %v2281
        %v2302 = vunpack.c.l.b16 %v2286
        %v2303 = vunpack.c.l.b16 %v2287
        %v2304 = vunpack.c.l.b16 %v2288
        %v2305 = vunpack.c.l.b16 %v2289
        %v2306 = vunpack.c.h.b16 %v2286
        %v2307 = vunpack.c.h.b16 %v2287
        %v2308 = vunpack.c.h.b16 %v2288
        %v2309 = vunpack.c.h.b16 %v2289
        %v2310 = vunpack.c.l.b16 %v2290
        %v2311 = vunpack.c.l.b16 %v2291
        %v2312 = vunpack.c.l.b16 %v2292
        %v2313 = vunpack.c.l.b16 %v2293
        %v2314 = vunpack.c.h.b16 %v2290
        %v2315 = vunpack.c.h.b16 %v2291
        %v2316 = vunpack.c.h.b16 %v2292
        %v2317 = vunpack.c.h.b16 %v2293
        %v2318 = vpack.c.b16 %v2303, %v2302
        %v2319 = vpack.c.b16 %v2305, %v2304
        %v2320 = vpack.c.b16 %v2307, %v2306
        %v2321 = vpack.c.b16 %v2309, %v2308
        %v2322 = vpack.c.b16 %v2311, %v2310
        %v2323 = vpack.c.b16 %v2313, %v2312
        %v2324 = vpack.c.b16 %v2315, %v2314
        %v2325 = vpack.c.b16 %v2317, %v2316
        %2334 = vst [vmem:[%s198] sm:$0xff] %v2318
        %2335 = vst [vmem:[%s198 + $0x8] sm:$0xff] %v2319
        %2336 = vst [vmem:[%s198 + $0x10] sm:$0xff] %v2320
        %2337 = vst [vmem:[%s198 + $0x18] sm:$0xff] %v2321
        %2338 = vst [vmem:[%s198 + $0x20] sm:$0xff] %v2322
        %2339 = vst [vmem:[%s198 + $0x28] sm:$0xff] %v2323
        %vm2340 = vcmask 1040384
        %vm2341 = vsmask.f32 256
        %vm2342 = vmand %vm2340, %vm2341
        %vm2343 = vcmask 1044484
        %vm2344 = vsmask.f32 4352
        %vm2345 = vmand %vm2343, %vm2344
        %vm2346 = vmor %vm2345, %vm2342
        %v2347 = vld [vmem:[%s198 + $0x30] sm:$0x11]
        %v2348 = vsel %vm2346, %v2324, %v2347
        %2349 = vst [vmem:[%s198 + $0x30] sm:$0x11] %v2348
        %v2350 = vld [vmem:[%s198 + $0x38] sm:$0x11]
        %v2351 = vsel %vm2346, %v2325, %v2350
        %2352 = vst [vmem:[%s198 + $0x38] sm:$0x11] %v2351
        %p2353 = scmp.lt.s32.totalorder %s16, 1
        %s2354 = scalar_select %p2353, %s16, 1
        %s2355 = smul.addr %s2354, 16
        %s2356 = smul.addr %s2355, 4
        %s2357 = scalar_lea.vmem %s3, %s2356
        // Predicated region
        $region41: #{motion_attention_64_forward.5} parent=31 // pred_check
          %p2358 = pneg %p102
        $region42: #{motion_attention_64_forward.5} parent=31 // pred_check_branch
          %2360 = sbr.rel (%p2358) target = $region44
        $region43: #{motion_attention_64_forward.5} parent=31 // pred_region
          _
        $region44: #{motion_attention_64_forward.5} parent=31 // pred_fallthru
          _
      $region32: #{motion_attention_64_forward.5} parent=5 // pred_fallthru
        _
      %p2361 = scmp.le.s32.totalorder 2, %s11
      // Predicated region
      $region45: #{motion_attention_64_forward.5} parent=5 // pred_check
        %p2362 = pneg %p2361
      $region46: #{motion_attention_64_forward.5} parent=5 // pred_check_branch
        %2364 = sbr.rel (%p2362) target = $region48
      $region47: #{motion_attention_64_forward.5} parent=5 // pred_region
        %s2365 = ssub.s32 %s11, 2
        // Predicated region
        $region49: #{motion_attention_64_forward.5} parent=47 // pred_check
          %p2366 = pneg %p108
        $region50: #{motion_attention_64_forward.5} parent=47 // pred_check_branch
          %2368 = sbr.rel (%p2366) target = $region52
        $region51: #{motion_attention_64_forward.5} parent=47 // pred_region
          %p2369 = scmp.lt.s32.totalorder %s17, 1
          %s2370 = scalar_select %p2369, %s17, 1
          %s2371 = smul.addr %s2370, 16
          %s2372 = smul.addr %s2371, 4
          %s2373 = scalar_lea.vmem %s3, %s2372
        $region52: #{motion_attention_64_forward.5} parent=47 // pred_fallthru
          _
      $region48: #{motion_attention_64_forward.5} parent=5 // pred_fallthru
        _
    $region6: #{motion_attention_64_forward.5} parent=1 // loop_footer
      %s15 = sadd.s32 1, %s11
    $region7: #{motion_attention_64_forward.5} parent=1 // loop_footer_branch
      %10 = sbr.rel target = $region3
    $region8: #{motion_attention_64_forward.5} parent=1 // loop_exit
      _
    %2374 = vsyncpa [#allocation3], 1
    %s2375 = scalar_lea.sflag [#allocation3], 1
    %2376 = vsyncpa %s2375, 1
    %2377 = vsyncpa [#allocation5], 1

// kernel: motion_attention_64_forward.7
$region0: #{motion_attention_64_forward.7}
  #allocation0 [shape = 'u32[]', space=smem, size = 0x4, offset = 0x4, fixed_abs, tag = 'smem constant byte address 0x4 - core index']
  #allocation1 [shape = 'u32[144,128]{1,0:T(1,128)}', space=vmem, size = 0x12000, scoped, tag = 'internal scratch']
  %s0 = inlined_call_operand.vmem [shape: bf16[2,312,64], index: 0, kind: input, shape index: {}]
  %s1 = inlined_call_operand.vmem [shape: bf16[256,128], index: 1, kind: input, shape index: {}]
  %s2 = inlined_call_operand.vmem [shape: f32[1,128], index: 2, kind: input, shape index: {}]
  %s3 = inlined_call_operand.vmem [shape: bf16[2,289,128], index: 3, kind: output, shape index: {}]
  %s4 = sld [smem:[#allocation0]]
  $region45: #{motion_attention_64_forward.7} parent=0
    _
  %s6 = ssub.s32 1, %s4
  %s7 = scalar_select 0, %s6, %s4
  loop: start=0, step=1, limit=4
  $region2: #{motion_attention_64_forward.7} parent=0 // loop_pre_header
    _
  $region3: #{motion_attention_64_forward.7} parent=0 // loop_header
    %s9 = sphi 0, %s13
    %p10 = scmp.ge.s32.totalorder %s9, 4
    %s19 = sphi 0, %s21
    %s22 = sphi 0, %s19
    %s23 = sphi 0, %s22
    %s39 = sphi 0, %s23
    %s43 = sphi 0, %s43
    %s45 = sphi 0, %s43
    %s46 = sphi 0, %s45
    %s60 = sphi 0, %s46
    %s64 = sphi 0, %s64
    %s66 = sphi 0, %s64
    %s67 = sphi 0, %s66
    %s81 = sphi 0, %s67
    %s87 = sphi 0, %s89
    %s90 = sphi 0, %s87
    %s91 = sphi 0, %s90
    %s107 = sphi 0, %s91
  $region4: #{motion_attention_64_forward.7} parent=0 // loop_header_branch
    %12 = sbr.rel (%p10) target = $region8
  $region5: #{motion_attention_64_forward.7} parent=0 // loop_body
    %s14 = ssub.s32 %s9, 1
    %s15 = ssub.s32 %s9, 2
    %s16 = sadd.s32 %s9, 1
    %s17 = ssub.s32 %s9, %s16
    %p18 = scmp.eq.s32.totalorder %s17, 0
    %s20 = sadd.s32 %s19, 1
    %s21 = scalar_select %p18, %s19, %s20
    %p24 = pneg %p18
    %p25 = scmp.eq.s32.totalorder %s9, 1
    %p26 = por %p24, %p25
    %p27 = scmp.ne.s32.totalorder %s19, %s22
    %p28 = scmp.eq.s32.totalorder %s9, 0
    %p29 = por %p27, %p28
    %p30 = scmp.ne.s32.totalorder %s19, %s22
    %p31 = scmp.eq.s32.totalorder %s14, 1
    %p32 = por %p30, %p31
    %p33 = scmp.ne.s32.totalorder %s22, %s23
    %p34 = scmp.eq.s32.totalorder %s14, 0
    %p35 = por %p33, %p34
    %p36 = scmp.ne.s32.totalorder %s22, %s23
    %p37 = scmp.eq.s32.totalorder %s15, 1
    %p38 = por %p36, %p37
    %p40 = scmp.ne.s32.totalorder %s23, %s39
    %p41 = scmp.eq.s32.totalorder %s15, 0
    %p42 = por %p40, %p41
    %s44 = sadd.s32 %s43, 1
    %p47 = scmp.eq.s32.totalorder %s9, 1
    %p48 = scmp.ne.s32.totalorder %s43, %s45
    %p49 = scmp.eq.s32.totalorder %s9, 0
    %p50 = por %p48, %p49
    %p51 = scmp.ne.s32.totalorder %s43, %s45
    %p52 = scmp.eq.s32.totalorder %s14, 1
    %p53 = por %p51, %p52
    %p54 = scmp.ne.s32.totalorder %s45, %s46
    %p55 = scmp.eq.s32.totalorder %s14, 0
    %p56 = por %p54, %p55
    %p57 = scmp.ne.s32.totalorder %s45, %s46
    %p58 = scmp.eq.s32.totalorder %s15, 1
    %p59 = por %p57, %p58
    %p61 = scmp.ne.s32.totalorder %s46, %s60
    %p62 = scmp.eq.s32.totalorder %s15, 0
    %p63 = por %p61, %p62
    %s65 = sadd.s32 %s64, 1
    %p68 = scmp.eq.s32.totalorder %s9, 1
    %p69 = scmp.ne.s32.totalorder %s64, %s66
    %p70 = scmp.eq.s32.totalorder %s9, 0
    %p71 = por %p69, %p70
    %p72 = scmp.ne.s32.totalorder %s64, %s66
    %p73 = scmp.eq.s32.totalorder %s14, 1
    %p74 = por %p72, %p73
    %p75 = scmp.ne.s32.totalorder %s66, %s67
    %p76 = scmp.eq.s32.totalorder %s14, 0
    %p77 = por %p75, %p76
    %p78 = scmp.ne.s32.totalorder %s66, %s67
    %p79 = scmp.eq.s32.totalorder %s15, 1
    %p80 = por %p78, %p79
    %p82 = scmp.ne.s32.totalorder %s67, %s81
    %p83 = scmp.eq.s32.totalorder %s15, 0
    %p84 = por %p82, %p83
    %s85 = ssub.s32 %s9, %s16
    %p86 = scmp.eq.s32.totalorder %s85, 0
    %s88 = sadd.s32 %s87, 1
    %s89 = scalar_select %p86, %s87, %s88
    %p92 = pneg %p86
    %p93 = scmp.eq.s32.totalorder %s9, 1
    %p94 = por %p92, %p93
    %p95 = scmp.ne.s32.totalorder %s87, %s90
    %p96 = scmp.eq.s32.totalorder %s9, 0
    %p97 = por %p95, %p96
    %p98 = scmp.ne.s32.totalorder %s87, %s90
    %p99 = scmp.eq.s32.totalorder %s14, 1
    %p100 = por %p98, %p99
    %p101 = scmp.ne.s32.totalorder %s90, %s91
    %p102 = scmp.eq.s32.totalorder %s14, 0
    %p103 = por %p101, %p102
    %p104 = scmp.ne.s32.totalorder %s90, %s91
    %p105 = scmp.eq.s32.totalorder %s15, 1
    %p106 = por %p104, %p105
    %p108 = scmp.ne.s32.totalorder %s91, %s107
    %p109 = scmp.eq.s32.totalorder %s15, 0
    %p110 = por %p108, %p109
    %p111 = scmp.le.s32.totalorder 1, %s9
    %p112 = scmp.lt.s32.totalorder %s9, 3
    %p113 = pnand %p111, %p112
    %p114 = pneg %p113
    // Predicated region
    $region9: #{motion_attention_64_forward.7} parent=5 // pred_check
      _
    $region10: #{motion_attention_64_forward.7} parent=5 // pred_check_branch
      %116 = sbr.rel (%p113) target = $region12
    $region11: #{motion_attention_64_forward.7} parent=5 // pred_region
      %s117 = ssub.s32 %s9, 1
      // Predicated region
      $region13: #{motion_attention_64_forward.7} parent=11 // pred_check
        %p118 = pneg %p56
      $region14: #{motion_attention_64_forward.7} parent=11 // pred_check_branch
        %120 = sbr.rel (%p118) target = $region16
      $region15: #{motion_attention_64_forward.7} parent=11 // pred_region
        _
      $region16: #{motion_attention_64_forward.7} parent=11 // pred_fallthru
        _
      // Predicated region
      $region17: #{motion_attention_64_forward.7} parent=11 // pred_check
        %p121 = pneg %p77
      $region18: #{motion_attention_64_forward.7} parent=11 // pred_check_branch
        %123 = sbr.rel (%p121) target = $region20
      $region19: #{motion_attention_64_forward.7} parent=11 // pred_region
        _
      $region20: #{motion_attention_64_forward.7} parent=11 // pred_fallthru
        _
    $region12: #{motion_attention_64_forward.7} parent=5 // pred_fallthru
      _
    %p124 = scmp.lt.s32.totalorder %s9, 2
    // Predicated region
    $region21: #{motion_attention_64_forward.7} parent=5 // pred_check
      %p125 = pneg %p124
    $region22: #{motion_attention_64_forward.7} parent=5 // pred_check_branch
      %127 = sbr.rel (%p125) target = $region24
    $region23: #{motion_attention_64_forward.7} parent=5 // pred_region
      // Predicated region
      $region25: #{motion_attention_64_forward.7} parent=23 // pred_check
        %p128 = pneg %p29
      $region26: #{motion_attention_64_forward.7} parent=23 // pred_check_branch
        %130 = sbr.rel (%p128) target = $region28
      $region27: #{motion_attention_64_forward.7} parent=23 // pred_region
        %p131 = scmp.lt.s32.totalorder %s9, 1
        %s132 = scalar_select %p131, %s9, 1
        %s133 = smul.addr %s132, 39
        %s134 = smul.addr %s133, 4
        %s135 = scalar_lea.vmem %s0, %s134
      $region28: #{motion_attention_64_forward.7} parent=23 // pred_fallthru
        _
    $region24: #{motion_attention_64_forward.7} parent=5 // pred_fallthru
      _
    %p136 = scmp.le.s32.totalorder 1, %s9
    %p137 = scmp.lt.s32.totalorder %s9, 3
    %p138 = pnand %p136, %p137
    %p139 = pneg %p138
    // Predicated region
    $region29: #{motion_attention_64_forward.7} parent=5 // pred_check
      _
    $region30: #{motion_attention_64_forward.7} parent=5 // pred_check_branch
      %141 = sbr.rel (%p138) target = $region32
    $region31: #{motion_attention_64_forward.7} parent=5 // pred_region
      %s142 = ssub.s32 %s9, 1
      %p143 = scmp.lt.s32.totalorder %s14, 1
      %s144 = scalar_select %p143, %s14, 1
      %s145 = smul.addr %s144, 39
      %s146 = smul.addr %s145, 4
      %s147 = scalar_lea.vmem %s0, %s146
      %p148 = pneg %p35
      %p149 = pneg %p32
      %p150 = pneg %p56
      %p151 = pneg %p53
      %p152 = pneg %p77
      %p153 = pneg %p74
      %p154 = pneg %p103
      %p155 = pneg %p100
      %p156 = scmp.lt.s32.totalorder %s14, 1
      %s157 = scalar_select %p156, %s14, 1
      %s158 = smul.addr %s157, 37
      %s159 = smul.addr %s158, 4
      %s160 = scalar_lea.vmem %s3, %s159
      %p161 = scmp.lt.s32.totalorder %s14, 1
      %s162 = scalar_select %p161, %s14, 1
      %s163 = smul.addr %s162, 39
      %s164 = smul.addr %s163, 4
      %s165 = scalar_lea.vmem %s0, %s164
      %p166 = scmp.lt.s32.totalorder %s14, 1
      %s167 = scalar_select %p166, %s14, 1
      %s168 = smul.addr %s167, 37
      %s169 = smul.addr %s168, 4
      %s170 = scalar_lea.vmem %s3, %s169
      %v172 = vld [vmem:[%s165] sm:$0xf]
      %v173 = vld [vmem:[%s165 + $0x4] sm:$0xf]
      %v174 = vld [vmem:[%s165 + $0x8] sm:$0xf]
      %v175 = vld [vmem:[%s165 + $0xc] sm:$0xf]
      %v176 = vld [vmem:[%s165 + $0x10] sm:$0xf]
      %v177 = vld [vmem:[%s165 + $0x14] sm:$0xf]
      %v178 = vld [vmem:[%s165 + $0x18] sm:$0xf]
      %v179 = vld [vmem:[%s165 + $0x1c] sm:$0xf]
      %v180 = vld [vmem:[%s165 + $0x20] sm:$0xf]
      %v181 = vld [vmem:[%s165 + $0x24] sm:$0xf]
      %v182 = vld [vmem:[%s165 + $0x28] sm:$0xf]
      %v183 = vld [vmem:[%s165 + $0x2c] sm:$0xf]
      %v184 = vld [vmem:[%s165 + $0x30] sm:$0xf]
      %v185 = vld [vmem:[%s165 + $0x34] sm:$0xf]
      %v186 = vld [vmem:[%s165 + $0x38] sm:$0xf]
      %v187 = vld [vmem:[%s165 + $0x3c] sm:$0xf]
      %v188 = vld [vmem:[%s165 + $0x40] sm:$0xf]
      %v189 = vld [vmem:[%s165 + $0x44] sm:$0xf]
      %v190 = vld [vmem:[%s165 + $0x48] sm:$0xf]
      %v191 = vld [vmem:[%s165 + $0x4c] sm:$0xf]
      %v192 = vld [vmem:[%s165 + $0x50] sm:$0xf]
      %v193 = vld [vmem:[%s165 + $0x54] sm:$0xf]
      %v194 = vld [vmem:[%s165 + $0x58] sm:$0xf]
      %v195 = vld [vmem:[%s165 + $0x5c] sm:$0xf]
      %v196 = vld [vmem:[%s165 + $0x60] sm:$0xf]
      %v197 = vld [vmem:[%s165 + $0x64] sm:$0xf]
      %v198 = vld [vmem:[%s165 + $0x68] sm:$0xf]
      %v199 = vld [vmem:[%s165 + $0x6c] sm:$0xf]
      %v200 = vld [vmem:[%s165 + $0x70] sm:$0xf]
      %v201 = vld [vmem:[%s165 + $0x74] sm:$0xf]
      %v202 = vld [vmem:[%s165 + $0x78] sm:$0xf]
      %v203 = vld [vmem:[%s165 + $0x7c] sm:$0xf]
      %v204 = vld [vmem:[%s165 + $0x80] sm:$0xf]
      %v205 = vld [vmem:[%s165 + $0x84] sm:$0xf]
      %v206 = vld [vmem:[%s165 + $0x88] sm:$0xf]
      %v207 = vld [vmem:[%s165 + $0x8c] sm:$0xf]
      %v208 = vld [vmem:[%s165 + $0x90] sm:$0xf]
      %v209 = vld [vmem:[%s165 + $0x94] sm:$0xf]
      %v210 = vld [vmem:[%s165 + $0x98] sm:$0xf]
      %v211 = vld [vmem:[%s1] sm:$0xf]
      %v212 = vld [vmem:[%s1 + $0x4] sm:$0xf]
      %v213 = vld [vmem:[%s1 + $0x8] sm:$0xf]
      %v214 = vld [vmem:[%s1 + $0xc] sm:$0xf]
      %v215 = vld [vmem:[%s1 + $0x10] sm:$0xf]
      %v216 = vld [vmem:[%s1 + $0x14] sm:$0xf]
      %v217 = vld [vmem:[%s1 + $0x18] sm:$0xf]
      %v218 = vld [vmem:[%s1 + $0x1c] sm:$0xf]
      %v219 = vld [vmem:[%s1 + $0x20] sm:$0xf]
      %v220 = vld [vmem:[%s1 + $0x24] sm:$0xf]
      %v221 = vld [vmem:[%s1 + $0x28] sm:$0xf]
      %v222 = vld [vmem:[%s1 + $0x2c] sm:$0xf]
      %v223 = vld [vmem:[%s1 + $0x30] sm:$0xf]
      %v224 = vld [vmem:[%s1 + $0x34] sm:$0xf]
      %v225 = vld [vmem:[%s1 + $0x38] sm:$0xf]
      %v226 = vld [vmem:[%s1 + $0x3c] sm:$0xf]
      %v227 = vld [vmem:[%s1 + $0x40] sm:$0xf]
      %v228 = vld [vmem:[%s1 + $0x44] sm:$0xf]
      %v229 = vld [vmem:[%s1 + $0x48] sm:$0xf]
      %v230 = vld [vmem:[%s1 + $0x4c] sm:$0xf]
      %v231 = vld [vmem:[%s1 + $0x50] sm:$0xf]
      %v232 = vld [vmem:[%s1 + $0x54] sm:$0xf]
      %v233 = vld [vmem:[%s1 + $0x58] sm:$0xf]
      %v234 = vld [vmem:[%s1 + $0x5c] sm:$0xf]
      %v235 = vld [vmem:[%s1 + $0x60] sm:$0xf]
      %v236 = vld [vmem:[%s1 + $0x64] sm:$0xf]
      %v237 = vld [vmem:[%s1 + $0x68] sm:$0xf]
      %v238 = vld [vmem:[%s1 + $0x6c] sm:$0xf]
      %v239 = vld [vmem:[%s1 + $0x70] sm:$0xf]
      %v240 = vld [vmem:[%s1 + $0x74] sm:$0xf]
      %v241 = vld [vmem:[%s1 + $0x78] sm:$0xf]
      %v242 = vld [vmem:[%s1 + $0x7c] sm:$0xf]
      %v280 = vunpack.c.l.b16 %v172
      %v281 = vunpack.c.l.b16 %v173
      %v282 = vunpack.c.l.b16 %v174
      %v283 = vunpack.c.l.b16 %v175
      %v284 = vunpack.c.l.b16 %v176
      %v285 = vunpack.c.l.b16 %v177
      %v286 = vunpack.c.l.b16 %v178
      %v287 = vunpack.c.l.b16 %v179
      %v288 = vunpack.c.l.b16 %v180
      %v289 = vunpack.c.l.b16 %v181
      %v290 = vunpack.c.l.b16 %v182
      %v291 = vunpack.c.l.b16 %v183
      %v292 = vunpack.c.l.b16 %v184
      %v293 = vunpack.c.l.b16 %v185
      %v294 = vunpack.c.l.b16 %v186
      %v295 = vunpack.c.l.b16 %v187
      %v296 = vunpack.c.l.b16 %v188
      %v297 = vunpack.c.l.b16 %v189
      %v298 = vunpack.c.l.b16 %v190
      %v299 = vunpack.c.l.b16 %v191
      %v300 = vunpack.c.l.b16 %v192
      %v301 = vunpack.c.l.b16 %v193
      %v302 = vunpack.c.l.b16 %v194
      %v303 = vunpack.c.l.b16 %v195
      %v304 = vunpack.c.l.b16 %v196
      %v305 = vunpack.c.l.b16 %v197
      %v306 = vunpack.c.l.b16 %v198
      %v307 = vunpack.c.l.b16 %v199
      %v308 = vunpack.c.l.b16 %v200
      %v309 = vunpack.c.l.b16 %v201
      %v310 = vunpack.c.l.b16 %v202
      %v311 = vunpack.c.l.b16 %v203
      %v312 = vunpack.c.l.b16 %v204
      %v313 = vunpack.c.l.b16 %v205
      %v314 = vunpack.c.l.b16 %v206
      %v315 = vunpack.c.l.b16 %v207
      %v316 = vunpack.c.l.b16 %v208
      %v317 = vpack.c.b16 %v281, %v280
      %v318 = vpack.c.b16 %v283, %v282
      %v319 = vpack.c.b16 %v285, %v284
      %v320 = vpack.c.b16 %v287, %v286
      %v321 = vpack.c.b16 %v289, %v288
      %v322 = vpack.c.b16 %v291, %v290
      %v323 = vpack.c.b16 %v293, %v292
      %v324 = vpack.c.b16 %v295, %v294
      %v325 = vpack.c.b16 %v297, %v296
      %v326 = vpack.c.b16 %v299, %v298
      %v327 = vpack.c.b16 %v301, %v300
      %v328 = vpack.c.b16 %v303, %v302
      %v329 = vpack.c.b16 %v305, %v304
      %v330 = vpack.c.b16 %v307, %v306
      %v331 = vpack.c.b16 %v309, %v308
      %v332 = vpack.c.b16 %v311, %v310
      %v333 = vpack.c.b16 %v313, %v312
      %v334 = vpack.c.b16 %v315, %v314
      %v335 = vpack.c.b16 %v316, %v316
      %vm336 = vsmask.f32 7424
      %v338 = vshrl.u32 %v317, 16
      %v340 = vshll.u32 %v317, 16
      %v342 = vrot.slane %v340, 1
      %v343 = vor.u32 %v338, %v342
      %v345 = vshll.u32 %v318, 16
      %v347 = vrot.slane %v345, 1
      %v348 = vsel %vm336, %v343, %v347
      %v349 = vshrl.u32 %v318, 16
      %v351 = vor.u32 %v349, %v347
      %v353 = vshll.u32 %v319, 16
      %v355 = vrot.slane %v353, 1
      %v356 = vsel %vm336, %v351, %v355
      %v357 = vshrl.u32 %v319, 16
      %v359 = vor.u32 %v357, %v355
      %v361 = vshll.u32 %v320, 16
      %v363 = vrot.slane %v361, 1
      %v364 = vsel %vm336, %v359, %v363
      %v365 = vshrl.u32 %v320, 16
      %v367 = vor.u32 %v365, %v363
      %v369 = vshll.u32 %v321, 16
      %v371 = vrot.slane %v369, 1
      %v372 = vsel %vm336, %v367, %v371
      %v373 = vshrl.u32 %v321, 16
      %v375 = vor.u32 %v373, %v371
      %v377 = vshll.u32 %v322, 16
      %v379 = vrot.slane %v377, 1
      %v380 = vsel %vm336, %v375, %v379
      %v381 = vshrl.u32 %v322, 16
      %v383 = vor.u32 %v381, %v379
      %v385 = vshll.u32 %v323, 16
      %v387 = vrot.slane %v385, 1
      %v388 = vsel %vm336, %v383, %v387
      %v389 = vshrl.u32 %v323, 16
      %v391 = vor.u32 %v389, %v387
      %v393 = vshll.u32 %v324, 16
      %v395 = vrot.slane %v393, 1
      %v396 = vsel %vm336, %v391, %v395
      %v397 = vshrl.u32 %v324, 16
      %v399 = vor.u32 %v397, %v395
      %v401 = vshll.u32 %v325, 16
      %v403 = vrot.slane %v401, 1
      %v404 = vsel %vm336, %v399, %v403
      %v405 = vshrl.u32 %v325, 16
      %v407 = vor.u32 %v405, %v403
      %v409 = vshll.u32 %v326, 16
      %v411 = vrot.slane %v409, 1
      %v412 = vsel %vm336, %v407, %v411
      %v413 = vshrl.u32 %v326, 16
      %v415 = vor.u32 %v413, %v411
      %v417 = vshll.u32 %v327, 16
      %v419 = vrot.slane %v417, 1
      %v420 = vsel %vm336, %v415, %v419
      %v421 = vshrl.u32 %v327, 16
      %v423 = vor.u32 %v421, %v419
      %v425 = vshll.u32 %v328, 16
      %v427 = vrot.slane %v425, 1
      %v428 = vsel %vm336, %v423, %v427
      %v429 = vshrl.u32 %v328, 16
      %v431 = vor.u32 %v429, %v427
      %v433 = vshll.u32 %v329, 16
      %v435 = vrot.slane %v433, 1
      %v436 = vsel %vm336, %v431, %v435
      %v437 = vshrl.u32 %v329, 16
      %v439 = vor.u32 %v437, %v435
      %v441 = vshll.u32 %v330, 16
      %v443 = vrot.slane %v441, 1
      %v444 = vsel %vm336, %v439, %v443
      %v445 = vshrl.u32 %v330, 16
      %v447 = vor.u32 %v445, %v443
      %v449 = vshll.u32 %v331, 16
      %v451 = vrot.slane %v449, 1
      %v452 = vsel %vm336, %v447, %v451
      %v453 = vshrl.u32 %v331, 16
      %v455 = vor.u32 %v453, %v451
      %v457 = vshll.u32 %v332, 16
      %v459 = vrot.slane %v457, 1
      %v460 = vsel %vm336, %v455, %v459
      %v461 = vshrl.u32 %v332, 16
      %v463 = vor.u32 %v461, %v459
      %v465 = vshll.u32 %v333, 16
      %v467 = vrot.slane %v465, 1
      %v468 = vsel %vm336, %v463, %v467
      %v469 = vshrl.u32 %v333, 16
      %v471 = vor.u32 %v469, %v467
      %v473 = vshll.u32 %v334, 16
      %v475 = vrot.slane %v473, 1
      %v476 = vsel %vm336, %v471, %v475
      %v477 = vshrl.u32 %v334, 16
      %v479 = vor.u32 %v477, %v475
      %v481 = vshll.u32 %v335, 16
      %v483 = vrot.slane %v481, 1
      %v484 = vsel %vm336, %v479, %v483
      %v485 = vshrl.u32 %v335, 16
      %v495 = vunpack.c.l.b16 %v219
      %v496 = vunpack.c.l.b16 %v220
      %v497 = vunpack.c.l.b16 %v221
      %v498 = vunpack.c.l.b16 %v222
      %v499 = vunpack.c.l.b16 %v223
      %v500 = vunpack.c.l.b16 %v224
      %v501 = vunpack.c.l.b16 %v225
      %v502 = vunpack.c.l.b16 %v226
      %v503 = vpack.c.b16 %v496, %v495
      %v504 = vpack.c.b16 %v498, %v497
      %v505 = vpack.c.b16 %v500, %v499
      %v506 = vpack.c.b16 %v502, %v501
      %vm511 = vcmask 523264
      %v513 = vsel %vm511, %v348, 0
      %v516 = vsel %vm511, %v356, 0
      %v519 = vsel %vm511, %v364, 0
      %v522 = vsel %vm511, %v372, 0
      %v525 = vsel %vm511, %v380, 0
      %v528 = vsel %vm511, %v388, 0
      %v531 = vsel %vm511, %v396, 0
      %v534 = vsel %vm511, %v404, 0
      %v537 = vsel %vm511, %v412, 0
      %v540 = vsel %vm511, %v420, 0
      %v543 = vsel %vm511, %v428, 0
      %v546 = vsel %vm511, %v436, 0
      %v549 = vsel %vm511, %v444, 0
      %v552 = vsel %vm511, %v452, 0
      %v555 = vsel %vm511, %v460, 0
      %v558 = vsel %vm511, %v468, 0
      %v561 = vsel %vm511, %v476, 0
      %v564 = vsel %vm511, %v484, 0
      %v567 = vsel %vm511, %v485, 0
      %569 = vmatprep.subr.bf16.mxu0 0
      %570 = vmatpush1.bf16.msra.mxu0 %v503
      %571 = vmatprep.subr.bf16.mxu0 0
      %572 = vmatpush1.bf16.msra.mxu0 %v504
      %573 = vmatprep.subr.bf16.mxu0 0
      %574 = vmatpush1.bf16.msra.mxu0 %v505
      %575 = vmatprep.subr.bf16.mxu0 0
      %576 = vmatpush1.bf16.msra.mxu0 %v506
      %577 = vmatprep.subr.bf16.mxu0 0
      %578 = vmatpush1.bf16.msra.mxu0 0
      %579 = vmatprep.subr.bf16.mxu0 0
      %580 = vmatpush1.bf16.msra.mxu0 0
      %581 = vmatprep.subr.bf16.mxu0 0
      %582 = vmatpush1.bf16.msra.mxu0 0
      %583 = vmatprep.subr.bf16.mxu0 0
      %584 = vmatpush1.bf16.msra.mxu0 0
      %585 = vmatprep.subr.bf16.mxu0 0
      %586 = vmatpush1.bf16.msra.mxu0 0
      %587 = vmatprep.subr.bf16.mxu0 0
      %588 = vmatpush1.bf16.msra.mxu0 0
      %589 = vmatprep.subr.bf16.mxu0 0
      %590 = vmatpush1.bf16.msra.mxu0 0
      %591 = vmatprep.subr.bf16.mxu0 0
      %592 = vmatpush1.bf16.msra.mxu0 0
      %593 = vmatprep.subr.bf16.mxu0 0
      %594 = vmatpush1.bf16.msra.mxu0 0
      %595 = vmatprep.subr.bf16.mxu0 0
      %596 = vmatpush1.bf16.msra.mxu0 0
      %597 = vmatprep.subr.bf16.mxu0 0
      %598 = vmatpush1.bf16.msra.mxu0 0
      %599 = vmatprep.subr.bf16.mxu0 0
      %600 = vmatpush1.bf16.msra.mxu0 0
      %601 = vmatprep.mubr.bf16.mxu0 0
      %602 = vmatmul.mubr.bf16.gmra.mrb[0].mxu0 %v513
      %v603 = vpop.f32.mrb[0].mxu0
      %v604 = vadd.f32 0.0, %v603
      %v605 = vpop.f32.mrb[0].mxu0
      %v606 = vpop.f32.mrb[0].mxu0
      %v607 = vadd.f32 0.0, %v606
      %v608 = vpop.f32.mrb[0].mxu0
      %609 = vmatprep.mubr.bf16.mxu0 0
      %610 = vmatmul.mubr.bf16.gmra.mrb[0].mxu0 %v516
      %v611 = vpop.f32.mrb[0].mxu0
      %v612 = vadd.f32 0.0, %v611
      %v613 = vpop.f32.mrb[0].mxu0
      %v614 = vpop.f32.mrb[0].mxu0
      %v615 = vadd.f32 0.0, %v614
      %v616 = vpop.f32.mrb[0].mxu0
      %617 = vmatprep.mubr.bf16.mxu0 0
      %618 = vmatmul.mubr.bf16.gmra.mrb[0].mxu0 %v519
      %v619 = vpop.f32.mrb[0].mxu0
      %v620 = vadd.f32 0.0, %v619
      %v621 = vpop.f32.mrb[0].mxu0
      %v622 = vpop.f32.mrb[0].mxu0
      %v623 = vadd.f32 0.0, %v622
      %v624 = vpop.f32.mrb[0].mxu0
      %625 = vmatprep.mubr.bf16.mxu0 0
      %626 = vmatmul.mubr.bf16.gmra.mrb[0].mxu0 %v522
      %v627 = vpop.f32.mrb[0].mxu0
      %v628 = vadd.f32 0.0, %v627
      %v629 = vpop.f32.mrb[0].mxu0
      %v630 = vpop.f32.mrb[0].mxu0
      %v631 = vadd.f32 0.0, %v630
      %v632 = vpop.f32.mrb[0].mxu0
      %633 = vmatprep.mubr.bf16.mxu0 0
      %634 = vmatmul.mubr.bf16.gmra.mrb[0].mxu0 %v525
      %v635 = vpop.f32.mrb[0].mxu0
      %v636 = vadd.f32 0.0, %v635
      %v637 = vpop.f32.mrb[0].mxu0
      %v638 = vpop.f32.mrb[0].mxu0
      %v639 = vadd.f32 0.0, %v638
      %v640 = vpop.f32.mrb[0].mxu0
      %641 = vmatprep.mubr.bf16.mxu0 0
      %642 = vmatmul.mubr.bf16.gmra.mrb[0].mxu0 %v528
      %v643 = vpop.f32.mrb[0].mxu0
      %v644 = vadd.f32 0.0, %v643
      %v645 = vpop.f32.mrb[0].mxu0
      %v646 = vpop.f32.mrb[0].mxu0
      %v647 = vadd.f32 0.0, %v646
      %v648 = vpop.f32.mrb[0].mxu0
      %649 = vmatprep.mubr.bf16.mxu0 0
      %650 = vmatmul.mubr.bf16.gmra.mrb[0].mxu0 %v531
      %v651 = vpop.f32.mrb[0].mxu0
      %v652 = vadd.f32 0.0, %v651
      %v653 = vpop.f32.mrb[0].mxu0
      %v654 = vpop.f32.mrb[0].mxu0
      %v655 = vadd.f32 0.0, %v654
      %v656 = vpop.f32.mrb[0].mxu0
      %657 = vmatprep.mubr.bf16.mxu0 0
      %658 = vmatmul.mubr.bf16.gmra.mrb[0].mxu0 %v534
      %v659 = vpop.f32.mrb[0].mxu0
      %v660 = vadd.f32 0.0, %v659
      %v661 = vpop.f32.mrb[0].mxu0
      %v662 = vpop.f32.mrb[0].mxu0
      %v663 = vadd.f32 0.0, %v662
      %v664 = vpop.f32.mrb[0].mxu0
      %665 = vmatprep.mubr.bf16.mxu0 0
      %666 = vmatmul.mubr.bf16.gmra.mrb[0].mxu0 %v537
      %v667 = vpop.f32.mrb[0].mxu0
      %v668 = vadd.f32 0.0, %v667
      %v669 = vpop.f32.mrb[0].mxu0
      %v670 = vpop.f32.mrb[0].mxu0
      %v671 = vadd.f32 0.0, %v670
      %v672 = vpop.f32.mrb[0].mxu0
      %673 = vmatprep.mubr.bf16.mxu0 0
      %674 = vmatmul.mubr.bf16.gmra.mrb[0].mxu0 %v540
      %v675 = vpop.f32.mrb[0].mxu0
      %v676 = vadd.f32 0.0, %v675
      %v677 = vpop.f32.mrb[0].mxu0
      %v678 = vpop.f32.mrb[0].mxu0
      %v679 = vadd.f32 0.0, %v678
      %v680 = vpop.f32.mrb[0].mxu0
      %681 = vmatprep.mubr.bf16.mxu0 0
      %682 = vmatmul.mubr.bf16.gmra.mrb[0].mxu0 %v543
      %v683 = vpop.f32.mrb[0].mxu0
      %v684 = vadd.f32 0.0, %v683
      %v685 = vpop.f32.mrb[0].mxu0
      %v686 = vpop.f32.mrb[0].mxu0
      %v687 = vadd.f32 0.0, %v686
      %v688 = vpop.f32.mrb[0].mxu0
      %689 = vmatprep.mubr.bf16.mxu0 0
      %690 = vmatmul.mubr.bf16.gmra.mrb[0].mxu0 %v546
      %v691 = vpop.f32.mrb[0].mxu0
      %v692 = vadd.f32 0.0, %v691
      %v693 = vpop.f32.mrb[0].mxu0
      %v694 = vpop.f32.mrb[0].mxu0
      %v695 = vadd.f32 0.0, %v694
      %v696 = vpop.f32.mrb[0].mxu0
      %697 = vmatprep.mubr.bf16.mxu0 0
      %698 = vmatmul.mubr.bf16.gmra.mrb[0].mxu0 %v549
      %v699 = vpop.f32.mrb[0].mxu0
      %v700 = vadd.f32 0.0, %v699
      %v701 = vpop.f32.mrb[0].mxu0
      %v702 = vpop.f32.mrb[0].mxu0
      %v703 = vadd.f32 0.0, %v702
      %v704 = vpop.f32.mrb[0].mxu0
      %705 = vmatprep.mubr.bf16.mxu0 0
      %706 = vmatmul.mubr.bf16.gmra.mrb[0].mxu0 %v552
      %v707 = vpop.f32.mrb[0].mxu0
      %v708 = vadd.f32 0.0, %v707
      %v709 = vpop.f32.mrb[0].mxu0
      %v710 = vpop.f32.mrb[0].mxu0
      %v711 = vadd.f32 0.0, %v710
      %v712 = vpop.f32.mrb[0].mxu0
      %713 = vmatprep.mubr.bf16.mxu0 0
      %714 = vmatmul.mubr.bf16.gmra.mrb[0].mxu0 %v555
      %v715 = vpop.f32.mrb[0].mxu0
      %v716 = vadd.f32 0.0, %v715
      %v717 = vpop.f32.mrb[0].mxu0
      %v718 = vpop.f32.mrb[0].mxu0
      %v719 = vadd.f32 0.0, %v718
      %v720 = vpop.f32.mrb[0].mxu0
      %721 = vmatprep.mubr.bf16.mxu0 0
      %722 = vmatmul.mubr.bf16.gmra.mrb[0].mxu0 %v558
      %v723 = vpop.f32.mrb[0].mxu0
      %v724 = vadd.f32 0.0, %v723
      %v725 = vpop.f32.mrb[0].mxu0
      %v726 = vpop.f32.mrb[0].mxu0
      %v727 = vadd.f32 0.0, %v726
      %v728 = vpop.f32.mrb[0].mxu0
      %729 = vmatprep.mubr.bf16.mxu0 0
      %730 = vmatmul.mubr.bf16.gmra.mrb[0].mxu0 %v561
      %v731 = vpop.f32.mrb[0].mxu0
      %v732 = vadd.f32 0.0, %v731
      %v733 = vpop.f32.mrb[0].mxu0
      %v734 = vpop.f32.mrb[0].mxu0
      %v735 = vadd.f32 0.0, %v734
      %v736 = vpop.f32.mrb[0].mxu0
      %737 = vmatprep.mubr.bf16.mxu0 0
      %738 = vmatmul.mubr.bf16.gmra.mrb[0].mxu0 %v564
      %v739 = vpop.f32.mrb[0].mxu0
      %v740 = vadd.f32 0.0, %v739
      %v741 = vpop.f32.mrb[0].mxu0
      %v742 = vpop.f32.mrb[0].mxu0
      %v743 = vadd.f32 0.0, %v742
      %v744 = vpop.f32.mrb[0].mxu0
      %745 = vmatprep.mubr.bf16.mxu0 0
      %746 = vmatmul.mubr.bf16.gmra.mrb[0].mxu0 %v567
      %v747 = vpop.f32.mrb[0].mxu0
      %v748 = vadd.f32 0.0, %v747
      %v749 = vpop.f32.mrb[0].mxu0
      %v750 = vpop.f32.mrb[0].mxu0
      %v751 = vpop.f32.mrb[0].mxu0
      %752 = vdwg.mxu0
      %v761 = vunpack.c.l.b16 %v211
      %v762 = vunpack.c.l.b16 %v212
      %v763 = vunpack.c.l.b16 %v213
      %v764 = vunpack.c.l.b16 %v214
      %v765 = vunpack.c.l.b16 %v215
      %v766 = vunpack.c.l.b16 %v216
      %v767 = vunpack.c.l.b16 %v217
      %v768 = vunpack.c.l.b16 %v218
      %v769 = vpack.c.b16 %v762, %v761
      %v770 = vpack.c.b16 %v764, %v763
      %v771 = vpack.c.b16 %v766, %v765
      %v772 = vpack.c.b16 %v768, %v767
      %v777 = vsel %vm511, %v317, 0
      %v779 = vsel %vm511, %v318, 0
      %v781 = vsel %vm511, %v319, 0
      %v783 = vsel %vm511, %v320, 0
      %v785 = vsel %vm511, %v321, 0
      %v787 = vsel %vm511, %v322, 0
      %v789 = vsel %vm511, %v323, 0
      %v791 = vsel %vm511, %v324, 0
      %v793 = vsel %vm511, %v325, 0
      %v795 = vsel %vm511, %v326, 0
      %v797 = vsel %vm511, %v327, 0
      %v799 = vsel %vm511, %v328, 0
      %v801 = vsel %vm511, %v329, 0
      %v803 = vsel %vm511, %v330, 0
      %v805 = vsel %vm511, %v331, 0
      %v807 = vsel %vm511, %v332, 0
      %v809 = vsel %vm511, %v333, 0
      %v811 = vsel %vm511, %v334, 0
      %v813 = vsel %vm511, %v335, 0
      %815 = vmatprep.subr.bf16.mxu0 0
      %816 = vmatpush1.bf16.msra.mxu0 %v769
      %817 = vmatprep.subr.bf16.mxu0 0
      %818 = vmatpush1.bf16.msra.mxu0 %v770
      %819 = vmatprep.subr.bf16.mxu0 0
      %820 = vmatpush1.bf16.msra.mxu0 %v771
      %821 = vmatprep.subr.bf16.mxu0 0
      %822 = vmatpush1.bf16.msra.mxu0 %v772
      %823 = vmatprep.subr.bf16.mxu0 0
      %824 = vmatpush1.bf16.msra.mxu0 0
      %825 = vmatprep.subr.bf16.mxu0 0
      %826 = vmatpush1.bf16.msra.mxu0 0
      %827 = vmatprep.subr.bf16.mxu0 0
      %828 = vmatpush1.bf16.msra.mxu0 0
      %829 = vmatprep.subr.bf16.mxu0 0
      %830 = vmatpush1.bf16.msra.mxu0 0
      %831 = vmatprep.subr.bf16.mxu0 0
      %832 = vmatpush1.bf16.msra.mxu0 0
      %833 = vmatprep.subr.bf16.mxu0 0
      %834 = vmatpush1.bf16.msra.mxu0 0
      %835 = vmatprep.subr.bf16.mxu0 0
      %836 = vmatpush1.bf16.msra.mxu0 0
      %837 = vmatprep.subr.bf16.mxu0 0
      %838 = vmatpush1.bf16.msra.mxu0 0
      %839 = vmatprep.subr.bf16.mxu0 0
      %840 = vmatpush1.bf16.msra.mxu0 0
      %841 = vmatprep.subr.bf16.mxu0 0
      %842 = vmatpush1.bf16.msra.mxu0 0
      %843 = vmatprep.subr.bf16.mxu0 0
      %844 = vmatpush1.bf16.msra.mxu0 0
      %845 = vmatprep.subr.bf16.mxu0 0
      %846 = vmatpush1.bf16.msra.mxu0 0
      %847 = vmatprep.mubr.bf16.mxu0 0
      %848 = vmatmul.mubr.bf16.gmra.mrb[0].mxu0 %v777
      %v849 = vpop.f32.mrb[0].mxu0
      %v850 = vadd.f32 %v604, %v849
      %v851 = vpop.f32.mrb[0].mxu0
      %v852 = vpop.f32.mrb[0].mxu0
      %v853 = vadd.f32 %v607, %v852
      %v854 = vpop.f32.mrb[0].mxu0
      %855 = vmatprep.mubr.bf16.mxu0 0
      %856 = vmatmul.mubr.bf16.gmra.mrb[0].mxu0 %v779
      %v857 = vpop.f32.mrb[0].mxu0
      %v858 = vadd.f32 %v612, %v857
      %v859 = vpop.f32.mrb[0].mxu0
      %v860 = vpop.f32.mrb[0].mxu0
      %v861 = vadd.f32 %v615, %v860
      %v862 = vpop.f32.mrb[0].mxu0
      %863 = vmatprep.mubr.bf16.mxu0 0
      %864 = vmatmul.mubr.bf16.gmra.mrb[0].mxu0 %v781
      %v865 = vpop.f32.mrb[0].mxu0
      %v866 = vadd.f32 %v620, %v865
      %v867 = vpop.f32.mrb[0].mxu0
      %v868 = vpop.f32.mrb[0].mxu0
      %v869 = vadd.f32 %v623, %v868
      %v870 = vpop.f32.mrb[0].mxu0
      %871 = vmatprep.mubr.bf16.mxu0 0
      %872 = vmatmul.mubr.bf16.gmra.mrb[0].mxu0 %v783
      %v873 = vpop.f32.mrb[0].mxu0
      %v874 = vadd.f32 %v628, %v873
      %v875 = vpop.f32.mrb[0].mxu0
      %v876 = vpop.f32.mrb[0].mxu0
      %v877 = vadd.f32 %v631, %v876
      %v878 = vpop.f32.mrb[0].mxu0
      %879 = vmatprep.mubr.bf16.mxu0 0
      %880 = vmatmul.mubr.bf16.gmra.mrb[0].mxu0 %v785
      %v881 = vpop.f32.mrb[0].mxu0
      %v882 = vadd.f32 %v636, %v881
      %v883 = vpop.f32.mrb[0].mxu0
      %v884 = vpop.f32.mrb[0].mxu0
      %v885 = vadd.f32 %v639, %v884
      %v886 = vpop.f32.mrb[0].mxu0
      %887 = vmatprep.mubr.bf16.mxu0 0
      %888 = vmatmul.mubr.bf16.gmra.mrb[0].mxu0 %v787
      %v889 = vpop.f32.mrb[0].mxu0
      %v890 = vadd.f32 %v644, %v889
      %v891 = vpop.f32.mrb[0].mxu0
      %v892 = vpop.f32.mrb[0].mxu0
      %v893 = vadd.f32 %v647, %v892
      %v894 = vpop.f32.mrb[0].mxu0
      %895 = vmatprep.mubr.bf16.mxu0 0
      %896 = vmatmul.mubr.bf16.gmra.mrb[0].mxu0 %v789
      %v897 = vpop.f32.mrb[0].mxu0
      %v898 = vadd.f32 %v652, %v897
      %v899 = vpop.f32.mrb[0].mxu0
      %v900 = vpop.f32.mrb[0].mxu0
      %v901 = vadd.f32 %v655, %v900
      %v902 = vpop.f32.mrb[0].mxu0
      %903 = vmatprep.mubr.bf16.mxu0 0
      %904 = vmatmul.mubr.bf16.gmra.mrb[0].mxu0 %v791
      %v905 = vpop.f32.mrb[0].mxu0
      %v906 = vadd.f32 %v660, %v905
      %v907 = vpop.f32.mrb[0].mxu0
      %v908 = vpop.f32.mrb[0].mxu0
      %v909 = vadd.f32 %v663, %v908
      %v910 = vpop.f32.mrb[0].mxu0
      %911 = vmatprep.mubr.bf16.mxu0 0
      %912 = vmatmul.mubr.bf16.gmra.mrb[0].mxu0 %v793
      %v913 = vpop.f32.mrb[0].mxu0
      %v914 = vadd.f32 %v668, %v913
      %v915 = vpop.f32.mrb[0].mxu0
      %v916 = vpop.f32.mrb[0].mxu0
      %v917 = vadd.f32 %v671, %v916
      %v918 = vpop.f32.mrb[0].mxu0
      %919 = vmatprep.mubr.bf16.mxu0 0
      %920 = vmatmul.mubr.bf16.gmra.mrb[0].mxu0 %v795
      %v921 = vpop.f32.mrb[0].mxu0
      %v922 = vadd.f32 %v676, %v921
      %v923 = vpop.f32.mrb[0].mxu0
      %v924 = vpop.f32.mrb[0].mxu0
      %v925 = vadd.f32 %v679, %v924
      %v926 = vpop.f32.mrb[0].mxu0
      %927 = vmatprep.mubr.bf16.mxu0 0
      %928 = vmatmul.mubr.bf16.gmra.mrb[0].mxu0 %v797
      %v929 = vpop.f32.mrb[0].mxu0
      %v930 = vadd.f32 %v684, %v929
      %v931 = vpop.f32.mrb[0].mxu0
      %v932 = vpop.f32.mrb[0].mxu0
      %v933 = vadd.f32 %v687, %v932
      %v934 = vpop.f32.mrb[0].mxu0
      %935 = vmatprep.mubr.bf16.mxu0 0
      %936 = vmatmul.mubr.bf16.gmra.mrb[0].mxu0 %v799
      %v937 = vpop.f32.mrb[0].mxu0
      %v938 = vadd.f32 %v692, %v937
      %v939 = vpop.f32.mrb[0].mxu0
      %v940 = vpop.f32.mrb[0].mxu0
      %v941 = vadd.f32 %v695, %v940
      %v942 = vpop.f32.mrb[0].mxu0
      %943 = vmatprep.mubr.bf16.mxu0 0
      %944 = vmatmul.mubr.bf16.gmra.mrb[0].mxu0 %v801
      %v945 = vpop.f32.mrb[0].mxu0
      %v946 = vadd.f32 %v700, %v945
      %v947 = vpop.f32.mrb[0].mxu0
      %v948 = vpop.f32.mrb[0].mxu0
      %v949 = vadd.f32 %v703, %v948
      %v950 = vpop.f32.mrb[0].mxu0
      %951 = vmatprep.mubr.bf16.mxu0 0
      %952 = vmatmul.mubr.bf16.gmra.mrb[0].mxu0 %v803
      %v953 = vpop.f32.mrb[0].mxu0
      %v954 = vadd.f32 %v708, %v953
      %v955 = vpop.f32.mrb[0].mxu0
      %v956 = vpop.f32.mrb[0].mxu0
      %v957 = vadd.f32 %v711, %v956
      %v958 = vpop.f32.mrb[0].mxu0
      %959 = vmatprep.mubr.bf16.mxu0 0
      %960 = vmatmul.mubr.bf16.gmra.mrb[0].mxu0 %v805
      %v961 = vpop.f32.mrb[0].mxu0
      %v962 = vadd.f32 %v716, %v961
      %v963 = vpop.f32.mrb[0].mxu0
      %v964 = vpop.f32.mrb[0].mxu0
      %v965 = vadd.f32 %v719, %v964
      %v966 = vpop.f32.mrb[0].mxu0
      %967 = vmatprep.mubr.bf16.mxu0 0
      %968 = vmatmul.mubr.bf16.gmra.mrb[0].mxu0 %v807
      %v969 = vpop.f32.mrb[0].mxu0
      %v970 = vadd.f32 %v724, %v969
      %v971 = vpop.f32.mrb[0].mxu0
      %v972 = vpop.f32.mrb[0].mxu0
      %v973 = vadd.f32 %v727, %v972
      %v974 = vpop.f32.mrb[0].mxu0
      %975 = vmatprep.mubr.bf16.mxu0 0
      %976 = vmatmul.mubr.bf16.gmra.mrb[0].mxu0 %v809
      %v977 = vpop.f32.mrb[0].mxu0
      %v978 = vadd.f32 %v732, %v977
      %v979 = vpop.f32.mrb[0].mxu0
      %v980 = vpop.f32.mrb[0].mxu0
      %v981 = vadd.f32 %v735, %v980
      %v982 = vpop.f32.mrb[0].mxu0
      %983 = vmatprep.mubr.bf16.mxu0 0
      %984 = vmatmul.mubr.bf16.gmra.mrb[0].mxu0 %v811
      %v985 = vpop.f32.mrb[0].mxu0
      %v986 = vadd.f32 %v740, %v985
      %v987 = vpop.f32.mrb[0].mxu0
      %v988 = vpop.f32.mrb[0].mxu0
      %v989 = vadd.f32 %v743, %v988
      %v990 = vpop.f32.mrb[0].mxu0
      %991 = vmatprep.mubr.bf16.mxu0 0
      %992 = vmatmul.mubr.bf16.gmra.mrb[0].mxu0 %v813
      %v993 = vpop.f32.mrb[0].mxu0
      %v994 = vadd.f32 %v748, %v993
      %v995 = vpop.f32.mrb[0].mxu0
      %v996 = vpop.f32.mrb[0].mxu0
      %v997 = vpop.f32.mrb[0].mxu0
      %998 = vdwg.mxu0
      %v1001 = vunpack.c.l.b16 %v209
      %v1002 = vunpack.c.l.b16 %v210
      %v1003 = vpack.c.b16 %v1001, %v316
      %v1004 = vpack.c.b16 %v1002, %v1002
      %v1006 = vshll.u32 %v1003, 16
      %v1008 = vrot.slane %v1006, 1
      %v1009 = vsel %vm336, %v479, %v1008
      %v1010 = vshrl.u32 %v1003, 16
      %v1012 = vor.u32 %v1010, %v1008
      %v1014 = vshll.u32 %v1004, 16
      %v1016 = vrot.slane %v1014, 1
      %v1017 = vsel %vm336, %v1012, %v1016
      %v1018 = vshrl.u32 %v1004, 16
      %v1028 = vunpack.c.l.b16 %v227
      %v1029 = vunpack.c.l.b16 %v228
      %v1030 = vunpack.c.l.b16 %v229
      %v1031 = vunpack.c.l.b16 %v230
      %v1032 = vunpack.c.l.b16 %v231
      %v1033 = vunpack.c.l.b16 %v232
      %v1034 = vunpack.c.l.b16 %v233
      %v1035 = vunpack.c.l.b16 %v234
      %v1036 = vpack.c.b16 %v1029, %v1028
      %v1037 = vpack.c.b16 %v1031, %v1030
      %v1038 = vpack.c.b16 %v1033, %v1032
      %v1039 = vpack.c.b16 %v1035, %v1034
      %v1045 = vsel %vm511, %v1009, 0
      %v1048 = vsel %vm511, %v1017, 0
      %v1051 = vsel %vm511, %v1018, 0
      %1053 = vmatprep.subr.bf16.mxu0 0
      %1054 = vmatpush1.bf16.msra.mxu0 %v1036
      %1055 = vmatprep.subr.bf16.mxu0 0
      %1056 = vmatpush1.bf16.msra.mxu0 %v1037
      %1057 = vmatprep.subr.bf16.mxu0 0
      %1058 = vmatpush1.bf16.msra.mxu0 %v1038
      %1059 = vmatprep.subr.bf16.mxu0 0
      %1060 = vmatpush1.bf16.msra.mxu0 %v1039
      %1061 = vmatprep.subr.bf16.mxu0 0
      %1062 = vmatpush1.bf16.msra.mxu0 0
      %1063 = vmatprep.subr.bf16.mxu0 0
      %1064 = vmatpush1.bf16.msra.mxu0 0
      %1065 = vmatprep.subr.bf16.mxu0 0
      %1066 = vmatpush1.bf16.msra.mxu0 0
      %1067 = vmatprep.subr.bf16.mxu0 0
      %1068 = vmatpush1.bf16.msra.mxu0 0
      %1069 = vmatprep.subr.bf16.mxu0 0
      %1070 = vmatpush1.bf16.msra.mxu0 0
      %1071 = vmatprep.subr.bf16.mxu0 0
      %1072 = vmatpush1.bf16.msra.mxu0 0
      %1073 = vmatprep.subr.bf16.mxu0 0
      %1074 = vmatpush1.bf16.msra.mxu0 0
      %1075 = vmatprep.subr.bf16.mxu0 0
      %1076 = vmatpush1.bf16.msra.mxu0 0
      %1077 = vmatprep.subr.bf16.mxu0 0
      %1078 = vmatpush1.bf16.msra.mxu0 0
      %1079 = vmatprep.subr.bf16.mxu0 0
      %1080 = vmatpush1.bf16.msra.mxu0 0
      %1081 = vmatprep.subr.bf16.mxu0 0
      %1082 = vmatpush1.bf16.msra.mxu0 0
      %1083 = vmatprep.subr.bf16.mxu0 0
      %1084 = vmatpush1.bf16.msra.mxu0 0
      %1085 = vmatprep.mubr.bf16.mxu0 0
      %1086 = vmatmul.mubr.bf16.gmra.mrb[0].mxu0 %v516
      %v1087 = vpop.f32.mrb[0].mxu0
      %v1088 = vadd.f32 0.0, %v1087
      %v1089 = vpop.f32.mrb[0].mxu0
      %v1090 = vpop.f32.mrb[0].mxu0
      %v1091 = vadd.f32 0.0, %v1090
      %v1092 = vpop.f32.mrb[0].mxu0
      %1093 = vmatprep.mubr.bf16.mxu0 0
      %1094 = vmatmul.mubr.bf16.gmra.mrb[0].mxu0 %v519
      %v1095 = vpop.f32.mrb[0].mxu0
      %v1096 = vadd.f32 0.0, %v1095
      %v1097 = vpop.f32.mrb[0].mxu0
      %v1098 = vpop.f32.mrb[0].mxu0
      %v1099 = vadd.f32 0.0, %v1098
      %v1100 = vpop.f32.mrb[0].mxu0
      %1101 = vmatprep.mubr.bf16.mxu0 0
      %1102 = vmatmul.mubr.bf16.gmra.mrb[0].mxu0 %v522
      %v1103 = vpop.f32.mrb[0].mxu0
      %v1104 = vadd.f32 0.0, %v1103
      %v1105 = vpop.f32.mrb[0].mxu0
      %v1106 = vpop.f32.mrb[0].mxu0
      %v1107 = vadd.f32 0.0, %v1106
      %v1108 = vpop.f32.mrb[0].mxu0
      %1109 = vmatprep.mubr.bf16.mxu0 0
      %1110 = vmatmul.mubr.bf16.gmra.mrb[0].mxu0 %v525
      %v1111 = vpop.f32.mrb[0].mxu0
      %v1112 = vadd.f32 0.0, %v1111
      %v1113 = vpop.f32.mrb[0].mxu0
      %v1114 = vpop.f32.mrb[0].mxu0
      %v1115 = vadd.f32 0.0, %v1114
      %v1116 = vpop.f32.mrb[0].mxu0
      %1117 = vmatprep.mubr.bf16.mxu0 0
      %1118 = vmatmul.mubr.bf16.gmra.mrb[0].mxu0 %v528
      %v1119 = vpop.f32.mrb[0].mxu0
      %v1120 = vadd.f32 0.0, %v1119
      %v1121 = vpop.f32.mrb[0].mxu0
      %v1122 = vpop.f32.mrb[0].mxu0
      %v1123 = vadd.f32 0.0, %v1122
      %v1124 = vpop.f32.mrb[0].mxu0
      %1125 = vmatprep.mubr.bf16.mxu0 0
      %1126 = vmatmul.mubr.bf16.gmra.mrb[0].mxu0 %v531
      %v1127 = vpop.f32.mrb[0].mxu0
      %v1128 = vadd.f32 0.0, %v1127
      %v1129 = vpop.f32.mrb[0].mxu0
      %v1130 = vpop.f32.mrb[0].mxu0
      %v1131 = vadd.f32 0.0, %v1130
      %v1132 = vpop.f32.mrb[0].mxu0
      %1133 = vmatprep.mubr.bf16.mxu0 0
      %1134 = vmatmul.mubr.bf16.gmra.mrb[0].mxu0 %v534
      %v1135 = vpop.f32.mrb[0].mxu0
      %v1136 = vadd.f32 0.0, %v1135
      %v1137 = vpop.f32.mrb[0].mxu0
      %v1138 = vpop.f32.mrb[0].mxu0
      %v1139 = vadd.f32 0.0, %v1138
      %v1140 = vpop.f32.mrb[0].mxu0
      %1141 = vmatprep.mubr.bf16.mxu0 0
      %1142 = vmatmul.mubr.bf16.gmra.mrb[0].mxu0 %v537
      %v1143 = vpop.f32.mrb[0].mxu0
      %v1144 = vadd.f32 0.0, %v1143
      %v1145 = vpop.f32.mrb[0].mxu0
      %v1146 = vpop.f32.mrb[0].mxu0
      %v1147 = vadd.f32 0.0, %v1146
      %v1148 = vpop.f32.mrb[0].mxu0
      %1149 = vmatprep.mubr.bf16.mxu0 0
      %1150 = vmatmul.mubr.bf16.gmra.mrb[0].mxu0 %v540
      %v1151 = vpop.f32.mrb[0].mxu0
      %v1152 = vadd.f32 0.0, %v1151
      %v1153 = vpop.f32.mrb[0].mxu0
      %v1154 = vpop.f32.mrb[0].mxu0
      %v1155 = vadd.f32 0.0, %v1154
      %v1156 = vpop.f32.mrb[0].mxu0
      %1157 = vmatprep.mubr.bf16.mxu0 0
      %1158 = vmatmul.mubr.bf16.gmra.mrb[0].mxu0 %v543
      %v1159 = vpop.f32.mrb[0].mxu0
      %v1160 = vadd.f32 0.0, %v1159
      %v1161 = vpop.f32.mrb[0].mxu0
      %v1162 = vpop.f32.mrb[0].mxu0
      %v1163 = vadd.f32 0.0, %v1162
      %v1164 = vpop.f32.mrb[0].mxu0
      %1165 = vmatprep.mubr.bf16.mxu0 0
      %1166 = vmatmul.mubr.bf16.gmra.mrb[0].mxu0 %v546
      %v1167 = vpop.f32.mrb[0].mxu0
      %v1168 = vadd.f32 0.0, %v1167
      %v1169 = vpop.f32.mrb[0].mxu0
      %v1170 = vpop.f32.mrb[0].mxu0
      %v1171 = vadd.f32 0.0, %v1170
      %v1172 = vpop.f32.mrb[0].mxu0
      %1173 = vmatprep.mubr.bf16.mxu0 0
      %1174 = vmatmul.mubr.bf16.gmra.mrb[0].mxu0 %v549
      %v1175 = vpop.f32.mrb[0].mxu0
      %v1176 = vadd.f32 0.0, %v1175
      %v1177 = vpop.f32.mrb[0].mxu0
      %v1178 = vpop.f32.mrb[0].mxu0
      %v1179 = vadd.f32 0.0, %v1178
      %v1180 = vpop.f32.mrb[0].mxu0
      %1181 = vmatprep.mubr.bf16.mxu0 0
      %1182 = vmatmul.mubr.bf16.gmra.mrb[0].mxu0 %v552
      %v1183 = vpop.f32.mrb[0].mxu0
      %v1184 = vadd.f32 0.0, %v1183
      %v1185 = vpop.f32.mrb[0].mxu0
      %v1186 = vpop.f32.mrb[0].mxu0
      %v1187 = vadd.f32 0.0, %v1186
      %v1188 = vpop.f32.mrb[0].mxu0
      %1189 = vmatprep.mubr.bf16.mxu0 0
      %1190 = vmatmul.mubr.bf16.gmra.mrb[0].mxu0 %v555
      %v1191 = vpop.f32.mrb[0].mxu0
      %v1192 = vadd.f32 0.0, %v1191
      %v1193 = vpop.f32.mrb[0].mxu0
      %v1194 = vpop.f32.mrb[0].mxu0
      %v1195 = vadd.f32 0.0, %v1194
      %v1196 = vpop.f32.mrb[0].mxu0
      %1197 = vmatprep.mubr.bf16.mxu0 0
      %1198 = vmatmul.mubr.bf16.gmra.mrb[0].mxu0 %v558
      %v1199 = vpop.f32.mrb[0].mxu0
      %v1200 = vadd.f32 0.0, %v1199
      %v1201 = vpop.f32.mrb[0].mxu0
      %v1202 = vpop.f32.mrb[0].mxu0
      %v1203 = vadd.f32 0.0, %v1202
      %v1204 = vpop.f32.mrb[0].mxu0
      %1205 = vmatprep.mubr.bf16.mxu0 0
      %1206 = vmatmul.mubr.bf16.gmra.mrb[0].mxu0 %v561
      %v1207 = vpop.f32.mrb[0].mxu0
      %v1208 = vadd.f32 0.0, %v1207
      %v1209 = vpop.f32.mrb[0].mxu0
      %v1210 = vpop.f32.mrb[0].mxu0
      %v1211 = vadd.f32 0.0, %v1210
      %v1212 = vpop.f32.mrb[0].mxu0
      %1213 = vmatprep.mubr.bf16.mxu0 0
      %1214 = vmatmul.mubr.bf16.gmra.mrb[0].mxu0 %v1045
      %v1215 = vpop.f32.mrb[0].mxu0
      %v1216 = vadd.f32 0.0, %v1215
      %v1217 = vpop.f32.mrb[0].mxu0
      %v1218 = vpop.f32.mrb[0].mxu0
      %v1219 = vadd.f32 0.0, %v1218
      %v1220 = vpop.f32.mrb[0].mxu0
      %1221 = vmatprep.mubr.bf16.mxu0 0
      %1222 = vmatmul.mubr.bf16.gmra.mrb[0].mxu0 %v1048
      %v1223 = vpop.f32.mrb[0].mxu0
      %v1224 = vadd.f32 0.0, %v1223
      %v1225 = vpop.f32.mrb[0].mxu0
      %v1226 = vpop.f32.mrb[0].mxu0
      %v1227 = vadd.f32 0.0, %v1226
      %v1228 = vpop.f32.mrb[0].mxu0
      %1229 = vmatprep.mubr.bf16.mxu0 0
      %1230 = vmatmul.mubr.bf16.gmra.mrb[0].mxu0 %v1051
      %v1231 = vpop.f32.mrb[0].mxu0
      %v1232 = vadd.f32 0.0, %v1231
      %v1233 = vpop.f32.mrb[0].mxu0
      %v1234 = vpop.f32.mrb[0].mxu0
      %v1235 = vpop.f32.mrb[0].mxu0
      %1236 = vdwg.mxu0
      %v1237 = vadd.f32 %v850, %v1088
      %v1238 = vadd.f32 %v853, %v1091
      %v1239 = vadd.f32 %v858, %v1096
      %v1240 = vadd.f32 %v861, %v1099
      %v1241 = vadd.f32 %v866, %v1104
      %v1242 = vadd.f32 %v869, %v1107
      %v1243 = vadd.f32 %v874, %v1112
      %v1244 = vadd.f32 %v877, %v1115
      %v1245 = vadd.f32 %v882, %v1120
      %v1246 = vadd.f32 %v885, %v1123
      %v1247 = vadd.f32 %v890, %v1128
      %v1248 = vadd.f32 %v893, %v1131
      %v1249 = vadd.f32 %v898, %v1136
      %v1250 = vadd.f32 %v901, %v1139
      %v1251 = vadd.f32 %v906, %v1144
      %v1252 = vadd.f32 %v909, %v1147
      %v1253 = vadd.f32 %v914, %v1152
      %v1254 = vadd.f32 %v917, %v1155
      %v1255 = vadd.f32 %v922, %v1160
      %v1256 = vadd.f32 %v925, %v1163
      %v1257 = vadd.f32 %v930, %v1168
      %v1258 = vadd.f32 %v933, %v1171
      %v1259 = vadd.f32 %v938, %v1176
      %v1260 = vadd.f32 %v941, %v1179
      %v1261 = vadd.f32 %v946, %v1184
      %v1262 = vadd.f32 %v949, %v1187
      %v1263 = vadd.f32 %v954, %v1192
      %v1264 = vadd.f32 %v957, %v1195
      %v1265 = vadd.f32 %v962, %v1200
      %v1266 = vadd.f32 %v965, %v1203
      %v1267 = vadd.f32 %v970, %v1208
      %v1268 = vadd.f32 %v973, %v1211
      %v1269 = vadd.f32 %v978, %v1216
      %v1270 = vadd.f32 %v981, %v1219
      %v1271 = vadd.f32 %v986, %v1224
      %v1272 = vadd.f32 %v989, %v1227
      %v1273 = vadd.f32 %v994, %v1232
      %vm1274 = vcmask 1046528
      %v1275 = vrot.slane %v318, 1
      %v1276 = vrot.slane %v319, 1
      %v1277 = vsel %vm1274, %v1275, %v1276
      %v1278 = vrot.slane %v320, 1
      %v1279 = vsel %vm1274, %v1276, %v1278
      %v1280 = vrot.slane %v321, 1
      %v1281 = vsel %vm1274, %v1278, %v1280
      %v1282 = vrot.slane %v322, 1
      %v1283 = vsel %vm1274, %v1280, %v1282
      %v1284 = vrot.slane %v323, 1
      %v1285 = vsel %vm1274, %v1282, %v1284
      %v1286 = vrot.slane %v324, 1
      %v1287 = vsel %vm1274, %v1284, %v1286
      %v1288 = vrot.slane %v325, 1
      %v1289 = vsel %vm1274, %v1286, %v1288
      %v1290 = vrot.slane %v326, 1
      %v1291 = vsel %vm1274, %v1288, %v1290
      %v1292 = vrot.slane %v327, 1
      %v1293 = vsel %vm1274, %v1290, %v1292
      %v1294 = vrot.slane %v328, 1
      %v1295 = vsel %vm1274, %v1292, %v1294
      %v1296 = vrot.slane %v329, 1
      %v1297 = vsel %vm1274, %v1294, %v1296
      %v1298 = vrot.slane %v330, 1
      %v1299 = vsel %vm1274, %v1296, %v1298
      %v1300 = vrot.slane %v331, 1
      %v1301 = vsel %vm1274, %v1298, %v1300
      %v1302 = vrot.slane %v332, 1
      %v1303 = vsel %vm1274, %v1300, %v1302
      %v1304 = vrot.slane %v333, 1
      %v1305 = vsel %vm1274, %v1302, %v1304
      %v1306 = vrot.slane %v334, 1
      %v1307 = vsel %vm1274, %v1304, %v1306
      %v1308 = vrot.slane %v1003, 1
      %v1309 = vsel %vm1274, %v1306, %v1308
      %v1310 = vrot.slane %v1004, 1
      %v1311 = vsel %vm1274, %v1308, %v1310
      %v1320 = vunpack.c.l.b16 %v235
      %v1321 = vunpack.c.l.b16 %v236
      %v1322 = vunpack.c.l.b16 %v237
      %v1323 = vunpack.c.l.b16 %v238
      %v1324 = vunpack.c.l.b16 %v239
      %v1325 = vunpack.c.l.b16 %v240
      %v1326 = vunpack.c.l.b16 %v241
      %v1327 = vunpack.c.l.b16 %v242
      %v1328 = vpack.c.b16 %v1321, %v1320
      %v1329 = vpack.c.b16 %v1323, %v1322
      %v1330 = vpack.c.b16 %v1325, %v1324
      %v1331 = vpack.c.b16 %v1327, %v1326
      %v1337 = vsel %vm511, %v1277, 0
      %v1340 = vsel %vm511, %v1279, 0
      %v1343 = vsel %vm511, %v1281, 0
      %v1346 = vsel %vm511, %v1283, 0
      %v1349 = vsel %vm511, %v1285, 0
      %v1352 = vsel %vm511, %v1287, 0
      %v1355 = vsel %vm511, %v1289, 0
      %v1358 = vsel %vm511, %v1291, 0
      %v1361 = vsel %vm511, %v1293, 0
      %v1364 = vsel %vm511, %v1295, 0
      %v1367 = vsel %vm511, %v1297, 0
      %v1370 = vsel %vm511, %v1299, 0
      %v1373 = vsel %vm511, %v1301, 0
      %v1376 = vsel %vm511, %v1303, 0
      %v1379 = vsel %vm511, %v1305, 0
      %v1382 = vsel %vm511, %v1307, 0
      %v1385 = vsel %vm511, %v1309, 0
      %v1388 = vsel %vm511, %v1311, 0
      %v1391 = vsel %vm511, %v1310, 0
      %1393 = vmatprep.subr.bf16.mxu0 0
      %1394 = vmatpush1.bf16.msra.mxu0 %v1328
      %1395 = vmatprep.subr.bf16.mxu0 0
      %1396 = vmatpush1.bf16.msra.mxu0 %v1329
      %1397 = vmatprep.subr.bf16.mxu0 0
      %1398 = vmatpush1.bf16.msra.mxu0 %v1330
      %1399 = vmatprep.subr.bf16.mxu0 0
      %1400 = vmatpush1.bf16.msra.mxu0 %v1331
      %1401 = vmatprep.subr.bf16.mxu0 0
      %1402 = vmatpush1.bf16.msra.mxu0 0
      %1403 = vmatprep.subr.bf16.mxu0 0
      %1404 = vmatpush1.bf16.msra.mxu0 0
      %1405 = vmatprep.subr.bf16.mxu0 0
      %1406 = vmatpush1.bf16.msra.mxu0 0
      %1407 = vmatprep.subr.bf16.mxu0 0
      %1408 = vmatpush1.bf16.msra.mxu0 0
      %1409 = vmatprep.subr.bf16.mxu0 0
      %1410 = vmatpush1.bf16.msra.mxu0 0
      %1411 = vmatprep.subr.bf16.mxu0 0
      %1412 = vmatpush1.bf16.msra.mxu0 0
      %1413 = vmatprep.subr.bf16.mxu0 0
      %1414 = vmatpush1.bf16.msra.mxu0 0
      %1415 = vmatprep.subr.bf16.mxu0 0
      %1416 = vmatpush1.bf16.msra.mxu0 0
      %1417 = vmatprep.subr.bf16.mxu0 0
      %1418 = vmatpush1.bf16.msra.mxu0 0
      %1419 = vmatprep.subr.bf16.mxu0 0
      %1420 = vmatpush1.bf16.msra.mxu0 0
      %1421 = vmatprep.subr.bf16.mxu0 0
      %1422 = vmatpush1.bf16.msra.mxu0 0
      %1423 = vmatprep.subr.bf16.mxu0 0
      %1424 = vmatpush1.bf16.msra.mxu0 0
      %1425 = vmatprep.mubr.bf16.mxu0 0
      %1426 = vmatmul.mubr.bf16.gmra.mrb[0].mxu0 %v1337
      %v1427 = vpop.f32.mrb[0].mxu0
      %v1428 = vadd.f32 0.0, %v1427
      %v1429 = vpop.f32.mrb[0].mxu0
      %v1430 = vpop.f32.mrb[0].mxu0
      %v1431 = vadd.f32 0.0, %v1430
      %v1432 = vpop.f32.mrb[0].mxu0
      %1433 = vmatprep.mubr.bf16.mxu0 0
      %1434 = vmatmul.mubr.bf16.gmra.mrb[0].mxu0 %v1340
      %v1435 = vpop.f32.mrb[0].mxu0
      %v1436 = vadd.f32 0.0, %v1435
      %v1437 = vpop.f32.mrb[0].mxu0
      %v1438 = vpop.f32.mrb[0].mxu0
      %v1439 = vadd.f32 0.0, %v1438
      %v1440 = vpop.f32.mrb[0].mxu0
      %1441 = vmatprep.mubr.bf16.mxu0 0
      %1442 = vmatmul.mubr.bf16.gmra.mrb[0].mxu0 %v1343
      %v1443 = vpop.f32.mrb[0].mxu0
      %v1444 = vadd.f32 0.0, %v1443
      %v1445 = vpop.f32.mrb[0].mxu0
      %v1446 = vpop.f32.mrb[0].mxu0
      %v1447 = vadd.f32 0.0, %v1446
      %v1448 = vpop.f32.mrb[0].mxu0
      %1449 = vmatprep.mubr.bf16.mxu0 0
      %1450 = vmatmul.mubr.bf16.gmra.mrb[0].mxu0 %v1346
      %v1451 = vpop.f32.mrb[0].mxu0
      %v1452 = vadd.f32 0.0, %v1451
      %v1453 = vpop.f32.mrb[0].mxu0
      %v1454 = vpop.f32.mrb[0].mxu0
      %v1455 = vadd.f32 0.0, %v1454
      %v1456 = vpop.f32.mrb[0].mxu0
      %1457 = vmatprep.mubr.bf16.mxu0 0
      %1458 = vmatmul.mubr.bf16.gmra.mrb[0].mxu0 %v1349
      %v1459 = vpop.f32.mrb[0].mxu0
      %v1460 = vadd.f32 0.0, %v1459
      %v1461 = vpop.f32.mrb[0].mxu0
      %v1462 = vpop.f32.mrb[0].mxu0
      %v1463 = vadd.f32 0.0, %v1462
      %v1464 = vpop.f32.mrb[0].mxu0
      %1465 = vmatprep.mubr.bf16.mxu0 0
      %1466 = vmatmul.mubr.bf16.gmra.mrb[0].mxu0 %v1352
      %v1467 = vpop.f32.mrb[0].mxu0
      %v1468 = vadd.f32 0.0, %v1467
      %v1469 = vpop.f32.mrb[0].mxu0
      %v1470 = vpop.f32.mrb[0].mxu0
      %v1471 = vadd.f32 0.0, %v1470
      %v1472 = vpop.f32.mrb[0].mxu0
      %1473 = vmatprep.mubr.bf16.mxu0 0
      %1474 = vmatmul.mubr.bf16.gmra.mrb[0].mxu0 %v1355
      %v1475 = vpop.f32.mrb[0].mxu0
      %v1476 = vadd.f32 0.0, %v1475
      %v1477 = vpop.f32.mrb[0].mxu0
      %v1478 = vpop.f32.mrb[0].mxu0
      %v1479 = vadd.f32 0.0, %v1478
      %v1480 = vpop.f32.mrb[0].mxu0
      %1481 = vmatprep.mubr.bf16.mxu0 0
      %1482 = vmatmul.mubr.bf16.gmra.mrb[0].mxu0 %v1358
      %v1483 = vpop.f32.mrb[0].mxu0
      %v1484 = vadd.f32 0.0, %v1483
      %v1485 = vpop.f32.mrb[0].mxu0
      %v1486 = vpop.f32.mrb[0].mxu0
      %v1487 = vadd.f32 0.0, %v1486
      %v1488 = vpop.f32.mrb[0].mxu0
      %1489 = vmatprep.mubr.bf16.mxu0 0
      %1490 = vmatmul.mubr.bf16.gmra.mrb[0].mxu0 %v1361
      %v1491 = vpop.f32.mrb[0].mxu0
      %v1492 = vadd.f32 0.0, %v1491
      %v1493 = vpop.f32.mrb[0].mxu0
      %v1494 = vpop.f32.mrb[0].mxu0
      %v1495 = vadd.f32 0.0, %v1494
      %v1496 = vpop.f32.mrb[0].mxu0
      %1497 = vmatprep.mubr.bf16.mxu0 0
      %1498 = vmatmul.mubr.bf16.gmra.mrb[0].mxu0 %v1364
      %v1499 = vpop.f32.mrb[0].mxu0
      %v1500 = vadd.f32 0.0, %v1499
      %v1501 = vpop.f32.mrb[0].mxu0
      %v1502 = vpop.f32.mrb[0].mxu0
      %v1503 = vadd.f32 0.0, %v1502
      %v1504 = vpop.f32.mrb[0].mxu0
      %1505 = vmatprep.mubr.bf16.mxu0 0
      %1506 = vmatmul.mubr.bf16.gmra.mrb[0].mxu0 %v1367
      %v1507 = vpop.f32.mrb[0].mxu0
      %v1508 = vadd.f32 0.0, %v1507
      %v1509 = vpop.f32.mrb[0].mxu0
      %v1510 = vpop.f32.mrb[0].mxu0
      %v1511 = vadd.f32 0.0, %v1510
      %v1512 = vpop.f32.mrb[0].mxu0
      %1513 = vmatprep.mubr.bf16.mxu0 0
      %1514 = vmatmul.mubr.bf16.gmra.mrb[0].mxu0 %v1370
      %v1515 = vpop.f32.mrb[0].mxu0
      %v1516 = vadd.f32 0.0, %v1515
      %v1517 = vpop.f32.mrb[0].mxu0
      %v1518 = vpop.f32.mrb[0].mxu0
      %v1519 = vadd.f32 0.0, %v1518
      %v1520 = vpop.f32.mrb[0].mxu0
      %1521 = vmatprep.mubr.bf16.mxu0 0
      %1522 = vmatmul.mubr.bf16.gmra.mrb[0].mxu0 %v1373
      %v1523 = vpop.f32.mrb[0].mxu0
      %v1524 = vadd.f32 0.0, %v1523
      %v1525 = vpop.f32.mrb[0].mxu0
      %v1526 = vpop.f32.mrb[0].mxu0
      %v1527 = vadd.f32 0.0, %v1526
      %v1528 = vpop.f32.mrb[0].mxu0
      %1529 = vmatprep.mubr.bf16.mxu0 0
      %1530 = vmatmul.mubr.bf16.gmra.mrb[0].mxu0 %v1376
      %v1531 = vpop.f32.mrb[0].mxu0
      %v1532 = vadd.f32 0.0, %v1531
      %v1533 = vpop.f32.mrb[0].mxu0
      %v1534 = vpop.f32.mrb[0].mxu0
      %v1535 = vadd.f32 0.0, %v1534
      %v1536 = vpop.f32.mrb[0].mxu0
      %1537 = vmatprep.mubr.bf16.mxu0 0
      %1538 = vmatmul.mubr.bf16.gmra.mrb[0].mxu0 %v1379
      %v1539 = vpop.f32.mrb[0].mxu0
      %v1540 = vadd.f32 0.0, %v1539
      %v1541 = vpop.f32.mrb[0].mxu0
      %v1542 = vpop.f32.mrb[0].mxu0
      %v1543 = vadd.f32 0.0, %v1542
      %v1544 = vpop.f32.mrb[0].mxu0
      %1545 = vmatprep.mubr.bf16.mxu0 0
      %1546 = vmatmul.mubr.bf16.gmra.mrb[0].mxu0 %v1382
      %v1547 = vpop.f32.mrb[0].mxu0
      %v1548 = vadd.f32 0.0, %v1547
      %v1549 = vpop.f32.mrb[0].mxu0
      %v1550 = vpop.f32.mrb[0].mxu0
      %v1551 = vadd.f32 0.0, %v1550
      %v1552 = vpop.f32.mrb[0].mxu0
      %1553 = vmatprep.mubr.bf16.mxu0 0
      %1554 = vmatmul.mubr.bf16.gmra.mrb[0].mxu0 %v1385
      %v1555 = vpop.f32.mrb[0].mxu0
      %v1556 = vadd.f32 0.0, %v1555
      %v1557 = vpop.f32.mrb[0].mxu0
      %v1558 = vpop.f32.mrb[0].mxu0
      %v1559 = vadd.f32 0.0, %v1558
      %v1560 = vpop.f32.mrb[0].mxu0
      %1561 = vmatprep.mubr.bf16.mxu0 0
      %1562 = vmatmul.mubr.bf16.gmra.mrb[0].mxu0 %v1388
      %v1563 = vpop.f32.mrb[0].mxu0
      %v1564 = vadd.f32 0.0, %v1563
      %v1565 = vpop.f32.mrb[0].mxu0
      %v1566 = vpop.f32.mrb[0].mxu0
      %v1567 = vadd.f32 0.0, %v1566
      %v1568 = vpop.f32.mrb[0].mxu0
      %1569 = vmatprep.mubr.bf16.mxu0 0
      %1570 = vmatmul.mubr.bf16.gmra.mrb[0].mxu0 %v1391
      %v1571 = vpop.f32.mrb[0].mxu0
      %v1572 = vadd.f32 0.0, %v1571
      %v1573 = vpop.f32.mrb[0].mxu0
      %v1574 = vpop.f32.mrb[0].mxu0
      %v1575 = vpop.f32.mrb[0].mxu0
      %1576 = vdwg.mxu0
      %v1577 = vadd.f32 %v1237, %v1428
      %v1578 = vadd.f32 %v1238, %v1431
      %v1579 = vadd.f32 %v1239, %v1436
      %v1580 = vadd.f32 %v1240, %v1439
      %v1581 = vadd.f32 %v1241, %v1444
      %v1582 = vadd.f32 %v1242, %v1447
      %v1583 = vadd.f32 %v1243, %v1452
      %v1584 = vadd.f32 %v1244, %v1455
      %v1585 = vadd.f32 %v1245, %v1460
      %v1586 = vadd.f32 %v1246, %v1463
      %v1587 = vadd.f32 %v1247, %v1468
      %v1588 = vadd.f32 %v1248, %v1471
      %v1589 = vadd.f32 %v1249, %v1476
      %v1590 = vadd.f32 %v1250, %v1479
      %v1591 = vadd.f32 %v1251, %v1484
      %v1592 = vadd.f32 %v1252, %v1487
      %v1593 = vadd.f32 %v1253, %v1492
      %v1594 = vadd.f32 %v1254, %v1495
      %v1595 = vadd.f32 %v1255, %v1500
      %v1596 = vadd.f32 %v1256, %v1503
      %v1597 = vadd.f32 %v1257, %v1508
      %v1598 = vadd.f32 %v1258, %v1511
      %v1599 = vadd.f32 %v1259, %v1516
      %v1600 = vadd.f32 %v1260, %v1519
      %v1601 = vadd.f32 %v1261, %v1524
      %v1602 = vadd.f32 %v1262, %v1527
      %v1603 = vadd.f32 %v1263, %v1532
      %v1604 = vadd.f32 %v1264, %v1535
      %v1605 = vadd.f32 %v1265, %v1540
      %v1606 = vadd.f32 %v1266, %v1543
      %v1607 = vadd.f32 %v1267, %v1548
      %v1608 = vadd.f32 %v1268, %v1551
      %v1609 = vadd.f32 %v1269, %v1556
      %v1610 = vadd.f32 %v1270, %v1559
      %v1611 = vadd.f32 %v1271, %v1564
      %v1612 = vadd.f32 %v1272, %v1567
      %v1613 = vadd.f32 %v1273, %v1572
      %v1614 = vld [vmem:[%s2] sm:$0x1]
      %v1616 = vlaneseq
      %v1617 = vshrl.u32 %v1616, 7
      %v1618 = vsub.s32 0, %v1617
      %v1619 = vrot.slane %v1614, %v1618
      %v1621 = vadd.f32 %v1577, %v1619
      %v1622 = vadd.f32 %v1578, %v1619
      %v1623 = vadd.f32 %v1579, %v1619
      %v1624 = vadd.f32 %v1580, %v1619
      %v1625 = vadd.f32 %v1581, %v1619
      %v1626 = vadd.f32 %v1582, %v1619
      %v1627 = vadd.f32 %v1583, %v1619
      %v1628 = vadd.f32 %v1584, %v1619
      %v1629 = vadd.f32 %v1585, %v1619
      %v1630 = vadd.f32 %v1586, %v1619
      %v1631 = vadd.f32 %v1587, %v1619
      %v1632 = vadd.f32 %v1588, %v1619
      %v1633 = vadd.f32 %v1589, %v1619
      %v1634 = vadd.f32 %v1590, %v1619
      %v1635 = vadd.f32 %v1591, %v1619
      %v1636 = vadd.f32 %v1592, %v1619
      %v1637 = vadd.f32 %v1593, %v1619
      %v1638 = vadd.f32 %v1594, %v1619
      %v1639 = vadd.f32 %v1595, %v1619
      %v1640 = vadd.f32 %v1596, %v1619
      %v1641 = vadd.f32 %v1597, %v1619
      %v1642 = vadd.f32 %v1598, %v1619
      %v1643 = vadd.f32 %v1599, %v1619
      %v1644 = vadd.f32 %v1600, %v1619
      %v1645 = vadd.f32 %v1601, %v1619
      %v1646 = vadd.f32 %v1602, %v1619
      %v1647 = vadd.f32 %v1603, %v1619
      %v1648 = vadd.f32 %v1604, %v1619
      %v1649 = vadd.f32 %v1605, %v1619
      %v1650 = vadd.f32 %v1606, %v1619
      %v1651 = vadd.f32 %v1607, %v1619
      %v1652 = vadd.f32 %v1608, %v1619
      %v1653 = vadd.f32 %v1609, %v1619
      %v1654 = vadd.f32 %v1610, %v1619
      %v1655 = vadd.f32 %v1611, %v1619
      %v1656 = vadd.f32 %v1612, %v1619
      %v1657 = vadd.f32 %v1613, %v1619
      %v1658 = vmax.f32 %v1621, 0.0
      %v1659 = vmax.f32 %v1622, 0.0
      %v1660 = vmax.f32 %v1623, 0.0
      %v1661 = vmax.f32 %v1624, 0.0
      %v1662 = vmax.f32 %v1625, 0.0
      %v1663 = vmax.f32 %v1626, 0.0
      %v1664 = vmax.f32 %v1627, 0.0
      %v1665 = vmax.f32 %v1628, 0.0
      %v1666 = vmax.f32 %v1629, 0.0
      %v1667 = vmax.f32 %v1630, 0.0
      %v1668 = vmax.f32 %v1631, 0.0
      %v1669 = vmax.f32 %v1632, 0.0
      %v1670 = vmax.f32 %v1633, 0.0
      %v1671 = vmax.f32 %v1634, 0.0
      %v1672 = vmax.f32 %v1635, 0.0
      %v1673 = vmax.f32 %v1636, 0.0
      %v1674 = vmax.f32 %v1637, 0.0
      %v1675 = vmax.f32 %v1638, 0.0
      %v1676 = vmax.f32 %v1639, 0.0
      %v1677 = vmax.f32 %v1640, 0.0
      %v1678 = vmax.f32 %v1641, 0.0
      %v1679 = vmax.f32 %v1642, 0.0
      %v1680 = vmax.f32 %v1643, 0.0
      %v1681 = vmax.f32 %v1644, 0.0
      %v1682 = vmax.f32 %v1645, 0.0
      %v1683 = vmax.f32 %v1646, 0.0
      %v1684 = vmax.f32 %v1647, 0.0
      %v1685 = vmax.f32 %v1648, 0.0
      %v1686 = vmax.f32 %v1649, 0.0
      %v1687 = vmax.f32 %v1650, 0.0
      %v1688 = vmax.f32 %v1651, 0.0
      %v1689 = vmax.f32 %v1652, 0.0
      %v1690 = vmax.f32 %v1653, 0.0
      %v1691 = vmax.f32 %v1654, 0.0
      %v1692 = vmax.f32 %v1655, 0.0
      %v1693 = vmax.f32 %v1656, 0.0
      %v1694 = vmax.f32 %v1657, 0.0
      %v1695 = vpack.c.bf16 %v1659, %v1658
      %v1696 = vpack.c.bf16 %v1661, %v1660
      %v1697 = vpack.c.bf16 %v1663, %v1662
      %v1698 = vpack.c.bf16 %v1665, %v1664
      %v1699 = vpack.c.bf16 %v1667, %v1666
      %v1700 = vpack.c.bf16 %v1669, %v1668
      %v1701 = vpack.c.bf16 %v1671, %v1670
      %v1702 = vpack.c.bf16 %v1673, %v1672
      %v1703 = vpack.c.bf16 %v1675, %v1674
      %v1704 = vpack.c.bf16 %v1677, %v1676
      %v1705 = vpack.c.bf16 %v1679, %v1678
      %v1706 = vpack.c.bf16 %v1681, %v1680
      %v1707 = vpack.c.bf16 %v1683, %v1682
      %v1708 = vpack.c.bf16 %v1685, %v1684
      %v1709 = vpack.c.bf16 %v1687, %v1686
      %v1710 = vpack.c.bf16 %v1689, %v1688
      %v1711 = vpack.c.bf16 %v1691, %v1690
      %v1712 = vpack.c.bf16 %v1693, %v1692
      %v1713 = vpack.c.bf16 %v1694, %v1694
      %v1733 = vunpack.c.l.b16 %v1695
      %v1734 = vunpack.c.h.b16 %v1695
      %v1735 = vunpack.c.l.b16 %v1696
      %v1736 = vunpack.c.h.b16 %v1696
      %v1737 = vunpack.c.l.b16 %v1697
      %v1738 = vunpack.c.h.b16 %v1697
      %v1739 = vunpack.c.l.b16 %v1698
      %v1740 = vunpack.c.h.b16 %v1698
      %v1741 = vunpack.c.l.b16 %v1699
      %v1742 = vunpack.c.h.b16 %v1699
      %v1743 = vunpack.c.l.b16 %v1700
      %v1744 = vunpack.c.h.b16 %v1700
      %v1745 = vunpack.c.l.b16 %v1701
      %v1746 = vunpack.c.h.b16 %v1701
      %v1747 = vunpack.c.l.b16 %v1702
      %v1748 = vunpack.c.h.b16 %v1702
      %v1749 = vunpack.c.l.b16 %v1703
      %v1750 = vunpack.c.h.b16 %v1703
      %v1751 = vunpack.c.l.b16 %v1704
      %v1752 = vunpack.c.h.b16 %v1704
      %v1753 = vunpack.c.l.b16 %v1705
      %v1754 = vunpack.c.h.b16 %v1705
      %v1755 = vunpack.c.l.b16 %v1706
      %v1756 = vunpack.c.h.b16 %v1706
      %v1757 = vunpack.c.l.b16 %v1707
      %v1758 = vunpack.c.h.b16 %v1707
      %v1759 = vunpack.c.l.b16 %v1708
      %v1760 = vunpack.c.h.b16 %v1708
      %v1761 = vunpack.c.l.b16 %v1709
      %v1762 = vunpack.c.h.b16 %v1709
      %v1763 = vunpack.c.l.b16 %v1710
      %v1764 = vunpack.c.h.b16 %v1710
      %v1765 = vunpack.c.l.b16 %v1711
      %v1766 = vunpack.c.h.b16 %v1711
      %v1767 = vunpack.c.l.b16 %v1712
      %v1768 = vunpack.c.h.b16 %v1712
      %v1769 = vunpack.c.l.b16 %v1713
      %v1770 = vpack.c.b16 %v1733, %v1733
      %v1771 = vpack.c.b16 %v1734, %v1734
      %v1772 = vpack.c.b16 %v1735, %v1735
      %v1773 = vpack.c.b16 %v1736, %v1736
      %v1774 = vpack.c.b16 %v1737, %v1737
      %v1775 = vpack.c.b16 %v1738, %v1738
      %v1776 = vpack.c.b16 %v1739, %v1739
      %v1777 = vpack.c.b16 %v1740, %v1740
      %v1778 = vpack.c.b16 %v1741, %v1741
      %v1779 = vpack.c.b16 %v1742, %v1742
      %v1780 = vpack.c.b16 %v1743, %v1743
      %v1781 = vpack.c.b16 %v1744, %v1744
      %v1782 = vpack.c.b16 %v1745, %v1745
      %v1783 = vpack.c.b16 %v1746, %v1746
      %v1784 = vpack.c.b16 %v1747, %v1747
      %v1785 = vpack.c.b16 %v1748, %v1748
      %v1786 = vpack.c.b16 %v1749, %v1749
      %v1787 = vpack.c.b16 %v1750, %v1750
      %v1788 = vpack.c.b16 %v1751, %v1751
      %v1789 = vpack.c.b16 %v1752, %v1752
      %v1790 = vpack.c.b16 %v1753, %v1753
      %v1791 = vpack.c.b16 %v1754, %v1754
      %v1792 = vpack.c.b16 %v1755, %v1755
      %v1793 = vpack.c.b16 %v1756, %v1756
      %v1794 = vpack.c.b16 %v1757, %v1757
      %v1795 = vpack.c.b16 %v1758, %v1758
      %v1796 = vpack.c.b16 %v1759, %v1759
      %v1797 = vpack.c.b16 %v1760, %v1760
      %v1798 = vpack.c.b16 %v1761, %v1761
      %v1799 = vpack.c.b16 %v1762, %v1762
      %v1800 = vpack.c.b16 %v1763, %v1763
      %v1801 = vpack.c.b16 %v1764, %v1764
      %v1802 = vpack.c.b16 %v1765, %v1765
      %v1803 = vpack.c.b16 %v1766, %v1766
      %v1804 = vpack.c.b16 %v1767, %v1767
      %v1805 = vpack.c.b16 %v1768, %v1768
      %v1806 = vpack.c.b16 %v1769, %v1769
      %1844 = vst [vmem:[%s170] sm:$0xf] %v1770
      %1845 = vst [vmem:[%s170 + $0x4] sm:$0xf] %v1771
      %1846 = vst [vmem:[%s170 + $0x8] sm:$0xf] %v1772
      %1847 = vst [vmem:[%s170 + $0xc] sm:$0xf] %v1773
      %1848 = vst [vmem:[%s170 + $0x10] sm:$0xf] %v1774
      %1849 = vst [vmem:[%s170 + $0x14] sm:$0xf] %v1775
      %1850 = vst [vmem:[%s170 + $0x18] sm:$0xf] %v1776
      %1851 = vst [vmem:[%s170 + $0x1c] sm:$0xf] %v1777
      %1852 = vst [vmem:[%s170 + $0x20] sm:$0xf] %v1778
      %1853 = vst [vmem:[%s170 + $0x24] sm:$0xf] %v1779
      %1854 = vst [vmem:[%s170 + $0x28] sm:$0xf] %v1780
      %1855 = vst [vmem:[%s170 + $0x2c] sm:$0xf] %v1781
      %1856 = vst [vmem:[%s170 + $0x30] sm:$0xf] %v1782
      %1857 = vst [vmem:[%s170 + $0x34] sm:$0xf] %v1783
      %1858 = vst [vmem:[%s170 + $0x38] sm:$0xf] %v1784
      %1859 = vst [vmem:[%s170 + $0x3c] sm:$0xf] %v1785
      %1860 = vst [vmem:[%s170 + $0x40] sm:$0xf] %v1786
      %1861 = vst [vmem:[%s170 + $0x44] sm:$0xf] %v1787
      %1862 = vst [vmem:[%s170 + $0x48] sm:$0xf] %v1788
      %1863 = vst [vmem:[%s170 + $0x4c] sm:$0xf] %v1789
      %1864 = vst [vmem:[%s170 + $0x50] sm:$0xf] %v1790
      %1865 = vst [vmem:[%s170 + $0x54] sm:$0xf] %v1791
      %1866 = vst [vmem:[%s170 + $0x58] sm:$0xf] %v1792
      %1867 = vst [vmem:[%s170 + $0x5c] sm:$0xf] %v1793
      %1868 = vst [vmem:[%s170 + $0x60] sm:$0xf] %v1794
      %1869 = vst [vmem:[%s170 + $0x64] sm:$0xf] %v1795
      %1870 = vst [vmem:[%s170 + $0x68] sm:$0xf] %v1796
      %1871 = vst [vmem:[%s170 + $0x6c] sm:$0xf] %v1797
      %1872 = vst [vmem:[%s170 + $0x70] sm:$0xf] %v1798
      %1873 = vst [vmem:[%s170 + $0x74] sm:$0xf] %v1799
      %1874 = vst [vmem:[%s170 + $0x78] sm:$0xf] %v1800
      %1875 = vst [vmem:[%s170 + $0x7c] sm:$0xf] %v1801
      %1876 = vst [vmem:[%s170 + $0x80] sm:$0xf] %v1802
      %1877 = vst [vmem:[%s170 + $0x84] sm:$0xf] %v1803
      %1878 = vst [vmem:[%s170 + $0x88] sm:$0xf] %v1804
      %1879 = vst [vmem:[%s170 + $0x8c] sm:$0xf] %v1805
      %vm1880 = vcmask 1040384
      %vm1881 = vsmask.f32 256
      %vm1882 = vmand %vm1880, %vm1881
      %v1883 = vld [vmem:[%s170 + $0x90] sm:$0x1]
      %v1884 = vsel %vm1882, %v1806, %v1883
      %1885 = vst [vmem:[%s170 + $0x90] sm:$0x1] %v1884
      %p1886 = scmp.lt.s32.totalorder %s14, 1
      %s1887 = scalar_select %p1886, %s14, 1
      %s1888 = smul.addr %s1887, 37
      %s1889 = smul.addr %s1888, 4
      %s1890 = scalar_lea.vmem %s3, %s1889
      // Predicated region
      $region33: #{motion_attention_64_forward.7} parent=31 // pred_check
        %p1891 = pneg %p100
      $region34: #{motion_attention_64_forward.7} parent=31 // pred_check_branch
        %1893 = sbr.rel (%p1891) target = $region36
      $region35: #{motion_attention_64_forward.7} parent=31 // pred_region
        _
      $region36: #{motion_attention_64_forward.7} parent=31 // pred_fallthru
        _
    $region32: #{motion_attention_64_forward.7} parent=5 // pred_fallthru
      _
    %p1894 = scmp.le.s32.totalorder 2, %s9
    // Predicated region
    $region37: #{motion_attention_64_forward.7} parent=5 // pred_check
      %p1895 = pneg %p1894
    $region38: #{motion_attention_64_forward.7} parent=5 // pred_check_branch
      %1897 = sbr.rel (%p1895) target = $region40
    $region39: #{motion_attention_64_forward.7} parent=5 // pred_region
      %s1898 = ssub.s32 %s9, 2
      // Predicated region
      $region41: #{motion_attention_64_forward.7} parent=39 // pred_check
        %p1899 = pneg %p106
      $region42: #{motion_attention_64_forward.7} parent=39 // pred_check_branch
        %1901 = sbr.rel (%p1899) target = $region44
      $region43: #{motion_attention_64_forward.7} parent=39 // pred_region
        %p1902 = scmp.lt.s32.totalorder %s15, 1
        %s1903 = scalar_select %p1902, %s15, 1
        %s1904 = smul.addr %s1903, 37
        %s1905 = smul.addr %s1904, 4
        %s1906 = scalar_lea.vmem %s3, %s1905
      $region44: #{motion_attention_64_forward.7} parent=39 // pred_fallthru
        _
    $region40: #{motion_attention_64_forward.7} parent=5 // pred_fallthru
      _
  $region6: #{motion_attention_64_forward.7} parent=0 // loop_footer
    %s13 = sadd.s32 1, %s9
  $region7: #{motion_attention_64_forward.7} parent=0 // loop_footer_branch
    %8 = sbr.rel target = $region3
  $region8: #{motion_attention_64_forward.7} parent=0 // loop_exit
    _

// kernel: motion_attention_64_forward.8
$region0: #{motion_attention_64_forward.8}
  #allocation0 [shape = 'u32[]', space=smem, size = 0x4, offset = 0x4, fixed_abs, tag = 'smem constant byte address 0x4 - core index']
  #allocation1 [shape = 'u32[144,128]{1,0:T(1,128)}', space=vmem, size = 0x12000, scoped, tag = 'internal scratch']
  %s0 = inlined_call_operand.vmem [shape: bf16[2,4,312,32], index: 0, kind: input, shape index: {}]
  %s1 = inlined_call_operand.vmem [shape: bf16[288,64], index: 1, kind: input, shape index: {}]
  %s2 = inlined_call_operand.vmem [shape: f32[1,64], index: 2, kind: input, shape index: {}]
  %s3 = inlined_call_operand.vmem [shape: bf16[2,289,64], index: 3, kind: output, shape index: {}]
  %s4 = sld [smem:[#allocation0]]
  $region45: #{motion_attention_64_forward.8} parent=0
    _
  %s6 = ssub.s32 1, %s4
  %s7 = scalar_select 0, %s6, %s4
  loop: start=0, step=1, limit=4
  $region2: #{motion_attention_64_forward.8} parent=0 // loop_pre_header
    _
  $region3: #{motion_attention_64_forward.8} parent=0 // loop_header
    %s9 = sphi 0, %s13
    %p10 = scmp.ge.s32.totalorder %s9, 4
    %s19 = sphi 0, %s21
    %s22 = sphi 0, %s19
    %s23 = sphi 0, %s22
    %s39 = sphi 0, %s23
    %s43 = sphi 0, %s43
    %s45 = sphi 0, %s43
    %s46 = sphi 0, %s45
    %s60 = sphi 0, %s46
    %s64 = sphi 0, %s64
    %s66 = sphi 0, %s64
    %s67 = sphi 0, %s66
    %s81 = sphi 0, %s67
    %s87 = sphi 0, %s89
    %s90 = sphi 0, %s87
    %s91 = sphi 0, %s90
    %s107 = sphi 0, %s91
  $region4: #{motion_attention_64_forward.8} parent=0 // loop_header_branch
    %12 = sbr.rel (%p10) target = $region8
  $region5: #{motion_attention_64_forward.8} parent=0 // loop_body
    %s14 = ssub.s32 %s9, 1
    %s15 = ssub.s32 %s9, 2
    %s16 = sadd.s32 %s9, 1
    %s17 = ssub.s32 %s9, %s16
    %p18 = scmp.eq.s32.totalorder %s17, 0
    %s20 = sadd.s32 %s19, 1
    %s21 = scalar_select %p18, %s19, %s20
    %p24 = pneg %p18
    %p25 = scmp.eq.s32.totalorder %s9, 1
    %p26 = por %p24, %p25
    %p27 = scmp.ne.s32.totalorder %s19, %s22
    %p28 = scmp.eq.s32.totalorder %s9, 0
    %p29 = por %p27, %p28
    %p30 = scmp.ne.s32.totalorder %s19, %s22
    %p31 = scmp.eq.s32.totalorder %s14, 1
    %p32 = por %p30, %p31
    %p33 = scmp.ne.s32.totalorder %s22, %s23
    %p34 = scmp.eq.s32.totalorder %s14, 0
    %p35 = por %p33, %p34
    %p36 = scmp.ne.s32.totalorder %s22, %s23
    %p37 = scmp.eq.s32.totalorder %s15, 1
    %p38 = por %p36, %p37
    %p40 = scmp.ne.s32.totalorder %s23, %s39
    %p41 = scmp.eq.s32.totalorder %s15, 0
    %p42 = por %p40, %p41
    %s44 = sadd.s32 %s43, 1
    %p47 = scmp.eq.s32.totalorder %s9, 1
    %p48 = scmp.ne.s32.totalorder %s43, %s45
    %p49 = scmp.eq.s32.totalorder %s9, 0
    %p50 = por %p48, %p49
    %p51 = scmp.ne.s32.totalorder %s43, %s45
    %p52 = scmp.eq.s32.totalorder %s14, 1
    %p53 = por %p51, %p52
    %p54 = scmp.ne.s32.totalorder %s45, %s46
    %p55 = scmp.eq.s32.totalorder %s14, 0
    %p56 = por %p54, %p55
    %p57 = scmp.ne.s32.totalorder %s45, %s46
    %p58 = scmp.eq.s32.totalorder %s15, 1
    %p59 = por %p57, %p58
    %p61 = scmp.ne.s32.totalorder %s46, %s60
    %p62 = scmp.eq.s32.totalorder %s15, 0
    %p63 = por %p61, %p62
    %s65 = sadd.s32 %s64, 1
    %p68 = scmp.eq.s32.totalorder %s9, 1
    %p69 = scmp.ne.s32.totalorder %s64, %s66
    %p70 = scmp.eq.s32.totalorder %s9, 0
    %p71 = por %p69, %p70
    %p72 = scmp.ne.s32.totalorder %s64, %s66
    %p73 = scmp.eq.s32.totalorder %s14, 1
    %p74 = por %p72, %p73
    %p75 = scmp.ne.s32.totalorder %s66, %s67
    %p76 = scmp.eq.s32.totalorder %s14, 0
    %p77 = por %p75, %p76
    %p78 = scmp.ne.s32.totalorder %s66, %s67
    %p79 = scmp.eq.s32.totalorder %s15, 1
    %p80 = por %p78, %p79
    %p82 = scmp.ne.s32.totalorder %s67, %s81
    %p83 = scmp.eq.s32.totalorder %s15, 0
    %p84 = por %p82, %p83
    %s85 = ssub.s32 %s9, %s16
    %p86 = scmp.eq.s32.totalorder %s85, 0
    %s88 = sadd.s32 %s87, 1
    %s89 = scalar_select %p86, %s87, %s88
    %p92 = pneg %p86
    %p93 = scmp.eq.s32.totalorder %s9, 1
    %p94 = por %p92, %p93
    %p95 = scmp.ne.s32.totalorder %s87, %s90
    %p96 = scmp.eq.s32.totalorder %s9, 0
    %p97 = por %p95, %p96
    %p98 = scmp.ne.s32.totalorder %s87, %s90
    %p99 = scmp.eq.s32.totalorder %s14, 1
    %p100 = por %p98, %p99
    %p101 = scmp.ne.s32.totalorder %s90, %s91
    %p102 = scmp.eq.s32.totalorder %s14, 0
    %p103 = por %p101, %p102
    %p104 = scmp.ne.s32.totalorder %s90, %s91
    %p105 = scmp.eq.s32.totalorder %s15, 1
    %p106 = por %p104, %p105
    %p108 = scmp.ne.s32.totalorder %s91, %s107
    %p109 = scmp.eq.s32.totalorder %s15, 0
    %p110 = por %p108, %p109
    %p111 = scmp.le.s32.totalorder 1, %s9
    %p112 = scmp.lt.s32.totalorder %s9, 3
    %p113 = pnand %p111, %p112
    %p114 = pneg %p113
    // Predicated region
    $region9: #{motion_attention_64_forward.8} parent=5 // pred_check
      _
    $region10: #{motion_attention_64_forward.8} parent=5 // pred_check_branch
      %116 = sbr.rel (%p113) target = $region12
    $region11: #{motion_attention_64_forward.8} parent=5 // pred_region
      %s117 = ssub.s32 %s9, 1
      // Predicated region
      $region13: #{motion_attention_64_forward.8} parent=11 // pred_check
        %p118 = pneg %p56
      $region14: #{motion_attention_64_forward.8} parent=11 // pred_check_branch
        %120 = sbr.rel (%p118) target = $region16
      $region15: #{motion_attention_64_forward.8} parent=11 // pred_region
        _
      $region16: #{motion_attention_64_forward.8} parent=11 // pred_fallthru
        _
      // Predicated region
      $region17: #{motion_attention_64_forward.8} parent=11 // pred_check
        %p121 = pneg %p77
      $region18: #{motion_attention_64_forward.8} parent=11 // pred_check_branch
        %123 = sbr.rel (%p121) target = $region20
      $region19: #{motion_attention_64_forward.8} parent=11 // pred_region
        _
      $region20: #{motion_attention_64_forward.8} parent=11 // pred_fallthru
        _
    $region12: #{motion_attention_64_forward.8} parent=5 // pred_fallthru
      _
    %p124 = scmp.lt.s32.totalorder %s9, 2
    // Predicated region
    $region21: #{motion_attention_64_forward.8} parent=5 // pred_check
      %p125 = pneg %p124
    $region22: #{motion_attention_64_forward.8} parent=5 // pred_check_branch
      %127 = sbr.rel (%p125) target = $region24
    $region23: #{motion_attention_64_forward.8} parent=5 // pred_region
      // Predicated region
      $region25: #{motion_attention_64_forward.8} parent=23 // pred_check
        %p128 = pneg %p29
      $region26: #{motion_attention_64_forward.8} parent=23 // pred_check_branch
        %130 = sbr.rel (%p128) target = $region28
      $region27: #{motion_attention_64_forward.8} parent=23 // pred_region
        %p131 = scmp.lt.s32.totalorder %s9, 1
        %s132 = scalar_select %p131, %s9, 1
        %s133 = smul.addr %s132, 156
        %s134 = smul.addr %s133, 4
        %s135 = scalar_lea.vmem %s0, %s134
      $region28: #{motion_attention_64_forward.8} parent=23 // pred_fallthru
        _
    $region24: #{motion_attention_64_forward.8} parent=5 // pred_fallthru
      _
    %p136 = scmp.le.s32.totalorder 1, %s9
    %p137 = scmp.lt.s32.totalorder %s9, 3
    %p138 = pnand %p136, %p137
    %p139 = pneg %p138
    // Predicated region
    $region29: #{motion_attention_64_forward.8} parent=5 // pred_check
      _
    $region30: #{motion_attention_64_forward.8} parent=5 // pred_check_branch
      %141 = sbr.rel (%p138) target = $region32
    $region31: #{motion_attention_64_forward.8} parent=5 // pred_region
      %s142 = ssub.s32 %s9, 1
      %p143 = scmp.lt.s32.totalorder %s14, 1
      %s144 = scalar_select %p143, %s14, 1
      %s145 = smul.addr %s144, 156
      %s146 = smul.addr %s145, 4
      %s147 = scalar_lea.vmem %s0, %s146
      %p148 = pneg %p35
      %p149 = pneg %p32
      %p150 = pneg %p56
      %p151 = pneg %p53
      %p152 = pneg %p77
      %p153 = pneg %p74
      %p154 = pneg %p103
      %p155 = pneg %p100
      %p156 = scmp.lt.s32.totalorder %s14, 1
      %s157 = scalar_select %p156, %s14, 1
      %s158 = smul.addr %s157, 37
      %s159 = smul.addr %s158, 4
      %s160 = scalar_lea.vmem %s3, %s159
      %p161 = scmp.lt.s32.totalorder %s14, 1
      %s162 = scalar_select %p161, %s14, 1
      %s163 = smul.addr %s162, 156
      %s164 = smul.addr %s163, 4
      %s165 = scalar_lea.vmem %s0, %s164
      %p166 = scmp.lt.s32.totalorder %s14, 1
      %s167 = scalar_select %p166, %s14, 1
      %s168 = smul.addr %s167, 37
      %s169 = smul.addr %s168, 4
      %s170 = scalar_lea.vmem %s3, %s169
      %v172 = vld [vmem:[%s165] sm:$0xf]
      %v173 = vld [vmem:[%s165 + $0x4] sm:$0xf]
      %v174 = vld [vmem:[%s165 + $0x8] sm:$0xf]
      %v175 = vld [vmem:[%s165 + $0xc] sm:$0xf]
      %v176 = vld [vmem:[%s165 + $0x10] sm:$0xf]
      %v177 = vld [vmem:[%s165 + $0x14] sm:$0xf]
      %v178 = vld [vmem:[%s165 + $0x18] sm:$0xf]
      %v179 = vld [vmem:[%s165 + $0x1c] sm:$0xf]
      %v180 = vld [vmem:[%s165 + $0x20] sm:$0xf]
      %v181 = vld [vmem:[%s165 + $0x24] sm:$0xf]
      %v182 = vld [vmem:[%s165 + $0x28] sm:$0xf]
      %v183 = vld [vmem:[%s165 + $0x2c] sm:$0xf]
      %v184 = vld [vmem:[%s165 + $0x30] sm:$0xf]
      %v185 = vld [vmem:[%s165 + $0x34] sm:$0xf]
      %v186 = vld [vmem:[%s165 + $0x38] sm:$0xf]
      %v187 = vld [vmem:[%s165 + $0x3c] sm:$0xf]
      %v188 = vld [vmem:[%s165 + $0x40] sm:$0xf]
      %v189 = vld [vmem:[%s165 + $0x44] sm:$0xf]
      %v190 = vld [vmem:[%s165 + $0x48] sm:$0xf]
      %v191 = vld [vmem:[%s165 + $0x4c] sm:$0xf]
      %v192 = vld [vmem:[%s165 + $0x50] sm:$0xf]
      %v193 = vld [vmem:[%s165 + $0x54] sm:$0xf]
      %v194 = vld [vmem:[%s165 + $0x58] sm:$0xf]
      %v195 = vld [vmem:[%s165 + $0x5c] sm:$0xf]
      %v196 = vld [vmem:[%s165 + $0x60] sm:$0xf]
      %v197 = vld [vmem:[%s165 + $0x64] sm:$0xf]
      %v198 = vld [vmem:[%s165 + $0x68] sm:$0xf]
      %v199 = vld [vmem:[%s165 + $0x6c] sm:$0xf]
      %v200 = vld [vmem:[%s165 + $0x70] sm:$0xf]
      %v201 = vld [vmem:[%s165 + $0x74] sm:$0xf]
      %v202 = vld [vmem:[%s165 + $0x78] sm:$0xf]
      %v203 = vld [vmem:[%s165 + $0x7c] sm:$0xf]
      %v204 = vld [vmem:[%s165 + $0x80] sm:$0xf]
      %v205 = vld [vmem:[%s165 + $0x84] sm:$0xf]
      %v206 = vld [vmem:[%s165 + $0x88] sm:$0xf]
      %v207 = vld [vmem:[%s165 + $0x8c] sm:$0xf]
      %v208 = vld [vmem:[%s165 + $0x90] sm:$0xf]
      %v209 = vld [vmem:[%s165 + $0x94] sm:$0xf]
      %v210 = vld [vmem:[%s165 + $0x98] sm:$0xf]
      %v211 = vld [vmem:[%s165 + $0x9c] sm:$0xf]
      %v212 = vld [vmem:[%s165 + $0xa0] sm:$0xf]
      %v213 = vld [vmem:[%s165 + $0xa4] sm:$0xf]
      %v214 = vld [vmem:[%s165 + $0xa8] sm:$0xf]
      %v215 = vld [vmem:[%s165 + $0xac] sm:$0xf]
      %v216 = vld [vmem:[%s165 + $0xb0] sm:$0xf]
      %v217 = vld [vmem:[%s165 + $0xb4] sm:$0xf]
      %v218 = vld [vmem:[%s165 + $0xb8] sm:$0xf]
      %v219 = vld [vmem:[%s165 + $0xbc] sm:$0xf]
      %v220 = vld [vmem:[%s165 + $0xc0] sm:$0xf]
      %v221 = vld [vmem:[%s165 + $0xc4] sm:$0xf]
      %v222 = vld [vmem:[%s165 + $0xc8] sm:$0xf]
      %v223 = vld [vmem:[%s165 + $0xcc] sm:$0xf]
      %v224 = vld [vmem:[%s165 + $0xd0] sm:$0xf]
      %v225 = vld [vmem:[%s165 + $0xd4] sm:$0xf]
      %v226 = vld [vmem:[%s165 + $0xd8] sm:$0xf]
      %v227 = vld [vmem:[%s165 + $0xdc] sm:$0xf]
      %v228 = vld [vmem:[%s165 + $0xe0] sm:$0xf]
      %v229 = vld [vmem:[%s165 + $0xe4] sm:$0xf]
      %v230 = vld [vmem:[%s165 + $0xe8] sm:$0xf]
      %v231 = vld [vmem:[%s165 + $0xec] sm:$0xf]
      %v232 = vld [vmem:[%s165 + $0xf0] sm:$0xf]
      %v233 = vld [vmem:[%s165 + $0xf4] sm:$0xf]
      %v234 = vld [vmem:[%s165 + $0xf8] sm:$0xf]
      %v235 = vld [vmem:[%s165 + $0xfc] sm:$0xf]
      %v236 = vld [vmem:[%s165 + $0x100] sm:$0xf]
      %v237 = vld [vmem:[%s165 + $0x104] sm:$0xf]
      %v238 = vld [vmem:[%s165 + $0x108] sm:$0xf]
      %v239 = vld [vmem:[%s165 + $0x10c] sm:$0xf]
      %v240 = vld [vmem:[%s165 + $0x110] sm:$0xf]
      %v241 = vld [vmem:[%s165 + $0x114] sm:$0xf]
      %v242 = vld [vmem:[%s165 + $0x118] sm:$0xf]
      %v243 = vld [vmem:[%s165 + $0x11c] sm:$0xf]
      %v244 = vld [vmem:[%s165 + $0x120] sm:$0xf]
      %v245 = vld [vmem:[%s165 + $0x124] sm:$0xf]
      %v246 = vld [vmem:[%s165 + $0x128] sm:$0xf]
      %v247 = vld [vmem:[%s165 + $0x12c] sm:$0xf]
      %v248 = vld [vmem:[%s165 + $0x130] sm:$0xf]
      %v249 = vld [vmem:[%s165 + $0x134] sm:$0xf]
      %v250 = vld [vmem:[%s165 + $0x138] sm:$0xf]
      %v251 = vld [vmem:[%s165 + $0x13c] sm:$0xf]
      %v252 = vld [vmem:[%s165 + $0x140] sm:$0xf]
      %v253 = vld [vmem:[%s165 + $0x144] sm:$0xf]
      %v254 = vld [vmem:[%s165 + $0x148] sm:$0xf]
      %v255 = vld [vmem:[%s165 + $0x14c] sm:$0xf]
      %v256 = vld [vmem:[%s165 + $0x150] sm:$0xf]
      %v257 = vld [vmem:[%s165 + $0x154] sm:$0xf]
      %v258 = vld [vmem:[%s165 + $0x158] sm:$0xf]
      %v259 = vld [vmem:[%s165 + $0x15c] sm:$0xf]
      %v260 = vld [vmem:[%s165 + $0x160] sm:$0xf]
      %v261 = vld [vmem:[%s165 + $0x164] sm:$0xf]
      %v262 = vld [vmem:[%s165 + $0x168] sm:$0xf]
      %v263 = vld [vmem:[%s165 + $0x16c] sm:$0xf]
      %v264 = vld [vmem:[%s165 + $0x170] sm:$0xf]
      %v265 = vld [vmem:[%s165 + $0x174] sm:$0xf]
      %v266 = vld [vmem:[%s165 + $0x178] sm:$0xf]
      %v267 = vld [vmem:[%s165 + $0x17c] sm:$0xf]
      %v268 = vld [vmem:[%s165 + $0x180] sm:$0xf]
      %v269 = vld [vmem:[%s165 + $0x184] sm:$0xf]
      %v270 = vld [vmem:[%s165 + $0x188] sm:$0xf]
      %v271 = vld [vmem:[%s165 + $0x18c] sm:$0xf]
      %v272 = vld [vmem:[%s165 + $0x190] sm:$0xf]
      %v273 = vld [vmem:[%s165 + $0x194] sm:$0xf]
      %v274 = vld [vmem:[%s165 + $0x198] sm:$0xf]
      %v275 = vld [vmem:[%s165 + $0x19c] sm:$0xf]
      %v276 = vld [vmem:[%s165 + $0x1a0] sm:$0xf]
      %v277 = vld [vmem:[%s165 + $0x1a4] sm:$0xf]
      %v278 = vld [vmem:[%s165 + $0x1a8] sm:$0xf]
      %v279 = vld [vmem:[%s165 + $0x1ac] sm:$0xf]
      %v280 = vld [vmem:[%s165 + $0x1b0] sm:$0xf]
      %v281 = vld [vmem:[%s165 + $0x1b4] sm:$0xf]
      %v282 = vld [vmem:[%s165 + $0x1b8] sm:$0xf]
      %v283 = vld [vmem:[%s165 + $0x1bc] sm:$0xf]
      %v284 = vld [vmem:[%s165 + $0x1c0] sm:$0xf]
      %v285 = vld [vmem:[%s165 + $0x1c4] sm:$0xf]
      %v286 = vld [vmem:[%s165 + $0x1c8] sm:$0xf]
      %v287 = vld [vmem:[%s165 + $0x1d4] sm:$0xf]
      %v288 = vld [vmem:[%s165 + $0x1d8] sm:$0xf]
      %v289 = vld [vmem:[%s165 + $0x1dc] sm:$0xf]
      %v290 = vld [vmem:[%s165 + $0x1e0] sm:$0xf]
      %v291 = vld [vmem:[%s165 + $0x1e4] sm:$0xf]
      %v292 = vld [vmem:[%s165 + $0x1e8] sm:$0xf]
      %v293 = vld [vmem:[%s165 + $0x1ec] sm:$0xf]
      %v294 = vld [vmem:[%s165 + $0x1f0] sm:$0xf]
      %v295 = vld [vmem:[%s165 + $0x1f4] sm:$0xf]
      %v296 = vld [vmem:[%s165 + $0x1f8] sm:$0xf]
      %v297 = vld [vmem:[%s165 + $0x1fc] sm:$0xf]
      %v298 = vld [vmem:[%s165 + $0x200] sm:$0xf]
      %v299 = vld [vmem:[%s165 + $0x204] sm:$0xf]
      %v300 = vld [vmem:[%s165 + $0x208] sm:$0xf]
      %v301 = vld [vmem:[%s165 + $0x20c] sm:$0xf]
      %v302 = vld [vmem:[%s165 + $0x210] sm:$0xf]
      %v303 = vld [vmem:[%s165 + $0x214] sm:$0xf]
      %v304 = vld [vmem:[%s165 + $0x218] sm:$0xf]
      %v305 = vld [vmem:[%s165 + $0x21c] sm:$0xf]
      %v306 = vld [vmem:[%s165 + $0x220] sm:$0xf]
      %v307 = vld [vmem:[%s165 + $0x224] sm:$0xf]
      %v308 = vld [vmem:[%s165 + $0x228] sm:$0xf]
      %v309 = vld [vmem:[%s165 + $0x22c] sm:$0xf]
      %v310 = vld [vmem:[%s165 + $0x230] sm:$0xf]
      %v311 = vld [vmem:[%s165 + $0x234] sm:$0xf]
      %v312 = vld [vmem:[%s165 + $0x238] sm:$0xf]
      %v313 = vld [vmem:[%s165 + $0x23c] sm:$0xf]
      %v314 = vld [vmem:[%s165 + $0x240] sm:$0xf]
      %v315 = vld [vmem:[%s165 + $0x244] sm:$0xf]
      %v316 = vld [vmem:[%s165 + $0x248] sm:$0xf]
      %v317 = vld [vmem:[%s165 + $0x24c] sm:$0xf]
      %v318 = vld [vmem:[%s165 + $0x250] sm:$0xf]
      %v319 = vld [vmem:[%s165 + $0x254] sm:$0xf]
      %v320 = vld [vmem:[%s165 + $0x258] sm:$0xf]
      %v321 = vld [vmem:[%s165 + $0x25c] sm:$0xf]
      %v322 = vld [vmem:[%s165 + $0x260] sm:$0xf]
      %v323 = vld [vmem:[%s165 + $0x264] sm:$0xf]
      %v324 = vld [vmem:[%s1] sm:$0xf]
      %v325 = vld [vmem:[%s1 + $0x4] sm:$0xf]
      %v326 = vld [vmem:[%s1 + $0x8] sm:$0xf]
      %v327 = vld [vmem:[%s1 + $0xc] sm:$0xf]
      %v328 = vld [vmem:[%s1 + $0x10] sm:$0xf]
      %v329 = vld [vmem:[%s1 + $0x14] sm:$0xf]
      %v330 = vld [vmem:[%s1 + $0x18] sm:$0xf]
      %v331 = vld [vmem:[%s1 + $0x1c] sm:$0xf]
      %v332 = vld [vmem:[%s1 + $0x20] sm:$0xf]
      %v333 = vld [vmem:[%s1 + $0x24] sm:$0xf]
      %v334 = vld [vmem:[%s1 + $0x28] sm:$0xf]
      %v335 = vld [vmem:[%s1 + $0x2c] sm:$0xf]
      %v336 = vld [vmem:[%s1 + $0x30] sm:$0xf]
      %v337 = vld [vmem:[%s1 + $0x34] sm:$0xf]
      %v338 = vld [vmem:[%s1 + $0x38] sm:$0xf]
      %v339 = vld [vmem:[%s1 + $0x3c] sm:$0xf]
      %v340 = vld [vmem:[%s1 + $0x40] sm:$0xf]
      %v341 = vld [vmem:[%s1 + $0x44] sm:$0xf]
      %v342 = vld [vmem:[%s1 + $0x48] sm:$0xf]
      %v343 = vld [vmem:[%s1 + $0x4c] sm:$0xf]
      %v344 = vld [vmem:[%s1 + $0x50] sm:$0xf]
      %v345 = vld [vmem:[%s1 + $0x54] sm:$0xf]
      %v346 = vld [vmem:[%s1 + $0x58] sm:$0xf]
      %v347 = vld [vmem:[%s1 + $0x5c] sm:$0xf]
      %v348 = vld [vmem:[%s1 + $0x60] sm:$0xf]
      %v349 = vld [vmem:[%s1 + $0x64] sm:$0xf]
      %v350 = vld [vmem:[%s1 + $0x68] sm:$0xf]
      %v351 = vld [vmem:[%s1 + $0x6c] sm:$0xf]
      %v352 = vld [vmem:[%s1 + $0x70] sm:$0xf]
      %v353 = vld [vmem:[%s1 + $0x74] sm:$0xf]
      %v354 = vld [vmem:[%s1 + $0x78] sm:$0xf]
      %v355 = vld [vmem:[%s1 + $0x7c] sm:$0xf]
      %v356 = vld [vmem:[%s1 + $0x80] sm:$0xf]
      %v357 = vld [vmem:[%s1 + $0x84] sm:$0xf]
      %v358 = vld [vmem:[%s1 + $0x88] sm:$0xf]
      %v359 = vld [vmem:[%s1 + $0x8c] sm:$0xf]
      %v397 = vunpack.c.l.b16 %v211
      %v398 = vunpack.c.l.b16 %v212
      %v399 = vunpack.c.l.b16 %v213
      %v400 = vunpack.c.l.b16 %v214
      %v401 = vunpack.c.l.b16 %v215
      %v402 = vunpack.c.l.b16 %v216
      %v403 = vunpack.c.l.b16 %v217
      %v404 = vunpack.c.l.b16 %v218
      %v405 = vunpack.c.l.b16 %v219
      %v406 = vunpack.c.l.b16 %v220
      %v407 = vunpack.c.l.b16 %v221
      %v408 = vunpack.c.l.b16 %v222
      %v409 = vunpack.c.l.b16 %v223
      %v410 = vunpack.c.l.b16 %v224
      %v411 = vunpack.c.l.b16 %v225
      %v412 = vunpack.c.l.b16 %v226
      %v413 = vunpack.c.l.b16 %v227
      %v414 = vunpack.c.l.b16 %v228
      %v415 = vunpack.c.l.b16 %v229
      %v416 = vunpack.c.l.b16 %v230
      %v417 = vunpack.c.l.b16 %v231
      %v418 = vunpack.c.l.b16 %v232
      %v419 = vunpack.c.l.b16 %v233
      %v420 = vunpack.c.l.b16 %v234
      %v421 = vunpack.c.l.b16 %v235
      %v422 = vunpack.c.l.b16 %v236
      %v423 = vunpack.c.l.b16 %v237
      %v424 = vunpack.c.l.b16 %v238
      %v425 = vunpack.c.l.b16 %v239
      %v426 = vunpack.c.l.b16 %v240
      %v427 = vunpack.c.l.b16 %v241
      %v428 = vunpack.c.l.b16 %v242
      %v429 = vunpack.c.l.b16 %v243
      %v430 = vunpack.c.l.b16 %v244
      %v431 = vunpack.c.l.b16 %v245
      %v432 = vunpack.c.l.b16 %v246
      %v433 = vunpack.c.l.b16 %v247
      %v434 = vpack.c.b16 %v398, %v397
      %v435 = vpack.c.b16 %v400, %v399
      %v436 = vpack.c.b16 %v402, %v401
      %v437 = vpack.c.b16 %v404, %v403
      %v438 = vpack.c.b16 %v406, %v405
      %v439 = vpack.c.b16 %v408, %v407
      %v440 = vpack.c.b16 %v410, %v409
      %v441 = vpack.c.b16 %v412, %v411
      %v442 = vpack.c.b16 %v414, %v413
      %v443 = vpack.c.b16 %v416, %v415
      %v444 = vpack.c.b16 %v418, %v417
      %v445 = vpack.c.b16 %v420, %v419
      %v446 = vpack.c.b16 %v422, %v421
      %v447 = vpack.c.b16 %v424, %v423
      %v448 = vpack.c.b16 %v426, %v425
      %v449 = vpack.c.b16 %v428, %v427
      %v450 = vpack.c.b16 %v430, %v429
      %v451 = vpack.c.b16 %v432, %v431
      %v452 = vpack.c.b16 %v433, %v433
      %v457 = vunpack.c.l.b16 %v328
      %v458 = vunpack.c.l.b16 %v329
      %v459 = vunpack.c.l.b16 %v330
      %v460 = vunpack.c.l.b16 %v331
      %v461 = vpack.c.b16 %v458, %v457
      %v462 = vpack.c.b16 %v460, %v459
      %vm465 = vcmask 261120
      %v467 = vsel %vm465, %v434, 0
      %v470 = vsel %vm465, %v435, 0
      %v473 = vsel %vm465, %v436, 0
      %v476 = vsel %vm465, %v437, 0
      %v479 = vsel %vm465, %v438, 0
      %v482 = vsel %vm465, %v439, 0
      %v485 = vsel %vm465, %v440, 0
      %v488 = vsel %vm465, %v441, 0
      %v491 = vsel %vm465, %v442, 0
      %v494 = vsel %vm465, %v443, 0
      %v497 = vsel %vm465, %v444, 0
      %v500 = vsel %vm465, %v445, 0
      %v503 = vsel %vm465, %v446, 0
      %v506 = vsel %vm465, %v447, 0
      %v509 = vsel %vm465, %v448, 0
      %v512 = vsel %vm465, %v449, 0
      %v515 = vsel %vm465, %v450, 0
      %v518 = vsel %vm465, %v451, 0
      %v521 = vsel %vm465, %v452, 0
      %523 = vmatprep.subr.bf16.mxu0 0
      %524 = vmatpush1.bf16.msra.mxu0 %v461
      %525 = vmatprep.subr.bf16.mxu0 0
      %526 = vmatpush1.bf16.msra.mxu0 %v462
      %527 = vmatprep.subr.bf16.mxu0 0
      %528 = vmatpush1.bf16.msra.mxu0 0
      %529 = vmatprep.subr.bf16.mxu0 0
      %530 = vmatpush1.bf16.msra.mxu0 0
      %531 = vmatprep.subr.bf16.mxu0 0
      %532 = vmatpush1.bf16.msra.mxu0 0
      %533 = vmatprep.subr.bf16.mxu0 0
      %534 = vmatpush1.bf16.msra.mxu0 0
      %535 = vmatprep.subr.bf16.mxu0 0
      %536 = vmatpush1.bf16.msra.mxu0 0
      %537 = vmatprep.subr.bf16.mxu0 0
      %538 = vmatpush1.bf16.msra.mxu0 0
      %539 = vmatprep.subr.bf16.mxu0 0
      %540 = vmatpush1.bf16.msra.mxu0 0
      %541 = vmatprep.subr.bf16.mxu0 0
      %542 = vmatpush1.bf16.msra.mxu0 0
      %543 = vmatprep.subr.bf16.mxu0 0
      %544 = vmatpush1.bf16.msra.mxu0 0
      %545 = vmatprep.subr.bf16.mxu0 0
      %546 = vmatpush1.bf16.msra.mxu0 0
      %547 = vmatprep.subr.bf16.mxu0 0
      %548 = vmatpush1.bf16.msra.mxu0 0
      %549 = vmatprep.subr.bf16.mxu0 0
      %550 = vmatpush1.bf16.msra.mxu0 0
      %551 = vmatprep.subr.bf16.mxu0 0
      %552 = vmatpush1.bf16.msra.mxu0 0
      %553 = vmatprep.subr.bf16.mxu0 0
      %554 = vmatpush1.bf16.msra.mxu0 0
      %555 = vmatprep.mubr.bf16.mxu0 0
      %556 = vmatmul.mubr.bf16.gmra.mrb[0].mxu0 %v467
      %v557 = vpop.f32.mrb[0].mxu0
      %v558 = vadd.f32 0.0, %v557
      %v559 = vpop.f32.mrb[0].mxu0
      %v560 = vpop.f32.mrb[0].mxu0
      %v561 = vadd.f32 0.0, %v560
      %v562 = vpop.f32.mrb[0].mxu0
      %563 = vmatprep.mubr.bf16.mxu0 0
      %564 = vmatmul.mubr.bf16.gmra.mrb[0].mxu0 %v470
      %v565 = vpop.f32.mrb[0].mxu0
      %v566 = vadd.f32 0.0, %v565
      %v567 = vpop.f32.mrb[0].mxu0
      %v568 = vpop.f32.mrb[0].mxu0
      %v569 = vadd.f32 0.0, %v568
      %v570 = vpop.f32.mrb[0].mxu0
      %571 = vmatprep.mubr.bf16.mxu0 0
      %572 = vmatmul.mubr.bf16.gmra.mrb[0].mxu0 %v473
      %v573 = vpop.f32.mrb[0].mxu0
      %v574 = vadd.f32 0.0, %v573
      %v575 = vpop.f32.mrb[0].mxu0
      %v576 = vpop.f32.mrb[0].mxu0
      %v577 = vadd.f32 0.0, %v576
      %v578 = vpop.f32.mrb[0].mxu0
      %579 = vmatprep.mubr.bf16.mxu0 0
      %580 = vmatmul.mubr.bf16.gmra.mrb[0].mxu0 %v476
      %v581 = vpop.f32.mrb[0].mxu0
      %v582 = vadd.f32 0.0, %v581
      %v583 = vpop.f32.mrb[0].mxu0
      %v584 = vpop.f32.mrb[0].mxu0
      %v585 = vadd.f32 0.0, %v584
      %v586 = vpop.f32.mrb[0].mxu0
      %587 = vmatprep.mubr.bf16.mxu0 0
      %588 = vmatmul.mubr.bf16.gmra.mrb[0].mxu0 %v479
      %v589 = vpop.f32.mrb[0].mxu0
      %v590 = vadd.f32 0.0, %v589
      %v591 = vpop.f32.mrb[0].mxu0
      %v592 = vpop.f32.mrb[0].mxu0
      %v593 = vadd.f32 0.0, %v592
      %v594 = vpop.f32.mrb[0].mxu0
      %595 = vmatprep.mubr.bf16.mxu0 0
      %596 = vmatmul.mubr.bf16.gmra.mrb[0].mxu0 %v482
      %v597 = vpop.f32.mrb[0].mxu0
      %v598 = vadd.f32 0.0, %v597
      %v599 = vpop.f32.mrb[0].mxu0
      %v600 = vpop.f32.mrb[0].mxu0
      %v601 = vadd.f32 0.0, %v600
      %v602 = vpop.f32.mrb[0].mxu0
      %603 = vmatprep.mubr.bf16.mxu0 0
      %604 = vmatmul.mubr.bf16.gmra.mrb[0].mxu0 %v485
      %v605 = vpop.f32.mrb[0].mxu0
      %v606 = vadd.f32 0.0, %v605
      %v607 = vpop.f32.mrb[0].mxu0
      %v608 = vpop.f32.mrb[0].mxu0
      %v609 = vadd.f32 0.0, %v608
      %v610 = vpop.f32.mrb[0].mxu0
      %611 = vmatprep.mubr.bf16.mxu0 0
      %612 = vmatmul.mubr.bf16.gmra.mrb[0].mxu0 %v488
      %v613 = vpop.f32.mrb[0].mxu0
      %v614 = vadd.f32 0.0, %v613
      %v615 = vpop.f32.mrb[0].mxu0
      %v616 = vpop.f32.mrb[0].mxu0
      %v617 = vadd.f32 0.0, %v616
      %v618 = vpop.f32.mrb[0].mxu0
      %619 = vmatprep.mubr.bf16.mxu0 0
      %620 = vmatmul.mubr.bf16.gmra.mrb[0].mxu0 %v491
      %v621 = vpop.f32.mrb[0].mxu0
      %v622 = vadd.f32 0.0, %v621
      %v623 = vpop.f32.mrb[0].mxu0
      %v624 = vpop.f32.mrb[0].mxu0
      %v625 = vadd.f32 0.0, %v624
      %v626 = vpop.f32.mrb[0].mxu0
      %627 = vmatprep.mubr.bf16.mxu0 0
      %628 = vmatmul.mubr.bf16.gmra.mrb[0].mxu0 %v494
      %v629 = vpop.f32.mrb[0].mxu0
      %v630 = vadd.f32 0.0, %v629
      %v631 = vpop.f32.mrb[0].mxu0
      %v632 = vpop.f32.mrb[0].mxu0
      %v633 = vadd.f32 0.0, %v632
      %v634 = vpop.f32.mrb[0].mxu0
      %635 = vmatprep.mubr.bf16.mxu0 0
      %636 = vmatmul.mubr.bf16.gmra.mrb[0].mxu0 %v497
      %v637 = vpop.f32.mrb[0].mxu0
      %v638 = vadd.f32 0.0, %v637
      %v639 = vpop.f32.mrb[0].mxu0
      %v640 = vpop.f32.mrb[0].mxu0
      %v641 = vadd.f32 0.0, %v640
      %v642 = vpop.f32.mrb[0].mxu0
      %643 = vmatprep.mubr.bf16.mxu0 0
      %644 = vmatmul.mubr.bf16.gmra.mrb[0].mxu0 %v500
      %v645 = vpop.f32.mrb[0].mxu0
      %v646 = vadd.f32 0.0, %v645
      %v647 = vpop.f32.mrb[0].mxu0
      %v648 = vpop.f32.mrb[0].mxu0
      %v649 = vadd.f32 0.0, %v648
      %v650 = vpop.f32.mrb[0].mxu0
      %651 = vmatprep.mubr.bf16.mxu0 0
      %652 = vmatmul.mubr.bf16.gmra.mrb[0].mxu0 %v503
      %v653 = vpop.f32.mrb[0].mxu0
      %v654 = vadd.f32 0.0, %v653
      %v655 = vpop.f32.mrb[0].mxu0
      %v656 = vpop.f32.mrb[0].mxu0
      %v657 = vadd.f32 0.0, %v656
      %v658 = vpop.f32.mrb[0].mxu0
      %659 = vmatprep.mubr.bf16.mxu0 0
      %660 = vmatmul.mubr.bf16.gmra.mrb[0].mxu0 %v506
      %v661 = vpop.f32.mrb[0].mxu0
      %v662 = vadd.f32 0.0, %v661
      %v663 = vpop.f32.mrb[0].mxu0
      %v664 = vpop.f32.mrb[0].mxu0
      %v665 = vadd.f32 0.0, %v664
      %v666 = vpop.f32.mrb[0].mxu0
      %667 = vmatprep.mubr.bf16.mxu0 0
      %668 = vmatmul.mubr.bf16.gmra.mrb[0].mxu0 %v509
      %v669 = vpop.f32.mrb[0].mxu0
      %v670 = vadd.f32 0.0, %v669
      %v671 = vpop.f32.mrb[0].mxu0
      %v672 = vpop.f32.mrb[0].mxu0
      %v673 = vadd.f32 0.0, %v672
      %v674 = vpop.f32.mrb[0].mxu0
      %675 = vmatprep.mubr.bf16.mxu0 0
      %676 = vmatmul.mubr.bf16.gmra.mrb[0].mxu0 %v512
      %v677 = vpop.f32.mrb[0].mxu0
      %v678 = vadd.f32 0.0, %v677
      %v679 = vpop.f32.mrb[0].mxu0
      %v680 = vpop.f32.mrb[0].mxu0
      %v681 = vadd.f32 0.0, %v680
      %v682 = vpop.f32.mrb[0].mxu0
      %683 = vmatprep.mubr.bf16.mxu0 0
      %684 = vmatmul.mubr.bf16.gmra.mrb[0].mxu0 %v515
      %v685 = vpop.f32.mrb[0].mxu0
      %v686 = vadd.f32 0.0, %v685
      %v687 = vpop.f32.mrb[0].mxu0
      %v688 = vpop.f32.mrb[0].mxu0
      %v689 = vadd.f32 0.0, %v688
      %v690 = vpop.f32.mrb[0].mxu0
      %691 = vmatprep.mubr.bf16.mxu0 0
      %692 = vmatmul.mubr.bf16.gmra.mrb[0].mxu0 %v518
      %v693 = vpop.f32.mrb[0].mxu0
      %v694 = vadd.f32 0.0, %v693
      %v695 = vpop.f32.mrb[0].mxu0
      %v696 = vpop.f32.mrb[0].mxu0
      %v697 = vadd.f32 0.0, %v696
      %v698 = vpop.f32.mrb[0].mxu0
      %699 = vmatprep.mubr.bf16.mxu0 0
      %700 = vmatmul.mubr.bf16.gmra.mrb[0].mxu0 %v521
      %v701 = vpop.f32.mrb[0].mxu0
      %v702 = vadd.f32 0.0, %v701
      %v703 = vpop.f32.mrb[0].mxu0
      %v704 = vpop.f32.mrb[0].mxu0
      %v705 = vpop.f32.mrb[0].mxu0
      %706 = vdwg.mxu0
      %v744 = vunpack.c.l.b16 %v172
      %v745 = vunpack.c.l.b16 %v173
      %v746 = vunpack.c.l.b16 %v174
      %v747 = vunpack.c.l.b16 %v175
      %v748 = vunpack.c.l.b16 %v176
      %v749 = vunpack.c.l.b16 %v177
      %v750 = vunpack.c.l.b16 %v178
      %v751 = vunpack.c.l.b16 %v179
      %v752 = vunpack.c.l.b16 %v180
      %v753 = vunpack.c.l.b16 %v181
      %v754 = vunpack.c.l.b16 %v182
      %v755 = vunpack.c.l.b16 %v183
      %v756 = vunpack.c.l.b16 %v184
      %v757 = vunpack.c.l.b16 %v185
      %v758 = vunpack.c.l.b16 %v186
      %v759 = vunpack.c.l.b16 %v187
      %v760 = vunpack.c.l.b16 %v188
      %v761 = vunpack.c.l.b16 %v189
      %v762 = vunpack.c.l.b16 %v190
      %v763 = vunpack.c.l.b16 %v191
      %v764 = vunpack.c.l.b16 %v192
      %v765 = vunpack.c.l.b16 %v193
      %v766 = vunpack.c.l.b16 %v194
      %v767 = vunpack.c.l.b16 %v195
      %v768 = vunpack.c.l.b16 %v196
      %v769 = vunpack.c.l.b16 %v197
      %v770 = vunpack.c.l.b16 %v198
      %v771 = vunpack.c.l.b16 %v199
      %v772 = vunpack.c.l.b16 %v200
      %v773 = vunpack.c.l.b16 %v201
      %v774 = vunpack.c.l.b16 %v202
      %v775 = vunpack.c.l.b16 %v203
      %v776 = vunpack.c.l.b16 %v204
      %v777 = vunpack.c.l.b16 %v205
      %v778 = vunpack.c.l.b16 %v206
      %v779 = vunpack.c.l.b16 %v207
      %v780 = vunpack.c.l.b16 %v208
      %v781 = vpack.c.b16 %v745, %v744
      %v782 = vpack.c.b16 %v747, %v746
      %v783 = vpack.c.b16 %v749, %v748
      %v784 = vpack.c.b16 %v751, %v750
      %v785 = vpack.c.b16 %v753, %v752
      %v786 = vpack.c.b16 %v755, %v754
      %v787 = vpack.c.b16 %v757, %v756
      %v788 = vpack.c.b16 %v759, %v758
      %v789 = vpack.c.b16 %v761, %v760
      %v790 = vpack.c.b16 %v763, %v762
      %v791 = vpack.c.b16 %v765, %v764
      %v792 = vpack.c.b16 %v767, %v766
      %v793 = vpack.c.b16 %v769, %v768
      %v794 = vpack.c.b16 %v771, %v770
      %v795 = vpack.c.b16 %v773, %v772
      %v796 = vpack.c.b16 %v775, %v774
      %v797 = vpack.c.b16 %v777, %v776
      %v798 = vpack.c.b16 %v779, %v778
      %v799 = vpack.c.b16 %v780, %v780
      %v804 = vunpack.c.l.b16 %v324
      %v805 = vunpack.c.l.b16 %v325
      %v806 = vunpack.c.l.b16 %v326
      %v807 = vunpack.c.l.b16 %v327
      %v808 = vpack.c.b16 %v805, %v804
      %v809 = vpack.c.b16 %v807, %v806
      %v813 = vsel %vm465, %v781, 0
      %v816 = vsel %vm465, %v782, 0
      %v819 = vsel %vm465, %v783, 0
      %v822 = vsel %vm465, %v784, 0
      %v825 = vsel %vm465, %v785, 0
      %v828 = vsel %vm465, %v786, 0
      %v831 = vsel %vm465, %v787, 0
      %v834 = vsel %vm465, %v788, 0
      %v837 = vsel %vm465, %v789, 0
      %v840 = vsel %vm465, %v790, 0
      %v843 = vsel %vm465, %v791, 0
      %v846 = vsel %vm465, %v792, 0
      %v849 = vsel %vm465, %v793, 0
      %v852 = vsel %vm465, %v794, 0
      %v855 = vsel %vm465, %v795, 0
      %v858 = vsel %vm465, %v796, 0
      %v861 = vsel %vm465, %v797, 0
      %v864 = vsel %vm465, %v798, 0
      %v867 = vsel %vm465, %v799, 0
      %869 = vmatprep.subr.bf16.mxu0 0
      %870 = vmatpush1.bf16.msra.mxu0 %v808
      %871 = vmatprep.subr.bf16.mxu0 0
      %872 = vmatpush1.bf16.msra.mxu0 %v809
      %873 = vmatprep.subr.bf16.mxu0 0
      %874 = vmatpush1.bf16.msra.mxu0 0
      %875 = vmatprep.subr.bf16.mxu0 0
      %876 = vmatpush1.bf16.msra.mxu0 0
      %877 = vmatprep.subr.bf16.mxu0 0
      %878 = vmatpush1.bf16.msra.mxu0 0
      %879 = vmatprep.subr.bf16.mxu0 0
      %880 = vmatpush1.bf16.msra.mxu0 0
      %881 = vmatprep.subr.bf16.mxu0 0
      %882 = vmatpush1.bf16.msra.mxu0 0
      %883 = vmatprep.subr.bf16.mxu0 0
      %884 = vmatpush1.bf16.msra.mxu0 0
      %885 = vmatprep.subr.bf16.mxu0 0
      %886 = vmatpush1.bf16.msra.mxu0 0
      %887 = vmatprep.subr.bf16.mxu0 0
      %888 = vmatpush1.bf16.msra.mxu0 0
      %889 = vmatprep.subr.bf16.mxu0 0
      %890 = vmatpush1.bf16.msra.mxu0 0
      %891 = vmatprep.subr.bf16.mxu0 0
      %892 = vmatpush1.bf16.msra.mxu0 0
      %893 = vmatprep.subr.bf16.mxu0 0
      %894 = vmatpush1.bf16.msra.mxu0 0
      %895 = vmatprep.subr.bf16.mxu0 0
      %896 = vmatpush1.bf16.msra.mxu0 0
      %897 = vmatprep.subr.bf16.mxu0 0
      %898 = vmatpush1.bf16.msra.mxu0 0
      %899 = vmatprep.subr.bf16.mxu0 0
      %900 = vmatpush1.bf16.msra.mxu0 0
      %901 = vmatprep.mubr.bf16.mxu0 0
      %902 = vmatmul.mubr.bf16.gmra.mrb[0].mxu0 %v813
      %v903 = vpop.f32.mrb[0].mxu0
      %v904 = vadd.f32 %v558, %v903
      %v905 = vpop.f32.mrb[0].mxu0
      %v906 = vpop.f32.mrb[0].mxu0
      %v907 = vadd.f32 %v561, %v906
      %v908 = vpop.f32.mrb[0].mxu0
      %909 = vmatprep.mubr.bf16.mxu0 0
      %910 = vmatmul.mubr.bf16.gmra.mrb[0].mxu0 %v816
      %v911 = vpop.f32.mrb[0].mxu0
      %v912 = vadd.f32 %v566, %v911
      %v913 = vpop.f32.mrb[0].mxu0
      %v914 = vpop.f32.mrb[0].mxu0
      %v915 = vadd.f32 %v569, %v914
      %v916 = vpop.f32.mrb[0].mxu0
      %917 = vmatprep.mubr.bf16.mxu0 0
      %918 = vmatmul.mubr.bf16.gmra.mrb[0].mxu0 %v819
      %v919 = vpop.f32.mrb[0].mxu0
      %v920 = vadd.f32 %v574, %v919
      %v921 = vpop.f32.mrb[0].mxu0
      %v922 = vpop.f32.mrb[0].mxu0
      %v923 = vadd.f32 %v577, %v922
      %v924 = vpop.f32.mrb[0].mxu0
      %925 = vmatprep.mubr.bf16.mxu0 0
      %926 = vmatmul.mubr.bf16.gmra.mrb[0].mxu0 %v822
      %v927 = vpop.f32.mrb[0].mxu0
      %v928 = vadd.f32 %v582, %v927
      %v929 = vpop.f32.mrb[0].mxu0
      %v930 = vpop.f32.mrb[0].mxu0
      %v931 = vadd.f32 %v585, %v930
      %v932 = vpop.f32.mrb[0].mxu0
      %933 = vmatprep.mubr.bf16.mxu0 0
      %934 = vmatmul.mubr.bf16.gmra.mrb[0].mxu0 %v825
      %v935 = vpop.f32.mrb[0].mxu0
      %v936 = vadd.f32 %v590, %v935
      %v937 = vpop.f32.mrb[0].mxu0
      %v938 = vpop.f32.mrb[0].mxu0
      %v939 = vadd.f32 %v593, %v938
      %v940 = vpop.f32.mrb[0].mxu0
      %941 = vmatprep.mubr.bf16.mxu0 0
      %942 = vmatmul.mubr.bf16.gmra.mrb[0].mxu0 %v828
      %v943 = vpop.f32.mrb[0].mxu0
      %v944 = vadd.f32 %v598, %v943
      %v945 = vpop.f32.mrb[0].mxu0
      %v946 = vpop.f32.mrb[0].mxu0
      %v947 = vadd.f32 %v601, %v946
      %v948 = vpop.f32.mrb[0].mxu0
      %949 = vmatprep.mubr.bf16.mxu0 0
      %950 = vmatmul.mubr.bf16.gmra.mrb[0].mxu0 %v831
      %v951 = vpop.f32.mrb[0].mxu0
      %v952 = vadd.f32 %v606, %v951
      %v953 = vpop.f32.mrb[0].mxu0
      %v954 = vpop.f32.mrb[0].mxu0
      %v955 = vadd.f32 %v609, %v954
      %v956 = vpop.f32.mrb[0].mxu0
      %957 = vmatprep.mubr.bf16.mxu0 0
      %958 = vmatmul.mubr.bf16.gmra.mrb[0].mxu0 %v834
      %v959 = vpop.f32.mrb[0].mxu0
      %v960 = vadd.f32 %v614, %v959
      %v961 = vpop.f32.mrb[0].mxu0
      %v962 = vpop.f32.mrb[0].mxu0
      %v963 = vadd.f32 %v617, %v962
      %v964 = vpop.f32.mrb[0].mxu0
      %965 = vmatprep.mubr.bf16.mxu0 0
      %966 = vmatmul.mubr.bf16.gmra.mrb[0].mxu0 %v837
      %v967 = vpop.f32.mrb[0].mxu0
      %v968 = vadd.f32 %v622, %v967
      %v969 = vpop.f32.mrb[0].mxu0
      %v970 = vpop.f32.mrb[0].mxu0
      %v971 = vadd.f32 %v625, %v970
      %v972 = vpop.f32.mrb[0].mxu0
      %973 = vmatprep.mubr.bf16.mxu0 0
      %974 = vmatmul.mubr.bf16.gmra.mrb[0].mxu0 %v840
      %v975 = vpop.f32.mrb[0].mxu0
      %v976 = vadd.f32 %v630, %v975
      %v977 = vpop.f32.mrb[0].mxu0
      %v978 = vpop.f32.mrb[0].mxu0
      %v979 = vadd.f32 %v633, %v978
      %v980 = vpop.f32.mrb[0].mxu0
      %981 = vmatprep.mubr.bf16.mxu0 0
      %982 = vmatmul.mubr.bf16.gmra.mrb[0].mxu0 %v843
      %v983 = vpop.f32.mrb[0].mxu0
      %v984 = vadd.f32 %v638, %v983
      %v985 = vpop.f32.mrb[0].mxu0
      %v986 = vpop.f32.mrb[0].mxu0
      %v987 = vadd.f32 %v641, %v986
      %v988 = vpop.f32.mrb[0].mxu0
      %989 = vmatprep.mubr.bf16.mxu0 0
      %990 = vmatmul.mubr.bf16.gmra.mrb[0].mxu0 %v846
      %v991 = vpop.f32.mrb[0].mxu0
      %v992 = vadd.f32 %v646, %v991
      %v993 = vpop.f32.mrb[0].mxu0
      %v994 = vpop.f32.mrb[0].mxu0
      %v995 = vadd.f32 %v649, %v994
      %v996 = vpop.f32.mrb[0].mxu0
      %997 = vmatprep.mubr.bf16.mxu0 0
      %998 = vmatmul.mubr.bf16.gmra.mrb[0].mxu0 %v849
      %v999 = vpop.f32.mrb[0].mxu0
      %v1000 = vadd.f32 %v654, %v999
      %v1001 = vpop.f32.mrb[0].mxu0
      %v1002 = vpop.f32.mrb[0].mxu0
      %v1003 = vadd.f32 %v657, %v1002
      %v1004 = vpop.f32.mrb[0].mxu0
      %1005 = vmatprep.mubr.bf16.mxu0 0
      %1006 = vmatmul.mubr.bf16.gmra.mrb[0].mxu0 %v852
      %v1007 = vpop.f32.mrb[0].mxu0
      %v1008 = vadd.f32 %v662, %v1007
      %v1009 = vpop.f32.mrb[0].mxu0
      %v1010 = vpop.f32.mrb[0].mxu0
      %v1011 = vadd.f32 %v665, %v1010
      %v1012 = vpop.f32.mrb[0].mxu0
      %1013 = vmatprep.mubr.bf16.mxu0 0
      %1014 = vmatmul.mubr.bf16.gmra.mrb[0].mxu0 %v855
      %v1015 = vpop.f32.mrb[0].mxu0
      %v1016 = vadd.f32 %v670, %v1015
      %v1017 = vpop.f32.mrb[0].mxu0
      %v1018 = vpop.f32.mrb[0].mxu0
      %v1019 = vadd.f32 %v673, %v1018
      %v1020 = vpop.f32.mrb[0].mxu0
      %1021 = vmatprep.mubr.bf16.mxu0 0
      %1022 = vmatmul.mubr.bf16.gmra.mrb[0].mxu0 %v858
      %v1023 = vpop.f32.mrb[0].mxu0
      %v1024 = vadd.f32 %v678, %v1023
      %v1025 = vpop.f32.mrb[0].mxu0
      %v1026 = vpop.f32.mrb[0].mxu0
      %v1027 = vadd.f32 %v681, %v1026
      %v1028 = vpop.f32.mrb[0].mxu0
      %1029 = vmatprep.mubr.bf16.mxu0 0
      %1030 = vmatmul.mubr.bf16.gmra.mrb[0].mxu0 %v861
      %v1031 = vpop.f32.mrb[0].mxu0
      %v1032 = vadd.f32 %v686, %v1031
      %v1033 = vpop.f32.mrb[0].mxu0
      %v1034 = vpop.f32.mrb[0].mxu0
      %v1035 = vadd.f32 %v689, %v1034
      %v1036 = vpop.f32.mrb[0].mxu0
      %1037 = vmatprep.mubr.bf16.mxu0 0
      %1038 = vmatmul.mubr.bf16.gmra.mrb[0].mxu0 %v864
      %v1039 = vpop.f32.mrb[0].mxu0
      %v1040 = vadd.f32 %v694, %v1039
      %v1041 = vpop.f32.mrb[0].mxu0
      %v1042 = vpop.f32.mrb[0].mxu0
      %v1043 = vadd.f32 %v697, %v1042
      %v1044 = vpop.f32.mrb[0].mxu0
      %1045 = vmatprep.mubr.bf16.mxu0 0
      %1046 = vmatmul.mubr.bf16.gmra.mrb[0].mxu0 %v867
      %v1047 = vpop.f32.mrb[0].mxu0
      %v1048 = vadd.f32 %v702, %v1047
      %v1049 = vpop.f32.mrb[0].mxu0
      %v1050 = vpop.f32.mrb[0].mxu0
      %v1051 = vpop.f32.mrb[0].mxu0
      %1052 = vdwg.mxu0
      %vm1053 = vsmask.f32 7424
      %v1054 = vshrl.u32 %v781, 16
      %v1056 = vshll.u32 %v781, 16
      %v1058 = vrot.slane %v1056, 1
      %v1059 = vor.u32 %v1054, %v1058
      %v1060 = vshll.u32 %v782, 16
      %v1062 = vrot.slane %v1060, 1
      %v1063 = vsel %vm1053, %v1059, %v1062
      %v1064 = vshrl.u32 %v782, 16
      %v1066 = vor.u32 %v1064, %v1062
      %v1067 = vshll.u32 %v783, 16
      %v1069 = vrot.slane %v1067, 1
      %v1070 = vsel %vm1053, %v1066, %v1069
      %v1071 = vshrl.u32 %v783, 16
      %v1073 = vor.u32 %v1071, %v1069
      %v1074 = vshll.u32 %v784, 16
      %v1076 = vrot.slane %v1074, 1
      %v1077 = vsel %vm1053, %v1073, %v1076
      %v1078 = vshrl.u32 %v784, 16
      %v1080 = vor.u32 %v1078, %v1076
      %v1081 = vshll.u32 %v785, 16
      %v1083 = vrot.slane %v1081, 1
      %v1084 = vsel %vm1053, %v1080, %v1083
      %v1085 = vshrl.u32 %v785, 16
      %v1087 = vor.u32 %v1085, %v1083
      %v1088 = vshll.u32 %v786, 16
      %v1090 = vrot.slane %v1088, 1
      %v1091 = vsel %vm1053, %v1087, %v1090
      %v1092 = vshrl.u32 %v786, 16
      %v1094 = vor.u32 %v1092, %v1090
      %v1095 = vshll.u32 %v787, 16
      %v1097 = vrot.slane %v1095, 1
      %v1098 = vsel %vm1053, %v1094, %v1097
      %v1099 = vshrl.u32 %v787, 16
      %v1101 = vor.u32 %v1099, %v1097
      %v1102 = vshll.u32 %v788, 16
      %v1104 = vrot.slane %v1102, 1
      %v1105 = vsel %vm1053, %v1101, %v1104
      %v1106 = vshrl.u32 %v788, 16
      %v1108 = vor.u32 %v1106, %v1104
      %v1109 = vshll.u32 %v789, 16
      %v1111 = vrot.slane %v1109, 1
      %v1112 = vsel %vm1053, %v1108, %v1111
      %v1113 = vshrl.u32 %v789, 16
      %v1115 = vor.u32 %v1113, %v1111
      %v1116 = vshll.u32 %v790, 16
      %v1118 = vrot.slane %v1116, 1
      %v1119 = vsel %vm1053, %v1115, %v1118
      %v1120 = vshrl.u32 %v790, 16
      %v1122 = vor.u32 %v1120, %v1118
      %v1123 = vshll.u32 %v791, 16
      %v1125 = vrot.slane %v1123, 1
      %v1126 = vsel %vm1053, %v1122, %v1125
      %v1127 = vshrl.u32 %v791, 16
      %v1129 = vor.u32 %v1127, %v1125
      %v1130 = vshll.u32 %v792, 16
      %v1132 = vrot.slane %v1130, 1
      %v1133 = vsel %vm1053, %v1129, %v1132
      %v1134 = vshrl.u32 %v792, 16
      %v1136 = vor.u32 %v1134, %v1132
      %v1137 = vshll.u32 %v793, 16
      %v1139 = vrot.slane %v1137, 1
      %v1140 = vsel %vm1053, %v1136, %v1139
      %v1141 = vshrl.u32 %v793, 16
      %v1143 = vor.u32 %v1141, %v1139
      %v1144 = vshll.u32 %v794, 16
      %v1146 = vrot.slane %v1144, 1
      %v1147 = vsel %vm1053, %v1143, %v1146
      %v1148 = vshrl.u32 %v794, 16
      %v1150 = vor.u32 %v1148, %v1146
      %v1151 = vshll.u32 %v795, 16
      %v1153 = vrot.slane %v1151, 1
      %v1154 = vsel %vm1053, %v1150, %v1153
      %v1155 = vshrl.u32 %v795, 16
      %v1157 = vor.u32 %v1155, %v1153
      %v1158 = vshll.u32 %v796, 16
      %v1160 = vrot.slane %v1158, 1
      %v1161 = vsel %vm1053, %v1157, %v1160
      %v1162 = vshrl.u32 %v796, 16
      %v1164 = vor.u32 %v1162, %v1160
      %v1165 = vshll.u32 %v797, 16
      %v1167 = vrot.slane %v1165, 1
      %v1168 = vsel %vm1053, %v1164, %v1167
      %v1169 = vshrl.u32 %v797, 16
      %v1171 = vor.u32 %v1169, %v1167
      %v1172 = vshll.u32 %v798, 16
      %v1174 = vrot.slane %v1172, 1
      %v1175 = vsel %vm1053, %v1171, %v1174
      %v1176 = vshrl.u32 %v798, 16
      %v1178 = vor.u32 %v1176, %v1174
      %v1179 = vshll.u32 %v799, 16
      %v1181 = vrot.slane %v1179, 1
      %v1182 = vsel %vm1053, %v1178, %v1181
      %v1183 = vshrl.u32 %v799, 16
      %v1189 = vunpack.c.l.b16 %v332
      %v1190 = vunpack.c.l.b16 %v333
      %v1191 = vunpack.c.l.b16 %v334
      %v1192 = vunpack.c.l.b16 %v335
      %v1193 = vpack.c.b16 %v1190, %v1189
      %v1194 = vpack.c.b16 %v1192, %v1191
      %v1198 = vsel %vm465, %v1063, 0
      %v1201 = vsel %vm465, %v1070, 0
      %v1204 = vsel %vm465, %v1077, 0
      %v1207 = vsel %vm465, %v1084, 0
      %v1210 = vsel %vm465, %v1091, 0
      %v1213 = vsel %vm465, %v1098, 0
      %v1216 = vsel %vm465, %v1105, 0
      %v1219 = vsel %vm465, %v1112, 0
      %v1222 = vsel %vm465, %v1119, 0
      %v1225 = vsel %vm465, %v1126, 0
      %v1228 = vsel %vm465, %v1133, 0
      %v1231 = vsel %vm465, %v1140, 0
      %v1234 = vsel %vm465, %v1147, 0
      %v1237 = vsel %vm465, %v1154, 0
      %v1240 = vsel %vm465, %v1161, 0
      %v1243 = vsel %vm465, %v1168, 0
      %v1246 = vsel %vm465, %v1175, 0
      %v1249 = vsel %vm465, %v1182, 0
      %v1252 = vsel %vm465, %v1183, 0
      %1254 = vmatprep.subr.bf16.mxu0 0
      %1255 = vmatpush1.bf16.msra.mxu0 %v1193
      %1256 = vmatprep.subr.bf16.mxu0 0
      %1257 = vmatpush1.bf16.msra.mxu0 %v1194
      %1258 = vmatprep.subr.bf16.mxu0 0
      %1259 = vmatpush1.bf16.msra.mxu0 0
      %1260 = vmatprep.subr.bf16.mxu0 0
      %1261 = vmatpush1.bf16.msra.mxu0 0
      %1262 = vmatprep.subr.bf16.mxu0 0
      %1263 = vmatpush1.bf16.msra.mxu0 0
      %1264 = vmatprep.subr.bf16.mxu0 0
      %1265 = vmatpush1.bf16.msra.mxu0 0
      %1266 = vmatprep.subr.bf16.mxu0 0
      %1267 = vmatpush1.bf16.msra.mxu0 0
      %1268 = vmatprep.subr.bf16.mxu0 0
      %1269 = vmatpush1.bf16.msra.mxu0 0
      %1270 = vmatprep.subr.bf16.mxu0 0
      %1271 = vmatpush1.bf16.msra.mxu0 0
      %1272 = vmatprep.subr.bf16.mxu0 0
      %1273 = vmatpush1.bf16.msra.mxu0 0
      %1274 = vmatprep.subr.bf16.mxu0 0
      %1275 = vmatpush1.bf16.msra.mxu0 0
      %1276 = vmatprep.subr.bf16.mxu0 0
      %1277 = vmatpush1.bf16.msra.mxu0 0
      %1278 = vmatprep.subr.bf16.mxu0 0
      %1279 = vmatpush1.bf16.msra.mxu0 0
      %1280 = vmatprep.subr.bf16.mxu0 0
      %1281 = vmatpush1.bf16.msra.mxu0 0
      %1282 = vmatprep.subr.bf16.mxu0 0
      %1283 = vmatpush1.bf16.msra.mxu0 0
      %1284 = vmatprep.subr.bf16.mxu0 0
      %1285 = vmatpush1.bf16.msra.mxu0 0
      %1286 = vmatprep.mubr.bf16.mxu0 0
      %1287 = vmatmul.mubr.bf16.gmra.mrb[0].mxu0 %v1198
      %v1288 = vpop.f32.mrb[0].mxu0
      %v1289 = vadd.f32 0.0, %v1288
      %v1290 = vpop.f32.mrb[0].mxu0
      %v1291 = vpop.f32.mrb[0].mxu0
      %v1292 = vadd.f32 0.0, %v1291
      %v1293 = vpop.f32.mrb[0].mxu0
      %1294 = vmatprep.mubr.bf16.mxu0 0
      %1295 = vmatmul.mubr.bf16.gmra.mrb[0].mxu0 %v1201
      %v1296 = vpop.f32.mrb[0].mxu0
      %v1297 = vadd.f32 0.0, %v1296
      %v1298 = vpop.f32.mrb[0].mxu0
      %v1299 = vpop.f32.mrb[0].mxu0
      %v1300 = vadd.f32 0.0, %v1299
      %v1301 = vpop.f32.mrb[0].mxu0
      %1302 = vmatprep.mubr.bf16.mxu0 0
      %1303 = vmatmul.mubr.bf16.gmra.mrb[0].mxu0 %v1204
      %v1304 = vpop.f32.mrb[0].mxu0
      %v1305 = vadd.f32 0.0, %v1304
      %v1306 = vpop.f32.mrb[0].mxu0
      %v1307 = vpop.f32.mrb[0].mxu0
      %v1308 = vadd.f32 0.0, %v1307
      %v1309 = vpop.f32.mrb[0].mxu0
      %1310 = vmatprep.mubr.bf16.mxu0 0
      %1311 = vmatmul.mubr.bf16.gmra.mrb[0].mxu0 %v1207
      %v1312 = vpop.f32.mrb[0].mxu0
      %v1313 = vadd.f32 0.0, %v1312
      %v1314 = vpop.f32.mrb[0].mxu0
      %v1315 = vpop.f32.mrb[0].mxu0
      %v1316 = vadd.f32 0.0, %v1315
      %v1317 = vpop.f32.mrb[0].mxu0
      %1318 = vmatprep.mubr.bf16.mxu0 0
      %1319 = vmatmul.mubr.bf16.gmra.mrb[0].mxu0 %v1210
      %v1320 = vpop.f32.mrb[0].mxu0
      %v1321 = vadd.f32 0.0, %v1320
      %v1322 = vpop.f32.mrb[0].mxu0
      %v1323 = vpop.f32.mrb[0].mxu0
      %v1324 = vadd.f32 0.0, %v1323
      %v1325 = vpop.f32.mrb[0].mxu0
      %1326 = vmatprep.mubr.bf16.mxu0 0
      %1327 = vmatmul.mubr.bf16.gmra.mrb[0].mxu0 %v1213
      %v1328 = vpop.f32.mrb[0].mxu0
      %v1329 = vadd.f32 0.0, %v1328
      %v1330 = vpop.f32.mrb[0].mxu0
      %v1331 = vpop.f32.mrb[0].mxu0
      %v1332 = vadd.f32 0.0, %v1331
      %v1333 = vpop.f32.mrb[0].mxu0
      %1334 = vmatprep.mubr.bf16.mxu0 0
      %1335 = vmatmul.mubr.bf16.gmra.mrb[0].mxu0 %v1216
      %v1336 = vpop.f32.mrb[0].mxu0
      %v1337 = vadd.f32 0.0, %v1336
      %v1338 = vpop.f32.mrb[0].mxu0
      %v1339 = vpop.f32.mrb[0].mxu0
      %v1340 = vadd.f32 0.0, %v1339
      %v1341 = vpop.f32.mrb[0].mxu0
      %1342 = vmatprep.mubr.bf16.mxu0 0
      %1343 = vmatmul.mubr.bf16.gmra.mrb[0].mxu0 %v1219
      %v1344 = vpop.f32.mrb[0].mxu0
      %v1345 = vadd.f32 0.0, %v1344
      %v1346 = vpop.f32.mrb[0].mxu0
      %v1347 = vpop.f32.mrb[0].mxu0
      %v1348 = vadd.f32 0.0, %v1347
      %v1349 = vpop.f32.mrb[0].mxu0
      %1350 = vmatprep.mubr.bf16.mxu0 0
      %1351 = vmatmul.mubr.bf16.gmra.mrb[0].mxu0 %v1222
      %v1352 = vpop.f32.mrb[0].mxu0
      %v1353 = vadd.f32 0.0, %v1352
      %v1354 = vpop.f32.mrb[0].mxu0
      %v1355 = vpop.f32.mrb[0].mxu0
      %v1356 = vadd.f32 0.0, %v1355
      %v1357 = vpop.f32.mrb[0].mxu0
      %1358 = vmatprep.mubr.bf16.mxu0 0
      %1359 = vmatmul.mubr.bf16.gmra.mrb[0].mxu0 %v1225
      %v1360 = vpop.f32.mrb[0].mxu0
      %v1361 = vadd.f32 0.0, %v1360
      %v1362 = vpop.f32.mrb[0].mxu0
      %v1363 = vpop.f32.mrb[0].mxu0
      %v1364 = vadd.f32 0.0, %v1363
      %v1365 = vpop.f32.mrb[0].mxu0
      %1366 = vmatprep.mubr.bf16.mxu0 0
      %1367 = vmatmul.mubr.bf16.gmra.mrb[0].mxu0 %v1228
      %v1368 = vpop.f32.mrb[0].mxu0
      %v1369 = vadd.f32 0.0, %v1368
      %v1370 = vpop.f32.mrb[0].mxu0
      %v1371 = vpop.f32.mrb[0].mxu0
      %v1372 = vadd.f32 0.0, %v1371
      %v1373 = vpop.f32.mrb[0].mxu0
      %1374 = vmatprep.mubr.bf16.mxu0 0
      %1375 = vmatmul.mubr.bf16.gmra.mrb[0].mxu0 %v1231
      %v1376 = vpop.f32.mrb[0].mxu0
      %v1377 = vadd.f32 0.0, %v1376
      %v1378 = vpop.f32.mrb[0].mxu0
      %v1379 = vpop.f32.mrb[0].mxu0
      %v1380 = vadd.f32 0.0, %v1379
      %v1381 = vpop.f32.mrb[0].mxu0
      %1382 = vmatprep.mubr.bf16.mxu0 0
      %1383 = vmatmul.mubr.bf16.gmra.mrb[0].mxu0 %v1234
      %v1384 = vpop.f32.mrb[0].mxu0
      %v1385 = vadd.f32 0.0, %v1384
      %v1386 = vpop.f32.mrb[0].mxu0
      %v1387 = vpop.f32.mrb[0].mxu0
      %v1388 = vadd.f32 0.0, %v1387
      %v1389 = vpop.f32.mrb[0].mxu0
      %1390 = vmatprep.mubr.bf16.mxu0 0
      %1391 = vmatmul.mubr.bf16.gmra.mrb[0].mxu0 %v1237
      %v1392 = vpop.f32.mrb[0].mxu0
      %v1393 = vadd.f32 0.0, %v1392
      %v1394 = vpop.f32.mrb[0].mxu0
      %v1395 = vpop.f32.mrb[0].mxu0
      %v1396 = vadd.f32 0.0, %v1395
      %v1397 = vpop.f32.mrb[0].mxu0
      %1398 = vmatprep.mubr.bf16.mxu0 0
      %1399 = vmatmul.mubr.bf16.gmra.mrb[0].mxu0 %v1240
      %v1400 = vpop.f32.mrb[0].mxu0
      %v1401 = vadd.f32 0.0, %v1400
      %v1402 = vpop.f32.mrb[0].mxu0
      %v1403 = vpop.f32.mrb[0].mxu0
      %v1404 = vadd.f32 0.0, %v1403
      %v1405 = vpop.f32.mrb[0].mxu0
      %1406 = vmatprep.mubr.bf16.mxu0 0
      %1407 = vmatmul.mubr.bf16.gmra.mrb[0].mxu0 %v1243
      %v1408 = vpop.f32.mrb[0].mxu0
      %v1409 = vadd.f32 0.0, %v1408
      %v1410 = vpop.f32.mrb[0].mxu0
      %v1411 = vpop.f32.mrb[0].mxu0
      %v1412 = vadd.f32 0.0, %v1411
      %v1413 = vpop.f32.mrb[0].mxu0
      %1414 = vmatprep.mubr.bf16.mxu0 0
      %1415 = vmatmul.mubr.bf16.gmra.mrb[0].mxu0 %v1246
      %v1416 = vpop.f32.mrb[0].mxu0
      %v1417 = vadd.f32 0.0, %v1416
      %v1418 = vpop.f32.mrb[0].mxu0
      %v1419 = vpop.f32.mrb[0].mxu0
      %v1420 = vadd.f32 0.0, %v1419
      %v1421 = vpop.f32.mrb[0].mxu0
      %1422 = vmatprep.mubr.bf16.mxu0 0
      %1423 = vmatmul.mubr.bf16.gmra.mrb[0].mxu0 %v1249
      %v1424 = vpop.f32.mrb[0].mxu0
      %v1425 = vadd.f32 0.0, %v1424
      %v1426 = vpop.f32.mrb[0].mxu0
      %v1427 = vpop.f32.mrb[0].mxu0
      %v1428 = vadd.f32 0.0, %v1427
      %v1429 = vpop.f32.mrb[0].mxu0
      %1430 = vmatprep.mubr.bf16.mxu0 0
      %1431 = vmatmul.mubr.bf16.gmra.mrb[0].mxu0 %v1252
      %v1432 = vpop.f32.mrb[0].mxu0
      %v1433 = vadd.f32 0.0, %v1432
      %v1434 = vpop.f32.mrb[0].mxu0
      %v1435 = vpop.f32.mrb[0].mxu0
      %v1436 = vpop.f32.mrb[0].mxu0
      %1437 = vdwg.mxu0
      %v1438 = vadd.f32 %v904, %v1289
      %v1439 = vadd.f32 %v907, %v1292
      %v1440 = vadd.f32 %v912, %v1297
      %v1441 = vadd.f32 %v915, %v1300
      %v1442 = vadd.f32 %v920, %v1305
      %v1443 = vadd.f32 %v923, %v1308
      %v1444 = vadd.f32 %v928, %v1313
      %v1445 = vadd.f32 %v931, %v1316
      %v1446 = vadd.f32 %v936, %v1321
      %v1447 = vadd.f32 %v939, %v1324
      %v1448 = vadd.f32 %v944, %v1329
      %v1449 = vadd.f32 %v947, %v1332
      %v1450 = vadd.f32 %v952, %v1337
      %v1451 = vadd.f32 %v955, %v1340
      %v1452 = vadd.f32 %v960, %v1345
      %v1453 = vadd.f32 %v963, %v1348
      %v1454 = vadd.f32 %v968, %v1353
      %v1455 = vadd.f32 %v971, %v1356
      %v1456 = vadd.f32 %v976, %v1361
      %v1457 = vadd.f32 %v979, %v1364
      %v1458 = vadd.f32 %v984, %v1369
      %v1459 = vadd.f32 %v987, %v1372
      %v1460 = vadd.f32 %v992, %v1377
      %v1461 = vadd.f32 %v995, %v1380
      %v1462 = vadd.f32 %v1000, %v1385
      %v1463 = vadd.f32 %v1003, %v1388
      %v1464 = vadd.f32 %v1008, %v1393
      %v1465 = vadd.f32 %v1011, %v1396
      %v1466 = vadd.f32 %v1016, %v1401
      %v1467 = vadd.f32 %v1019, %v1404
      %v1468 = vadd.f32 %v1024, %v1409
      %v1469 = vadd.f32 %v1027, %v1412
      %v1470 = vadd.f32 %v1032, %v1417
      %v1471 = vadd.f32 %v1035, %v1420
      %v1472 = vadd.f32 %v1040, %v1425
      %v1473 = vadd.f32 %v1043, %v1428
      %v1474 = vadd.f32 %v1048, %v1433
      %v1512 = vunpack.c.l.b16 %v250
      %v1513 = vunpack.c.l.b16 %v251
      %v1514 = vunpack.c.l.b16 %v252
      %v1515 = vunpack.c.l.b16 %v253
      %v1516 = vunpack.c.l.b16 %v254
      %v1517 = vunpack.c.l.b16 %v255
      %v1518 = vunpack.c.l.b16 %v256
      %v1519 = vunpack.c.l.b16 %v257
      %v1520 = vunpack.c.l.b16 %v258
      %v1521 = vunpack.c.l.b16 %v259
      %v1522 = vunpack.c.l.b16 %v260
      %v1523 = vunpack.c.l.b16 %v261
      %v1524 = vunpack.c.l.b16 %v262
      %v1525 = vunpack.c.l.b16 %v263
      %v1526 = vunpack.c.l.b16 %v264
      %v1527 = vunpack.c.l.b16 %v265
      %v1528 = vunpack.c.l.b16 %v266
      %v1529 = vunpack.c.l.b16 %v267
      %v1530 = vunpack.c.l.b16 %v268
      %v1531 = vunpack.c.l.b16 %v269
      %v1532 = vunpack.c.l.b16 %v270
      %v1533 = vunpack.c.l.b16 %v271
      %v1534 = vunpack.c.l.b16 %v272
      %v1535 = vunpack.c.l.b16 %v273
      %v1536 = vunpack.c.l.b16 %v274
      %v1537 = vunpack.c.l.b16 %v275
      %v1538 = vunpack.c.l.b16 %v276
      %v1539 = vunpack.c.l.b16 %v277
      %v1540 = vunpack.c.l.b16 %v278
      %v1541 = vunpack.c.l.b16 %v279
      %v1542 = vunpack.c.l.b16 %v280
      %v1543 = vunpack.c.l.b16 %v281
      %v1544 = vunpack.c.l.b16 %v282
      %v1545 = vunpack.c.l.b16 %v283
      %v1546 = vunpack.c.l.b16 %v284
      %v1547 = vunpack.c.l.b16 %v285
      %v1548 = vunpack.c.l.b16 %v286
      %v1549 = vpack.c.b16 %v1513, %v1512
      %v1550 = vpack.c.b16 %v1515, %v1514
      %v1551 = vpack.c.b16 %v1517, %v1516
      %v1552 = vpack.c.b16 %v1519, %v1518
      %v1553 = vpack.c.b16 %v1521, %v1520
      %v1554 = vpack.c.b16 %v1523, %v1522
      %v1555 = vpack.c.b16 %v1525, %v1524
      %v1556 = vpack.c.b16 %v1527, %v1526
      %v1557 = vpack.c.b16 %v1529, %v1528
      %v1558 = vpack.c.b16 %v1531, %v1530
      %v1559 = vpack.c.b16 %v1533, %v1532
      %v1560 = vpack.c.b16 %v1535, %v1534
      %v1561 = vpack.c.b16 %v1537, %v1536
      %v1562 = vpack.c.b16 %v1539, %v1538
      %v1563 = vpack.c.b16 %v1541, %v1540
      %v1564 = vpack.c.b16 %v1543, %v1542
      %v1565 = vpack.c.b16 %v1545, %v1544
      %v1566 = vpack.c.b16 %v1547, %v1546
      %v1567 = vpack.c.b16 %v1548, %v1548
      %v1572 = vunpack.c.l.b16 %v336
      %v1573 = vunpack.c.l.b16 %v337
      %v1574 = vunpack.c.l.b16 %v338
      %v1575 = vunpack.c.l.b16 %v339
      %v1576 = vpack.c.b16 %v1573, %v1572
      %v1577 = vpack.c.b16 %v1575, %v1574
      %v1581 = vsel %vm465, %v1549, 0
      %v1584 = vsel %vm465, %v1550, 0
      %v1587 = vsel %vm465, %v1551, 0
      %v1590 = vsel %vm465, %v1552, 0
      %v1593 = vsel %vm465, %v1553, 0
      %v1596 = vsel %vm465, %v1554, 0
      %v1599 = vsel %vm465, %v1555, 0
      %v1602 = vsel %vm465, %v1556, 0
      %v1605 = vsel %vm465, %v1557, 0
      %v1608 = vsel %vm465, %v1558, 0
      %v1611 = vsel %vm465, %v1559, 0
      %v1614 = vsel %vm465, %v1560, 0
      %v1617 = vsel %vm465, %v1561, 0
      %v1620 = vsel %vm465, %v1562, 0
      %v1623 = vsel %vm465, %v1563, 0
      %v1626 = vsel %vm465, %v1564, 0
      %v1629 = vsel %vm465, %v1565, 0
      %v1632 = vsel %vm465, %v1566, 0
      %v1635 = vsel %vm465, %v1567, 0
      %1637 = vmatprep.subr.bf16.mxu0 0
      %1638 = vmatpush1.bf16.msra.mxu0 %v1576
      %1639 = vmatprep.subr.bf16.mxu0 0
      %1640 = vmatpush1.bf16.msra.mxu0 %v1577
      %1641 = vmatprep.subr.bf16.mxu0 0
      %1642 = vmatpush1.bf16.msra.mxu0 0
      %1643 = vmatprep.subr.bf16.mxu0 0
      %1644 = vmatpush1.bf16.msra.mxu0 0
      %1645 = vmatprep.subr.bf16.mxu0 0
      %1646 = vmatpush1.bf16.msra.mxu0 0
      %1647 = vmatprep.subr.bf16.mxu0 0
      %1648 = vmatpush1.bf16.msra.mxu0 0
      %1649 = vmatprep.subr.bf16.mxu0 0
      %1650 = vmatpush1.bf16.msra.mxu0 0
      %1651 = vmatprep.subr.bf16.mxu0 0
      %1652 = vmatpush1.bf16.msra.mxu0 0
      %1653 = vmatprep.subr.bf16.mxu0 0
      %1654 = vmatpush1.bf16.msra.mxu0 0
      %1655 = vmatprep.subr.bf16.mxu0 0
      %1656 = vmatpush1.bf16.msra.mxu0 0
      %1657 = vmatprep.subr.bf16.mxu0 0
      %1658 = vmatpush1.bf16.msra.mxu0 0
      %1659 = vmatprep.subr.bf16.mxu0 0
      %1660 = vmatpush1.bf16.msra.mxu0 0
      %1661 = vmatprep.subr.bf16.mxu0 0
      %1662 = vmatpush1.bf16.msra.mxu0 0
      %1663 = vmatprep.subr.bf16.mxu0 0
      %1664 = vmatpush1.bf16.msra.mxu0 0
      %1665 = vmatprep.subr.bf16.mxu0 0
      %1666 = vmatpush1.bf16.msra.mxu0 0
      %1667 = vmatprep.subr.bf16.mxu0 0
      %1668 = vmatpush1.bf16.msra.mxu0 0
      %1669 = vmatprep.mubr.bf16.mxu0 0
      %1670 = vmatmul.mubr.bf16.gmra.mrb[0].mxu0 %v1581
      %v1671 = vpop.f32.mrb[0].mxu0
      %v1672 = vadd.f32 0.0, %v1671
      %v1673 = vpop.f32.mrb[0].mxu0
      %v1674 = vpop.f32.mrb[0].mxu0
      %v1675 = vadd.f32 0.0, %v1674
      %v1676 = vpop.f32.mrb[0].mxu0
      %1677 = vmatprep.mubr.bf16.mxu0 0
      %1678 = vmatmul.mubr.bf16.gmra.mrb[0].mxu0 %v1584
      %v1679 = vpop.f32.mrb[0].mxu0
      %v1680 = vadd.f32 0.0, %v1679
      %v1681 = vpop.f32.mrb[0].mxu0
      %v1682 = vpop.f32.mrb[0].mxu0
      %v1683 = vadd.f32 0.0, %v1682
      %v1684 = vpop.f32.mrb[0].mxu0
      %1685 = vmatprep.mubr.bf16.mxu0 0
      %1686 = vmatmul.mubr.bf16.gmra.mrb[0].mxu0 %v1587
      %v1687 = vpop.f32.mrb[0].mxu0
      %v1688 = vadd.f32 0.0, %v1687
      %v1689 = vpop.f32.mrb[0].mxu0
      %v1690 = vpop.f32.mrb[0].mxu0
      %v1691 = vadd.f32 0.0, %v1690
      %v1692 = vpop.f32.mrb[0].mxu0
      %1693 = vmatprep.mubr.bf16.mxu0 0
      %1694 = vmatmul.mubr.bf16.gmra.mrb[0].mxu0 %v1590
      %v1695 = vpop.f32.mrb[0].mxu0
      %v1696 = vadd.f32 0.0, %v1695
      %v1697 = vpop.f32.mrb[0].mxu0
      %v1698 = vpop.f32.mrb[0].mxu0
      %v1699 = vadd.f32 0.0, %v1698
      %v1700 = vpop.f32.mrb[0].mxu0
      %1701 = vmatprep.mubr.bf16.mxu0 0
      %1702 = vmatmul.mubr.bf16.gmra.mrb[0].mxu0 %v1593
      %v1703 = vpop.f32.mrb[0].mxu0
      %v1704 = vadd.f32 0.0, %v1703
      %v1705 = vpop.f32.mrb[0].mxu0
      %v1706 = vpop.f32.mrb[0].mxu0
      %v1707 = vadd.f32 0.0, %v1706
      %v1708 = vpop.f32.mrb[0].mxu0
      %1709 = vmatprep.mubr.bf16.mxu0 0
      %1710 = vmatmul.mubr.bf16.gmra.mrb[0].mxu0 %v1596
      %v1711 = vpop.f32.mrb[0].mxu0
      %v1712 = vadd.f32 0.0, %v1711
      %v1713 = vpop.f32.mrb[0].mxu0
      %v1714 = vpop.f32.mrb[0].mxu0
      %v1715 = vadd.f32 0.0, %v1714
      %v1716 = vpop.f32.mrb[0].mxu0
      %1717 = vmatprep.mubr.bf16.mxu0 0
      %1718 = vmatmul.mubr.bf16.gmra.mrb[0].mxu0 %v1599
      %v1719 = vpop.f32.mrb[0].mxu0
      %v1720 = vadd.f32 0.0, %v1719
      %v1721 = vpop.f32.mrb[0].mxu0
      %v1722 = vpop.f32.mrb[0].mxu0
      %v1723 = vadd.f32 0.0, %v1722
      %v1724 = vpop.f32.mrb[0].mxu0
      %1725 = vmatprep.mubr.bf16.mxu0 0
      %1726 = vmatmul.mubr.bf16.gmra.mrb[0].mxu0 %v1602
      %v1727 = vpop.f32.mrb[0].mxu0
      %v1728 = vadd.f32 0.0, %v1727
      %v1729 = vpop.f32.mrb[0].mxu0
      %v1730 = vpop.f32.mrb[0].mxu0
      %v1731 = vadd.f32 0.0, %v1730
      %v1732 = vpop.f32.mrb[0].mxu0
      %1733 = vmatprep.mubr.bf16.mxu0 0
      %1734 = vmatmul.mubr.bf16.gmra.mrb[0].mxu0 %v1605
      %v1735 = vpop.f32.mrb[0].mxu0
      %v1736 = vadd.f32 0.0, %v1735
      %v1737 = vpop.f32.mrb[0].mxu0
      %v1738 = vpop.f32.mrb[0].mxu0
      %v1739 = vadd.f32 0.0, %v1738
      %v1740 = vpop.f32.mrb[0].mxu0
      %1741 = vmatprep.mubr.bf16.mxu0 0
      %1742 = vmatmul.mubr.bf16.gmra.mrb[0].mxu0 %v1608
      %v1743 = vpop.f32.mrb[0].mxu0
      %v1744 = vadd.f32 0.0, %v1743
      %v1745 = vpop.f32.mrb[0].mxu0
      %v1746 = vpop.f32.mrb[0].mxu0
      %v1747 = vadd.f32 0.0, %v1746
      %v1748 = vpop.f32.mrb[0].mxu0
      %1749 = vmatprep.mubr.bf16.mxu0 0
      %1750 = vmatmul.mubr.bf16.gmra.mrb[0].mxu0 %v1611
      %v1751 = vpop.f32.mrb[0].mxu0
      %v1752 = vadd.f32 0.0, %v1751
      %v1753 = vpop.f32.mrb[0].mxu0
      %v1754 = vpop.f32.mrb[0].mxu0
      %v1755 = vadd.f32 0.0, %v1754
      %v1756 = vpop.f32.mrb[0].mxu0
      %1757 = vmatprep.mubr.bf16.mxu0 0
      %1758 = vmatmul.mubr.bf16.gmra.mrb[0].mxu0 %v1614
      %v1759 = vpop.f32.mrb[0].mxu0
      %v1760 = vadd.f32 0.0, %v1759
      %v1761 = vpop.f32.mrb[0].mxu0
      %v1762 = vpop.f32.mrb[0].mxu0
      %v1763 = vadd.f32 0.0, %v1762
      %v1764 = vpop.f32.mrb[0].mxu0
      %1765 = vmatprep.mubr.bf16.mxu0 0
      %1766 = vmatmul.mubr.bf16.gmra.mrb[0].mxu0 %v1617
      %v1767 = vpop.f32.mrb[0].mxu0
      %v1768 = vadd.f32 0.0, %v1767
      %v1769 = vpop.f32.mrb[0].mxu0
      %v1770 = vpop.f32.mrb[0].mxu0
      %v1771 = vadd.f32 0.0, %v1770
      %v1772 = vpop.f32.mrb[0].mxu0
      %1773 = vmatprep.mubr.bf16.mxu0 0
      %1774 = vmatmul.mubr.bf16.gmra.mrb[0].mxu0 %v1620
      %v1775 = vpop.f32.mrb[0].mxu0
      %v1776 = vadd.f32 0.0, %v1775
      %v1777 = vpop.f32.mrb[0].mxu0
      %v1778 = vpop.f32.mrb[0].mxu0
      %v1779 = vadd.f32 0.0, %v1778
      %v1780 = vpop.f32.mrb[0].mxu0
      %1781 = vmatprep.mubr.bf16.mxu0 0
      %1782 = vmatmul.mubr.bf16.gmra.mrb[0].mxu0 %v1623
      %v1783 = vpop.f32.mrb[0].mxu0
      %v1784 = vadd.f32 0.0, %v1783
      %v1785 = vpop.f32.mrb[0].mxu0
      %v1786 = vpop.f32.mrb[0].mxu0
      %v1787 = vadd.f32 0.0, %v1786
      %v1788 = vpop.f32.mrb[0].mxu0
      %1789 = vmatprep.mubr.bf16.mxu0 0
      %1790 = vmatmul.mubr.bf16.gmra.mrb[0].mxu0 %v1626
      %v1791 = vpop.f32.mrb[0].mxu0
      %v1792 = vadd.f32 0.0, %v1791
      %v1793 = vpop.f32.mrb[0].mxu0
      %v1794 = vpop.f32.mrb[0].mxu0
      %v1795 = vadd.f32 0.0, %v1794
      %v1796 = vpop.f32.mrb[0].mxu0
      %1797 = vmatprep.mubr.bf16.mxu0 0
      %1798 = vmatmul.mubr.bf16.gmra.mrb[0].mxu0 %v1629
      %v1799 = vpop.f32.mrb[0].mxu0
      %v1800 = vadd.f32 0.0, %v1799
      %v1801 = vpop.f32.mrb[0].mxu0
      %v1802 = vpop.f32.mrb[0].mxu0
      %v1803 = vadd.f32 0.0, %v1802
      %v1804 = vpop.f32.mrb[0].mxu0
      %1805 = vmatprep.mubr.bf16.mxu0 0
      %1806 = vmatmul.mubr.bf16.gmra.mrb[0].mxu0 %v1632
      %v1807 = vpop.f32.mrb[0].mxu0
      %v1808 = vadd.f32 0.0, %v1807
      %v1809 = vpop.f32.mrb[0].mxu0
      %v1810 = vpop.f32.mrb[0].mxu0
      %v1811 = vadd.f32 0.0, %v1810
      %v1812 = vpop.f32.mrb[0].mxu0
      %1813 = vmatprep.mubr.bf16.mxu0 0
      %1814 = vmatmul.mubr.bf16.gmra.mrb[0].mxu0 %v1635
      %v1815 = vpop.f32.mrb[0].mxu0
      %v1816 = vadd.f32 0.0, %v1815
      %v1817 = vpop.f32.mrb[0].mxu0
      %v1818 = vpop.f32.mrb[0].mxu0
      %v1819 = vpop.f32.mrb[0].mxu0
      %1820 = vdwg.mxu0
      %v1821 = vadd.f32 %v1438, %v1672
      %v1822 = vadd.f32 %v1439, %v1675
      %v1823 = vadd.f32 %v1440, %v1680
      %v1824 = vadd.f32 %v1441, %v1683
      %v1825 = vadd.f32 %v1442, %v1688
      %v1826 = vadd.f32 %v1443, %v1691
      %v1827 = vadd.f32 %v1444, %v1696
      %v1828 = vadd.f32 %v1445, %v1699
      %v1829 = vadd.f32 %v1446, %v1704
      %v1830 = vadd.f32 %v1447, %v1707
      %v1831 = vadd.f32 %v1448, %v1712
      %v1832 = vadd.f32 %v1449, %v1715
      %v1833 = vadd.f32 %v1450, %v1720
      %v1834 = vadd.f32 %v1451, %v1723
      %v1835 = vadd.f32 %v1452, %v1728
      %v1836 = vadd.f32 %v1453, %v1731
      %v1837 = vadd.f32 %v1454, %v1736
      %v1838 = vadd.f32 %v1455, %v1739
      %v1839 = vadd.f32 %v1456, %v1744
      %v1840 = vadd.f32 %v1457, %v1747
      %v1841 = vadd.f32 %v1458, %v1752
      %v1842 = vadd.f32 %v1459, %v1755
      %v1843 = vadd.f32 %v1460, %v1760
      %v1844 = vadd.f32 %v1461, %v1763
      %v1845 = vadd.f32 %v1462, %v1768
      %v1846 = vadd.f32 %v1463, %v1771
      %v1847 = vadd.f32 %v1464, %v1776
      %v1848 = vadd.f32 %v1465, %v1779
      %v1849 = vadd.f32 %v1466, %v1784
      %v1850 = vadd.f32 %v1467, %v1787
      %v1851 = vadd.f32 %v1468, %v1792
      %v1852 = vadd.f32 %v1469, %v1795
      %v1853 = vadd.f32 %v1470, %v1800
      %v1854 = vadd.f32 %v1471, %v1803
      %v1855 = vadd.f32 %v1472, %v1808
      %v1856 = vadd.f32 %v1473, %v1811
      %v1857 = vadd.f32 %v1474, %v1816
      %v1895 = vunpack.c.l.b16 %v287
      %v1896 = vunpack.c.l.b16 %v288
      %v1897 = vunpack.c.l.b16 %v289
      %v1898 = vunpack.c.l.b16 %v290
      %v1899 = vunpack.c.l.b16 %v291
      %v1900 = vunpack.c.l.b16 %v292
      %v1901 = vunpack.c.l.b16 %v293
      %v1902 = vunpack.c.l.b16 %v294
      %v1903 = vunpack.c.l.b16 %v295
      %v1904 = vunpack.c.l.b16 %v296
      %v1905 = vunpack.c.l.b16 %v297
      %v1906 = vunpack.c.l.b16 %v298
      %v1907 = vunpack.c.l.b16 %v299
      %v1908 = vunpack.c.l.b16 %v300
      %v1909 = vunpack.c.l.b16 %v301
      %v1910 = vunpack.c.l.b16 %v302
      %v1911 = vunpack.c.l.b16 %v303
      %v1912 = vunpack.c.l.b16 %v304
      %v1913 = vunpack.c.l.b16 %v305
      %v1914 = vunpack.c.l.b16 %v306
      %v1915 = vunpack.c.l.b16 %v307
      %v1916 = vunpack.c.l.b16 %v308
      %v1917 = vunpack.c.l.b16 %v309
      %v1918 = vunpack.c.l.b16 %v310
      %v1919 = vunpack.c.l.b16 %v311
      %v1920 = vunpack.c.l.b16 %v312
      %v1921 = vunpack.c.l.b16 %v313
      %v1922 = vunpack.c.l.b16 %v314
      %v1923 = vunpack.c.l.b16 %v315
      %v1924 = vunpack.c.l.b16 %v316
      %v1925 = vunpack.c.l.b16 %v317
      %v1926 = vunpack.c.l.b16 %v318
      %v1927 = vunpack.c.l.b16 %v319
      %v1928 = vunpack.c.l.b16 %v320
      %v1929 = vunpack.c.l.b16 %v321
      %v1930 = vunpack.c.l.b16 %v322
      %v1931 = vunpack.c.l.b16 %v323
      %v1932 = vpack.c.b16 %v1896, %v1895
      %v1933 = vpack.c.b16 %v1898, %v1897
      %v1934 = vpack.c.b16 %v1900, %v1899
      %v1935 = vpack.c.b16 %v1902, %v1901
      %v1936 = vpack.c.b16 %v1904, %v1903
      %v1937 = vpack.c.b16 %v1906, %v1905
      %v1938 = vpack.c.b16 %v1908, %v1907
      %v1939 = vpack.c.b16 %v1910, %v1909
      %v1940 = vpack.c.b16 %v1912, %v1911
      %v1941 = vpack.c.b16 %v1914, %v1913
      %v1942 = vpack.c.b16 %v1916, %v1915
      %v1943 = vpack.c.b16 %v1918, %v1917
      %v1944 = vpack.c.b16 %v1920, %v1919
      %v1945 = vpack.c.b16 %v1922, %v1921
      %v1946 = vpack.c.b16 %v1924, %v1923
      %v1947 = vpack.c.b16 %v1926, %v1925
      %v1948 = vpack.c.b16 %v1928, %v1927
      %v1949 = vpack.c.b16 %v1930, %v1929
      %v1950 = vpack.c.b16 %v1931, %v1931
      %v1955 = vunpack.c.l.b16 %v340
      %v1956 = vunpack.c.l.b16 %v341
      %v1957 = vunpack.c.l.b16 %v342
      %v1958 = vunpack.c.l.b16 %v343
      %v1959 = vpack.c.b16 %v1956, %v1955
      %v1960 = vpack.c.b16 %v1958, %v1957
      %v1964 = vsel %vm465, %v1932, 0
      %v1967 = vsel %vm465, %v1933, 0
      %v1970 = vsel %vm465, %v1934, 0
      %v1973 = vsel %vm465, %v1935, 0
      %v1976 = vsel %vm465, %v1936, 0
      %v1979 = vsel %vm465, %v1937, 0
      %v1982 = vsel %vm465, %v1938, 0
      %v1985 = vsel %vm465, %v1939, 0
      %v1988 = vsel %vm465, %v1940, 0
      %v1991 = vsel %vm465, %v1941, 0
      %v1994 = vsel %vm465, %v1942, 0
      %v1997 = vsel %vm465, %v1943, 0
      %v2000 = vsel %vm465, %v1944, 0
      %v2003 = vsel %vm465, %v1945, 0
      %v2006 = vsel %vm465, %v1946, 0
      %v2009 = vsel %vm465, %v1947, 0
      %v2012 = vsel %vm465, %v1948, 0
      %v2015 = vsel %vm465, %v1949, 0
      %v2018 = vsel %vm465, %v1950, 0
      %2020 = vmatprep.subr.bf16.mxu0 0
      %2021 = vmatpush1.bf16.msra.mxu0 %v1959
      %2022 = vmatprep.subr.bf16.mxu0 0
      %2023 = vmatpush1.bf16.msra.mxu0 %v1960
      %2024 = vmatprep.subr.bf16.mxu0 0
      %2025 = vmatpush1.bf16.msra.mxu0 0
      %2026 = vmatprep.subr.bf16.mxu0 0
      %2027 = vmatpush1.bf16.msra.mxu0 0
      %2028 = vmatprep.subr.bf16.mxu0 0
      %2029 = vmatpush1.bf16.msra.mxu0 0
      %2030 = vmatprep.subr.bf16.mxu0 0
      %2031 = vmatpush1.bf16.msra.mxu0 0
      %2032 = vmatprep.subr.bf16.mxu0 0
      %2033 = vmatpush1.bf16.msra.mxu0 0
      %2034 = vmatprep.subr.bf16.mxu0 0
      %2035 = vmatpush1.bf16.msra.mxu0 0
      %2036 = vmatprep.subr.bf16.mxu0 0
      %2037 = vmatpush1.bf16.msra.mxu0 0
      %2038 = vmatprep.subr.bf16.mxu0 0
      %2039 = vmatpush1.bf16.msra.mxu0 0
      %2040 = vmatprep.subr.bf16.mxu0 0
      %2041 = vmatpush1.bf16.msra.mxu0 0
      %2042 = vmatprep.subr.bf16.mxu0 0
      %2043 = vmatpush1.bf16.msra.mxu0 0
      %2044 = vmatprep.subr.bf16.mxu0 0
      %2045 = vmatpush1.bf16.msra.mxu0 0
      %2046 = vmatprep.subr.bf16.mxu0 0
      %2047 = vmatpush1.bf16.msra.mxu0 0
      %2048 = vmatprep.subr.bf16.mxu0 0
      %2049 = vmatpush1.bf16.msra.mxu0 0
      %2050 = vmatprep.subr.bf16.mxu0 0
      %2051 = vmatpush1.bf16.msra.mxu0 0
      %2052 = vmatprep.mubr.bf16.mxu0 0
      %2053 = vmatmul.mubr.bf16.gmra.mrb[0].mxu0 %v1964
      %v2054 = vpop.f32.mrb[0].mxu0
      %v2055 = vadd.f32 0.0, %v2054
      %v2056 = vpop.f32.mrb[0].mxu0
      %v2057 = vpop.f32.mrb[0].mxu0
      %v2058 = vadd.f32 0.0, %v2057
      %v2059 = vpop.f32.mrb[0].mxu0
      %2060 = vmatprep.mubr.bf16.mxu0 0
      %2061 = vmatmul.mubr.bf16.gmra.mrb[0].mxu0 %v1967
      %v2062 = vpop.f32.mrb[0].mxu0
      %v2063 = vadd.f32 0.0, %v2062
      %v2064 = vpop.f32.mrb[0].mxu0
      %v2065 = vpop.f32.mrb[0].mxu0
      %v2066 = vadd.f32 0.0, %v2065
      %v2067 = vpop.f32.mrb[0].mxu0
      %2068 = vmatprep.mubr.bf16.mxu0 0
      %2069 = vmatmul.mubr.bf16.gmra.mrb[0].mxu0 %v1970
      %v2070 = vpop.f32.mrb[0].mxu0
      %v2071 = vadd.f32 0.0, %v2070
      %v2072 = vpop.f32.mrb[0].mxu0
      %v2073 = vpop.f32.mrb[0].mxu0
      %v2074 = vadd.f32 0.0, %v2073
      %v2075 = vpop.f32.mrb[0].mxu0
      %2076 = vmatprep.mubr.bf16.mxu0 0
      %2077 = vmatmul.mubr.bf16.gmra.mrb[0].mxu0 %v1973
      %v2078 = vpop.f32.mrb[0].mxu0
      %v2079 = vadd.f32 0.0, %v2078
      %v2080 = vpop.f32.mrb[0].mxu0
      %v2081 = vpop.f32.mrb[0].mxu0
      %v2082 = vadd.f32 0.0, %v2081
      %v2083 = vpop.f32.mrb[0].mxu0
      %2084 = vmatprep.mubr.bf16.mxu0 0
      %2085 = vmatmul.mubr.bf16.gmra.mrb[0].mxu0 %v1976
      %v2086 = vpop.f32.mrb[0].mxu0
      %v2087 = vadd.f32 0.0, %v2086
      %v2088 = vpop.f32.mrb[0].mxu0
      %v2089 = vpop.f32.mrb[0].mxu0
      %v2090 = vadd.f32 0.0, %v2089
      %v2091 = vpop.f32.mrb[0].mxu0
      %2092 = vmatprep.mubr.bf16.mxu0 0
      %2093 = vmatmul.mubr.bf16.gmra.mrb[0].mxu0 %v1979
      %v2094 = vpop.f32.mrb[0].mxu0
      %v2095 = vadd.f32 0.0, %v2094
      %v2096 = vpop.f32.mrb[0].mxu0
      %v2097 = vpop.f32.mrb[0].mxu0
      %v2098 = vadd.f32 0.0, %v2097
      %v2099 = vpop.f32.mrb[0].mxu0
      %2100 = vmatprep.mubr.bf16.mxu0 0
      %2101 = vmatmul.mubr.bf16.gmra.mrb[0].mxu0 %v1982
      %v2102 = vpop.f32.mrb[0].mxu0
      %v2103 = vadd.f32 0.0, %v2102
      %v2104 = vpop.f32.mrb[0].mxu0
      %v2105 = vpop.f32.mrb[0].mxu0
      %v2106 = vadd.f32 0.0, %v2105
      %v2107 = vpop.f32.mrb[0].mxu0
      %2108 = vmatprep.mubr.bf16.mxu0 0
      %2109 = vmatmul.mubr.bf16.gmra.mrb[0].mxu0 %v1985
      %v2110 = vpop.f32.mrb[0].mxu0
      %v2111 = vadd.f32 0.0, %v2110
      %v2112 = vpop.f32.mrb[0].mxu0
      %v2113 = vpop.f32.mrb[0].mxu0
      %v2114 = vadd.f32 0.0, %v2113
      %v2115 = vpop.f32.mrb[0].mxu0
      %2116 = vmatprep.mubr.bf16.mxu0 0
      %2117 = vmatmul.mubr.bf16.gmra.mrb[0].mxu0 %v1988
      %v2118 = vpop.f32.mrb[0].mxu0
      %v2119 = vadd.f32 0.0, %v2118
      %v2120 = vpop.f32.mrb[0].mxu0
      %v2121 = vpop.f32.mrb[0].mxu0
      %v2122 = vadd.f32 0.0, %v2121
      %v2123 = vpop.f32.mrb[0].mxu0
      %2124 = vmatprep.mubr.bf16.mxu0 0
      %2125 = vmatmul.mubr.bf16.gmra.mrb[0].mxu0 %v1991
      %v2126 = vpop.f32.mrb[0].mxu0
      %v2127 = vadd.f32 0.0, %v2126
      %v2128 = vpop.f32.mrb[0].mxu0
      %v2129 = vpop.f32.mrb[0].mxu0
      %v2130 = vadd.f32 0.0, %v2129
      %v2131 = vpop.f32.mrb[0].mxu0
      %2132 = vmatprep.mubr.bf16.mxu0 0
      %2133 = vmatmul.mubr.bf16.gmra.mrb[0].mxu0 %v1994
      %v2134 = vpop.f32.mrb[0].mxu0
      %v2135 = vadd.f32 0.0, %v2134
      %v2136 = vpop.f32.mrb[0].mxu0
      %v2137 = vpop.f32.mrb[0].mxu0
      %v2138 = vadd.f32 0.0, %v2137
      %v2139 = vpop.f32.mrb[0].mxu0
      %2140 = vmatprep.mubr.bf16.mxu0 0
      %2141 = vmatmul.mubr.bf16.gmra.mrb[0].mxu0 %v1997
      %v2142 = vpop.f32.mrb[0].mxu0
      %v2143 = vadd.f32 0.0, %v2142
      %v2144 = vpop.f32.mrb[0].mxu0
      %v2145 = vpop.f32.mrb[0].mxu0
      %v2146 = vadd.f32 0.0, %v2145
      %v2147 = vpop.f32.mrb[0].mxu0
      %2148 = vmatprep.mubr.bf16.mxu0 0
      %2149 = vmatmul.mubr.bf16.gmra.mrb[0].mxu0 %v2000
      %v2150 = vpop.f32.mrb[0].mxu0
      %v2151 = vadd.f32 0.0, %v2150
      %v2152 = vpop.f32.mrb[0].mxu0
      %v2153 = vpop.f32.mrb[0].mxu0
      %v2154 = vadd.f32 0.0, %v2153
      %v2155 = vpop.f32.mrb[0].mxu0
      %2156 = vmatprep.mubr.bf16.mxu0 0
      %2157 = vmatmul.mubr.bf16.gmra.mrb[0].mxu0 %v2003
      %v2158 = vpop.f32.mrb[0].mxu0
      %v2159 = vadd.f32 0.0, %v2158
      %v2160 = vpop.f32.mrb[0].mxu0
      %v2161 = vpop.f32.mrb[0].mxu0
      %v2162 = vadd.f32 0.0, %v2161
      %v2163 = vpop.f32.mrb[0].mxu0
      %2164 = vmatprep.mubr.bf16.mxu0 0
      %2165 = vmatmul.mubr.bf16.gmra.mrb[0].mxu0 %v2006
      %v2166 = vpop.f32.mrb[0].mxu0
      %v2167 = vadd.f32 0.0, %v2166
      %v2168 = vpop.f32.mrb[0].mxu0
      %v2169 = vpop.f32.mrb[0].mxu0
      %v2170 = vadd.f32 0.0, %v2169
      %v2171 = vpop.f32.mrb[0].mxu0
      %2172 = vmatprep.mubr.bf16.mxu0 0
      %2173 = vmatmul.mubr.bf16.gmra.mrb[0].mxu0 %v2009
      %v2174 = vpop.f32.mrb[0].mxu0
      %v2175 = vadd.f32 0.0, %v2174
      %v2176 = vpop.f32.mrb[0].mxu0
      %v2177 = vpop.f32.mrb[0].mxu0
      %v2178 = vadd.f32 0.0, %v2177
      %v2179 = vpop.f32.mrb[0].mxu0
      %2180 = vmatprep.mubr.bf16.mxu0 0
      %2181 = vmatmul.mubr.bf16.gmra.mrb[0].mxu0 %v2012
      %v2182 = vpop.f32.mrb[0].mxu0
      %v2183 = vadd.f32 0.0, %v2182
      %v2184 = vpop.f32.mrb[0].mxu0
      %v2185 = vpop.f32.mrb[0].mxu0
      %v2186 = vadd.f32 0.0, %v2185
      %v2187 = vpop.f32.mrb[0].mxu0
      %2188 = vmatprep.mubr.bf16.mxu0 0
      %2189 = vmatmul.mubr.bf16.gmra.mrb[0].mxu0 %v2015
      %v2190 = vpop.f32.mrb[0].mxu0
      %v2191 = vadd.f32 0.0, %v2190
      %v2192 = vpop.f32.mrb[0].mxu0
      %v2193 = vpop.f32.mrb[0].mxu0
      %v2194 = vadd.f32 0.0, %v2193
      %v2195 = vpop.f32.mrb[0].mxu0
      %2196 = vmatprep.mubr.bf16.mxu0 0
      %2197 = vmatmul.mubr.bf16.gmra.mrb[0].mxu0 %v2018
      %v2198 = vpop.f32.mrb[0].mxu0
      %v2199 = vadd.f32 0.0, %v2198
      %v2200 = vpop.f32.mrb[0].mxu0
      %v2201 = vpop.f32.mrb[0].mxu0
      %v2202 = vpop.f32.mrb[0].mxu0
      %2203 = vdwg.mxu0
      %v2204 = vadd.f32 %v1821, %v2055
      %v2205 = vadd.f32 %v1822, %v2058
      %v2206 = vadd.f32 %v1823, %v2063
      %v2207 = vadd.f32 %v1824, %v2066
      %v2208 = vadd.f32 %v1825, %v2071
      %v2209 = vadd.f32 %v1826, %v2074
      %v2210 = vadd.f32 %v1827, %v2079
      %v2211 = vadd.f32 %v1828, %v2082
      %v2212 = vadd.f32 %v1829, %v2087
      %v2213 = vadd.f32 %v1830, %v2090
      %v2214 = vadd.f32 %v1831, %v2095
      %v2215 = vadd.f32 %v1832, %v2098
      %v2216 = vadd.f32 %v1833, %v2103
      %v2217 = vadd.f32 %v1834, %v2106
      %v2218 = vadd.f32 %v1835, %v2111
      %v2219 = vadd.f32 %v1836, %v2114
      %v2220 = vadd.f32 %v1837, %v2119
      %v2221 = vadd.f32 %v1838, %v2122
      %v2222 = vadd.f32 %v1839, %v2127
      %v2223 = vadd.f32 %v1840, %v2130
      %v2224 = vadd.f32 %v1841, %v2135
      %v2225 = vadd.f32 %v1842, %v2138
      %v2226 = vadd.f32 %v1843, %v2143
      %v2227 = vadd.f32 %v1844, %v2146
      %v2228 = vadd.f32 %v1845, %v2151
      %v2229 = vadd.f32 %v1846, %v2154
      %v2230 = vadd.f32 %v1847, %v2159
      %v2231 = vadd.f32 %v1848, %v2162
      %v2232 = vadd.f32 %v1849, %v2167
      %v2233 = vadd.f32 %v1850, %v2170
      %v2234 = vadd.f32 %v1851, %v2175
      %v2235 = vadd.f32 %v1852, %v2178
      %v2236 = vadd.f32 %v1853, %v2183
      %v2237 = vadd.f32 %v1854, %v2186
      %v2238 = vadd.f32 %v1855, %v2191
      %v2239 = vadd.f32 %v1856, %v2194
      %v2240 = vadd.f32 %v1857, %v2199
      %v2241 = vshrl.u32 %v1549, 16
      %v2243 = vshll.u32 %v1549, 16
      %v2245 = vrot.slane %v2243, 1
      %v2246 = vor.u32 %v2241, %v2245
      %v2247 = vshll.u32 %v1550, 16
      %v2249 = vrot.slane %v2247, 1
      %v2250 = vsel %vm1053, %v2246, %v2249
      %v2251 = vshrl.u32 %v1550, 16
      %v2253 = vor.u32 %v2251, %v2249
      %v2254 = vshll.u32 %v1551, 16
      %v2256 = vrot.slane %v2254, 1
      %v2257 = vsel %vm1053, %v2253, %v2256
      %v2258 = vshrl.u32 %v1551, 16
      %v2260 = vor.u32 %v2258, %v2256
      %v2261 = vshll.u32 %v1552, 16
      %v2263 = vrot.slane %v2261, 1
      %v2264 = vsel %vm1053, %v2260, %v2263
      %v2265 = vshrl.u32 %v1552, 16
      %v2267 = vor.u32 %v2265, %v2263
      %v2268 = vshll.u32 %v1553, 16
      %v2270 = vrot.slane %v2268, 1
      %v2271 = vsel %vm1053, %v2267, %v2270
      %v2272 = vshrl.u32 %v1553, 16
      %v2274 = vor.u32 %v2272, %v2270
      %v2275 = vshll.u32 %v1554, 16
      %v2277 = vrot.slane %v2275, 1
      %v2278 = vsel %vm1053, %v2274, %v2277
      %v2279 = vshrl.u32 %v1554, 16
      %v2281 = vor.u32 %v2279, %v2277
      %v2282 = vshll.u32 %v1555, 16
      %v2284 = vrot.slane %v2282, 1
      %v2285 = vsel %vm1053, %v2281, %v2284
      %v2286 = vshrl.u32 %v1555, 16
      %v2288 = vor.u32 %v2286, %v2284
      %v2289 = vshll.u32 %v1556, 16
      %v2291 = vrot.slane %v2289, 1
      %v2292 = vsel %vm1053, %v2288, %v2291
      %v2293 = vshrl.u32 %v1556, 16
      %v2295 = vor.u32 %v2293, %v2291
      %v2296 = vshll.u32 %v1557, 16
      %v2298 = vrot.slane %v2296, 1
      %v2299 = vsel %vm1053, %v2295, %v2298
      %v2300 = vshrl.u32 %v1557, 16
      %v2302 = vor.u32 %v2300, %v2298
      %v2303 = vshll.u32 %v1558, 16
      %v2305 = vrot.slane %v2303, 1
      %v2306 = vsel %vm1053, %v2302, %v2305
      %v2307 = vshrl.u32 %v1558, 16
      %v2309 = vor.u32 %v2307, %v2305
      %v2310 = vshll.u32 %v1559, 16
      %v2312 = vrot.slane %v2310, 1
      %v2313 = vsel %vm1053, %v2309, %v2312
      %v2314 = vshrl.u32 %v1559, 16
      %v2316 = vor.u32 %v2314, %v2312
      %v2317 = vshll.u32 %v1560, 16
      %v2319 = vrot.slane %v2317, 1
      %v2320 = vsel %vm1053, %v2316, %v2319
      %v2321 = vshrl.u32 %v1560, 16
      %v2323 = vor.u32 %v2321, %v2319
      %v2324 = vshll.u32 %v1561, 16
      %v2326 = vrot.slane %v2324, 1
      %v2327 = vsel %vm1053, %v2323, %v2326
      %v2328 = vshrl.u32 %v1561, 16
      %v2330 = vor.u32 %v2328, %v2326
      %v2331 = vshll.u32 %v1562, 16
      %v2333 = vrot.slane %v2331, 1
      %v2334 = vsel %vm1053, %v2330, %v2333
      %v2335 = vshrl.u32 %v1562, 16
      %v2337 = vor.u32 %v2335, %v2333
      %v2338 = vshll.u32 %v1563, 16
      %v2340 = vrot.slane %v2338, 1
      %v2341 = vsel %vm1053, %v2337, %v2340
      %v2342 = vshrl.u32 %v1563, 16
      %v2344 = vor.u32 %v2342, %v2340
      %v2345 = vshll.u32 %v1564, 16
      %v2347 = vrot.slane %v2345, 1
      %v2348 = vsel %vm1053, %v2344, %v2347
      %v2349 = vshrl.u32 %v1564, 16
      %v2351 = vor.u32 %v2349, %v2347
      %v2352 = vshll.u32 %v1565, 16
      %v2354 = vrot.slane %v2352, 1
      %v2355 = vsel %vm1053, %v2351, %v2354
      %v2356 = vshrl.u32 %v1565, 16
      %v2358 = vor.u32 %v2356, %v2354
      %v2359 = vshll.u32 %v1566, 16
      %v2361 = vrot.slane %v2359, 1
      %v2362 = vsel %vm1053, %v2358, %v2361
      %v2363 = vshrl.u32 %v1566, 16
      %v2365 = vor.u32 %v2363, %v2361
      %v2366 = vshll.u32 %v1567, 16
      %v2368 = vrot.slane %v2366, 1
      %v2369 = vsel %vm1053, %v2365, %v2368
      %v2370 = vshrl.u32 %v1567, 16
      %v2376 = vunpack.c.l.b16 %v344
      %v2377 = vunpack.c.l.b16 %v345
      %v2378 = vunpack.c.l.b16 %v346
      %v2379 = vunpack.c.l.b16 %v347
      %v2380 = vpack.c.b16 %v2377, %v2376
      %v2381 = vpack.c.b16 %v2379, %v2378
      %v2385 = vsel %vm465, %v2250, 0
      %v2388 = vsel %vm465, %v2257, 0
      %v2391 = vsel %vm465, %v2264, 0
      %v2394 = vsel %vm465, %v2271, 0
      %v2397 = vsel %vm465, %v2278, 0
      %v2400 = vsel %vm465, %v2285, 0
      %v2403 = vsel %vm465, %v2292, 0
      %v2406 = vsel %vm465, %v2299, 0
      %v2409 = vsel %vm465, %v2306, 0
      %v2412 = vsel %vm465, %v2313, 0
      %v2415 = vsel %vm465, %v2320, 0
      %v2418 = vsel %vm465, %v2327, 0
      %v2421 = vsel %vm465, %v2334, 0
      %v2424 = vsel %vm465, %v2341, 0
      %v2427 = vsel %vm465, %v2348, 0
      %v2430 = vsel %vm465, %v2355, 0
      %v2433 = vsel %vm465, %v2362, 0
      %v2436 = vsel %vm465, %v2369, 0
      %v2439 = vsel %vm465, %v2370, 0
      %2441 = vmatprep.subr.bf16.mxu0 0
      %2442 = vmatpush1.bf16.msra.mxu0 %v2380
      %2443 = vmatprep.subr.bf16.mxu0 0
      %2444 = vmatpush1.bf16.msra.mxu0 %v2381
      %2445 = vmatprep.subr.bf16.mxu0 0
      %2446 = vmatpush1.bf16.msra.mxu0 0
      %2447 = vmatprep.subr.bf16.mxu0 0
      %2448 = vmatpush1.bf16.msra.mxu0 0
      %2449 = vmatprep.subr.bf16.mxu0 0
      %2450 = vmatpush1.bf16.msra.mxu0 0
      %2451 = vmatprep.subr.bf16.mxu0 0
      %2452 = vmatpush1.bf16.msra.mxu0 0
      %2453 = vmatprep.subr.bf16.mxu0 0
      %2454 = vmatpush1.bf16.msra.mxu0 0
      %2455 = vmatprep.subr.bf16.mxu0 0
      %2456 = vmatpush1.bf16.msra.mxu0 0
      %2457 = vmatprep.subr.bf16.mxu0 0
      %2458 = vmatpush1.bf16.msra.mxu0 0
      %2459 = vmatprep.subr.bf16.mxu0 0
      %2460 = vmatpush1.bf16.msra.mxu0 0
      %2461 = vmatprep.subr.bf16.mxu0 0
      %2462 = vmatpush1.bf16.msra.mxu0 0
      %2463 = vmatprep.subr.bf16.mxu0 0
      %2464 = vmatpush1.bf16.msra.mxu0 0
      %2465 = vmatprep.subr.bf16.mxu0 0
      %2466 = vmatpush1.bf16.msra.mxu0 0
      %2467 = vmatprep.subr.bf16.mxu0 0
      %2468 = vmatpush1.bf16.msra.mxu0 0
      %2469 = vmatprep.subr.bf16.mxu0 0
      %2470 = vmatpush1.bf16.msra.mxu0 0
      %2471 = vmatprep.subr.bf16.mxu0 0
      %2472 = vmatpush1.bf16.msra.mxu0 0
      %2473 = vmatprep.mubr.bf16.mxu0 0
      %2474 = vmatmul.mubr.bf16.gmra.mrb[0].mxu0 %v2385
      %v2475 = vpop.f32.mrb[0].mxu0
      %v2476 = vadd.f32 0.0, %v2475
      %v2477 = vpop.f32.mrb[0].mxu0
      %v2478 = vpop.f32.mrb[0].mxu0
      %v2479 = vadd.f32 0.0, %v2478
      %v2480 = vpop.f32.mrb[0].mxu0
      %2481 = vmatprep.mubr.bf16.mxu0 0
      %2482 = vmatmul.mubr.bf16.gmra.mrb[0].mxu0 %v2388
      %v2483 = vpop.f32.mrb[0].mxu0
      %v2484 = vadd.f32 0.0, %v2483
      %v2485 = vpop.f32.mrb[0].mxu0
      %v2486 = vpop.f32.mrb[0].mxu0
      %v2487 = vadd.f32 0.0, %v2486
      %v2488 = vpop.f32.mrb[0].mxu0
      %2489 = vmatprep.mubr.bf16.mxu0 0
      %2490 = vmatmul.mubr.bf16.gmra.mrb[0].mxu0 %v2391
      %v2491 = vpop.f32.mrb[0].mxu0
      %v2492 = vadd.f32 0.0, %v2491
      %v2493 = vpop.f32.mrb[0].mxu0
      %v2494 = vpop.f32.mrb[0].mxu0
      %v2495 = vadd.f32 0.0, %v2494
      %v2496 = vpop.f32.mrb[0].mxu0
      %2497 = vmatprep.mubr.bf16.mxu0 0
      %2498 = vmatmul.mubr.bf16.gmra.mrb[0].mxu0 %v2394
      %v2499 = vpop.f32.mrb[0].mxu0
      %v2500 = vadd.f32 0.0, %v2499
      %v2501 = vpop.f32.mrb[0].mxu0
      %v2502 = vpop.f32.mrb[0].mxu0
      %v2503 = vadd.f32 0.0, %v2502
      %v2504 = vpop.f32.mrb[0].mxu0
      %2505 = vmatprep.mubr.bf16.mxu0 0
      %2506 = vmatmul.mubr.bf16.gmra.mrb[0].mxu0 %v2397
      %v2507 = vpop.f32.mrb[0].mxu0
      %v2508 = vadd.f32 0.0, %v2507
      %v2509 = vpop.f32.mrb[0].mxu0
      %v2510 = vpop.f32.mrb[0].mxu0
      %v2511 = vadd.f32 0.0, %v2510
      %v2512 = vpop.f32.mrb[0].mxu0
      %2513 = vmatprep.mubr.bf16.mxu0 0
      %2514 = vmatmul.mubr.bf16.gmra.mrb[0].mxu0 %v2400
      %v2515 = vpop.f32.mrb[0].mxu0
      %v2516 = vadd.f32 0.0, %v2515
      %v2517 = vpop.f32.mrb[0].mxu0
      %v2518 = vpop.f32.mrb[0].mxu0
      %v2519 = vadd.f32 0.0, %v2518
      %v2520 = vpop.f32.mrb[0].mxu0
      %2521 = vmatprep.mubr.bf16.mxu0 0
      %2522 = vmatmul.mubr.bf16.gmra.mrb[0].mxu0 %v2403
      %v2523 = vpop.f32.mrb[0].mxu0
      %v2524 = vadd.f32 0.0, %v2523
      %v2525 = vpop.f32.mrb[0].mxu0
      %v2526 = vpop.f32.mrb[0].mxu0
      %v2527 = vadd.f32 0.0, %v2526
      %v2528 = vpop.f32.mrb[0].mxu0
      %2529 = vmatprep.mubr.bf16.mxu0 0
      %2530 = vmatmul.mubr.bf16.gmra.mrb[0].mxu0 %v2406
      %v2531 = vpop.f32.mrb[0].mxu0
      %v2532 = vadd.f32 0.0, %v2531
      %v2533 = vpop.f32.mrb[0].mxu0
      %v2534 = vpop.f32.mrb[0].mxu0
      %v2535 = vadd.f32 0.0, %v2534
      %v2536 = vpop.f32.mrb[0].mxu0
      %2537 = vmatprep.mubr.bf16.mxu0 0
      %2538 = vmatmul.mubr.bf16.gmra.mrb[0].mxu0 %v2409
      %v2539 = vpop.f32.mrb[0].mxu0
      %v2540 = vadd.f32 0.0, %v2539
      %v2541 = vpop.f32.mrb[0].mxu0
      %v2542 = vpop.f32.mrb[0].mxu0
      %v2543 = vadd.f32 0.0, %v2542
      %v2544 = vpop.f32.mrb[0].mxu0
      %2545 = vmatprep.mubr.bf16.mxu0 0
      %2546 = vmatmul.mubr.bf16.gmra.mrb[0].mxu0 %v2412
      %v2547 = vpop.f32.mrb[0].mxu0
      %v2548 = vadd.f32 0.0, %v2547
      %v2549 = vpop.f32.mrb[0].mxu0
      %v2550 = vpop.f32.mrb[0].mxu0
      %v2551 = vadd.f32 0.0, %v2550
      %v2552 = vpop.f32.mrb[0].mxu0
      %2553 = vmatprep.mubr.bf16.mxu0 0
      %2554 = vmatmul.mubr.bf16.gmra.mrb[0].mxu0 %v2415
      %v2555 = vpop.f32.mrb[0].mxu0
      %v2556 = vadd.f32 0.0, %v2555
      %v2557 = vpop.f32.mrb[0].mxu0
      %v2558 = vpop.f32.mrb[0].mxu0
      %v2559 = vadd.f32 0.0, %v2558
      %v2560 = vpop.f32.mrb[0].mxu0
      %2561 = vmatprep.mubr.bf16.mxu0 0
      %2562 = vmatmul.mubr.bf16.gmra.mrb[0].mxu0 %v2418
      %v2563 = vpop.f32.mrb[0].mxu0
      %v2564 = vadd.f32 0.0, %v2563
      %v2565 = vpop.f32.mrb[0].mxu0
      %v2566 = vpop.f32.mrb[0].mxu0
      %v2567 = vadd.f32 0.0, %v2566
      %v2568 = vpop.f32.mrb[0].mxu0
      %2569 = vmatprep.mubr.bf16.mxu0 0
      %2570 = vmatmul.mubr.bf16.gmra.mrb[0].mxu0 %v2421
      %v2571 = vpop.f32.mrb[0].mxu0
      %v2572 = vadd.f32 0.0, %v2571
      %v2573 = vpop.f32.mrb[0].mxu0
      %v2574 = vpop.f32.mrb[0].mxu0
      %v2575 = vadd.f32 0.0, %v2574
      %v2576 = vpop.f32.mrb[0].mxu0
      %2577 = vmatprep.mubr.bf16.mxu0 0
      %2578 = vmatmul.mubr.bf16.gmra.mrb[0].mxu0 %v2424
      %v2579 = vpop.f32.mrb[0].mxu0
      %v2580 = vadd.f32 0.0, %v2579
      %v2581 = vpop.f32.mrb[0].mxu0
      %v2582 = vpop.f32.mrb[0].mxu0
      %v2583 = vadd.f32 0.0, %v2582
      %v2584 = vpop.f32.mrb[0].mxu0
      %2585 = vmatprep.mubr.bf16.mxu0 0
      %2586 = vmatmul.mubr.bf16.gmra.mrb[0].mxu0 %v2427
      %v2587 = vpop.f32.mrb[0].mxu0
      %v2588 = vadd.f32 0.0, %v2587
      %v2589 = vpop.f32.mrb[0].mxu0
      %v2590 = vpop.f32.mrb[0].mxu0
      %v2591 = vadd.f32 0.0, %v2590
      %v2592 = vpop.f32.mrb[0].mxu0
      %2593 = vmatprep.mubr.bf16.mxu0 0
      %2594 = vmatmul.mubr.bf16.gmra.mrb[0].mxu0 %v2430
      %v2595 = vpop.f32.mrb[0].mxu0
      %v2596 = vadd.f32 0.0, %v2595
      %v2597 = vpop.f32.mrb[0].mxu0
      %v2598 = vpop.f32.mrb[0].mxu0
      %v2599 = vadd.f32 0.0, %v2598
      %v2600 = vpop.f32.mrb[0].mxu0
      %2601 = vmatprep.mubr.bf16.mxu0 0
      %2602 = vmatmul.mubr.bf16.gmra.mrb[0].mxu0 %v2433
      %v2603 = vpop.f32.mrb[0].mxu0
      %v2604 = vadd.f32 0.0, %v2603
      %v2605 = vpop.f32.mrb[0].mxu0
      %v2606 = vpop.f32.mrb[0].mxu0
      %v2607 = vadd.f32 0.0, %v2606
      %v2608 = vpop.f32.mrb[0].mxu0
      %2609 = vmatprep.mubr.bf16.mxu0 0
      %2610 = vmatmul.mubr.bf16.gmra.mrb[0].mxu0 %v2436
      %v2611 = vpop.f32.mrb[0].mxu0
      %v2612 = vadd.f32 0.0, %v2611
      %v2613 = vpop.f32.mrb[0].mxu0
      %v2614 = vpop.f32.mrb[0].mxu0
      %v2615 = vadd.f32 0.0, %v2614
      %v2616 = vpop.f32.mrb[0].mxu0
      %2617 = vmatprep.mubr.bf16.mxu0 0
      %2618 = vmatmul.mubr.bf16.gmra.mrb[0].mxu0 %v2439
      %v2619 = vpop.f32.mrb[0].mxu0
      %v2620 = vadd.f32 0.0, %v2619
      %v2621 = vpop.f32.mrb[0].mxu0
      %v2622 = vpop.f32.mrb[0].mxu0
      %v2623 = vpop.f32.mrb[0].mxu0
      %2624 = vdwg.mxu0
      %v2625 = vadd.f32 %v2204, %v2476
      %v2626 = vadd.f32 %v2205, %v2479
      %v2627 = vadd.f32 %v2206, %v2484
      %v2628 = vadd.f32 %v2207, %v2487
      %v2629 = vadd.f32 %v2208, %v2492
      %v2630 = vadd.f32 %v2209, %v2495
      %v2631 = vadd.f32 %v2210, %v2500
      %v2632 = vadd.f32 %v2211, %v2503
      %v2633 = vadd.f32 %v2212, %v2508
      %v2634 = vadd.f32 %v2213, %v2511
      %v2635 = vadd.f32 %v2214, %v2516
      %v2636 = vadd.f32 %v2215, %v2519
      %v2637 = vadd.f32 %v2216, %v2524
      %v2638 = vadd.f32 %v2217, %v2527
      %v2639 = vadd.f32 %v2218, %v2532
      %v2640 = vadd.f32 %v2219, %v2535
      %v2641 = vadd.f32 %v2220, %v2540
      %v2642 = vadd.f32 %v2221, %v2543
      %v2643 = vadd.f32 %v2222, %v2548
      %v2644 = vadd.f32 %v2223, %v2551
      %v2645 = vadd.f32 %v2224, %v2556
      %v2646 = vadd.f32 %v2225, %v2559
      %v2647 = vadd.f32 %v2226, %v2564
      %v2648 = vadd.f32 %v2227, %v2567
      %v2649 = vadd.f32 %v2228, %v2572
      %v2650 = vadd.f32 %v2229, %v2575
      %v2651 = vadd.f32 %v2230, %v2580
      %v2652 = vadd.f32 %v2231, %v2583
      %v2653 = vadd.f32 %v2232, %v2588
      %v2654 = vadd.f32 %v2233, %v2591
      %v2655 = vadd.f32 %v2234, %v2596
      %v2656 = vadd.f32 %v2235, %v2599
      %v2657 = vadd.f32 %v2236, %v2604
      %v2658 = vadd.f32 %v2237, %v2607
      %v2659 = vadd.f32 %v2238, %v2612
      %v2660 = vadd.f32 %v2239, %v2615
      %v2661 = vadd.f32 %v2240, %v2620
      %v2664 = vunpack.c.l.b16 %v209
      %v2665 = vunpack.c.l.b16 %v210
      %v2666 = vpack.c.b16 %v2664, %v780
      %v2667 = vpack.c.b16 %v2665, %v2665
      %v2669 = vshll.u32 %v2666, 16
      %v2671 = vrot.slane %v2669, 1
      %v2672 = vsel %vm1053, %v1178, %v2671
      %v2673 = vshrl.u32 %v2666, 16
      %v2675 = vor.u32 %v2673, %v2671
      %v2677 = vshll.u32 %v2667, 16
      %v2679 = vrot.slane %v2677, 1
      %v2680 = vsel %vm1053, %v2675, %v2679
      %v2681 = vshrl.u32 %v2667, 16
      %v2687 = vunpack.c.l.b16 %v348
      %v2688 = vunpack.c.l.b16 %v349
      %v2689 = vunpack.c.l.b16 %v350
      %v2690 = vunpack.c.l.b16 %v351
      %v2691 = vpack.c.b16 %v2688, %v2687
      %v2692 = vpack.c.b16 %v2690, %v2689
      %v2696 = vsel %vm465, %v2672, 0
      %v2699 = vsel %vm465, %v2680, 0
      %v2702 = vsel %vm465, %v2681, 0
      %2704 = vmatprep.subr.bf16.mxu0 0
      %2705 = vmatpush1.bf16.msra.mxu0 %v2691
      %2706 = vmatprep.subr.bf16.mxu0 0
      %2707 = vmatpush1.bf16.msra.mxu0 %v2692
      %2708 = vmatprep.subr.bf16.mxu0 0
      %2709 = vmatpush1.bf16.msra.mxu0 0
      %2710 = vmatprep.subr.bf16.mxu0 0
      %2711 = vmatpush1.bf16.msra.mxu0 0
      %2712 = vmatprep.subr.bf16.mxu0 0
      %2713 = vmatpush1.bf16.msra.mxu0 0
      %2714 = vmatprep.subr.bf16.mxu0 0
      %2715 = vmatpush1.bf16.msra.mxu0 0
      %2716 = vmatprep.subr.bf16.mxu0 0
      %2717 = vmatpush1.bf16.msra.mxu0 0
      %2718 = vmatprep.subr.bf16.mxu0 0
      %2719 = vmatpush1.bf16.msra.mxu0 0
      %2720 = vmatprep.subr.bf16.mxu0 0
      %2721 = vmatpush1.bf16.msra.mxu0 0
      %2722 = vmatprep.subr.bf16.mxu0 0
      %2723 = vmatpush1.bf16.msra.mxu0 0
      %2724 = vmatprep.subr.bf16.mxu0 0
      %2725 = vmatpush1.bf16.msra.mxu0 0
      %2726 = vmatprep.subr.bf16.mxu0 0
      %2727 = vmatpush1.bf16.msra.mxu0 0
      %2728 = vmatprep.subr.bf16.mxu0 0
      %2729 = vmatpush1.bf16.msra.mxu0 0
      %2730 = vmatprep.subr.bf16.mxu0 0
      %2731 = vmatpush1.bf16.msra.mxu0 0
      %2732 = vmatprep.subr.bf16.mxu0 0
      %2733 = vmatpush1.bf16.msra.mxu0 0
      %2734 = vmatprep.subr.bf16.mxu0 0
      %2735 = vmatpush1.bf16.msra.mxu0 0
      %2736 = vmatprep.mubr.bf16.mxu0 0
      %2737 = vmatmul.mubr.bf16.gmra.mrb[0].mxu0 %v1201
      %v2738 = vpop.f32.mrb[0].mxu0
      %v2739 = vadd.f32 0.0, %v2738
      %v2740 = vpop.f32.mrb[0].mxu0
      %v2741 = vpop.f32.mrb[0].mxu0
      %v2742 = vadd.f32 0.0, %v2741
      %v2743 = vpop.f32.mrb[0].mxu0
      %2744 = vmatprep.mubr.bf16.mxu0 0
      %2745 = vmatmul.mubr.bf16.gmra.mrb[0].mxu0 %v1204
      %v2746 = vpop.f32.mrb[0].mxu0
      %v2747 = vadd.f32 0.0, %v2746
      %v2748 = vpop.f32.mrb[0].mxu0
      %v2749 = vpop.f32.mrb[0].mxu0
      %v2750 = vadd.f32 0.0, %v2749
      %v2751 = vpop.f32.mrb[0].mxu0
      %2752 = vmatprep.mubr.bf16.mxu0 0
      %2753 = vmatmul.mubr.bf16.gmra.mrb[0].mxu0 %v1207
      %v2754 = vpop.f32.mrb[0].mxu0
      %v2755 = vadd.f32 0.0, %v2754
      %v2756 = vpop.f32.mrb[0].mxu0
      %v2757 = vpop.f32.mrb[0].mxu0
      %v2758 = vadd.f32 0.0, %v2757
      %v2759 = vpop.f32.mrb[0].mxu0
      %2760 = vmatprep.mubr.bf16.mxu0 0
      %2761 = vmatmul.mubr.bf16.gmra.mrb[0].mxu0 %v1210
      %v2762 = vpop.f32.mrb[0].mxu0
      %v2763 = vadd.f32 0.0, %v2762
      %v2764 = vpop.f32.mrb[0].mxu0
      %v2765 = vpop.f32.mrb[0].mxu0
      %v2766 = vadd.f32 0.0, %v2765
      %v2767 = vpop.f32.mrb[0].mxu0
      %2768 = vmatprep.mubr.bf16.mxu0 0
      %2769 = vmatmul.mubr.bf16.gmra.mrb[0].mxu0 %v1213
      %v2770 = vpop.f32.mrb[0].mxu0
      %v2771 = vadd.f32 0.0, %v2770
      %v2772 = vpop.f32.mrb[0].mxu0
      %v2773 = vpop.f32.mrb[0].mxu0
      %v2774 = vadd.f32 0.0, %v2773
      %v2775 = vpop.f32.mrb[0].mxu0
      %2776 = vmatprep.mubr.bf16.mxu0 0
      %2777 = vmatmul.mubr.bf16.gmra.mrb[0].mxu0 %v1216
      %v2778 = vpop.f32.mrb[0].mxu0
      %v2779 = vadd.f32 0.0, %v2778
      %v2780 = vpop.f32.mrb[0].mxu0
      %v2781 = vpop.f32.mrb[0].mxu0
      %v2782 = vadd.f32 0.0, %v2781
      %v2783 = vpop.f32.mrb[0].mxu0
      %2784 = vmatprep.mubr.bf16.mxu0 0
      %2785 = vmatmul.mubr.bf16.gmra.mrb[0].mxu0 %v1219
      %v2786 = vpop.f32.mrb[0].mxu0
      %v2787 = vadd.f32 0.0, %v2786
      %v2788 = vpop.f32.mrb[0].mxu0
      %v2789 = vpop.f32.mrb[0].mxu0
      %v2790 = vadd.f32 0.0, %v2789
      %v2791 = vpop.f32.mrb[0].mxu0
      %2792 = vmatprep.mubr.bf16.mxu0 0
      %2793 = vmatmul.mubr.bf16.gmra.mrb[0].mxu0 %v1222
      %v2794 = vpop.f32.mrb[0].mxu0
      %v2795 = vadd.f32 0.0, %v2794
      %v2796 = vpop.f32.mrb[0].mxu0
      %v2797 = vpop.f32.mrb[0].mxu0
      %v2798 = vadd.f32 0.0, %v2797
      %v2799 = vpop.f32.mrb[0].mxu0
      %2800 = vmatprep.mubr.bf16.mxu0 0
      %2801 = vmatmul.mubr.bf16.gmra.mrb[0].mxu0 %v1225
      %v2802 = vpop.f32.mrb[0].mxu0
      %v2803 = vadd.f32 0.0, %v2802
      %v2804 = vpop.f32.mrb[0].mxu0
      %v2805 = vpop.f32.mrb[0].mxu0
      %v2806 = vadd.f32 0.0, %v2805
      %v2807 = vpop.f32.mrb[0].mxu0
      %2808 = vmatprep.mubr.bf16.mxu0 0
      %2809 = vmatmul.mubr.bf16.gmra.mrb[0].mxu0 %v1228
      %v2810 = vpop.f32.mrb[0].mxu0
      %v2811 = vadd.f32 0.0, %v2810
      %v2812 = vpop.f32.mrb[0].mxu0
      %v2813 = vpop.f32.mrb[0].mxu0
      %v2814 = vadd.f32 0.0, %v2813
      %v2815 = vpop.f32.mrb[0].mxu0
      %2816 = vmatprep.mubr.bf16.mxu0 0
      %2817 = vmatmul.mubr.bf16.gmra.mrb[0].mxu0 %v1231
      %v2818 = vpop.f32.mrb[0].mxu0
      %v2819 = vadd.f32 0.0, %v2818
      %v2820 = vpop.f32.mrb[0].mxu0
      %v2821 = vpop.f32.mrb[0].mxu0
      %v2822 = vadd.f32 0.0, %v2821
      %v2823 = vpop.f32.mrb[0].mxu0
      %2824 = vmatprep.mubr.bf16.mxu0 0
      %2825 = vmatmul.mubr.bf16.gmra.mrb[0].mxu0 %v1234
      %v2826 = vpop.f32.mrb[0].mxu0
      %v2827 = vadd.f32 0.0, %v2826
      %v2828 = vpop.f32.mrb[0].mxu0
      %v2829 = vpop.f32.mrb[0].mxu0
      %v2830 = vadd.f32 0.0, %v2829
      %v2831 = vpop.f32.mrb[0].mxu0
      %2832 = vmatprep.mubr.bf16.mxu0 0
      %2833 = vmatmul.mubr.bf16.gmra.mrb[0].mxu0 %v1237
      %v2834 = vpop.f32.mrb[0].mxu0
      %v2835 = vadd.f32 0.0, %v2834
      %v2836 = vpop.f32.mrb[0].mxu0
      %v2837 = vpop.f32.mrb[0].mxu0
      %v2838 = vadd.f32 0.0, %v2837
      %v2839 = vpop.f32.mrb[0].mxu0
      %2840 = vmatprep.mubr.bf16.mxu0 0
      %2841 = vmatmul.mubr.bf16.gmra.mrb[0].mxu0 %v1240
      %v2842 = vpop.f32.mrb[0].mxu0
      %v2843 = vadd.f32 0.0, %v2842
      %v2844 = vpop.f32.mrb[0].mxu0
      %v2845 = vpop.f32.mrb[0].mxu0
      %v2846 = vadd.f32 0.0, %v2845
      %v2847 = vpop.f32.mrb[0].mxu0
      %2848 = vmatprep.mubr.bf16.mxu0 0
      %2849 = vmatmul.mubr.bf16.gmra.mrb[0].mxu0 %v1243
      %v2850 = vpop.f32.mrb[0].mxu0
      %v2851 = vadd.f32 0.0, %v2850
      %v2852 = vpop.f32.mrb[0].mxu0
      %v2853 = vpop.f32.mrb[0].mxu0
      %v2854 = vadd.f32 0.0, %v2853
      %v2855 = vpop.f32.mrb[0].mxu0
      %2856 = vmatprep.mubr.bf16.mxu0 0
      %2857 = vmatmul.mubr.bf16.gmra.mrb[0].mxu0 %v1246
      %v2858 = vpop.f32.mrb[0].mxu0
      %v2859 = vadd.f32 0.0, %v2858
      %v2860 = vpop.f32.mrb[0].mxu0
      %v2861 = vpop.f32.mrb[0].mxu0
      %v2862 = vadd.f32 0.0, %v2861
      %v2863 = vpop.f32.mrb[0].mxu0
      %2864 = vmatprep.mubr.bf16.mxu0 0
      %2865 = vmatmul.mubr.bf16.gmra.mrb[0].mxu0 %v2696
      %v2866 = vpop.f32.mrb[0].mxu0
      %v2867 = vadd.f32 0.0, %v2866
      %v2868 = vpop.f32.mrb[0].mxu0
      %v2869 = vpop.f32.mrb[0].mxu0
      %v2870 = vadd.f32 0.0, %v2869
      %v2871 = vpop.f32.mrb[0].mxu0
      %2872 = vmatprep.mubr.bf16.mxu0 0
      %2873 = vmatmul.mubr.bf16.gmra.mrb[0].mxu0 %v2699
      %v2874 = vpop.f32.mrb[0].mxu0
      %v2875 = vadd.f32 0.0, %v2874
      %v2876 = vpop.f32.mrb[0].mxu0
      %v2877 = vpop.f32.mrb[0].mxu0
      %v2878 = vadd.f32 0.0, %v2877
      %v2879 = vpop.f32.mrb[0].mxu0
      %2880 = vmatprep.mubr.bf16.mxu0 0
      %2881 = vmatmul.mubr.bf16.gmra.mrb[0].mxu0 %v2702
      %v2882 = vpop.f32.mrb[0].mxu0
      %v2883 = vadd.f32 0.0, %v2882
      %v2884 = vpop.f32.mrb[0].mxu0
      %v2885 = vpop.f32.mrb[0].mxu0
      %v2886 = vpop.f32.mrb[0].mxu0
      %2887 = vdwg.mxu0
      %v2888 = vadd.f32 %v2625, %v2739
      %v2889 = vadd.f32 %v2626, %v2742
      %v2890 = vadd.f32 %v2627, %v2747
      %v2891 = vadd.f32 %v2628, %v2750
      %v2892 = vadd.f32 %v2629, %v2755
      %v2893 = vadd.f32 %v2630, %v2758
      %v2894 = vadd.f32 %v2631, %v2763
      %v2895 = vadd.f32 %v2632, %v2766
      %v2896 = vadd.f32 %v2633, %v2771
      %v2897 = vadd.f32 %v2634, %v2774
      %v2898 = vadd.f32 %v2635, %v2779
      %v2899 = vadd.f32 %v2636, %v2782
      %v2900 = vadd.f32 %v2637, %v2787
      %v2901 = vadd.f32 %v2638, %v2790
      %v2902 = vadd.f32 %v2639, %v2795
      %v2903 = vadd.f32 %v2640, %v2798
      %v2904 = vadd.f32 %v2641, %v2803
      %v2905 = vadd.f32 %v2642, %v2806
      %v2906 = vadd.f32 %v2643, %v2811
      %v2907 = vadd.f32 %v2644, %v2814
      %v2908 = vadd.f32 %v2645, %v2819
      %v2909 = vadd.f32 %v2646, %v2822
      %v2910 = vadd.f32 %v2647, %v2827
      %v2911 = vadd.f32 %v2648, %v2830
      %v2912 = vadd.f32 %v2649, %v2835
      %v2913 = vadd.f32 %v2650, %v2838
      %v2914 = vadd.f32 %v2651, %v2843
      %v2915 = vadd.f32 %v2652, %v2846
      %v2916 = vadd.f32 %v2653, %v2851
      %v2917 = vadd.f32 %v2654, %v2854
      %v2918 = vadd.f32 %v2655, %v2859
      %v2919 = vadd.f32 %v2656, %v2862
      %v2920 = vadd.f32 %v2657, %v2867
      %v2921 = vadd.f32 %v2658, %v2870
      %v2922 = vadd.f32 %v2659, %v2875
      %v2923 = vadd.f32 %v2660, %v2878
      %v2924 = vadd.f32 %v2661, %v2883
      %v2927 = vunpack.c.l.b16 %v248
      %v2928 = vunpack.c.l.b16 %v249
      %v2929 = vpack.c.b16 %v2927, %v433
      %v2930 = vpack.c.b16 %v2928, %v2928
      %v2931 = vshrl.u32 %v435, 16
      %v2933 = vshll.u32 %v435, 16
      %v2935 = vrot.slane %v2933, 1
      %v2936 = vor.u32 %v2931, %v2935
      %v2937 = vshll.u32 %v436, 16
      %v2939 = vrot.slane %v2937, 1
      %v2940 = vsel %vm1053, %v2936, %v2939
      %v2941 = vshrl.u32 %v436, 16
      %v2943 = vor.u32 %v2941, %v2939
      %v2944 = vshll.u32 %v437, 16
      %v2946 = vrot.slane %v2944, 1
      %v2947 = vsel %vm1053, %v2943, %v2946
      %v2948 = vshrl.u32 %v437, 16
      %v2950 = vor.u32 %v2948, %v2946
      %v2951 = vshll.u32 %v438, 16
      %v2953 = vrot.slane %v2951, 1
      %v2954 = vsel %vm1053, %v2950, %v2953
      %v2955 = vshrl.u32 %v438, 16
      %v2957 = vor.u32 %v2955, %v2953
      %v2958 = vshll.u32 %v439, 16
      %v2960 = vrot.slane %v2958, 1
      %v2961 = vsel %vm1053, %v2957, %v2960
      %v2962 = vshrl.u32 %v439, 16
      %v2964 = vor.u32 %v2962, %v2960
      %v2965 = vshll.u32 %v440, 16
      %v2967 = vrot.slane %v2965, 1
      %v2968 = vsel %vm1053, %v2964, %v2967
      %v2969 = vshrl.u32 %v440, 16
      %v2971 = vor.u32 %v2969, %v2967
      %v2972 = vshll.u32 %v441, 16
      %v2974 = vrot.slane %v2972, 1
      %v2975 = vsel %vm1053, %v2971, %v2974
      %v2976 = vshrl.u32 %v441, 16
      %v2978 = vor.u32 %v2976, %v2974
      %v2979 = vshll.u32 %v442, 16
      %v2981 = vrot.slane %v2979, 1
      %v2982 = vsel %vm1053, %v2978, %v2981
      %v2983 = vshrl.u32 %v442, 16
      %v2985 = vor.u32 %v2983, %v2981
      %v2986 = vshll.u32 %v443, 16
      %v2988 = vrot.slane %v2986, 1
      %v2989 = vsel %vm1053, %v2985, %v2988
      %v2990 = vshrl.u32 %v443, 16
      %v2992 = vor.u32 %v2990, %v2988
      %v2993 = vshll.u32 %v444, 16
      %v2995 = vrot.slane %v2993, 1
      %v2996 = vsel %vm1053, %v2992, %v2995
      %v2997 = vshrl.u32 %v444, 16
      %v2999 = vor.u32 %v2997, %v2995
      %v3000 = vshll.u32 %v445, 16
      %v3002 = vrot.slane %v3000, 1
      %v3003 = vsel %vm1053, %v2999, %v3002
      %v3004 = vshrl.u32 %v445, 16
      %v3006 = vor.u32 %v3004, %v3002
      %v3007 = vshll.u32 %v446, 16
      %v3009 = vrot.slane %v3007, 1
      %v3010 = vsel %vm1053, %v3006, %v3009
      %v3011 = vshrl.u32 %v446, 16
      %v3013 = vor.u32 %v3011, %v3009
      %v3014 = vshll.u32 %v447, 16
      %v3016 = vrot.slane %v3014, 1
      %v3017 = vsel %vm1053, %v3013, %v3016
      %v3018 = vshrl.u32 %v447, 16
      %v3020 = vor.u32 %v3018, %v3016
      %v3021 = vshll.u32 %v448, 16
      %v3023 = vrot.slane %v3021, 1
      %v3024 = vsel %vm1053, %v3020, %v3023
      %v3025 = vshrl.u32 %v448, 16
      %v3027 = vor.u32 %v3025, %v3023
      %v3028 = vshll.u32 %v449, 16
      %v3030 = vrot.slane %v3028, 1
      %v3031 = vsel %vm1053, %v3027, %v3030
      %v3032 = vshrl.u32 %v449, 16
      %v3034 = vor.u32 %v3032, %v3030
      %v3035 = vshll.u32 %v450, 16
      %v3037 = vrot.slane %v3035, 1
      %v3038 = vsel %vm1053, %v3034, %v3037
      %v3039 = vshrl.u32 %v450, 16
      %v3041 = vor.u32 %v3039, %v3037
      %v3042 = vshll.u32 %v451, 16
      %v3044 = vrot.slane %v3042, 1
      %v3045 = vsel %vm1053, %v3041, %v3044
      %v3046 = vshrl.u32 %v451, 16
      %v3048 = vor.u32 %v3046, %v3044
      %v3050 = vshll.u32 %v2929, 16
      %v3052 = vrot.slane %v3050, 1
      %v3053 = vsel %vm1053, %v3048, %v3052
      %v3054 = vshrl.u32 %v2929, 16
      %v3056 = vor.u32 %v3054, %v3052
      %v3058 = vshll.u32 %v2930, 16
      %v3060 = vrot.slane %v3058, 1
      %v3061 = vsel %vm1053, %v3056, %v3060
      %v3062 = vshrl.u32 %v2930, 16
      %v3068 = vunpack.c.l.b16 %v352
      %v3069 = vunpack.c.l.b16 %v353
      %v3070 = vunpack.c.l.b16 %v354
      %v3071 = vunpack.c.l.b16 %v355
      %v3072 = vpack.c.b16 %v3069, %v3068
      %v3073 = vpack.c.b16 %v3071, %v3070
      %v3077 = vsel %vm465, %v2940, 0
      %v3080 = vsel %vm465, %v2947, 0
      %v3083 = vsel %vm465, %v2954, 0
      %v3086 = vsel %vm465, %v2961, 0
      %v3089 = vsel %vm465, %v2968, 0
      %v3092 = vsel %vm465, %v2975, 0
      %v3095 = vsel %vm465, %v2982, 0
      %v3098 = vsel %vm465, %v2989, 0
      %v3101 = vsel %vm465, %v2996, 0
      %v3104 = vsel %vm465, %v3003, 0
      %v3107 = vsel %vm465, %v3010, 0
      %v3110 = vsel %vm465, %v3017, 0
      %v3113 = vsel %vm465, %v3024, 0
      %v3116 = vsel %vm465, %v3031, 0
      %v3119 = vsel %vm465, %v3038, 0
      %v3122 = vsel %vm465, %v3045, 0
      %v3125 = vsel %vm465, %v3053, 0
      %v3128 = vsel %vm465, %v3061, 0
      %v3131 = vsel %vm465, %v3062, 0
      %3133 = vmatprep.subr.bf16.mxu0 0
      %3134 = vmatpush1.bf16.msra.mxu0 %v3072
      %3135 = vmatprep.subr.bf16.mxu0 0
      %3136 = vmatpush1.bf16.msra.mxu0 %v3073
      %3137 = vmatprep.subr.bf16.mxu0 0
      %3138 = vmatpush1.bf16.msra.mxu0 0
      %3139 = vmatprep.subr.bf16.mxu0 0
      %3140 = vmatpush1.bf16.msra.mxu0 0
      %3141 = vmatprep.subr.bf16.mxu0 0
      %3142 = vmatpush1.bf16.msra.mxu0 0
      %3143 = vmatprep.subr.bf16.mxu0 0
      %3144 = vmatpush1.bf16.msra.mxu0 0
      %3145 = vmatprep.subr.bf16.mxu0 0
      %3146 = vmatpush1.bf16.msra.mxu0 0
      %3147 = vmatprep.subr.bf16.mxu0 0
      %3148 = vmatpush1.bf16.msra.mxu0 0
      %3149 = vmatprep.subr.bf16.mxu0 0
      %3150 = vmatpush1.bf16.msra.mxu0 0
      %3151 = vmatprep.subr.bf16.mxu0 0
      %3152 = vmatpush1.bf16.msra.mxu0 0
      %3153 = vmatprep.subr.bf16.mxu0 0
      %3154 = vmatpush1.bf16.msra.mxu0 0
      %3155 = vmatprep.subr.bf16.mxu0 0
      %3156 = vmatpush1.bf16.msra.mxu0 0
      %3157 = vmatprep.subr.bf16.mxu0 0
      %3158 = vmatpush1.bf16.msra.mxu0 0
      %3159 = vmatprep.subr.bf16.mxu0 0
      %3160 = vmatpush1.bf16.msra.mxu0 0
      %3161 = vmatprep.subr.bf16.mxu0 0
      %3162 = vmatpush1.bf16.msra.mxu0 0
      %3163 = vmatprep.subr.bf16.mxu0 0
      %3164 = vmatpush1.bf16.msra.mxu0 0
      %3165 = vmatprep.mubr.bf16.mxu0 0
      %3166 = vmatmul.mubr.bf16.gmra.mrb[0].mxu0 %v3077
      %v3167 = vpop.f32.mrb[0].mxu0
      %v3168 = vadd.f32 0.0, %v3167
      %v3169 = vpop.f32.mrb[0].mxu0
      %v3170 = vpop.f32.mrb[0].mxu0
      %v3171 = vadd.f32 0.0, %v3170
      %v3172 = vpop.f32.mrb[0].mxu0
      %3173 = vmatprep.mubr.bf16.mxu0 0
      %3174 = vmatmul.mubr.bf16.gmra.mrb[0].mxu0 %v3080
      %v3175 = vpop.f32.mrb[0].mxu0
      %v3176 = vadd.f32 0.0, %v3175
      %v3177 = vpop.f32.mrb[0].mxu0
      %v3178 = vpop.f32.mrb[0].mxu0
      %v3179 = vadd.f32 0.0, %v3178
      %v3180 = vpop.f32.mrb[0].mxu0
      %3181 = vmatprep.mubr.bf16.mxu0 0
      %3182 = vmatmul.mubr.bf16.gmra.mrb[0].mxu0 %v3083
      %v3183 = vpop.f32.mrb[0].mxu0
      %v3184 = vadd.f32 0.0, %v3183
      %v3185 = vpop.f32.mrb[0].mxu0
      %v3186 = vpop.f32.mrb[0].mxu0
      %v3187 = vadd.f32 0.0, %v3186
      %v3188 = vpop.f32.mrb[0].mxu0
      %3189 = vmatprep.mubr.bf16.mxu0 0
      %3190 = vmatmul.mubr.bf16.gmra.mrb[0].mxu0 %v3086
      %v3191 = vpop.f32.mrb[0].mxu0
      %v3192 = vadd.f32 0.0, %v3191
      %v3193 = vpop.f32.mrb[0].mxu0
      %v3194 = vpop.f32.mrb[0].mxu0
      %v3195 = vadd.f32 0.0, %v3194
      %v3196 = vpop.f32.mrb[0].mxu0
      %3197 = vmatprep.mubr.bf16.mxu0 0
      %3198 = vmatmul.mubr.bf16.gmra.mrb[0].mxu0 %v3089
      %v3199 = vpop.f32.mrb[0].mxu0
      %v3200 = vadd.f32 0.0, %v3199
      %v3201 = vpop.f32.mrb[0].mxu0
      %v3202 = vpop.f32.mrb[0].mxu0
      %v3203 = vadd.f32 0.0, %v3202
      %v3204 = vpop.f32.mrb[0].mxu0
      %3205 = vmatprep.mubr.bf16.mxu0 0
      %3206 = vmatmul.mubr.bf16.gmra.mrb[0].mxu0 %v3092
      %v3207 = vpop.f32.mrb[0].mxu0
      %v3208 = vadd.f32 0.0, %v3207
      %v3209 = vpop.f32.mrb[0].mxu0
      %v3210 = vpop.f32.mrb[0].mxu0
      %v3211 = vadd.f32 0.0, %v3210
      %v3212 = vpop.f32.mrb[0].mxu0
      %3213 = vmatprep.mubr.bf16.mxu0 0
      %3214 = vmatmul.mubr.bf16.gmra.mrb[0].mxu0 %v3095
      %v3215 = vpop.f32.mrb[0].mxu0
      %v3216 = vadd.f32 0.0, %v3215
      %v3217 = vpop.f32.mrb[0].mxu0
      %v3218 = vpop.f32.mrb[0].mxu0
      %v3219 = vadd.f32 0.0, %v3218
      %v3220 = vpop.f32.mrb[0].mxu0
      %3221 = vmatprep.mubr.bf16.mxu0 0
      %3222 = vmatmul.mubr.bf16.gmra.mrb[0].mxu0 %v3098
      %v3223 = vpop.f32.mrb[0].mxu0
      %v3224 = vadd.f32 0.0, %v3223
      %v3225 = vpop.f32.mrb[0].mxu0
      %v3226 = vpop.f32.mrb[0].mxu0
      %v3227 = vadd.f32 0.0, %v3226
      %v3228 = vpop.f32.mrb[0].mxu0
      %3229 = vmatprep.mubr.bf16.mxu0 0
      %3230 = vmatmul.mubr.bf16.gmra.mrb[0].mxu0 %v3101
      %v3231 = vpop.f32.mrb[0].mxu0
      %v3232 = vadd.f32 0.0, %v3231
      %v3233 = vpop.f32.mrb[0].mxu0
      %v3234 = vpop.f32.mrb[0].mxu0
      %v3235 = vadd.f32 0.0, %v3234
      %v3236 = vpop.f32.mrb[0].mxu0
      %3237 = vmatprep.mubr.bf16.mxu0 0
      %3238 = vmatmul.mubr.bf16.gmra.mrb[0].mxu0 %v3104
      %v3239 = vpop.f32.mrb[0].mxu0
      %v3240 = vadd.f32 0.0, %v3239
      %v3241 = vpop.f32.mrb[0].mxu0
      %v3242 = vpop.f32.mrb[0].mxu0
      %v3243 = vadd.f32 0.0, %v3242
      %v3244 = vpop.f32.mrb[0].mxu0
      %3245 = vmatprep.mubr.bf16.mxu0 0
      %3246 = vmatmul.mubr.bf16.gmra.mrb[0].mxu0 %v3107
      %v3247 = vpop.f32.mrb[0].mxu0
      %v3248 = vadd.f32 0.0, %v3247
      %v3249 = vpop.f32.mrb[0].mxu0
      %v3250 = vpop.f32.mrb[0].mxu0
      %v3251 = vadd.f32 0.0, %v3250
      %v3252 = vpop.f32.mrb[0].mxu0
      %3253 = vmatprep.mubr.bf16.mxu0 0
      %3254 = vmatmul.mubr.bf16.gmra.mrb[0].mxu0 %v3110
      %v3255 = vpop.f32.mrb[0].mxu0
      %v3256 = vadd.f32 0.0, %v3255
      %v3257 = vpop.f32.mrb[0].mxu0
      %v3258 = vpop.f32.mrb[0].mxu0
      %v3259 = vadd.f32 0.0, %v3258
      %v3260 = vpop.f32.mrb[0].mxu0
      %3261 = vmatprep.mubr.bf16.mxu0 0
      %3262 = vmatmul.mubr.bf16.gmra.mrb[0].mxu0 %v3113
      %v3263 = vpop.f32.mrb[0].mxu0
      %v3264 = vadd.f32 0.0, %v3263
      %v3265 = vpop.f32.mrb[0].mxu0
      %v3266 = vpop.f32.mrb[0].mxu0
      %v3267 = vadd.f32 0.0, %v3266
      %v3268 = vpop.f32.mrb[0].mxu0
      %3269 = vmatprep.mubr.bf16.mxu0 0
      %3270 = vmatmul.mubr.bf16.gmra.mrb[0].mxu0 %v3116
      %v3271 = vpop.f32.mrb[0].mxu0
      %v3272 = vadd.f32 0.0, %v3271
      %v3273 = vpop.f32.mrb[0].mxu0
      %v3274 = vpop.f32.mrb[0].mxu0
      %v3275 = vadd.f32 0.0, %v3274
      %v3276 = vpop.f32.mrb[0].mxu0
      %3277 = vmatprep.mubr.bf16.mxu0 0
      %3278 = vmatmul.mubr.bf16.gmra.mrb[0].mxu0 %v3119
      %v3279 = vpop.f32.mrb[0].mxu0
      %v3280 = vadd.f32 0.0, %v3279
      %v3281 = vpop.f32.mrb[0].mxu0
      %v3282 = vpop.f32.mrb[0].mxu0
      %v3283 = vadd.f32 0.0, %v3282
      %v3284 = vpop.f32.mrb[0].mxu0
      %3285 = vmatprep.mubr.bf16.mxu0 0
      %3286 = vmatmul.mubr.bf16.gmra.mrb[0].mxu0 %v3122
      %v3287 = vpop.f32.mrb[0].mxu0
      %v3288 = vadd.f32 0.0, %v3287
      %v3289 = vpop.f32.mrb[0].mxu0
      %v3290 = vpop.f32.mrb[0].mxu0
      %v3291 = vadd.f32 0.0, %v3290
      %v3292 = vpop.f32.mrb[0].mxu0
      %3293 = vmatprep.mubr.bf16.mxu0 0
      %3294 = vmatmul.mubr.bf16.gmra.mrb[0].mxu0 %v3125
      %v3295 = vpop.f32.mrb[0].mxu0
      %v3296 = vadd.f32 0.0, %v3295
      %v3297 = vpop.f32.mrb[0].mxu0
      %v3298 = vpop.f32.mrb[0].mxu0
      %v3299 = vadd.f32 0.0, %v3298
      %v3300 = vpop.f32.mrb[0].mxu0
      %3301 = vmatprep.mubr.bf16.mxu0 0
      %3302 = vmatmul.mubr.bf16.gmra.mrb[0].mxu0 %v3128
      %v3303 = vpop.f32.mrb[0].mxu0
      %v3304 = vadd.f32 0.0, %v3303
      %v3305 = vpop.f32.mrb[0].mxu0
      %v3306 = vpop.f32.mrb[0].mxu0
      %v3307 = vadd.f32 0.0, %v3306
      %v3308 = vpop.f32.mrb[0].mxu0
      %3309 = vmatprep.mubr.bf16.mxu0 0
      %3310 = vmatmul.mubr.bf16.gmra.mrb[0].mxu0 %v3131
      %v3311 = vpop.f32.mrb[0].mxu0
      %v3312 = vadd.f32 0.0, %v3311
      %v3313 = vpop.f32.mrb[0].mxu0
      %v3314 = vpop.f32.mrb[0].mxu0
      %v3315 = vpop.f32.mrb[0].mxu0
      %3316 = vdwg.mxu0
      %v3317 = vadd.f32 %v2888, %v3168
      %v3318 = vadd.f32 %v2889, %v3171
      %v3319 = vadd.f32 %v2890, %v3176
      %v3320 = vadd.f32 %v2891, %v3179
      %v3321 = vadd.f32 %v2892, %v3184
      %v3322 = vadd.f32 %v2893, %v3187
      %v3323 = vadd.f32 %v2894, %v3192
      %v3324 = vadd.f32 %v2895, %v3195
      %v3325 = vadd.f32 %v2896, %v3200
      %v3326 = vadd.f32 %v2897, %v3203
      %v3327 = vadd.f32 %v2898, %v3208
      %v3328 = vadd.f32 %v2899, %v3211
      %v3329 = vadd.f32 %v2900, %v3216
      %v3330 = vadd.f32 %v2901, %v3219
      %v3331 = vadd.f32 %v2902, %v3224
      %v3332 = vadd.f32 %v2903, %v3227
      %v3333 = vadd.f32 %v2904, %v3232
      %v3334 = vadd.f32 %v2905, %v3235
      %v3335 = vadd.f32 %v2906, %v3240
      %v3336 = vadd.f32 %v2907, %v3243
      %v3337 = vadd.f32 %v2908, %v3248
      %v3338 = vadd.f32 %v2909, %v3251
      %v3339 = vadd.f32 %v2910, %v3256
      %v3340 = vadd.f32 %v2911, %v3259
      %v3341 = vadd.f32 %v2912, %v3264
      %v3342 = vadd.f32 %v2913, %v3267
      %v3343 = vadd.f32 %v2914, %v3272
      %v3344 = vadd.f32 %v2915, %v3275
      %v3345 = vadd.f32 %v2916, %v3280
      %v3346 = vadd.f32 %v2917, %v3283
      %v3347 = vadd.f32 %v2918, %v3288
      %v3348 = vadd.f32 %v2919, %v3291
      %v3349 = vadd.f32 %v2920, %v3296
      %v3350 = vadd.f32 %v2921, %v3299
      %v3351 = vadd.f32 %v2922, %v3304
      %v3352 = vadd.f32 %v2923, %v3307
      %v3353 = vadd.f32 %v2924, %v3312
      %vm3354 = vcmask 1046528
      %v3355 = vrot.slane %v782, 1
      %v3356 = vrot.slane %v783, 1
      %v3357 = vsel %vm3354, %v3355, %v3356
      %v3358 = vrot.slane %v784, 1
      %v3359 = vsel %vm3354, %v3356, %v3358
      %v3360 = vrot.slane %v785, 1
      %v3361 = vsel %vm3354, %v3358, %v3360
      %v3362 = vrot.slane %v786, 1
      %v3363 = vsel %vm3354, %v3360, %v3362
      %v3364 = vrot.slane %v787, 1
      %v3365 = vsel %vm3354, %v3362, %v3364
      %v3366 = vrot.slane %v788, 1
      %v3367 = vsel %vm3354, %v3364, %v3366
      %v3368 = vrot.slane %v789, 1
      %v3369 = vsel %vm3354, %v3366, %v3368
      %v3370 = vrot.slane %v790, 1
      %v3371 = vsel %vm3354, %v3368, %v3370
      %v3372 = vrot.slane %v791, 1
      %v3373 = vsel %vm3354, %v3370, %v3372
      %v3374 = vrot.slane %v792, 1
      %v3375 = vsel %vm3354, %v3372, %v3374
      %v3376 = vrot.slane %v793, 1
      %v3377 = vsel %vm3354, %v3374, %v3376
      %v3378 = vrot.slane %v794, 1
      %v3379 = vsel %vm3354, %v3376, %v3378
      %v3380 = vrot.slane %v795, 1
      %v3381 = vsel %vm3354, %v3378, %v3380
      %v3382 = vrot.slane %v796, 1
      %v3383 = vsel %vm3354, %v3380, %v3382
      %v3384 = vrot.slane %v797, 1
      %v3385 = vsel %vm3354, %v3382, %v3384
      %v3386 = vrot.slane %v798, 1
      %v3387 = vsel %vm3354, %v3384, %v3386
      %v3388 = vrot.slane %v2666, 1
      %v3389 = vsel %vm3354, %v3386, %v3388
      %v3390 = vrot.slane %v2667, 1
      %v3391 = vsel %vm3354, %v3388, %v3390
      %v3396 = vunpack.c.l.b16 %v356
      %v3397 = vunpack.c.l.b16 %v357
      %v3398 = vunpack.c.l.b16 %v358
      %v3399 = vunpack.c.l.b16 %v359
      %v3400 = vpack.c.b16 %v3397, %v3396
      %v3401 = vpack.c.b16 %v3399, %v3398
      %v3405 = vsel %vm465, %v3357, 0
      %v3408 = vsel %vm465, %v3359, 0
      %v3411 = vsel %vm465, %v3361, 0
      %v3414 = vsel %vm465, %v3363, 0
      %v3417 = vsel %vm465, %v3365, 0
      %v3420 = vsel %vm465, %v3367, 0
      %v3423 = vsel %vm465, %v3369, 0
      %v3426 = vsel %vm465, %v3371, 0
      %v3429 = vsel %vm465, %v3373, 0
      %v3432 = vsel %vm465, %v3375, 0
      %v3435 = vsel %vm465, %v3377, 0
      %v3438 = vsel %vm465, %v3379, 0
      %v3441 = vsel %vm465, %v3381, 0
      %v3444 = vsel %vm465, %v3383, 0
      %v3447 = vsel %vm465, %v3385, 0
      %v3450 = vsel %vm465, %v3387, 0
      %v3453 = vsel %vm465, %v3389, 0
      %v3456 = vsel %vm465, %v3391, 0
      %v3459 = vsel %vm465, %v3390, 0
      %3461 = vmatprep.subr.bf16.mxu0 0
      %3462 = vmatpush1.bf16.msra.mxu0 %v3400
      %3463 = vmatprep.subr.bf16.mxu0 0
      %3464 = vmatpush1.bf16.msra.mxu0 %v3401
      %3465 = vmatprep.subr.bf16.mxu0 0
      %3466 = vmatpush1.bf16.msra.mxu0 0
      %3467 = vmatprep.subr.bf16.mxu0 0
      %3468 = vmatpush1.bf16.msra.mxu0 0
      %3469 = vmatprep.subr.bf16.mxu0 0
      %3470 = vmatpush1.bf16.msra.mxu0 0
      %3471 = vmatprep.subr.bf16.mxu0 0
      %3472 = vmatpush1.bf16.msra.mxu0 0
      %3473 = vmatprep.subr.bf16.mxu0 0
      %3474 = vmatpush1.bf16.msra.mxu0 0
      %3475 = vmatprep.subr.bf16.mxu0 0
      %3476 = vmatpush1.bf16.msra.mxu0 0
      %3477 = vmatprep.subr.bf16.mxu0 0
      %3478 = vmatpush1.bf16.msra.mxu0 0
      %3479 = vmatprep.subr.bf16.mxu0 0
      %3480 = vmatpush1.bf16.msra.mxu0 0
      %3481 = vmatprep.subr.bf16.mxu0 0
      %3482 = vmatpush1.bf16.msra.mxu0 0
      %3483 = vmatprep.subr.bf16.mxu0 0
      %3484 = vmatpush1.bf16.msra.mxu0 0
      %3485 = vmatprep.subr.bf16.mxu0 0
      %3486 = vmatpush1.bf16.msra.mxu0 0
      %3487 = vmatprep.subr.bf16.mxu0 0
      %3488 = vmatpush1.bf16.msra.mxu0 0
      %3489 = vmatprep.subr.bf16.mxu0 0
      %3490 = vmatpush1.bf16.msra.mxu0 0
      %3491 = vmatprep.subr.bf16.mxu0 0
      %3492 = vmatpush1.bf16.msra.mxu0 0
      %3493 = vmatprep.mubr.bf16.mxu0 0
      %3494 = vmatmul.mubr.bf16.gmra.mrb[0].mxu0 %v3405
      %v3495 = vpop.f32.mrb[0].mxu0
      %v3496 = vadd.f32 0.0, %v3495
      %v3497 = vpop.f32.mrb[0].mxu0
      %v3498 = vpop.f32.mrb[0].mxu0
      %v3499 = vadd.f32 0.0, %v3498
      %v3500 = vpop.f32.mrb[0].mxu0
      %3501 = vmatprep.mubr.bf16.mxu0 0
      %3502 = vmatmul.mubr.bf16.gmra.mrb[0].mxu0 %v3408
      %v3503 = vpop.f32.mrb[0].mxu0
      %v3504 = vadd.f32 0.0, %v3503
      %v3505 = vpop.f32.mrb[0].mxu0
      %v3506 = vpop.f32.mrb[0].mxu0
      %v3507 = vadd.f32 0.0, %v3506
      %v3508 = vpop.f32.mrb[0].mxu0
      %3509 = vmatprep.mubr.bf16.mxu0 0
      %3510 = vmatmul.mubr.bf16.gmra.mrb[0].mxu0 %v3411
      %v3511 = vpop.f32.mrb[0].mxu0
      %v3512 = vadd.f32 0.0, %v3511
      %v3513 = vpop.f32.mrb[0].mxu0
      %v3514 = vpop.f32.mrb[0].mxu0
      %v3515 = vadd.f32 0.0, %v3514
      %v3516 = vpop.f32.mrb[0].mxu0
      %3517 = vmatprep.mubr.bf16.mxu0 0
      %3518 = vmatmul.mubr.bf16.gmra.mrb[0].mxu0 %v3414
      %v3519 = vpop.f32.mrb[0].mxu0
      %v3520 = vadd.f32 0.0, %v3519
      %v3521 = vpop.f32.mrb[0].mxu0
      %v3522 = vpop.f32.mrb[0].mxu0
      %v3523 = vadd.f32 0.0, %v3522
      %v3524 = vpop.f32.mrb[0].mxu0
      %3525 = vmatprep.mubr.bf16.mxu0 0
      %3526 = vmatmul.mubr.bf16.gmra.mrb[0].mxu0 %v3417
      %v3527 = vpop.f32.mrb[0].mxu0
      %v3528 = vadd.f32 0.0, %v3527
      %v3529 = vpop.f32.mrb[0].mxu0
      %v3530 = vpop.f32.mrb[0].mxu0
      %v3531 = vadd.f32 0.0, %v3530
      %v3532 = vpop.f32.mrb[0].mxu0
      %3533 = vmatprep.mubr.bf16.mxu0 0
      %3534 = vmatmul.mubr.bf16.gmra.mrb[0].mxu0 %v3420
      %v3535 = vpop.f32.mrb[0].mxu0
      %v3536 = vadd.f32 0.0, %v3535
      %v3537 = vpop.f32.mrb[0].mxu0
      %v3538 = vpop.f32.mrb[0].mxu0
      %v3539 = vadd.f32 0.0, %v3538
      %v3540 = vpop.f32.mrb[0].mxu0
      %3541 = vmatprep.mubr.bf16.mxu0 0
      %3542 = vmatmul.mubr.bf16.gmra.mrb[0].mxu0 %v3423
      %v3543 = vpop.f32.mrb[0].mxu0
      %v3544 = vadd.f32 0.0, %v3543
      %v3545 = vpop.f32.mrb[0].mxu0
      %v3546 = vpop.f32.mrb[0].mxu0
      %v3547 = vadd.f32 0.0, %v3546
      %v3548 = vpop.f32.mrb[0].mxu0
      %3549 = vmatprep.mubr.bf16.mxu0 0
      %3550 = vmatmul.mubr.bf16.gmra.mrb[0].mxu0 %v3426
      %v3551 = vpop.f32.mrb[0].mxu0
      %v3552 = vadd.f32 0.0, %v3551
      %v3553 = vpop.f32.mrb[0].mxu0
      %v3554 = vpop.f32.mrb[0].mxu0
      %v3555 = vadd.f32 0.0, %v3554
      %v3556 = vpop.f32.mrb[0].mxu0
      %3557 = vmatprep.mubr.bf16.mxu0 0
      %3558 = vmatmul.mubr.bf16.gmra.mrb[0].mxu0 %v3429
      %v3559 = vpop.f32.mrb[0].mxu0
      %v3560 = vadd.f32 0.0, %v3559
      %v3561 = vpop.f32.mrb[0].mxu0
      %v3562 = vpop.f32.mrb[0].mxu0
      %v3563 = vadd.f32 0.0, %v3562
      %v3564 = vpop.f32.mrb[0].mxu0
      %3565 = vmatprep.mubr.bf16.mxu0 0
      %3566 = vmatmul.mubr.bf16.gmra.mrb[0].mxu0 %v3432
      %v3567 = vpop.f32.mrb[0].mxu0
      %v3568 = vadd.f32 0.0, %v3567
      %v3569 = vpop.f32.mrb[0].mxu0
      %v3570 = vpop.f32.mrb[0].mxu0
      %v3571 = vadd.f32 0.0, %v3570
      %v3572 = vpop.f32.mrb[0].mxu0
      %3573 = vmatprep.mubr.bf16.mxu0 0
      %3574 = vmatmul.mubr.bf16.gmra.mrb[0].mxu0 %v3435
      %v3575 = vpop.f32.mrb[0].mxu0
      %v3576 = vadd.f32 0.0, %v3575
      %v3577 = vpop.f32.mrb[0].mxu0
      %v3578 = vpop.f32.mrb[0].mxu0
      %v3579 = vadd.f32 0.0, %v3578
      %v3580 = vpop.f32.mrb[0].mxu0
      %3581 = vmatprep.mubr.bf16.mxu0 0
      %3582 = vmatmul.mubr.bf16.gmra.mrb[0].mxu0 %v3438
      %v3583 = vpop.f32.mrb[0].mxu0
      %v3584 = vadd.f32 0.0, %v3583
      %v3585 = vpop.f32.mrb[0].mxu0
      %v3586 = vpop.f32.mrb[0].mxu0
      %v3587 = vadd.f32 0.0, %v3586
      %v3588 = vpop.f32.mrb[0].mxu0
      %3589 = vmatprep.mubr.bf16.mxu0 0
      %3590 = vmatmul.mubr.bf16.gmra.mrb[0].mxu0 %v3441
      %v3591 = vpop.f32.mrb[0].mxu0
      %v3592 = vadd.f32 0.0, %v3591
      %v3593 = vpop.f32.mrb[0].mxu0
      %v3594 = vpop.f32.mrb[0].mxu0
      %v3595 = vadd.f32 0.0, %v3594
      %v3596 = vpop.f32.mrb[0].mxu0
      %3597 = vmatprep.mubr.bf16.mxu0 0
      %3598 = vmatmul.mubr.bf16.gmra.mrb[0].mxu0 %v3444
      %v3599 = vpop.f32.mrb[0].mxu0
      %v3600 = vadd.f32 0.0, %v3599
      %v3601 = vpop.f32.mrb[0].mxu0
      %v3602 = vpop.f32.mrb[0].mxu0
      %v3603 = vadd.f32 0.0, %v3602
      %v3604 = vpop.f32.mrb[0].mxu0
      %3605 = vmatprep.mubr.bf16.mxu0 0
      %3606 = vmatmul.mubr.bf16.gmra.mrb[0].mxu0 %v3447
      %v3607 = vpop.f32.mrb[0].mxu0
      %v3608 = vadd.f32 0.0, %v3607
      %v3609 = vpop.f32.mrb[0].mxu0
      %v3610 = vpop.f32.mrb[0].mxu0
      %v3611 = vadd.f32 0.0, %v3610
      %v3612 = vpop.f32.mrb[0].mxu0
      %3613 = vmatprep.mubr.bf16.mxu0 0
      %3614 = vmatmul.mubr.bf16.gmra.mrb[0].mxu0 %v3450
      %v3615 = vpop.f32.mrb[0].mxu0
      %v3616 = vadd.f32 0.0, %v3615
      %v3617 = vpop.f32.mrb[0].mxu0
      %v3618 = vpop.f32.mrb[0].mxu0
      %v3619 = vadd.f32 0.0, %v3618
      %v3620 = vpop.f32.mrb[0].mxu0
      %3621 = vmatprep.mubr.bf16.mxu0 0
      %3622 = vmatmul.mubr.bf16.gmra.mrb[0].mxu0 %v3453
      %v3623 = vpop.f32.mrb[0].mxu0
      %v3624 = vadd.f32 0.0, %v3623
      %v3625 = vpop.f32.mrb[0].mxu0
      %v3626 = vpop.f32.mrb[0].mxu0
      %v3627 = vadd.f32 0.0, %v3626
      %v3628 = vpop.f32.mrb[0].mxu0
      %3629 = vmatprep.mubr.bf16.mxu0 0
      %3630 = vmatmul.mubr.bf16.gmra.mrb[0].mxu0 %v3456
      %v3631 = vpop.f32.mrb[0].mxu0
      %v3632 = vadd.f32 0.0, %v3631
      %v3633 = vpop.f32.mrb[0].mxu0
      %v3634 = vpop.f32.mrb[0].mxu0
      %v3635 = vadd.f32 0.0, %v3634
      %v3636 = vpop.f32.mrb[0].mxu0
      %3637 = vmatprep.mubr.bf16.mxu0 0
      %3638 = vmatmul.mubr.bf16.gmra.mrb[0].mxu0 %v3459
      %v3639 = vpop.f32.mrb[0].mxu0
      %v3640 = vadd.f32 0.0, %v3639
      %v3641 = vpop.f32.mrb[0].mxu0
      %v3642 = vpop.f32.mrb[0].mxu0
      %v3643 = vpop.f32.mrb[0].mxu0
      %3644 = vdwg.mxu0
      %v3645 = vadd.f32 %v3317, %v3496
      %v3646 = vadd.f32 %v3318, %v3499
      %v3647 = vadd.f32 %v3319, %v3504
      %v3648 = vadd.f32 %v3320, %v3507
      %v3649 = vadd.f32 %v3321, %v3512
      %v3650 = vadd.f32 %v3322, %v3515
      %v3651 = vadd.f32 %v3323, %v3520
      %v3652 = vadd.f32 %v3324, %v3523
      %v3653 = vadd.f32 %v3325, %v3528
      %v3654 = vadd.f32 %v3326, %v3531
      %v3655 = vadd.f32 %v3327, %v3536
      %v3656 = vadd.f32 %v3328, %v3539
      %v3657 = vadd.f32 %v3329, %v3544
      %v3658 = vadd.f32 %v3330, %v3547
      %v3659 = vadd.f32 %v3331, %v3552
      %v3660 = vadd.f32 %v3332, %v3555
      %v3661 = vadd.f32 %v3333, %v3560
      %v3662 = vadd.f32 %v3334, %v3563
      %v3663 = vadd.f32 %v3335, %v3568
      %v3664 = vadd.f32 %v3336, %v3571
      %v3665 = vadd.f32 %v3337, %v3576
      %v3666 = vadd.f32 %v3338, %v3579
      %v3667 = vadd.f32 %v3339, %v3584
      %v3668 = vadd.f32 %v3340, %v3587
      %v3669 = vadd.f32 %v3341, %v3592
      %v3670 = vadd.f32 %v3342, %v3595
      %v3671 = vadd.f32 %v3343, %v3600
      %v3672 = vadd.f32 %v3344, %v3603
      %v3673 = vadd.f32 %v3345, %v3608
      %v3674 = vadd.f32 %v3346, %v3611
      %v3675 = vadd.f32 %v3347, %v3616
      %v3676 = vadd.f32 %v3348, %v3619
      %v3677 = vadd.f32 %v3349, %v3624
      %v3678 = vadd.f32 %v3350, %v3627
      %v3679 = vadd.f32 %v3351, %v3632
      %v3680 = vadd.f32 %v3352, %v3635
      %v3681 = vadd.f32 %v3353, %v3640
      %v3682 = vld [vmem:[%s2] sm:$0x1]
      %v3684 = vlaneseq
      %v3685 = vshrl.u32 %v3684, 7
      %v3686 = vsub.s32 0, %v3685
      %v3687 = vrot.slane %v3682, %v3686
      %v3689 = vadd.f32 %v3645, %v3687
      %v3690 = vadd.f32 %v3646, %v3687
      %v3691 = vadd.f32 %v3647, %v3687
      %v3692 = vadd.f32 %v3648, %v3687
      %v3693 = vadd.f32 %v3649, %v3687
      %v3694 = vadd.f32 %v3650, %v3687
      %v3695 = vadd.f32 %v3651, %v3687
      %v3696 = vadd.f32 %v3652, %v3687
      %v3697 = vadd.f32 %v3653, %v3687
      %v3698 = vadd.f32 %v3654, %v3687
      %v3699 = vadd.f32 %v3655, %v3687
      %v3700 = vadd.f32 %v3656, %v3687
      %v3701 = vadd.f32 %v3657, %v3687
      %v3702 = vadd.f32 %v3658, %v3687
      %v3703 = vadd.f32 %v3659, %v3687
      %v3704 = vadd.f32 %v3660, %v3687
      %v3705 = vadd.f32 %v3661, %v3687
      %v3706 = vadd.f32 %v3662, %v3687
      %v3707 = vadd.f32 %v3663, %v3687
      %v3708 = vadd.f32 %v3664, %v3687
      %v3709 = vadd.f32 %v3665, %v3687
      %v3710 = vadd.f32 %v3666, %v3687
      %v3711 = vadd.f32 %v3667, %v3687
      %v3712 = vadd.f32 %v3668, %v3687
      %v3713 = vadd.f32 %v3669, %v3687
      %v3714 = vadd.f32 %v3670, %v3687
      %v3715 = vadd.f32 %v3671, %v3687
      %v3716 = vadd.f32 %v3672, %v3687
      %v3717 = vadd.f32 %v3673, %v3687
      %v3718 = vadd.f32 %v3674, %v3687
      %v3719 = vadd.f32 %v3675, %v3687
      %v3720 = vadd.f32 %v3676, %v3687
      %v3721 = vadd.f32 %v3677, %v3687
      %v3722 = vadd.f32 %v3678, %v3687
      %v3723 = vadd.f32 %v3679, %v3687
      %v3724 = vadd.f32 %v3680, %v3687
      %v3725 = vadd.f32 %v3681, %v3687
      %v3726 = vmax.f32 %v3689, 0.0
      %v3727 = vmax.f32 %v3690, 0.0
      %v3728 = vmax.f32 %v3691, 0.0
      %v3729 = vmax.f32 %v3692, 0.0
      %v3730 = vmax.f32 %v3693, 0.0
      %v3731 = vmax.f32 %v3694, 0.0
      %v3732 = vmax.f32 %v3695, 0.0
      %v3733 = vmax.f32 %v3696, 0.0
      %v3734 = vmax.f32 %v3697, 0.0
      %v3735 = vmax.f32 %v3698, 0.0
      %v3736 = vmax.f32 %v3699, 0.0
      %v3737 = vmax.f32 %v3700, 0.0
      %v3738 = vmax.f32 %v3701, 0.0
      %v3739 = vmax.f32 %v3702, 0.0
      %v3740 = vmax.f32 %v3703, 0.0
      %v3741 = vmax.f32 %v3704, 0.0
      %v3742 = vmax.f32 %v3705, 0.0
      %v3743 = vmax.f32 %v3706, 0.0
      %v3744 = vmax.f32 %v3707, 0.0
      %v3745 = vmax.f32 %v3708, 0.0
      %v3746 = vmax.f32 %v3709, 0.0
      %v3747 = vmax.f32 %v3710, 0.0
      %v3748 = vmax.f32 %v3711, 0.0
      %v3749 = vmax.f32 %v3712, 0.0
      %v3750 = vmax.f32 %v3713, 0.0
      %v3751 = vmax.f32 %v3714, 0.0
      %v3752 = vmax.f32 %v3715, 0.0
      %v3753 = vmax.f32 %v3716, 0.0
      %v3754 = vmax.f32 %v3717, 0.0
      %v3755 = vmax.f32 %v3718, 0.0
      %v3756 = vmax.f32 %v3719, 0.0
      %v3757 = vmax.f32 %v3720, 0.0
      %v3758 = vmax.f32 %v3721, 0.0
      %v3759 = vmax.f32 %v3722, 0.0
      %v3760 = vmax.f32 %v3723, 0.0
      %v3761 = vmax.f32 %v3724, 0.0
      %v3762 = vmax.f32 %v3725, 0.0
      %v3763 = vpack.c.bf16 %v3727, %v3726
      %v3764 = vpack.c.bf16 %v3729, %v3728
      %v3765 = vpack.c.bf16 %v3731, %v3730
      %v3766 = vpack.c.bf16 %v3733, %v3732
      %v3767 = vpack.c.bf16 %v3735, %v3734
      %v3768 = vpack.c.bf16 %v3737, %v3736
      %v3769 = vpack.c.bf16 %v3739, %v3738
      %v3770 = vpack.c.bf16 %v3741, %v3740
      %v3771 = vpack.c.bf16 %v3743, %v3742
      %v3772 = vpack.c.bf16 %v3745, %v3744
      %v3773 = vpack.c.bf16 %v3747, %v3746
      %v3774 = vpack.c.bf16 %v3749, %v3748
      %v3775 = vpack.c.bf16 %v3751, %v3750
      %v3776 = vpack.c.bf16 %v3753, %v3752
      %v3777 = vpack.c.bf16 %v3755, %v3754
      %v3778 = vpack.c.bf16 %v3757, %v3756
      %v3779 = vpack.c.bf16 %v3759, %v3758
      %v3780 = vpack.c.bf16 %v3761, %v3760
      %v3781 = vpack.c.bf16 %v3762, %v3762
      %v3801 = vunpack.c.l.b16 %v3763
      %v3802 = vunpack.c.h.b16 %v3763
      %v3803 = vunpack.c.l.b16 %v3764
      %v3804 = vunpack.c.h.b16 %v3764
      %v3805 = vunpack.c.l.b16 %v3765
      %v3806 = vunpack.c.h.b16 %v3765
      %v3807 = vunpack.c.l.b16 %v3766
      %v3808 = vunpack.c.h.b16 %v3766
      %v3809 = vunpack.c.l.b16 %v3767
      %v3810 = vunpack.c.h.b16 %v3767
      %v3811 = vunpack.c.l.b16 %v3768
      %v3812 = vunpack.c.h.b16 %v3768
      %v3813 = vunpack.c.l.b16 %v3769
      %v3814 = vunpack.c.h.b16 %v3769
      %v3815 = vunpack.c.l.b16 %v3770
      %v3816 = vunpack.c.h.b16 %v3770
      %v3817 = vunpack.c.l.b16 %v3771
      %v3818 = vunpack.c.h.b16 %v3771
      %v3819 = vunpack.c.l.b16 %v3772
      %v3820 = vunpack.c.h.b16 %v3772
      %v3821 = vunpack.c.l.b16 %v3773
      %v3822 = vunpack.c.h.b16 %v3773
      %v3823 = vunpack.c.l.b16 %v3774
      %v3824 = vunpack.c.h.b16 %v3774
      %v3825 = vunpack.c.l.b16 %v3775
      %v3826 = vunpack.c.h.b16 %v3775
      %v3827 = vunpack.c.l.b16 %v3776
      %v3828 = vunpack.c.h.b16 %v3776
      %v3829 = vunpack.c.l.b16 %v3777
      %v3830 = vunpack.c.h.b16 %v3777
      %v3831 = vunpack.c.l.b16 %v3778
      %v3832 = vunpack.c.h.b16 %v3778
      %v3833 = vunpack.c.l.b16 %v3779
      %v3834 = vunpack.c.h.b16 %v3779
      %v3835 = vunpack.c.l.b16 %v3780
      %v3836 = vunpack.c.h.b16 %v3780
      %v3837 = vunpack.c.l.b16 %v3781
      %v3838 = vpack.c.b16 %v3801, %v3801
      %v3839 = vpack.c.b16 %v3802, %v3802
      %v3840 = vpack.c.b16 %v3803, %v3803
      %v3841 = vpack.c.b16 %v3804, %v3804
      %v3842 = vpack.c.b16 %v3805, %v3805
      %v3843 = vpack.c.b16 %v3806, %v3806
      %v3844 = vpack.c.b16 %v3807, %v3807
      %v3845 = vpack.c.b16 %v3808, %v3808
      %v3846 = vpack.c.b16 %v3809, %v3809
      %v3847 = vpack.c.b16 %v3810, %v3810
      %v3848 = vpack.c.b16 %v3811, %v3811
      %v3849 = vpack.c.b16 %v3812, %v3812
      %v3850 = vpack.c.b16 %v3813, %v3813
      %v3851 = vpack.c.b16 %v3814, %v3814
      %v3852 = vpack.c.b16 %v3815, %v3815
      %v3853 = vpack.c.b16 %v3816, %v3816
      %v3854 = vpack.c.b16 %v3817, %v3817
      %v3855 = vpack.c.b16 %v3818, %v3818
      %v3856 = vpack.c.b16 %v3819, %v3819
      %v3857 = vpack.c.b16 %v3820, %v3820
      %v3858 = vpack.c.b16 %v3821, %v3821
      %v3859 = vpack.c.b16 %v3822, %v3822
      %v3860 = vpack.c.b16 %v3823, %v3823
      %v3861 = vpack.c.b16 %v3824, %v3824
      %v3862 = vpack.c.b16 %v3825, %v3825
      %v3863 = vpack.c.b16 %v3826, %v3826
      %v3864 = vpack.c.b16 %v3827, %v3827
      %v3865 = vpack.c.b16 %v3828, %v3828
      %v3866 = vpack.c.b16 %v3829, %v3829
      %v3867 = vpack.c.b16 %v3830, %v3830
      %v3868 = vpack.c.b16 %v3831, %v3831
      %v3869 = vpack.c.b16 %v3832, %v3832
      %v3870 = vpack.c.b16 %v3833, %v3833
      %v3871 = vpack.c.b16 %v3834, %v3834
      %v3872 = vpack.c.b16 %v3835, %v3835
      %v3873 = vpack.c.b16 %v3836, %v3836
      %v3874 = vpack.c.b16 %v3837, %v3837
      %vm3912 = vcmask 519168
      %3913 = vst.msk [vmem:[%s170] sm:$0xf] %vm3912, %v3838
      %3914 = vst.msk [vmem:[%s170 + $0x4] sm:$0xf] %vm3912, %v3839
      %3915 = vst.msk [vmem:[%s170 + $0x8] sm:$0xf] %vm3912, %v3840
      %3916 = vst.msk [vmem:[%s170 + $0xc] sm:$0xf] %vm3912, %v3841
      %3917 = vst.msk [vmem:[%s170 + $0x10] sm:$0xf] %vm3912, %v3842
      %3918 = vst.msk [vmem:[%s170 + $0x14] sm:$0xf] %vm3912, %v3843
      %3919 = vst.msk [vmem:[%s170 + $0x18] sm:$0xf] %vm3912, %v3844
      %3920 = vst.msk [vmem:[%s170 + $0x1c] sm:$0xf] %vm3912, %v3845
      %3921 = vst.msk [vmem:[%s170 + $0x20] sm:$0xf] %vm3912, %v3846
      %3922 = vst.msk [vmem:[%s170 + $0x24] sm:$0xf] %vm3912, %v3847
      %3923 = vst.msk [vmem:[%s170 + $0x28] sm:$0xf] %vm3912, %v3848
      %3924 = vst.msk [vmem:[%s170 + $0x2c] sm:$0xf] %vm3912, %v3849
      %3925 = vst.msk [vmem:[%s170 + $0x30] sm:$0xf] %vm3912, %v3850
      %3926 = vst.msk [vmem:[%s170 + $0x34] sm:$0xf] %vm3912, %v3851
      %3927 = vst.msk [vmem:[%s170 + $0x38] sm:$0xf] %vm3912, %v3852
      %3928 = vst.msk [vmem:[%s170 + $0x3c] sm:$0xf] %vm3912, %v3853
      %3929 = vst.msk [vmem:[%s170 + $0x40] sm:$0xf] %vm3912, %v3854
      %3930 = vst.msk [vmem:[%s170 + $0x44] sm:$0xf] %vm3912, %v3855
      %3931 = vst.msk [vmem:[%s170 + $0x48] sm:$0xf] %vm3912, %v3856
      %3932 = vst.msk [vmem:[%s170 + $0x4c] sm:$0xf] %vm3912, %v3857
      %3933 = vst.msk [vmem:[%s170 + $0x50] sm:$0xf] %vm3912, %v3858
      %3934 = vst.msk [vmem:[%s170 + $0x54] sm:$0xf] %vm3912, %v3859
      %3935 = vst.msk [vmem:[%s170 + $0x58] sm:$0xf] %vm3912, %v3860
      %3936 = vst.msk [vmem:[%s170 + $0x5c] sm:$0xf] %vm3912, %v3861
      %3937 = vst.msk [vmem:[%s170 + $0x60] sm:$0xf] %vm3912, %v3862
      %3938 = vst.msk [vmem:[%s170 + $0x64] sm:$0xf] %vm3912, %v3863
      %3939 = vst.msk [vmem:[%s170 + $0x68] sm:$0xf] %vm3912, %v3864
      %3940 = vst.msk [vmem:[%s170 + $0x6c] sm:$0xf] %vm3912, %v3865
      %3941 = vst.msk [vmem:[%s170 + $0x70] sm:$0xf] %vm3912, %v3866
      %3942 = vst.msk [vmem:[%s170 + $0x74] sm:$0xf] %vm3912, %v3867
      %3943 = vst.msk [vmem:[%s170 + $0x78] sm:$0xf] %vm3912, %v3868
      %3944 = vst.msk [vmem:[%s170 + $0x7c] sm:$0xf] %vm3912, %v3869
      %3945 = vst.msk [vmem:[%s170 + $0x80] sm:$0xf] %vm3912, %v3870
      %3946 = vst.msk [vmem:[%s170 + $0x84] sm:$0xf] %vm3912, %v3871
      %3947 = vst.msk [vmem:[%s170 + $0x88] sm:$0xf] %vm3912, %v3872
      %3948 = vst.msk [vmem:[%s170 + $0x8c] sm:$0xf] %vm3912, %v3873
      %vm3949 = vcmask 516096
      %vm3950 = vsmask.f32 256
      %vm3951 = vmand %vm3949, %vm3950
      %v3952 = vld [vmem:[%s170 + $0x90] sm:$0x1]
      %v3953 = vsel %vm3951, %v3874, %v3952
      %3954 = vst [vmem:[%s170 + $0x90] sm:$0x1] %v3953
      %p3955 = scmp.lt.s32.totalorder %s14, 1
      %s3956 = scalar_select %p3955, %s14, 1
      %s3957 = smul.addr %s3956, 37
      %s3958 = smul.addr %s3957, 4
      %s3959 = scalar_lea.vmem %s3, %s3958
      // Predicated region
      $region33: #{motion_attention_64_forward.8} parent=31 // pred_check
        %p3960 = pneg %p100
      $region34: #{motion_attention_64_forward.8} parent=31 // pred_check_branch
        %3962 = sbr.rel (%p3960) target = $region36
      $region35: #{motion_attention_64_forward.8} parent=31 // pred_region
        _
      $region36: #{motion_attention_64_forward.8} parent=31 // pred_fallthru
        _
    $region32: #{motion_attention_64_forward.8} parent=5 // pred_fallthru
      _
    %p3963 = scmp.le.s32.totalorder 2, %s9
    // Predicated region
    $region37: #{motion_attention_64_forward.8} parent=5 // pred_check
      %p3964 = pneg %p3963
    $region38: #{motion_attention_64_forward.8} parent=5 // pred_check_branch
      %3966 = sbr.rel (%p3964) target = $region40
    $region39: #{motion_attention_64_forward.8} parent=5 // pred_region
      %s3967 = ssub.s32 %s9, 2
      // Predicated region
      $region41: #{motion_attention_64_forward.8} parent=39 // pred_check
        %p3968 = pneg %p106
      $region42: #{motion_attention_64_forward.8} parent=39 // pred_check_branch
        %3970 = sbr.rel (%p3968) target = $region44
      $region43: #{motion_attention_64_forward.8} parent=39 // pred_region
        %p3971 = scmp.lt.s32.totalorder %s15, 1
        %s3972 = scalar_select %p3971, %s15, 1
        %s3973 = smul.addr %s3972, 37
        %s3974 = smul.addr %s3973, 4
        %s3975 = scalar_lea.vmem %s3, %s3974
      $region44: #{motion_attention_64_forward.8} parent=39 // pred_fallthru
        _
    $region40: #{motion_attention_64_forward.8} parent=5 // pred_fallthru
      _
  $region6: #{motion_attention_64_forward.8} parent=0 // loop_footer
    %s13 = sadd.s32 1, %s9
  $region7: #{motion_attention_64_forward.8} parent=0 // loop_footer_branch
    %8 = sbr.rel target = $region3
  $region8: #{motion_attention_64_forward.8} parent=0 // loop_exit
    _

// kernel: motion_attention_64_forward.9
$region0: #{motion_attention_64_forward.9}
  #allocation0 [shape = 'u32[]', space=smem, size = 0x4, offset = 0x4, fixed_abs, tag = 'smem constant byte address 0x4 - core index']
  #allocation1 [shape = 'u32[144,128]{1,0:T(1,128)}', space=vmem, size = 0x12000, scoped, tag = 'internal scratch']
  %s0 = inlined_call_operand.vmem [shape: bf16[2,4,96,64], index: 0, kind: input, shape index: {}]
  %s1 = inlined_call_operand.vmem [shape: bf16[576,128], index: 1, kind: input, shape index: {}]
  %s2 = inlined_call_operand.vmem [shape: f32[1,128], index: 2, kind: input, shape index: {}]
  %s3 = inlined_call_operand.vmem [shape: f32[1,81], index: 3, kind: input, shape index: {}]
  %s4 = inlined_call_operand.hbm [shape: f32[2,1,128], index: 4, kind: output, shape index: {}]
  %s5 = sld [smem:[#allocation0]]
  $region49: #{motion_attention_64_forward.9} parent=0
    _
  %s7 = ssub.s32 1, %s5
  %s8 = scalar_select 0, %s7, %s5
  $region1: #{motion_attention_64_forward.9} parent=0
    #allocation2 [shape = 'u8[1024]{0}', space=vmem, size = 0x400, scoped, tag = 'output window, operand 0']
    #allocation3 [shape = 's32[2]{0}', space=sflag, size = 0x8, scoped, tag = 'scoped memory for motion_attention_64_forward.9']
    %9 = vsyncpa [#allocation3], 0
    %s10 = scalar_lea.sflag [#allocation3], 1
    %11 = vsyncpa %s10, 0
    loop: start=0, step=1, limit=4
    $region2: #{motion_attention_64_forward.9} parent=1 // loop_pre_header
      _
    $region3: #{motion_attention_64_forward.9} parent=1 // loop_header
      %s13 = sphi 0, %s17
      %p14 = scmp.ge.s32.totalorder %s13, 4
      %s23 = sphi 0, %s25
      %s26 = sphi 0, %s23
      %s27 = sphi 0, %s26
      %s43 = sphi 0, %s27
      %s47 = sphi 0, %s47
      %s49 = sphi 0, %s47
      %s50 = sphi 0, %s49
      %s64 = sphi 0, %s50
      %s68 = sphi 0, %s68
      %s70 = sphi 0, %s68
      %s71 = sphi 0, %s70
      %s85 = sphi 0, %s71
      %s89 = sphi 0, %s89
      %s91 = sphi 0, %s89
      %s92 = sphi 0, %s91
      %s106 = sphi 0, %s92
      %s112 = sphi 0, %s114
      %s115 = sphi 0, %s112
      %s116 = sphi 0, %s115
      %s132 = sphi 0, %s116
    $region4: #{motion_attention_64_forward.9} parent=1 // loop_header_branch
      %16 = sbr.rel (%p14) target = $region8
    $region5: #{motion_attention_64_forward.9} parent=1 // loop_body
      %s18 = ssub.s32 %s13, 1
      %s19 = ssub.s32 %s13, 2
      %s20 = sadd.s32 %s13, 1
      %s21 = ssub.s32 %s13, %s20
      %p22 = scmp.eq.s32.totalorder %s21, 0
      %s24 = sadd.s32 %s23, 1
      %s25 = scalar_select %p22, %s23, %s24
      %p28 = pneg %p22
      %p29 = scmp.eq.s32.totalorder %s13, 1
      %p30 = por %p28, %p29
      %p31 = scmp.ne.s32.totalorder %s23, %s26
      %p32 = scmp.eq.s32.totalorder %s13, 0
      %p33 = por %p31, %p32
      %p34 = scmp.ne.s32.totalorder %s23, %s26
      %p35 = scmp.eq.s32.totalorder %s18, 1
      %p36 = por %p34, %p35
      %p37 = scmp.ne.s32.totalorder %s26, %s27
      %p38 = scmp.eq.s32.totalorder %s18, 0
      %p39 = por %p37, %p38
      %p40 = scmp.ne.s32.totalorder %s26, %s27
      %p41 = scmp.eq.s32.totalorder %s19, 1
      %p42 = por %p40, %p41
      %p44 = scmp.ne.s32.totalorder %s27, %s43
      %p45 = scmp.eq.s32.totalorder %s19, 0
      %p46 = por %p44, %p45
      %s48 = sadd.s32 %s47, 1
      %p51 = scmp.eq.s32.totalorder %s13, 1
      %p52 = scmp.ne.s32.totalorder %s47, %s49
      %p53 = scmp.eq.s32.totalorder %s13, 0
      %p54 = por %p52, %p53
      %p55 = scmp.ne.s32.totalorder %s47, %s49
      %p56 = scmp.eq.s32.totalorder %s18, 1
      %p57 = por %p55, %p56
      %p58 = scmp.ne.s32.totalorder %s49, %s50
      %p59 = scmp.eq.s32.totalorder %s18, 0
      %p60 = por %p58, %p59
      %p61 = scmp.ne.s32.totalorder %s49, %s50
      %p62 = scmp.eq.s32.totalorder %s19, 1
      %p63 = por %p61, %p62
      %p65 = scmp.ne.s32.totalorder %s50, %s64
      %p66 = scmp.eq.s32.totalorder %s19, 0
      %p67 = por %p65, %p66
      %s69 = sadd.s32 %s68, 1
      %p72 = scmp.eq.s32.totalorder %s13, 1
      %p73 = scmp.ne.s32.totalorder %s68, %s70
      %p74 = scmp.eq.s32.totalorder %s13, 0
      %p75 = por %p73, %p74
      %p76 = scmp.ne.s32.totalorder %s68, %s70
      %p77 = scmp.eq.s32.totalorder %s18, 1
      %p78 = por %p76, %p77
      %p79 = scmp.ne.s32.totalorder %s70, %s71
      %p80 = scmp.eq.s32.totalorder %s18, 0
      %p81 = por %p79, %p80
      %p82 = scmp.ne.s32.totalorder %s70, %s71
      %p83 = scmp.eq.s32.totalorder %s19, 1
      %p84 = por %p82, %p83
      %p86 = scmp.ne.s32.totalorder %s71, %s85
      %p87 = scmp.eq.s32.totalorder %s19, 0
      %p88 = por %p86, %p87
      %s90 = sadd.s32 %s89, 1
      %p93 = scmp.eq.s32.totalorder %s13, 1
      %p94 = scmp.ne.s32.totalorder %s89, %s91
      %p95 = scmp.eq.s32.totalorder %s13, 0
      %p96 = por %p94, %p95
      %p97 = scmp.ne.s32.totalorder %s89, %s91
      %p98 = scmp.eq.s32.totalorder %s18, 1
      %p99 = por %p97, %p98
      %p100 = scmp.ne.s32.totalorder %s91, %s92
      %p101 = scmp.eq.s32.totalorder %s18, 0
      %p102 = por %p100, %p101
      %p103 = scmp.ne.s32.totalorder %s91, %s92
      %p104 = scmp.eq.s32.totalorder %s19, 1
      %p105 = por %p103, %p104
      %p107 = scmp.ne.s32.totalorder %s92, %s106
      %p108 = scmp.eq.s32.totalorder %s19, 0
      %p109 = por %p107, %p108
      %s110 = ssub.s32 %s13, %s20
      %p111 = scmp.eq.s32.totalorder %s110, 0
      %s113 = sadd.s32 %s112, 1
      %s114 = scalar_select %p111, %s112, %s113
      %p117 = pneg %p111
      %p118 = scmp.eq.s32.totalorder %s13, 1
      %p119 = por %p117, %p118
      %p120 = scmp.ne.s32.totalorder %s112, %s115
      %p121 = scmp.eq.s32.totalorder %s13, 0
      %p122 = por %p120, %p121
      %p123 = scmp.ne.s32.totalorder %s112, %s115
      %p124 = scmp.eq.s32.totalorder %s18, 1
      %p125 = por %p123, %p124
      %p126 = scmp.ne.s32.totalorder %s115, %s116
      %p127 = scmp.eq.s32.totalorder %s18, 0
      %p128 = por %p126, %p127
      %p129 = scmp.ne.s32.totalorder %s115, %s116
      %p130 = scmp.eq.s32.totalorder %s19, 1
      %p131 = por %p129, %p130
      %p133 = scmp.ne.s32.totalorder %s116, %s132
      %p134 = scmp.eq.s32.totalorder %s19, 0
      %p135 = por %p133, %p134
      %p136 = scmp.le.s32.totalorder 1, %s13
      %p137 = scmp.lt.s32.totalorder %s13, 3
      %p138 = pnand %p136, %p137
      %p139 = pneg %p138
      // Predicated region
      $region9: #{motion_attention_64_forward.9} parent=5 // pred_check
        _
      $region10: #{motion_attention_64_forward.9} parent=5 // pred_check_branch
        %141 = sbr.rel (%p138) target = $region12
      $region11: #{motion_attention_64_forward.9} parent=5 // pred_region
        %s142 = ssub.s32 %s13, 1
        // Predicated region
        $region13: #{motion_attention_64_forward.9} parent=11 // pred_check
          %p143 = pneg %p60
        $region14: #{motion_attention_64_forward.9} parent=11 // pred_check_branch
          %145 = sbr.rel (%p143) target = $region16
        $region15: #{motion_attention_64_forward.9} parent=11 // pred_region
          _
        $region16: #{motion_attention_64_forward.9} parent=11 // pred_fallthru
          _
        // Predicated region
        $region17: #{motion_attention_64_forward.9} parent=11 // pred_check
          %p146 = pneg %p81
        $region18: #{motion_attention_64_forward.9} parent=11 // pred_check_branch
          %148 = sbr.rel (%p146) target = $region20
        $region19: #{motion_attention_64_forward.9} parent=11 // pred_region
          _
        $region20: #{motion_attention_64_forward.9} parent=11 // pred_fallthru
          _
        // Predicated region
        $region21: #{motion_attention_64_forward.9} parent=11 // pred_check
          %p149 = pneg %p102
        $region22: #{motion_attention_64_forward.9} parent=11 // pred_check_branch
          %151 = sbr.rel (%p149) target = $region24
        $region23: #{motion_attention_64_forward.9} parent=11 // pred_region
          _
        $region24: #{motion_attention_64_forward.9} parent=11 // pred_fallthru
          _
      $region12: #{motion_attention_64_forward.9} parent=5 // pred_fallthru
        _
      %p152 = scmp.lt.s32.totalorder %s13, 2
      // Predicated region
      $region25: #{motion_attention_64_forward.9} parent=5 // pred_check
        %p153 = pneg %p152
      $region26: #{motion_attention_64_forward.9} parent=5 // pred_check_branch
        %155 = sbr.rel (%p153) target = $region28
      $region27: #{motion_attention_64_forward.9} parent=5 // pred_region
        // Predicated region
        $region29: #{motion_attention_64_forward.9} parent=27 // pred_check
          %p156 = pneg %p33
        $region30: #{motion_attention_64_forward.9} parent=27 // pred_check_branch
          %158 = sbr.rel (%p156) target = $region32
        $region31: #{motion_attention_64_forward.9} parent=27 // pred_region
          %p159 = scmp.lt.s32.totalorder %s13, 1
          %s160 = scalar_select %p159, %s13, 1
          %s161 = smul.addr %s160, 48
          %s162 = smul.addr %s161, 4
          %s163 = scalar_lea.vmem %s0, %s162
        $region32: #{motion_attention_64_forward.9} parent=27 // pred_fallthru
          _
      $region28: #{motion_attention_64_forward.9} parent=5 // pred_fallthru
        _
      %p164 = scmp.le.s32.totalorder 1, %s13
      %p165 = scmp.lt.s32.totalorder %s13, 3
      %p166 = pnand %p164, %p165
      %p167 = pneg %p166
      // Predicated region
      $region33: #{motion_attention_64_forward.9} parent=5 // pred_check
        _
      $region34: #{motion_attention_64_forward.9} parent=5 // pred_check_branch
        %169 = sbr.rel (%p166) target = $region36
      $region35: #{motion_attention_64_forward.9} parent=5 // pred_region
        %s170 = ssub.s32 %s13, 1
        %p171 = scmp.lt.s32.totalorder %s18, 1
        %s172 = scalar_select %p171, %s18, 1
        %s173 = smul.addr %s172, 48
        %s174 = smul.addr %s173, 4
        %s175 = scalar_lea.vmem %s0, %s174
        %p176 = pneg %p39
        %p177 = pneg %p36
        %p178 = pneg %p60
        %p179 = pneg %p57
        %p180 = pneg %p81
        %p181 = pneg %p78
        %p182 = pneg %p102
        %p183 = pneg %p99
        %p184 = pneg %p128
        %p185 = pneg %p125
        %s186 = sand.u32 %s115, 1
        %s187 = scalar_lea.sflag [#allocation3], %s186
        %s188 = sand.u32 %s115, 1
        %s189 = scalar_lea.vmem [#allocation2], %s188
        %p190 = scmp.lt.s32.totalorder %s18, 1
        %s191 = scalar_select %p190, %s18, 1
        %s192 = smul.addr %s191, 48
        %s193 = smul.addr %s192, 4
        %s194 = scalar_lea.vmem %s0, %s193
        %v196 = vld [vmem:[%s194] sm:$0xf]
        %v197 = vld [vmem:[%s194 + $0x4] sm:$0xf]
        %v198 = vld [vmem:[%s194 + $0x8] sm:$0xf]
        %v199 = vld [vmem:[%s194 + $0xc] sm:$0xf]
        %v200 = vld [vmem:[%s194 + $0x10] sm:$0xf]
        %v201 = vld [vmem:[%s194 + $0x14] sm:$0xf]
        %v202 = vld [vmem:[%s194 + $0x18] sm:$0xf]
        %v203 = vld [vmem:[%s194 + $0x1c] sm:$0xf]
        %v204 = vld [vmem:[%s194 + $0x20] sm:$0xf]
        %v205 = vld [vmem:[%s194 + $0x24] sm:$0xf]
        %v206 = vld [vmem:[%s194 + $0x28] sm:$0xf]
        %v207 = vld [vmem:[%s194 + $0x2c] sm:$0xf]
        %v208 = vld [vmem:[%s194 + $0x30] sm:$0xf]
        %v209 = vld [vmem:[%s194 + $0x34] sm:$0xf]
        %v210 = vld [vmem:[%s194 + $0x38] sm:$0xf]
        %v211 = vld [vmem:[%s194 + $0x3c] sm:$0xf]
        %v212 = vld [vmem:[%s194 + $0x40] sm:$0xf]
        %v213 = vld [vmem:[%s194 + $0x44] sm:$0xf]
        %v214 = vld [vmem:[%s194 + $0x48] sm:$0xf]
        %v215 = vld [vmem:[%s194 + $0x4c] sm:$0xf]
        %v216 = vld [vmem:[%s194 + $0x50] sm:$0xf]
        %v217 = vld [vmem:[%s194 + $0x54] sm:$0xf]
        %v218 = vld [vmem:[%s194 + $0x58] sm:$0xf]
        %v219 = vld [vmem:[%s194 + $0x5c] sm:$0xf]
        %v220 = vld [vmem:[%s194 + $0x60] sm:$0xf]
        %v221 = vld [vmem:[%s194 + $0x64] sm:$0xf]
        %v222 = vld [vmem:[%s194 + $0x68] sm:$0xf]
        %v223 = vld [vmem:[%s194 + $0x6c] sm:$0xf]
        %v224 = vld [vmem:[%s194 + $0x70] sm:$0xf]
        %v225 = vld [vmem:[%s194 + $0x74] sm:$0xf]
        %v226 = vld [vmem:[%s194 + $0x78] sm:$0xf]
        %v227 = vld [vmem:[%s194 + $0x7c] sm:$0xf]
        %v228 = vld [vmem:[%s194 + $0x80] sm:$0xf]
        %v229 = vld [vmem:[%s194 + $0x84] sm:$0xf]
        %v230 = vld [vmem:[%s194 + $0x88] sm:$0xf]
        %v231 = vld [vmem:[%s194 + $0x90] sm:$0xf]
        %v232 = vld [vmem:[%s194 + $0x94] sm:$0xf]
        %v233 = vld [vmem:[%s194 + $0x98] sm:$0xf]
        %v234 = vld [vmem:[%s194 + $0x9c] sm:$0xf]
        %v235 = vld [vmem:[%s194 + $0xa0] sm:$0xf]
        %v236 = vld [vmem:[%s194 + $0xa4] sm:$0xf]
        %v237 = vld [vmem:[%s194 + $0xa8] sm:$0xf]
        %v238 = vld [vmem:[%s194 + $0xac] sm:$0xf]
        %v239 = vld [vmem:[%s194 + $0xb0] sm:$0xf]
        %v240 = vld [vmem:[%s194 + $0xb4] sm:$0xf]
        %v241 = vld [vmem:[%s194 + $0xb8] sm:$0xf]
        %v242 = vld [vmem:[%s1] sm:$0xf]
        %v243 = vld [vmem:[%s1 + $0x4] sm:$0xf]
        %v244 = vld [vmem:[%s1 + $0x8] sm:$0xf]
        %v245 = vld [vmem:[%s1 + $0xc] sm:$0xf]
        %v246 = vld [vmem:[%s1 + $0x10] sm:$0xf]
        %v247 = vld [vmem:[%s1 + $0x14] sm:$0xf]
        %v248 = vld [vmem:[%s1 + $0x18] sm:$0xf]
        %v249 = vld [vmem:[%s1 + $0x1c] sm:$0xf]
        %v250 = vld [vmem:[%s1 + $0x20] sm:$0xf]
        %v251 = vld [vmem:[%s1 + $0x24] sm:$0xf]
        %v252 = vld [vmem:[%s1 + $0x28] sm:$0xf]
        %v253 = vld [vmem:[%s1 + $0x2c] sm:$0xf]
        %v254 = vld [vmem:[%s1 + $0x30] sm:$0xf]
        %v255 = vld [vmem:[%s1 + $0x34] sm:$0xf]
        %v256 = vld [vmem:[%s1 + $0x38] sm:$0xf]
        %v257 = vld [vmem:[%s1 + $0x3c] sm:$0xf]
        %v258 = vld [vmem:[%s1 + $0x40] sm:$0xf]
        %v259 = vld [vmem:[%s1 + $0x44] sm:$0xf]
        %v260 = vld [vmem:[%s1 + $0x48] sm:$0xf]
        %v261 = vld [vmem:[%s1 + $0x4c] sm:$0xf]
        %v262 = vld [vmem:[%s1 + $0x50] sm:$0xf]
        %v263 = vld [vmem:[%s1 + $0x54] sm:$0xf]
        %v264 = vld [vmem:[%s1 + $0x58] sm:$0xf]
        %v265 = vld [vmem:[%s1 + $0x5c] sm:$0xf]
        %v266 = vld [vmem:[%s1 + $0x60] sm:$0xf]
        %v267 = vld [vmem:[%s1 + $0x64] sm:$0xf]
        %v268 = vld [vmem:[%s1 + $0x68] sm:$0xf]
        %v269 = vld [vmem:[%s1 + $0x6c] sm:$0xf]
        %v270 = vld [vmem:[%s1 + $0x70] sm:$0xf]
        %v271 = vld [vmem:[%s1 + $0x74] sm:$0xf]
        %v272 = vld [vmem:[%s1 + $0x78] sm:$0xf]
        %v273 = vld [vmem:[%s1 + $0x7c] sm:$0xf]
        %v274 = vld [vmem:[%s1 + $0x80] sm:$0xf]
        %v275 = vld [vmem:[%s1 + $0x84] sm:$0xf]
        %v276 = vld [vmem:[%s1 + $0x88] sm:$0xf]
        %v277 = vld [vmem:[%s1 + $0x8c] sm:$0xf]
        %v278 = vld [vmem:[%s1 + $0x90] sm:$0xf]
        %v279 = vld [vmem:[%s1 + $0x94] sm:$0xf]
        %v280 = vld [vmem:[%s1 + $0x98] sm:$0xf]
        %v281 = vld [vmem:[%s1 + $0x9c] sm:$0xf]
        %v282 = vld [vmem:[%s1 + $0xa0] sm:$0xf]
        %v283 = vld [vmem:[%s1 + $0xa4] sm:$0xf]
        %v284 = vld [vmem:[%s1 + $0xa8] sm:$0xf]
        %v285 = vld [vmem:[%s1 + $0xac] sm:$0xf]
        %v286 = vld [vmem:[%s1 + $0xb0] sm:$0xf]
        %v287 = vld [vmem:[%s1 + $0xb4] sm:$0xf]
        %v288 = vld [vmem:[%s1 + $0xb8] sm:$0xf]
        %v289 = vld [vmem:[%s1 + $0xbc] sm:$0xf]
        %v290 = vld [vmem:[%s1 + $0xc0] sm:$0xf]
        %v291 = vld [vmem:[%s1 + $0xc4] sm:$0xf]
        %v292 = vld [vmem:[%s1 + $0xc8] sm:$0xf]
        %v293 = vld [vmem:[%s1 + $0xcc] sm:$0xf]
        %v294 = vld [vmem:[%s1 + $0xd0] sm:$0xf]
        %v295 = vld [vmem:[%s1 + $0xd4] sm:$0xf]
        %v296 = vld [vmem:[%s1 + $0xd8] sm:$0xf]
        %v297 = vld [vmem:[%s1 + $0xdc] sm:$0xf]
        %v298 = vld [vmem:[%s1 + $0xe0] sm:$0xf]
        %v299 = vld [vmem:[%s1 + $0xe4] sm:$0xf]
        %v300 = vld [vmem:[%s1 + $0xe8] sm:$0xf]
        %v301 = vld [vmem:[%s1 + $0xec] sm:$0xf]
        %v302 = vld [vmem:[%s1 + $0xf0] sm:$0xf]
        %v303 = vld [vmem:[%s1 + $0xf4] sm:$0xf]
        %v304 = vld [vmem:[%s1 + $0xf8] sm:$0xf]
        %v305 = vld [vmem:[%s1 + $0xfc] sm:$0xf]
        %v306 = vld [vmem:[%s1 + $0x100] sm:$0xf]
        %v307 = vld [vmem:[%s1 + $0x104] sm:$0xf]
        %v308 = vld [vmem:[%s1 + $0x108] sm:$0xf]
        %v309 = vld [vmem:[%s1 + $0x10c] sm:$0xf]
        %v310 = vld [vmem:[%s1 + $0x110] sm:$0xf]
        %v311 = vld [vmem:[%s1 + $0x114] sm:$0xf]
        %v312 = vld [vmem:[%s1 + $0x118] sm:$0xf]
        %v313 = vld [vmem:[%s1 + $0x11c] sm:$0xf]
        %v325 = vunpack.c.l.b16 %v208
        %v326 = vunpack.c.l.b16 %v209
        %v327 = vunpack.c.l.b16 %v210
        %v328 = vunpack.c.l.b16 %v211
        %v329 = vunpack.c.l.b16 %v212
        %v330 = vunpack.c.l.b16 %v213
        %v331 = vunpack.c.l.b16 %v214
        %v332 = vunpack.c.l.b16 %v215
        %v333 = vunpack.c.l.b16 %v216
        %v334 = vunpack.c.l.b16 %v217
        %v335 = vunpack.c.l.b16 %v218
        %v336 = vpack.c.b16 %v326, %v325
        %v337 = vpack.c.b16 %v328, %v327
        %v338 = vpack.c.b16 %v330, %v329
        %v339 = vpack.c.b16 %v332, %v331
        %v340 = vpack.c.b16 %v334, %v333
        %v341 = vpack.c.b16 %v335, %v335
        %v350 = vunpack.c.l.b16 %v250
        %v351 = vunpack.c.l.b16 %v251
        %v352 = vunpack.c.l.b16 %v252
        %v353 = vunpack.c.l.b16 %v253
        %v354 = vunpack.c.l.b16 %v254
        %v355 = vunpack.c.l.b16 %v255
        %v356 = vunpack.c.l.b16 %v256
        %v357 = vunpack.c.l.b16 %v257
        %v358 = vpack.c.b16 %v351, %v350
        %v359 = vpack.c.b16 %v353, %v352
        %v360 = vpack.c.b16 %v355, %v354
        %v361 = vpack.c.b16 %v357, %v356
        %vm366 = vcmask 523264
        %v368 = vsel %vm366, %v336, 0
        %v371 = vsel %vm366, %v337, 0
        %v374 = vsel %vm366, %v338, 0
        %v377 = vsel %vm366, %v339, 0
        %v380 = vsel %vm366, %v340, 0
        %v383 = vsel %vm366, %v341, 0
        %385 = vmatprep.subr.bf16.mxu0 0
        %386 = vmatpush1.bf16.msra.mxu0 %v358
        %387 = vmatprep.subr.bf16.mxu0 0
        %388 = vmatpush1.bf16.msra.mxu0 %v359
        %389 = vmatprep.subr.bf16.mxu0 0
        %390 = vmatpush1.bf16.msra.mxu0 %v360
        %391 = vmatprep.subr.bf16.mxu0 0
        %392 = vmatpush1.bf16.msra.mxu0 %v361
        %393 = vmatprep.subr.bf16.mxu0 0
        %394 = vmatpush1.bf16.msra.mxu0 0
        %395 = vmatprep.subr.bf16.mxu0 0
        %396 = vmatpush1.bf16.msra.mxu0 0
        %397 = vmatprep.subr.bf16.mxu0 0
        %398 = vmatpush1.bf16.msra.mxu0 0
        %399 = vmatprep.subr.bf16.mxu0 0
        %400 = vmatpush1.bf16.msra.mxu0 0
        %401 = vmatprep.subr.bf16.mxu0 0
        %402 = vmatpush1.bf16.msra.mxu0 0
        %403 = vmatprep.subr.bf16.mxu0 0
        %404 = vmatpush1.bf16.msra.mxu0 0
        %405 = vmatprep.subr.bf16.mxu0 0
        %406 = vmatpush1.bf16.msra.mxu0 0
        %407 = vmatprep.subr.bf16.mxu0 0
        %408 = vmatpush1.bf16.msra.mxu0 0
        %409 = vmatprep.subr.bf16.mxu0 0
        %410 = vmatpush1.bf16.msra.mxu0 0
        %411 = vmatprep.subr.bf16.mxu0 0
        %412 = vmatpush1.bf16.msra.mxu0 0
        %413 = vmatprep.subr.bf16.mxu0 0
        %414 = vmatpush1.bf16.msra.mxu0 0
        %415 = vmatprep.subr.bf16.mxu0 0
        %416 = vmatpush1.bf16.msra.mxu0 0
        %417 = vmatprep.mubr.bf16.mxu0 0
        %418 = vmatmul.mubr.bf16.gmra.mrb[0].mxu0 %v368
        %v419 = vpop.f32.mrb[0].mxu0
        %v420 = vadd.f32 0.0, %v419
        %v421 = vpop.f32.mrb[0].mxu0
        %v422 = vpop.f32.mrb[0].mxu0
        %v423 = vadd.f32 0.0, %v422
        %v424 = vpop.f32.mrb[0].mxu0
        %425 = vmatprep.mubr.bf16.mxu0 0
        %426 = vmatmul.mubr.bf16.gmra.mrb[0].mxu0 %v371
        %v427 = vpop.f32.mrb[0].mxu0
        %v428 = vadd.f32 0.0, %v427
        %v429 = vpop.f32.mrb[0].mxu0
        %v430 = vpop.f32.mrb[0].mxu0
        %v431 = vadd.f32 0.0, %v430
        %v432 = vpop.f32.mrb[0].mxu0
        %433 = vmatprep.mubr.bf16.mxu0 0
        %434 = vmatmul.mubr.bf16.gmra.mrb[0].mxu0 %v374
        %v435 = vpop.f32.mrb[0].mxu0
        %v436 = vadd.f32 0.0, %v435
        %v437 = vpop.f32.mrb[0].mxu0
        %v438 = vpop.f32.mrb[0].mxu0
        %v439 = vadd.f32 0.0, %v438
        %v440 = vpop.f32.mrb[0].mxu0
        %441 = vmatprep.mubr.bf16.mxu0 0
        %442 = vmatmul.mubr.bf16.gmra.mrb[0].mxu0 %v377
        %v443 = vpop.f32.mrb[0].mxu0
        %v444 = vadd.f32 0.0, %v443
        %v445 = vpop.f32.mrb[0].mxu0
        %v446 = vpop.f32.mrb[0].mxu0
        %v447 = vadd.f32 0.0, %v446
        %v448 = vpop.f32.mrb[0].mxu0
        %449 = vmatprep.mubr.bf16.mxu0 0
        %450 = vmatmul.mubr.bf16.gmra.mrb[0].mxu0 %v380
        %v451 = vpop.f32.mrb[0].mxu0
        %v452 = vadd.f32 0.0, %v451
        %v453 = vpop.f32.mrb[0].mxu0
        %v454 = vpop.f32.mrb[0].mxu0
        %v455 = vadd.f32 0.0, %v454
        %v456 = vpop.f32.mrb[0].mxu0
        %457 = vmatprep.mubr.bf16.mxu0 0
        %458 = vmatmul.mubr.bf16.gmra.mrb[0].mxu0 %v383
        %v459 = vpop.f32.mrb[0].mxu0
        %v460 = vadd.f32 0.0, %v459
        %v461 = vpop.f32.mrb[0].mxu0
        %v462 = vpop.f32.mrb[0].mxu0
        %v463 = vpop.f32.mrb[0].mxu0
        %464 = vdwg.mxu0
        %v476 = vunpack.c.l.b16 %v196
        %v477 = vunpack.c.l.b16 %v197
        %v478 = vunpack.c.l.b16 %v198
        %v479 = vunpack.c.l.b16 %v199
        %v480 = vunpack.c.l.b16 %v200
        %v481 = vunpack.c.l.b16 %v201
        %v482 = vunpack.c.l.b16 %v202
        %v483 = vunpack.c.l.b16 %v203
        %v484 = vunpack.c.l.b16 %v204
        %v485 = vunpack.c.l.b16 %v205
        %v486 = vunpack.c.l.b16 %v206
        %v487 = vpack.c.b16 %v477, %v476
        %v488 = vpack.c.b16 %v479, %v478
        %v489 = vpack.c.b16 %v481, %v480
        %v490 = vpack.c.b16 %v483, %v482
        %v491 = vpack.c.b16 %v485, %v484
        %v492 = vpack.c.b16 %v486, %v486
        %v501 = vunpack.c.l.b16 %v242
        %v502 = vunpack.c.l.b16 %v243
        %v503 = vunpack.c.l.b16 %v244
        %v504 = vunpack.c.l.b16 %v245
        %v505 = vunpack.c.l.b16 %v246
        %v506 = vunpack.c.l.b16 %v247
        %v507 = vunpack.c.l.b16 %v248
        %v508 = vunpack.c.l.b16 %v249
        %v509 = vpack.c.b16 %v502, %v501
        %v510 = vpack.c.b16 %v504, %v503
        %v511 = vpack.c.b16 %v506, %v505
        %v512 = vpack.c.b16 %v508, %v507
        %v518 = vsel %vm366, %v487, 0
        %v521 = vsel %vm366, %v488, 0
        %v524 = vsel %vm366, %v489, 0
        %v527 = vsel %vm366, %v490, 0
        %v530 = vsel %vm366, %v491, 0
        %v533 = vsel %vm366, %v492, 0
        %535 = vmatprep.subr.bf16.mxu0 0
        %536 = vmatpush1.bf16.msra.mxu0 %v509
        %537 = vmatprep.subr.bf16.mxu0 0
        %538 = vmatpush1.bf16.msra.mxu0 %v510
        %539 = vmatprep.subr.bf16.mxu0 0
        %540 = vmatpush1.bf16.msra.mxu0 %v511
        %541 = vmatprep.subr.bf16.mxu0 0
        %542 = vmatpush1.bf16.msra.mxu0 %v512
        %543 = vmatprep.subr.bf16.mxu0 0
        %544 = vmatpush1.bf16.msra.mxu0 0
        %545 = vmatprep.subr.bf16.mxu0 0
        %546 = vmatpush1.bf16.msra.mxu0 0
        %547 = vmatprep.subr.bf16.mxu0 0
        %548 = vmatpush1.bf16.msra.mxu0 0
        %549 = vmatprep.subr.bf16.mxu0 0
        %550 = vmatpush1.bf16.msra.mxu0 0
        %551 = vmatprep.subr.bf16.mxu0 0
        %552 = vmatpush1.bf16.msra.mxu0 0
        %553 = vmatprep.subr.bf16.mxu0 0
        %554 = vmatpush1.bf16.msra.mxu0 0
        %555 = vmatprep.subr.bf16.mxu0 0
        %556 = vmatpush1.bf16.msra.mxu0 0
        %557 = vmatprep.subr.bf16.mxu0 0
        %558 = vmatpush1.bf16.msra.mxu0 0
        %559 = vmatprep.subr.bf16.mxu0 0
        %560 = vmatpush1.bf16.msra.mxu0 0
        %561 = vmatprep.subr.bf16.mxu0 0
        %562 = vmatpush1.bf16.msra.mxu0 0
        %563 = vmatprep.subr.bf16.mxu0 0
        %564 = vmatpush1.bf16.msra.mxu0 0
        %565 = vmatprep.subr.bf16.mxu0 0
        %566 = vmatpush1.bf16.msra.mxu0 0
        %567 = vmatprep.mubr.bf16.mxu0 0
        %568 = vmatmul.mubr.bf16.gmra.mrb[0].mxu0 %v518
        %v569 = vpop.f32.mrb[0].mxu0
        %v570 = vadd.f32 %v420, %v569
        %v571 = vpop.f32.mrb[0].mxu0
        %v572 = vpop.f32.mrb[0].mxu0
        %v573 = vadd.f32 %v423, %v572
        %v574 = vpop.f32.mrb[0].mxu0
        %575 = vmatprep.mubr.bf16.mxu0 0
        %576 = vmatmul.mubr.bf16.gmra.mrb[0].mxu0 %v521
        %v577 = vpop.f32.mrb[0].mxu0
        %v578 = vadd.f32 %v428, %v577
        %v579 = vpop.f32.mrb[0].mxu0
        %v580 = vpop.f32.mrb[0].mxu0
        %v581 = vadd.f32 %v431, %v580
        %v582 = vpop.f32.mrb[0].mxu0
        %583 = vmatprep.mubr.bf16.mxu0 0
        %584 = vmatmul.mubr.bf16.gmra.mrb[0].mxu0 %v524
        %v585 = vpop.f32.mrb[0].mxu0
        %v586 = vadd.f32 %v436, %v585
        %v587 = vpop.f32.mrb[0].mxu0
        %v588 = vpop.f32.mrb[0].mxu0
        %v589 = vadd.f32 %v439, %v588
        %v590 = vpop.f32.mrb[0].mxu0
        %591 = vmatprep.mubr.bf16.mxu0 0
        %592 = vmatmul.mubr.bf16.gmra.mrb[0].mxu0 %v527
        %v593 = vpop.f32.mrb[0].mxu0
        %v594 = vadd.f32 %v444, %v593
        %v595 = vpop.f32.mrb[0].mxu0
        %v596 = vpop.f32.mrb[0].mxu0
        %v597 = vadd.f32 %v447, %v596
        %v598 = vpop.f32.mrb[0].mxu0
        %599 = vmatprep.mubr.bf16.mxu0 0
        %600 = vmatmul.mubr.bf16.gmra.mrb[0].mxu0 %v530
        %v601 = vpop.f32.mrb[0].mxu0
        %v602 = vadd.f32 %v452, %v601
        %v603 = vpop.f32.mrb[0].mxu0
        %v604 = vpop.f32.mrb[0].mxu0
        %v605 = vadd.f32 %v455, %v604
        %v606 = vpop.f32.mrb[0].mxu0
        %607 = vmatprep.mubr.bf16.mxu0 0
        %608 = vmatmul.mubr.bf16.gmra.mrb[0].mxu0 %v533
        %v609 = vpop.f32.mrb[0].mxu0
        %v610 = vadd.f32 %v460, %v609
        %v611 = vpop.f32.mrb[0].mxu0
        %v612 = vpop.f32.mrb[0].mxu0
        %v613 = vpop.f32.mrb[0].mxu0
        %614 = vdwg.mxu0
        %vm615 = vsmask.f32 7424
        %v616 = vshrl.u32 %v487, 16
        %v618 = vshll.u32 %v487, 16
        %v620 = vrot.slane %v618, 1
        %v621 = vor.u32 %v616, %v620
        %v622 = vshll.u32 %v488, 16
        %v624 = vrot.slane %v622, 1
        %v625 = vsel %vm615, %v621, %v624
        %v626 = vshrl.u32 %v488, 16
        %v628 = vor.u32 %v626, %v624
        %v629 = vshll.u32 %v489, 16
        %v631 = vrot.slane %v629, 1
        %v632 = vsel %vm615, %v628, %v631
        %v633 = vshrl.u32 %v489, 16
        %v635 = vor.u32 %v633, %v631
        %v636 = vshll.u32 %v490, 16
        %v638 = vrot.slane %v636, 1
        %v639 = vsel %vm615, %v635, %v638
        %v640 = vshrl.u32 %v490, 16
        %v642 = vor.u32 %v640, %v638
        %v643 = vshll.u32 %v491, 16
        %v645 = vrot.slane %v643, 1
        %v646 = vsel %vm615, %v642, %v645
        %v647 = vshrl.u32 %v491, 16
        %v649 = vor.u32 %v647, %v645
        %v650 = vshll.u32 %v492, 16
        %v652 = vrot.slane %v650, 1
        %v653 = vsel %vm615, %v649, %v652
        %v654 = vshrl.u32 %v492, 16
        %v664 = vunpack.c.l.b16 %v258
        %v665 = vunpack.c.l.b16 %v259
        %v666 = vunpack.c.l.b16 %v260
        %v667 = vunpack.c.l.b16 %v261
        %v668 = vunpack.c.l.b16 %v262
        %v669 = vunpack.c.l.b16 %v263
        %v670 = vunpack.c.l.b16 %v264
        %v671 = vunpack.c.l.b16 %v265
        %v672 = vpack.c.b16 %v665, %v664
        %v673 = vpack.c.b16 %v667, %v666
        %v674 = vpack.c.b16 %v669, %v668
        %v675 = vpack.c.b16 %v671, %v670
        %v681 = vsel %vm366, %v625, 0
        %v684 = vsel %vm366, %v632, 0
        %v687 = vsel %vm366, %v639, 0
        %v690 = vsel %vm366, %v646, 0
        %v693 = vsel %vm366, %v653, 0
        %v696 = vsel %vm366, %v654, 0
        %698 = vmatprep.subr.bf16.mxu0 0
        %699 = vmatpush1.bf16.msra.mxu0 %v672
        %700 = vmatprep.subr.bf16.mxu0 0
        %701 = vmatpush1.bf16.msra.mxu0 %v673
        %702 = vmatprep.subr.bf16.mxu0 0
        %703 = vmatpush1.bf16.msra.mxu0 %v674
        %704 = vmatprep.subr.bf16.mxu0 0
        %705 = vmatpush1.bf16.msra.mxu0 %v675
        %706 = vmatprep.subr.bf16.mxu0 0
        %707 = vmatpush1.bf16.msra.mxu0 0
        %708 = vmatprep.subr.bf16.mxu0 0
        %709 = vmatpush1.bf16.msra.mxu0 0
        %710 = vmatprep.subr.bf16.mxu0 0
        %711 = vmatpush1.bf16.msra.mxu0 0
        %712 = vmatprep.subr.bf16.mxu0 0
        %713 = vmatpush1.bf16.msra.mxu0 0
        %714 = vmatprep.subr.bf16.mxu0 0
        %715 = vmatpush1.bf16.msra.mxu0 0
        %716 = vmatprep.subr.bf16.mxu0 0
        %717 = vmatpush1.bf16.msra.mxu0 0
        %718 = vmatprep.subr.bf16.mxu0 0
        %719 = vmatpush1.bf16.msra.mxu0 0
        %720 = vmatprep.subr.bf16.mxu0 0
        %721 = vmatpush1.bf16.msra.mxu0 0
        %722 = vmatprep.subr.bf16.mxu0 0
        %723 = vmatpush1.bf16.msra.mxu0 0
        %724 = vmatprep.subr.bf16.mxu0 0
        %725 = vmatpush1.bf16.msra.mxu0 0
        %726 = vmatprep.subr.bf16.mxu0 0
        %727 = vmatpush1.bf16.msra.mxu0 0
        %728 = vmatprep.subr.bf16.mxu0 0
        %729 = vmatpush1.bf16.msra.mxu0 0
        %730 = vmatprep.mubr.bf16.mxu0 0
        %731 = vmatmul.mubr.bf16.gmra.mrb[0].mxu0 %v681
        %v732 = vpop.f32.mrb[0].mxu0
        %v733 = vadd.f32 0.0, %v732
        %v734 = vpop.f32.mrb[0].mxu0
        %v735 = vpop.f32.mrb[0].mxu0
        %v736 = vadd.f32 0.0, %v735
        %v737 = vpop.f32.mrb[0].mxu0
        %738 = vmatprep.mubr.bf16.mxu0 0
        %739 = vmatmul.mubr.bf16.gmra.mrb[0].mxu0 %v684
        %v740 = vpop.f32.mrb[0].mxu0
        %v741 = vadd.f32 0.0, %v740
        %v742 = vpop.f32.mrb[0].mxu0
        %v743 = vpop.f32.mrb[0].mxu0
        %v744 = vadd.f32 0.0, %v743
        %v745 = vpop.f32.mrb[0].mxu0
        %746 = vmatprep.mubr.bf16.mxu0 0
        %747 = vmatmul.mubr.bf16.gmra.mrb[0].mxu0 %v687
        %v748 = vpop.f32.mrb[0].mxu0
        %v749 = vadd.f32 0.0, %v748
        %v750 = vpop.f32.mrb[0].mxu0
        %v751 = vpop.f32.mrb[0].mxu0
        %v752 = vadd.f32 0.0, %v751
        %v753 = vpop.f32.mrb[0].mxu0
        %754 = vmatprep.mubr.bf16.mxu0 0
        %755 = vmatmul.mubr.bf16.gmra.mrb[0].mxu0 %v690
        %v756 = vpop.f32.mrb[0].mxu0
        %v757 = vadd.f32 0.0, %v756
        %v758 = vpop.f32.mrb[0].mxu0
        %v759 = vpop.f32.mrb[0].mxu0
        %v760 = vadd.f32 0.0, %v759
        %v761 = vpop.f32.mrb[0].mxu0
        %762 = vmatprep.mubr.bf16.mxu0 0
        %763 = vmatmul.mubr.bf16.gmra.mrb[0].mxu0 %v693
        %v764 = vpop.f32.mrb[0].mxu0
        %v765 = vadd.f32 0.0, %v764
        %v766 = vpop.f32.mrb[0].mxu0
        %v767 = vpop.f32.mrb[0].mxu0
        %v768 = vadd.f32 0.0, %v767
        %v769 = vpop.f32.mrb[0].mxu0
        %770 = vmatprep.mubr.bf16.mxu0 0
        %771 = vmatmul.mubr.bf16.gmra.mrb[0].mxu0 %v696
        %v772 = vpop.f32.mrb[0].mxu0
        %v773 = vadd.f32 0.0, %v772
        %v774 = vpop.f32.mrb[0].mxu0
        %v775 = vpop.f32.mrb[0].mxu0
        %v776 = vpop.f32.mrb[0].mxu0
        %777 = vdwg.mxu0
        %v778 = vadd.f32 %v570, %v733
        %v779 = vadd.f32 %v573, %v736
        %v780 = vadd.f32 %v578, %v741
        %v781 = vadd.f32 %v581, %v744
        %v782 = vadd.f32 %v586, %v749
        %v783 = vadd.f32 %v589, %v752
        %v784 = vadd.f32 %v594, %v757
        %v785 = vadd.f32 %v597, %v760
        %v786 = vadd.f32 %v602, %v765
        %v787 = vadd.f32 %v605, %v768
        %v788 = vadd.f32 %v610, %v773
        %v800 = vunpack.c.l.b16 %v220
        %v801 = vunpack.c.l.b16 %v221
        %v802 = vunpack.c.l.b16 %v222
        %v803 = vunpack.c.l.b16 %v223
        %v804 = vunpack.c.l.b16 %v224
        %v805 = vunpack.c.l.b16 %v225
        %v806 = vunpack.c.l.b16 %v226
        %v807 = vunpack.c.l.b16 %v227
        %v808 = vunpack.c.l.b16 %v228
        %v809 = vunpack.c.l.b16 %v229
        %v810 = vunpack.c.l.b16 %v230
        %v811 = vpack.c.b16 %v801, %v800
        %v812 = vpack.c.b16 %v803, %v802
        %v813 = vpack.c.b16 %v805, %v804
        %v814 = vpack.c.b16 %v807, %v806
        %v815 = vpack.c.b16 %v809, %v808
        %v816 = vpack.c.b16 %v810, %v810
        %v825 = vunpack.c.l.b16 %v266
        %v826 = vunpack.c.l.b16 %v267
        %v827 = vunpack.c.l.b16 %v268
        %v828 = vunpack.c.l.b16 %v269
        %v829 = vunpack.c.l.b16 %v270
        %v830 = vunpack.c.l.b16 %v271
        %v831 = vunpack.c.l.b16 %v272
        %v832 = vunpack.c.l.b16 %v273
        %v833 = vpack.c.b16 %v826, %v825
        %v834 = vpack.c.b16 %v828, %v827
        %v835 = vpack.c.b16 %v830, %v829
        %v836 = vpack.c.b16 %v832, %v831
        %v842 = vsel %vm366, %v811, 0
        %v845 = vsel %vm366, %v812, 0
        %v848 = vsel %vm366, %v813, 0
        %v851 = vsel %vm366, %v814, 0
        %v854 = vsel %vm366, %v815, 0
        %v857 = vsel %vm366, %v816, 0
        %859 = vmatprep.subr.bf16.mxu0 0
        %860 = vmatpush1.bf16.msra.mxu0 %v833
        %861 = vmatprep.subr.bf16.mxu0 0
        %862 = vmatpush1.bf16.msra.mxu0 %v834
        %863 = vmatprep.subr.bf16.mxu0 0
        %864 = vmatpush1.bf16.msra.mxu0 %v835
        %865 = vmatprep.subr.bf16.mxu0 0
        %866 = vmatpush1.bf16.msra.mxu0 %v836
        %867 = vmatprep.subr.bf16.mxu0 0
        %868 = vmatpush1.bf16.msra.mxu0 0
        %869 = vmatprep.subr.bf16.mxu0 0
        %870 = vmatpush1.bf16.msra.mxu0 0
        %871 = vmatprep.subr.bf16.mxu0 0
        %872 = vmatpush1.bf16.msra.mxu0 0
        %873 = vmatprep.subr.bf16.mxu0 0
        %874 = vmatpush1.bf16.msra.mxu0 0
        %875 = vmatprep.subr.bf16.mxu0 0
        %876 = vmatpush1.bf16.msra.mxu0 0
        %877 = vmatprep.subr.bf16.mxu0 0
        %878 = vmatpush1.bf16.msra.mxu0 0
        %879 = vmatprep.subr.bf16.mxu0 0
        %880 = vmatpush1.bf16.msra.mxu0 0
        %881 = vmatprep.subr.bf16.mxu0 0
        %882 = vmatpush1.bf16.msra.mxu0 0
        %883 = vmatprep.subr.bf16.mxu0 0
        %884 = vmatpush1.bf16.msra.mxu0 0
        %885 = vmatprep.subr.bf16.mxu0 0
        %886 = vmatpush1.bf16.msra.mxu0 0
        %887 = vmatprep.subr.bf16.mxu0 0
        %888 = vmatpush1.bf16.msra.mxu0 0
        %889 = vmatprep.subr.bf16.mxu0 0
        %890 = vmatpush1.bf16.msra.mxu0 0
        %891 = vmatprep.mubr.bf16.mxu0 0
        %892 = vmatmul.mubr.bf16.gmra.mrb[0].mxu0 %v842
        %v893 = vpop.f32.mrb[0].mxu0
        %v894 = vadd.f32 0.0, %v893
        %v895 = vpop.f32.mrb[0].mxu0
        %v896 = vpop.f32.mrb[0].mxu0
        %v897 = vadd.f32 0.0, %v896
        %v898 = vpop.f32.mrb[0].mxu0
        %899 = vmatprep.mubr.bf16.mxu0 0
        %900 = vmatmul.mubr.bf16.gmra.mrb[0].mxu0 %v845
        %v901 = vpop.f32.mrb[0].mxu0
        %v902 = vadd.f32 0.0, %v901
        %v903 = vpop.f32.mrb[0].mxu0
        %v904 = vpop.f32.mrb[0].mxu0
        %v905 = vadd.f32 0.0, %v904
        %v906 = vpop.f32.mrb[0].mxu0
        %907 = vmatprep.mubr.bf16.mxu0 0
        %908 = vmatmul.mubr.bf16.gmra.mrb[0].mxu0 %v848
        %v909 = vpop.f32.mrb[0].mxu0
        %v910 = vadd.f32 0.0, %v909
        %v911 = vpop.f32.mrb[0].mxu0
        %v912 = vpop.f32.mrb[0].mxu0
        %v913 = vadd.f32 0.0, %v912
        %v914 = vpop.f32.mrb[0].mxu0
        %915 = vmatprep.mubr.bf16.mxu0 0
        %916 = vmatmul.mubr.bf16.gmra.mrb[0].mxu0 %v851
        %v917 = vpop.f32.mrb[0].mxu0
        %v918 = vadd.f32 0.0, %v917
        %v919 = vpop.f32.mrb[0].mxu0
        %v920 = vpop.f32.mrb[0].mxu0
        %v921 = vadd.f32 0.0, %v920
        %v922 = vpop.f32.mrb[0].mxu0
        %923 = vmatprep.mubr.bf16.mxu0 0
        %924 = vmatmul.mubr.bf16.gmra.mrb[0].mxu0 %v854
        %v925 = vpop.f32.mrb[0].mxu0
        %v926 = vadd.f32 0.0, %v925
        %v927 = vpop.f32.mrb[0].mxu0
        %v928 = vpop.f32.mrb[0].mxu0
        %v929 = vadd.f32 0.0, %v928
        %v930 = vpop.f32.mrb[0].mxu0
        %931 = vmatprep.mubr.bf16.mxu0 0
        %932 = vmatmul.mubr.bf16.gmra.mrb[0].mxu0 %v857
        %v933 = vpop.f32.mrb[0].mxu0
        %v934 = vadd.f32 0.0, %v933
        %v935 = vpop.f32.mrb[0].mxu0
        %v936 = vpop.f32.mrb[0].mxu0
        %v937 = vpop.f32.mrb[0].mxu0
        %938 = vdwg.mxu0
        %v939 = vadd.f32 %v778, %v894
        %v940 = vadd.f32 %v779, %v897
        %v941 = vadd.f32 %v780, %v902
        %v942 = vadd.f32 %v781, %v905
        %v943 = vadd.f32 %v782, %v910
        %v944 = vadd.f32 %v783, %v913
        %v945 = vadd.f32 %v784, %v918
        %v946 = vadd.f32 %v785, %v921
        %v947 = vadd.f32 %v786, %v926
        %v948 = vadd.f32 %v787, %v929
        %v949 = vadd.f32 %v788, %v934
        %v961 = vunpack.c.l.b16 %v231
        %v962 = vunpack.c.l.b16 %v232
        %v963 = vunpack.c.l.b16 %v233
        %v964 = vunpack.c.l.b16 %v234
        %v965 = vunpack.c.l.b16 %v235
        %v966 = vunpack.c.l.b16 %v236
        %v967 = vunpack.c.l.b16 %v237
        %v968 = vunpack.c.l.b16 %v238
        %v969 = vunpack.c.l.b16 %v239
        %v970 = vunpack.c.l.b16 %v240
        %v971 = vunpack.c.l.b16 %v241
        %v972 = vpack.c.b16 %v962, %v961
        %v973 = vpack.c.b16 %v964, %v963
        %v974 = vpack.c.b16 %v966, %v965
        %v975 = vpack.c.b16 %v968, %v967
        %v976 = vpack.c.b16 %v970, %v969
        %v977 = vpack.c.b16 %v971, %v971
        %v986 = vunpack.c.l.b16 %v274
        %v987 = vunpack.c.l.b16 %v275
        %v988 = vunpack.c.l.b16 %v276
        %v989 = vunpack.c.l.b16 %v277
        %v990 = vunpack.c.l.b16 %v278
        %v991 = vunpack.c.l.b16 %v279
        %v992 = vunpack.c.l.b16 %v280
        %v993 = vunpack.c.l.b16 %v281
        %v994 = vpack.c.b16 %v987, %v986
        %v995 = vpack.c.b16 %v989, %v988
        %v996 = vpack.c.b16 %v991, %v990
        %v997 = vpack.c.b16 %v993, %v992
        %v1003 = vsel %vm366, %v972, 0
        %v1006 = vsel %vm366, %v973, 0
        %v1009 = vsel %vm366, %v974, 0
        %v1012 = vsel %vm366, %v975, 0
        %v1015 = vsel %vm366, %v976, 0
        %v1018 = vsel %vm366, %v977, 0
        %1020 = vmatprep.subr.bf16.mxu0 0
        %1021 = vmatpush1.bf16.msra.mxu0 %v994
        %1022 = vmatprep.subr.bf16.mxu0 0
        %1023 = vmatpush1.bf16.msra.mxu0 %v995
        %1024 = vmatprep.subr.bf16.mxu0 0
        %1025 = vmatpush1.bf16.msra.mxu0 %v996
        %1026 = vmatprep.subr.bf16.mxu0 0
        %1027 = vmatpush1.bf16.msra.mxu0 %v997
        %1028 = vmatprep.subr.bf16.mxu0 0
        %1029 = vmatpush1.bf16.msra.mxu0 0
        %1030 = vmatprep.subr.bf16.mxu0 0
        %1031 = vmatpush1.bf16.msra.mxu0 0
        %1032 = vmatprep.subr.bf16.mxu0 0
        %1033 = vmatpush1.bf16.msra.mxu0 0
        %1034 = vmatprep.subr.bf16.mxu0 0
        %1035 = vmatpush1.bf16.msra.mxu0 0
        %1036 = vmatprep.subr.bf16.mxu0 0
        %1037 = vmatpush1.bf16.msra.mxu0 0
        %1038 = vmatprep.subr.bf16.mxu0 0
        %1039 = vmatpush1.bf16.msra.mxu0 0
        %1040 = vmatprep.subr.bf16.mxu0 0
        %1041 = vmatpush1.bf16.msra.mxu0 0
        %1042 = vmatprep.subr.bf16.mxu0 0
        %1043 = vmatpush1.bf16.msra.mxu0 0
        %1044 = vmatprep.subr.bf16.mxu0 0
        %1045 = vmatpush1.bf16.msra.mxu0 0
        %1046 = vmatprep.subr.bf16.mxu0 0
        %1047 = vmatpush1.bf16.msra.mxu0 0
        %1048 = vmatprep.subr.bf16.mxu0 0
        %1049 = vmatpush1.bf16.msra.mxu0 0
        %1050 = vmatprep.subr.bf16.mxu0 0
        %1051 = vmatpush1.bf16.msra.mxu0 0
        %1052 = vmatprep.mubr.bf16.mxu0 0
        %1053 = vmatmul.mubr.bf16.gmra.mrb[0].mxu0 %v1003
        %v1054 = vpop.f32.mrb[0].mxu0
        %v1055 = vadd.f32 0.0, %v1054
        %v1056 = vpop.f32.mrb[0].mxu0
        %v1057 = vpop.f32.mrb[0].mxu0
        %v1058 = vadd.f32 0.0, %v1057
        %v1059 = vpop.f32.mrb[0].mxu0
        %1060 = vmatprep.mubr.bf16.mxu0 0
        %1061 = vmatmul.mubr.bf16.gmra.mrb[0].mxu0 %v1006
        %v1062 = vpop.f32.mrb[0].mxu0
        %v1063 = vadd.f32 0.0, %v1062
        %v1064 = vpop.f32.mrb[0].mxu0
        %v1065 = vpop.f32.mrb[0].mxu0
        %v1066 = vadd.f32 0.0, %v1065
        %v1067 = vpop.f32.mrb[0].mxu0
        %1068 = vmatprep.mubr.bf16.mxu0 0
        %1069 = vmatmul.mubr.bf16.gmra.mrb[0].mxu0 %v1009
        %v1070 = vpop.f32.mrb[0].mxu0
        %v1071 = vadd.f32 0.0, %v1070
        %v1072 = vpop.f32.mrb[0].mxu0
        %v1073 = vpop.f32.mrb[0].mxu0
        %v1074 = vadd.f32 0.0, %v1073
        %v1075 = vpop.f32.mrb[0].mxu0
        %1076 = vmatprep.mubr.bf16.mxu0 0
        %1077 = vmatmul.mubr.bf16.gmra.mrb[0].mxu0 %v1012
        %v1078 = vpop.f32.mrb[0].mxu0
        %v1079 = vadd.f32 0.0, %v1078
        %v1080 = vpop.f32.mrb[0].mxu0
        %v1081 = vpop.f32.mrb[0].mxu0
        %v1082 = vadd.f32 0.0, %v1081
        %v1083 = vpop.f32.mrb[0].mxu0
        %1084 = vmatprep.mubr.bf16.mxu0 0
        %1085 = vmatmul.mubr.bf16.gmra.mrb[0].mxu0 %v1015
        %v1086 = vpop.f32.mrb[0].mxu0
        %v1087 = vadd.f32 0.0, %v1086
        %v1088 = vpop.f32.mrb[0].mxu0
        %v1089 = vpop.f32.mrb[0].mxu0
        %v1090 = vadd.f32 0.0, %v1089
        %v1091 = vpop.f32.mrb[0].mxu0
        %1092 = vmatprep.mubr.bf16.mxu0 0
        %1093 = vmatmul.mubr.bf16.gmra.mrb[0].mxu0 %v1018
        %v1094 = vpop.f32.mrb[0].mxu0
        %v1095 = vadd.f32 0.0, %v1094
        %v1096 = vpop.f32.mrb[0].mxu0
        %v1097 = vpop.f32.mrb[0].mxu0
        %v1098 = vpop.f32.mrb[0].mxu0
        %1099 = vdwg.mxu0
        %v1100 = vadd.f32 %v939, %v1055
        %v1101 = vadd.f32 %v940, %v1058
        %v1102 = vadd.f32 %v941, %v1063
        %v1103 = vadd.f32 %v942, %v1066
        %v1104 = vadd.f32 %v943, %v1071
        %v1105 = vadd.f32 %v944, %v1074
        %v1106 = vadd.f32 %v945, %v1079
        %v1107 = vadd.f32 %v946, %v1082
        %v1108 = vadd.f32 %v947, %v1087
        %v1109 = vadd.f32 %v948, %v1090
        %v1110 = vadd.f32 %v949, %v1095
        %v1111 = vshrl.u32 %v811, 16
        %v1113 = vshll.u32 %v811, 16
        %v1115 = vrot.slane %v1113, 1
        %v1116 = vor.u32 %v1111, %v1115
        %v1117 = vshll.u32 %v812, 16
        %v1119 = vrot.slane %v1117, 1
        %v1120 = vsel %vm615, %v1116, %v1119
        %v1121 = vshrl.u32 %v812, 16
        %v1123 = vor.u32 %v1121, %v1119
        %v1124 = vshll.u32 %v813, 16
        %v1126 = vrot.slane %v1124, 1
        %v1127 = vsel %vm615, %v1123, %v1126
        %v1128 = vshrl.u32 %v813, 16
        %v1130 = vor.u32 %v1128, %v1126
        %v1131 = vshll.u32 %v814, 16
        %v1133 = vrot.slane %v1131, 1
        %v1134 = vsel %vm615, %v1130, %v1133
        %v1135 = vshrl.u32 %v814, 16
        %v1137 = vor.u32 %v1135, %v1133
        %v1138 = vshll.u32 %v815, 16
        %v1140 = vrot.slane %v1138, 1
        %v1141 = vsel %vm615, %v1137, %v1140
        %v1142 = vshrl.u32 %v815, 16
        %v1144 = vor.u32 %v1142, %v1140
        %v1145 = vshll.u32 %v816, 16
        %v1147 = vrot.slane %v1145, 1
        %v1148 = vsel %vm615, %v1144, %v1147
        %v1149 = vshrl.u32 %v816, 16
        %v1159 = vunpack.c.l.b16 %v282
        %v1160 = vunpack.c.l.b16 %v283
        %v1161 = vunpack.c.l.b16 %v284
        %v1162 = vunpack.c.l.b16 %v285
        %v1163 = vunpack.c.l.b16 %v286
        %v1164 = vunpack.c.l.b16 %v287
        %v1165 = vunpack.c.l.b16 %v288
        %v1166 = vunpack.c.l.b16 %v289
        %v1167 = vpack.c.b16 %v1160, %v1159
        %v1168 = vpack.c.b16 %v1162, %v1161
        %v1169 = vpack.c.b16 %v1164, %v1163
        %v1170 = vpack.c.b16 %v1166, %v1165
        %v1176 = vsel %vm366, %v1120, 0
        %v1179 = vsel %vm366, %v1127, 0
        %v1182 = vsel %vm366, %v1134, 0
        %v1185 = vsel %vm366, %v1141, 0
        %v1188 = vsel %vm366, %v1148, 0
        %v1191 = vsel %vm366, %v1149, 0
        %1193 = vmatprep.subr.bf16.mxu0 0
        %1194 = vmatpush1.bf16.msra.mxu0 %v1167
        %1195 = vmatprep.subr.bf16.mxu0 0
        %1196 = vmatpush1.bf16.msra.mxu0 %v1168
        %1197 = vmatprep.subr.bf16.mxu0 0
        %1198 = vmatpush1.bf16.msra.mxu0 %v1169
        %1199 = vmatprep.subr.bf16.mxu0 0
        %1200 = vmatpush1.bf16.msra.mxu0 %v1170
        %1201 = vmatprep.subr.bf16.mxu0 0
        %1202 = vmatpush1.bf16.msra.mxu0 0
        %1203 = vmatprep.subr.bf16.mxu0 0
        %1204 = vmatpush1.bf16.msra.mxu0 0
        %1205 = vmatprep.subr.bf16.mxu0 0
        %1206 = vmatpush1.bf16.msra.mxu0 0
        %1207 = vmatprep.subr.bf16.mxu0 0
        %1208 = vmatpush1.bf16.msra.mxu0 0
        %1209 = vmatprep.subr.bf16.mxu0 0
        %1210 = vmatpush1.bf16.msra.mxu0 0
        %1211 = vmatprep.subr.bf16.mxu0 0
        %1212 = vmatpush1.bf16.msra.mxu0 0
        %1213 = vmatprep.subr.bf16.mxu0 0
        %1214 = vmatpush1.bf16.msra.mxu0 0
        %1215 = vmatprep.subr.bf16.mxu0 0
        %1216 = vmatpush1.bf16.msra.mxu0 0
        %1217 = vmatprep.subr.bf16.mxu0 0
        %1218 = vmatpush1.bf16.msra.mxu0 0
        %1219 = vmatprep.subr.bf16.mxu0 0
        %1220 = vmatpush1.bf16.msra.mxu0 0
        %1221 = vmatprep.subr.bf16.mxu0 0
        %1222 = vmatpush1.bf16.msra.mxu0 0
        %1223 = vmatprep.subr.bf16.mxu0 0
        %1224 = vmatpush1.bf16.msra.mxu0 0
        %1225 = vmatprep.mubr.bf16.mxu0 0
        %1226 = vmatmul.mubr.bf16.gmra.mrb[0].mxu0 %v1176
        %v1227 = vpop.f32.mrb[0].mxu0
        %v1228 = vadd.f32 0.0, %v1227
        %v1229 = vpop.f32.mrb[0].mxu0
        %v1230 = vpop.f32.mrb[0].mxu0
        %v1231 = vadd.f32 0.0, %v1230
        %v1232 = vpop.f32.mrb[0].mxu0
        %1233 = vmatprep.mubr.bf16.mxu0 0
        %1234 = vmatmul.mubr.bf16.gmra.mrb[0].mxu0 %v1179
        %v1235 = vpop.f32.mrb[0].mxu0
        %v1236 = vadd.f32 0.0, %v1235
        %v1237 = vpop.f32.mrb[0].mxu0
        %v1238 = vpop.f32.mrb[0].mxu0
        %v1239 = vadd.f32 0.0, %v1238
        %v1240 = vpop.f32.mrb[0].mxu0
        %1241 = vmatprep.mubr.bf16.mxu0 0
        %1242 = vmatmul.mubr.bf16.gmra.mrb[0].mxu0 %v1182
        %v1243 = vpop.f32.mrb[0].mxu0
        %v1244 = vadd.f32 0.0, %v1243
        %v1245 = vpop.f32.mrb[0].mxu0
        %v1246 = vpop.f32.mrb[0].mxu0
        %v1247 = vadd.f32 0.0, %v1246
        %v1248 = vpop.f32.mrb[0].mxu0
        %1249 = vmatprep.mubr.bf16.mxu0 0
        %1250 = vmatmul.mubr.bf16.gmra.mrb[0].mxu0 %v1185
        %v1251 = vpop.f32.mrb[0].mxu0
        %v1252 = vadd.f32 0.0, %v1251
        %v1253 = vpop.f32.mrb[0].mxu0
        %v1254 = vpop.f32.mrb[0].mxu0
        %v1255 = vadd.f32 0.0, %v1254
        %v1256 = vpop.f32.mrb[0].mxu0
        %1257 = vmatprep.mubr.bf16.mxu0 0
        %1258 = vmatmul.mubr.bf16.gmra.mrb[0].mxu0 %v1188
        %v1259 = vpop.f32.mrb[0].mxu0
        %v1260 = vadd.f32 0.0, %v1259
        %v1261 = vpop.f32.mrb[0].mxu0
        %v1262 = vpop.f32.mrb[0].mxu0
        %v1263 = vadd.f32 0.0, %v1262
        %v1264 = vpop.f32.mrb[0].mxu0
        %1265 = vmatprep.mubr.bf16.mxu0 0
        %1266 = vmatmul.mubr.bf16.gmra.mrb[0].mxu0 %v1191
        %v1267 = vpop.f32.mrb[0].mxu0
        %v1268 = vadd.f32 0.0, %v1267
        %v1269 = vpop.f32.mrb[0].mxu0
        %v1270 = vpop.f32.mrb[0].mxu0
        %v1271 = vpop.f32.mrb[0].mxu0
        %1272 = vdwg.mxu0
        %v1273 = vadd.f32 %v1100, %v1228
        %v1274 = vadd.f32 %v1101, %v1231
        %v1275 = vadd.f32 %v1102, %v1236
        %v1276 = vadd.f32 %v1103, %v1239
        %v1277 = vadd.f32 %v1104, %v1244
        %v1278 = vadd.f32 %v1105, %v1247
        %v1279 = vadd.f32 %v1106, %v1252
        %v1280 = vadd.f32 %v1107, %v1255
        %v1281 = vadd.f32 %v1108, %v1260
        %v1282 = vadd.f32 %v1109, %v1263
        %v1283 = vadd.f32 %v1110, %v1268
        %v1285 = vunpack.c.l.b16 %v207
        %v1286 = vpack.c.b16 %v478, %v477
        %v1287 = vpack.c.b16 %v480, %v479
        %v1288 = vpack.c.b16 %v482, %v481
        %v1289 = vpack.c.b16 %v484, %v483
        %v1290 = vpack.c.b16 %v486, %v485
        %v1291 = vpack.c.b16 %v1285, %v1285
        %v1293 = vshrl.u32 %v1286, 16
        %v1295 = vshll.u32 %v1286, 16
        %v1297 = vrot.slane %v1295, 1
        %v1298 = vor.u32 %v1293, %v1297
        %v1300 = vshll.u32 %v1287, 16
        %v1302 = vrot.slane %v1300, 1
        %v1303 = vsel %vm615, %v1298, %v1302
        %v1304 = vshrl.u32 %v1287, 16
        %v1306 = vor.u32 %v1304, %v1302
        %v1308 = vshll.u32 %v1288, 16
        %v1310 = vrot.slane %v1308, 1
        %v1311 = vsel %vm615, %v1306, %v1310
        %v1312 = vshrl.u32 %v1288, 16
        %v1314 = vor.u32 %v1312, %v1310
        %v1316 = vshll.u32 %v1289, 16
        %v1318 = vrot.slane %v1316, 1
        %v1319 = vsel %vm615, %v1314, %v1318
        %v1320 = vshrl.u32 %v1289, 16
        %v1322 = vor.u32 %v1320, %v1318
        %v1324 = vshll.u32 %v1290, 16
        %v1326 = vrot.slane %v1324, 1
        %v1327 = vsel %vm615, %v1322, %v1326
        %v1328 = vshrl.u32 %v1290, 16
        %v1330 = vor.u32 %v1328, %v1326
        %v1332 = vshll.u32 %v1291, 16
        %v1334 = vrot.slane %v1332, 1
        %v1335 = vsel %vm615, %v1330, %v1334
        %v1336 = vshrl.u32 %v1291, 16
        %v1346 = vunpack.c.l.b16 %v290
        %v1347 = vunpack.c.l.b16 %v291
        %v1348 = vunpack.c.l.b16 %v292
        %v1349 = vunpack.c.l.b16 %v293
        %v1350 = vunpack.c.l.b16 %v294
        %v1351 = vunpack.c.l.b16 %v295
        %v1352 = vunpack.c.l.b16 %v296
        %v1353 = vunpack.c.l.b16 %v297
        %v1354 = vpack.c.b16 %v1347, %v1346
        %v1355 = vpack.c.b16 %v1349, %v1348
        %v1356 = vpack.c.b16 %v1351, %v1350
        %v1357 = vpack.c.b16 %v1353, %v1352
        %v1363 = vsel %vm366, %v1303, 0
        %v1366 = vsel %vm366, %v1311, 0
        %v1369 = vsel %vm366, %v1319, 0
        %v1372 = vsel %vm366, %v1327, 0
        %v1375 = vsel %vm366, %v1335, 0
        %v1378 = vsel %vm366, %v1336, 0
        %1380 = vmatprep.subr.bf16.mxu0 0
        %1381 = vmatpush1.bf16.msra.mxu0 %v1354
        %1382 = vmatprep.subr.bf16.mxu0 0
        %1383 = vmatpush1.bf16.msra.mxu0 %v1355
        %1384 = vmatprep.subr.bf16.mxu0 0
        %1385 = vmatpush1.bf16.msra.mxu0 %v1356
        %1386 = vmatprep.subr.bf16.mxu0 0
        %1387 = vmatpush1.bf16.msra.mxu0 %v1357
        %1388 = vmatprep.subr.bf16.mxu0 0
        %1389 = vmatpush1.bf16.msra.mxu0 0
        %1390 = vmatprep.subr.bf16.mxu0 0
        %1391 = vmatpush1.bf16.msra.mxu0 0
        %1392 = vmatprep.subr.bf16.mxu0 0
        %1393 = vmatpush1.bf16.msra.mxu0 0
        %1394 = vmatprep.subr.bf16.mxu0 0
        %1395 = vmatpush1.bf16.msra.mxu0 0
        %1396 = vmatprep.subr.bf16.mxu0 0
        %1397 = vmatpush1.bf16.msra.mxu0 0
        %1398 = vmatprep.subr.bf16.mxu0 0
        %1399 = vmatpush1.bf16.msra.mxu0 0
        %1400 = vmatprep.subr.bf16.mxu0 0
        %1401 = vmatpush1.bf16.msra.mxu0 0
        %1402 = vmatprep.subr.bf16.mxu0 0
        %1403 = vmatpush1.bf16.msra.mxu0 0
        %1404 = vmatprep.subr.bf16.mxu0 0
        %1405 = vmatpush1.bf16.msra.mxu0 0
        %1406 = vmatprep.subr.bf16.mxu0 0
        %1407 = vmatpush1.bf16.msra.mxu0 0
        %1408 = vmatprep.subr.bf16.mxu0 0
        %1409 = vmatpush1.bf16.msra.mxu0 0
        %1410 = vmatprep.subr.bf16.mxu0 0
        %1411 = vmatpush1.bf16.msra.mxu0 0
        %1412 = vmatprep.mubr.bf16.mxu0 0
        %1413 = vmatmul.mubr.bf16.gmra.mrb[0].mxu0 %v1363
        %v1414 = vpop.f32.mrb[0].mxu0
        %v1415 = vadd.f32 0.0, %v1414
        %v1416 = vpop.f32.mrb[0].mxu0
        %v1417 = vpop.f32.mrb[0].mxu0
        %v1418 = vadd.f32 0.0, %v1417
        %v1419 = vpop.f32.mrb[0].mxu0
        %1420 = vmatprep.mubr.bf16.mxu0 0
        %1421 = vmatmul.mubr.bf16.gmra.mrb[0].mxu0 %v1366
        %v1422 = vpop.f32.mrb[0].mxu0
        %v1423 = vadd.f32 0.0, %v1422
        %v1424 = vpop.f32.mrb[0].mxu0
        %v1425 = vpop.f32.mrb[0].mxu0
        %v1426 = vadd.f32 0.0, %v1425
        %v1427 = vpop.f32.mrb[0].mxu0
        %1428 = vmatprep.mubr.bf16.mxu0 0
        %1429 = vmatmul.mubr.bf16.gmra.mrb[0].mxu0 %v1369
        %v1430 = vpop.f32.mrb[0].mxu0
        %v1431 = vadd.f32 0.0, %v1430
        %v1432 = vpop.f32.mrb[0].mxu0
        %v1433 = vpop.f32.mrb[0].mxu0
        %v1434 = vadd.f32 0.0, %v1433
        %v1435 = vpop.f32.mrb[0].mxu0
        %1436 = vmatprep.mubr.bf16.mxu0 0
        %1437 = vmatmul.mubr.bf16.gmra.mrb[0].mxu0 %v1372
        %v1438 = vpop.f32.mrb[0].mxu0
        %v1439 = vadd.f32 0.0, %v1438
        %v1440 = vpop.f32.mrb[0].mxu0
        %v1441 = vpop.f32.mrb[0].mxu0
        %v1442 = vadd.f32 0.0, %v1441
        %v1443 = vpop.f32.mrb[0].mxu0
        %1444 = vmatprep.mubr.bf16.mxu0 0
        %1445 = vmatmul.mubr.bf16.gmra.mrb[0].mxu0 %v1375
        %v1446 = vpop.f32.mrb[0].mxu0
        %v1447 = vadd.f32 0.0, %v1446
        %v1448 = vpop.f32.mrb[0].mxu0
        %v1449 = vpop.f32.mrb[0].mxu0
        %v1450 = vadd.f32 0.0, %v1449
        %v1451 = vpop.f32.mrb[0].mxu0
        %1452 = vmatprep.mubr.bf16.mxu0 0
        %1453 = vmatmul.mubr.bf16.gmra.mrb[0].mxu0 %v1378
        %v1454 = vpop.f32.mrb[0].mxu0
        %v1455 = vadd.f32 0.0, %v1454
        %v1456 = vpop.f32.mrb[0].mxu0
        %v1457 = vpop.f32.mrb[0].mxu0
        %v1458 = vpop.f32.mrb[0].mxu0
        %1459 = vdwg.mxu0
        %v1460 = vadd.f32 %v1273, %v1415
        %v1461 = vadd.f32 %v1274, %v1418
        %v1462 = vadd.f32 %v1275, %v1423
        %v1463 = vadd.f32 %v1276, %v1426
        %v1464 = vadd.f32 %v1277, %v1431
        %v1465 = vadd.f32 %v1278, %v1434
        %v1466 = vadd.f32 %v1279, %v1439
        %v1467 = vadd.f32 %v1280, %v1442
        %v1468 = vadd.f32 %v1281, %v1447
        %v1469 = vadd.f32 %v1282, %v1450
        %v1470 = vadd.f32 %v1283, %v1455
        %v1472 = vunpack.c.l.b16 %v219
        %v1473 = vpack.c.b16 %v327, %v326
        %v1474 = vpack.c.b16 %v329, %v328
        %v1475 = vpack.c.b16 %v331, %v330
        %v1476 = vpack.c.b16 %v333, %v332
        %v1477 = vpack.c.b16 %v335, %v334
        %v1478 = vpack.c.b16 %v1472, %v1472
        %v1480 = vshrl.u32 %v1473, 16
        %v1482 = vshll.u32 %v1473, 16
        %v1484 = vrot.slane %v1482, 1
        %v1485 = vor.u32 %v1480, %v1484
        %v1487 = vshll.u32 %v1474, 16
        %v1489 = vrot.slane %v1487, 1
        %v1490 = vsel %vm615, %v1485, %v1489
        %v1491 = vshrl.u32 %v1474, 16
        %v1493 = vor.u32 %v1491, %v1489
        %v1495 = vshll.u32 %v1475, 16
        %v1497 = vrot.slane %v1495, 1
        %v1498 = vsel %vm615, %v1493, %v1497
        %v1499 = vshrl.u32 %v1475, 16
        %v1501 = vor.u32 %v1499, %v1497
        %v1503 = vshll.u32 %v1476, 16
        %v1505 = vrot.slane %v1503, 1
        %v1506 = vsel %vm615, %v1501, %v1505
        %v1507 = vshrl.u32 %v1476, 16
        %v1509 = vor.u32 %v1507, %v1505
        %v1511 = vshll.u32 %v1477, 16
        %v1513 = vrot.slane %v1511, 1
        %v1514 = vsel %vm615, %v1509, %v1513
        %v1515 = vshrl.u32 %v1477, 16
        %v1517 = vor.u32 %v1515, %v1513
        %v1519 = vshll.u32 %v1478, 16
        %v1521 = vrot.slane %v1519, 1
        %v1522 = vsel %vm615, %v1517, %v1521
        %v1523 = vshrl.u32 %v1478, 16
        %v1533 = vunpack.c.l.b16 %v298
        %v1534 = vunpack.c.l.b16 %v299
        %v1535 = vunpack.c.l.b16 %v300
        %v1536 = vunpack.c.l.b16 %v301
        %v1537 = vunpack.c.l.b16 %v302
        %v1538 = vunpack.c.l.b16 %v303
        %v1539 = vunpack.c.l.b16 %v304
        %v1540 = vunpack.c.l.b16 %v305
        %v1541 = vpack.c.b16 %v1534, %v1533
        %v1542 = vpack.c.b16 %v1536, %v1535
        %v1543 = vpack.c.b16 %v1538, %v1537
        %v1544 = vpack.c.b16 %v1540, %v1539
        %v1550 = vsel %vm366, %v1490, 0
        %v1553 = vsel %vm366, %v1498, 0
        %v1556 = vsel %vm366, %v1506, 0
        %v1559 = vsel %vm366, %v1514, 0
        %v1562 = vsel %vm366, %v1522, 0
        %v1565 = vsel %vm366, %v1523, 0
        %1567 = vmatprep.subr.bf16.mxu0 0
        %1568 = vmatpush1.bf16.msra.mxu0 %v1541
        %1569 = vmatprep.subr.bf16.mxu0 0
        %1570 = vmatpush1.bf16.msra.mxu0 %v1542
        %1571 = vmatprep.subr.bf16.mxu0 0
        %1572 = vmatpush1.bf16.msra.mxu0 %v1543
        %1573 = vmatprep.subr.bf16.mxu0 0
        %1574 = vmatpush1.bf16.msra.mxu0 %v1544
        %1575 = vmatprep.subr.bf16.mxu0 0
        %1576 = vmatpush1.bf16.msra.mxu0 0
        %1577 = vmatprep.subr.bf16.mxu0 0
        %1578 = vmatpush1.bf16.msra.mxu0 0
        %1579 = vmatprep.subr.bf16.mxu0 0
        %1580 = vmatpush1.bf16.msra.mxu0 0
        %1581 = vmatprep.subr.bf16.mxu0 0
        %1582 = vmatpush1.bf16.msra.mxu0 0
        %1583 = vmatprep.subr.bf16.mxu0 0
        %1584 = vmatpush1.bf16.msra.mxu0 0
        %1585 = vmatprep.subr.bf16.mxu0 0
        %1586 = vmatpush1.bf16.msra.mxu0 0
        %1587 = vmatprep.subr.bf16.mxu0 0
        %1588 = vmatpush1.bf16.msra.mxu0 0
        %1589 = vmatprep.subr.bf16.mxu0 0
        %1590 = vmatpush1.bf16.msra.mxu0 0
        %1591 = vmatprep.subr.bf16.mxu0 0
        %1592 = vmatpush1.bf16.msra.mxu0 0
        %1593 = vmatprep.subr.bf16.mxu0 0
        %1594 = vmatpush1.bf16.msra.mxu0 0
        %1595 = vmatprep.subr.bf16.mxu0 0
        %1596 = vmatpush1.bf16.msra.mxu0 0
        %1597 = vmatprep.subr.bf16.mxu0 0
        %1598 = vmatpush1.bf16.msra.mxu0 0
        %1599 = vmatprep.mubr.bf16.mxu0 0
        %1600 = vmatmul.mubr.bf16.gmra.mrb[0].mxu0 %v1550
        %v1601 = vpop.f32.mrb[0].mxu0
        %v1602 = vadd.f32 0.0, %v1601
        %v1603 = vpop.f32.mrb[0].mxu0
        %v1604 = vpop.f32.mrb[0].mxu0
        %v1605 = vadd.f32 0.0, %v1604
        %v1606 = vpop.f32.mrb[0].mxu0
        %1607 = vmatprep.mubr.bf16.mxu0 0
        %1608 = vmatmul.mubr.bf16.gmra.mrb[0].mxu0 %v1553
        %v1609 = vpop.f32.mrb[0].mxu0
        %v1610 = vadd.f32 0.0, %v1609
        %v1611 = vpop.f32.mrb[0].mxu0
        %v1612 = vpop.f32.mrb[0].mxu0
        %v1613 = vadd.f32 0.0, %v1612
        %v1614 = vpop.f32.mrb[0].mxu0
        %1615 = vmatprep.mubr.bf16.mxu0 0
        %1616 = vmatmul.mubr.bf16.gmra.mrb[0].mxu0 %v1556
        %v1617 = vpop.f32.mrb[0].mxu0
        %v1618 = vadd.f32 0.0, %v1617
        %v1619 = vpop.f32.mrb[0].mxu0
        %v1620 = vpop.f32.mrb[0].mxu0
        %v1621 = vadd.f32 0.0, %v1620
        %v1622 = vpop.f32.mrb[0].mxu0
        %1623 = vmatprep.mubr.bf16.mxu0 0
        %1624 = vmatmul.mubr.bf16.gmra.mrb[0].mxu0 %v1559
        %v1625 = vpop.f32.mrb[0].mxu0
        %v1626 = vadd.f32 0.0, %v1625
        %v1627 = vpop.f32.mrb[0].mxu0
        %v1628 = vpop.f32.mrb[0].mxu0
        %v1629 = vadd.f32 0.0, %v1628
        %v1630 = vpop.f32.mrb[0].mxu0
        %1631 = vmatprep.mubr.bf16.mxu0 0
        %1632 = vmatmul.mubr.bf16.gmra.mrb[0].mxu0 %v1562
        %v1633 = vpop.f32.mrb[0].mxu0
        %v1634 = vadd.f32 0.0, %v1633
        %v1635 = vpop.f32.mrb[0].mxu0
        %v1636 = vpop.f32.mrb[0].mxu0
        %v1637 = vadd.f32 0.0, %v1636
        %v1638 = vpop.f32.mrb[0].mxu0
        %1639 = vmatprep.mubr.bf16.mxu0 0
        %1640 = vmatmul.mubr.bf16.gmra.mrb[0].mxu0 %v1565
        %v1641 = vpop.f32.mrb[0].mxu0
        %v1642 = vadd.f32 0.0, %v1641
        %v1643 = vpop.f32.mrb[0].mxu0
        %v1644 = vpop.f32.mrb[0].mxu0
        %v1645 = vpop.f32.mrb[0].mxu0
        %1646 = vdwg.mxu0
        %v1647 = vadd.f32 %v1460, %v1602
        %v1648 = vadd.f32 %v1461, %v1605
        %v1649 = vadd.f32 %v1462, %v1610
        %v1650 = vadd.f32 %v1463, %v1613
        %v1651 = vadd.f32 %v1464, %v1618
        %v1652 = vadd.f32 %v1465, %v1621
        %v1653 = vadd.f32 %v1466, %v1626
        %v1654 = vadd.f32 %v1467, %v1629
        %v1655 = vadd.f32 %v1468, %v1634
        %v1656 = vadd.f32 %v1469, %v1637
        %v1657 = vadd.f32 %v1470, %v1642
        %vm1658 = vcmask 1046528
        %v1659 = vrot.slane %v1286, 1
        %v1660 = vrot.slane %v1287, 1
        %v1661 = vsel %vm1658, %v1659, %v1660
        %v1662 = vrot.slane %v1288, 1
        %v1663 = vsel %vm1658, %v1660, %v1662
        %v1664 = vrot.slane %v1289, 1
        %v1665 = vsel %vm1658, %v1662, %v1664
        %v1666 = vrot.slane %v1290, 1
        %v1667 = vsel %vm1658, %v1664, %v1666
        %v1668 = vrot.slane %v1291, 1
        %v1669 = vsel %vm1658, %v1666, %v1668
        %v1678 = vunpack.c.l.b16 %v306
        %v1679 = vunpack.c.l.b16 %v307
        %v1680 = vunpack.c.l.b16 %v308
        %v1681 = vunpack.c.l.b16 %v309
        %v1682 = vunpack.c.l.b16 %v310
        %v1683 = vunpack.c.l.b16 %v311
        %v1684 = vunpack.c.l.b16 %v312
        %v1685 = vunpack.c.l.b16 %v313
        %v1686 = vpack.c.b16 %v1679, %v1678
        %v1687 = vpack.c.b16 %v1681, %v1680
        %v1688 = vpack.c.b16 %v1683, %v1682
        %v1689 = vpack.c.b16 %v1685, %v1684
        %v1695 = vsel %vm366, %v1661, 0
        %v1698 = vsel %vm366, %v1663, 0
        %v1701 = vsel %vm366, %v1665, 0
        %v1704 = vsel %vm366, %v1667, 0
        %v1707 = vsel %vm366, %v1669, 0
        %v1710 = vsel %vm366, %v1668, 0
        %1712 = vmatprep.subr.bf16.mxu0 0
        %1713 = vmatpush1.bf16.msra.mxu0 %v1686
        %1714 = vmatprep.subr.bf16.mxu0 0
        %1715 = vmatpush1.bf16.msra.mxu0 %v1687
        %1716 = vmatprep.subr.bf16.mxu0 0
        %1717 = vmatpush1.bf16.msra.mxu0 %v1688
        %1718 = vmatprep.subr.bf16.mxu0 0
        %1719 = vmatpush1.bf16.msra.mxu0 %v1689
        %1720 = vmatprep.subr.bf16.mxu0 0
        %1721 = vmatpush1.bf16.msra.mxu0 0
        %1722 = vmatprep.subr.bf16.mxu0 0
        %1723 = vmatpush1.bf16.msra.mxu0 0
        %1724 = vmatprep.subr.bf16.mxu0 0
        %1725 = vmatpush1.bf16.msra.mxu0 0
        %1726 = vmatprep.subr.bf16.mxu0 0
        %1727 = vmatpush1.bf16.msra.mxu0 0
        %1728 = vmatprep.subr.bf16.mxu0 0
        %1729 = vmatpush1.bf16.msra.mxu0 0
        %1730 = vmatprep.subr.bf16.mxu0 0
        %1731 = vmatpush1.bf16.msra.mxu0 0
        %1732 = vmatprep.subr.bf16.mxu0 0
        %1733 = vmatpush1.bf16.msra.mxu0 0
        %1734 = vmatprep.subr.bf16.mxu0 0
        %1735 = vmatpush1.bf16.msra.mxu0 0
        %1736 = vmatprep.subr.bf16.mxu0 0
        %1737 = vmatpush1.bf16.msra.mxu0 0
        %1738 = vmatprep.subr.bf16.mxu0 0
        %1739 = vmatpush1.bf16.msra.mxu0 0
        %1740 = vmatprep.subr.bf16.mxu0 0
        %1741 = vmatpush1.bf16.msra.mxu0 0
        %1742 = vmatprep.subr.bf16.mxu0 0
        %1743 = vmatpush1.bf16.msra.mxu0 0
        %1744 = vmatprep.mubr.bf16.mxu0 0
        %1745 = vmatmul.mubr.bf16.gmra.mrb[0].mxu0 %v1695
        %v1746 = vpop.f32.mrb[0].mxu0
        %v1747 = vadd.f32 0.0, %v1746
        %v1748 = vpop.f32.mrb[0].mxu0
        %v1749 = vpop.f32.mrb[0].mxu0
        %v1750 = vadd.f32 0.0, %v1749
        %v1751 = vpop.f32.mrb[0].mxu0
        %1752 = vmatprep.mubr.bf16.mxu0 0
        %1753 = vmatmul.mubr.bf16.gmra.mrb[0].mxu0 %v1698
        %v1754 = vpop.f32.mrb[0].mxu0
        %v1755 = vadd.f32 0.0, %v1754
        %v1756 = vpop.f32.mrb[0].mxu0
        %v1757 = vpop.f32.mrb[0].mxu0
        %v1758 = vadd.f32 0.0, %v1757
        %v1759 = vpop.f32.mrb[0].mxu0
        %1760 = vmatprep.mubr.bf16.mxu0 0
        %1761 = vmatmul.mubr.bf16.gmra.mrb[0].mxu0 %v1701
        %v1762 = vpop.f32.mrb[0].mxu0
        %v1763 = vadd.f32 0.0, %v1762
        %v1764 = vpop.f32.mrb[0].mxu0
        %v1765 = vpop.f32.mrb[0].mxu0
        %v1766 = vadd.f32 0.0, %v1765
        %v1767 = vpop.f32.mrb[0].mxu0
        %1768 = vmatprep.mubr.bf16.mxu0 0
        %1769 = vmatmul.mubr.bf16.gmra.mrb[0].mxu0 %v1704
        %v1770 = vpop.f32.mrb[0].mxu0
        %v1771 = vadd.f32 0.0, %v1770
        %v1772 = vpop.f32.mrb[0].mxu0
        %v1773 = vpop.f32.mrb[0].mxu0
        %v1774 = vadd.f32 0.0, %v1773
        %v1775 = vpop.f32.mrb[0].mxu0
        %1776 = vmatprep.mubr.bf16.mxu0 0
        %1777 = vmatmul.mubr.bf16.gmra.mrb[0].mxu0 %v1707
        %v1778 = vpop.f32.mrb[0].mxu0
        %v1779 = vadd.f32 0.0, %v1778
        %v1780 = vpop.f32.mrb[0].mxu0
        %v1781 = vpop.f32.mrb[0].mxu0
        %v1782 = vadd.f32 0.0, %v1781
        %v1783 = vpop.f32.mrb[0].mxu0
        %1784 = vmatprep.mubr.bf16.mxu0 0
        %1785 = vmatmul.mubr.bf16.gmra.mrb[0].mxu0 %v1710
        %v1786 = vpop.f32.mrb[0].mxu0
        %v1787 = vadd.f32 0.0, %v1786
        %v1788 = vpop.f32.mrb[0].mxu0
        %v1789 = vpop.f32.mrb[0].mxu0
        %v1790 = vpop.f32.mrb[0].mxu0
        %1791 = vdwg.mxu0
        %v1792 = vadd.f32 %v1647, %v1747
        %v1793 = vadd.f32 %v1648, %v1750
        %v1794 = vadd.f32 %v1649, %v1755
        %v1795 = vadd.f32 %v1650, %v1758
        %v1796 = vadd.f32 %v1651, %v1763
        %v1797 = vadd.f32 %v1652, %v1766
        %v1798 = vadd.f32 %v1653, %v1771
        %v1799 = vadd.f32 %v1654, %v1774
        %v1800 = vadd.f32 %v1655, %v1779
        %v1801 = vadd.f32 %v1656, %v1782
        %v1802 = vadd.f32 %v1657, %v1787
        %v1803 = vld [vmem:[%s3] sm:$0x1]
        %v1804 = vld [vmem:[%s2] sm:$0x1]
        %vm1805 = vcmask 662528
        %v1807 = vsel %vm1805, %v1803, 0
        %vm1809 = vcmask 1040384
        %v1811 = vsel %vm1809, %v1802, 0
        %1813 = vmatprep.subr.mxu0 0.0
        %1814 = vmatpush1.msra.mxu0 %v1792
        %1815 = vmatprep.subr.mxu0 0.0
        %1816 = vmatpush1.msra.mxu0 %v1793
        %1817 = vmatprep.subr.mxu0 0.0
        %1818 = vmatpush1.msra.mxu0 %v1794
        %1819 = vmatprep.subr.mxu0 0.0
        %1820 = vmatpush1.msra.mxu0 %v1795
        %1821 = vmatprep.subr.mxu0 0.0
        %1822 = vmatpush1.msra.mxu0 %v1796
        %1823 = vmatprep.subr.mxu0 0.0
        %1824 = vmatpush1.msra.mxu0 %v1797
        %1825 = vmatprep.subr.mxu0 0.0
        %1826 = vmatpush1.msra.mxu0 %v1798
        %1827 = vmatprep.subr.mxu0 0.0
        %1828 = vmatpush1.msra.mxu0 %v1799
        %1829 = vmatprep.subr.mxu0 0.0
        %1830 = vmatpush1.msra.mxu0 %v1800
        %1831 = vmatprep.subr.mxu0 0.0
        %1832 = vmatpush1.msra.mxu0 %v1801
        %1833 = vmatprep.subr.mxu0 0.0
        %1834 = vmatpush1.msra.mxu0 %v1811
        %1835 = vmatprep.subr.mxu0 0.0
        %1836 = vmatpush1.msra.mxu0 0.0
        %1837 = vmatprep.subr.mxu0 0.0
        %1838 = vmatpush1.msra.mxu0 0.0
        %1839 = vmatprep.subr.mxu0 0.0
        %1840 = vmatpush1.msra.mxu0 0.0
        %1841 = vmatprep.subr.mxu0 0.0
        %1842 = vmatpush1.msra.mxu0 0.0
        %1843 = vmatprep.subr.mxu0 0.0
        %1844 = vmatpush1.msra.mxu0 0.0
        %1845 = vmatprep.subr.mxu0 0.0
        %1846 = vmatpush1.msra.mxu0 0.0
        %1847 = vmatprep.subr.mxu0 0.0
        %1848 = vmatpush1.msra.mxu0 0.0
        %1849 = vmatprep.subr.mxu0 0.0
        %1850 = vmatpush1.msra.mxu0 0.0
        %1851 = vmatprep.subr.mxu0 0.0
        %1852 = vmatpush1.msra.mxu0 0.0
        %1853 = vmatprep.subr.mxu0 0.0
        %1854 = vmatpush1.msra.mxu0 0.0
        %1855 = vmatprep.subr.mxu0 0.0
        %1856 = vmatpush1.msra.mxu0 0.0
        %1857 = vmatprep.subr.mxu0 0.0
        %1858 = vmatpush1.msra.mxu0 0.0
        %1859 = vmatprep.subr.mxu0 0.0
        %1860 = vmatpush1.msra.mxu0 0.0
        %1861 = vmatprep.subr.mxu0 0.0
        %1862 = vmatpush1.msra.mxu0 0.0
        %1863 = vmatprep.subr.mxu0 0.0
        %1864 = vmatpush1.msra.mxu0 0.0
        %1865 = vmatprep.subr.mxu0 0.0
        %1866 = vmatpush1.msra.mxu0 0.0
        %1867 = vmatprep.subr.mxu0 0.0
        %1868 = vmatpush1.msra.mxu0 0.0
        %1869 = vmatprep.subr.mxu0 0.0
        %1870 = vmatpush1.msra.mxu0 0.0
        %1871 = vmatprep.subr.mxu0 0.0
        %1872 = vmatpush1.msra.mxu0 0.0
        %1873 = vmatprep.subr.mxu0 0.0
        %1874 = vmatpush1.msra.mxu0 0.0
        %1875 = vmatprep.subr.mxu0 0.0
        %1876 = vmatpush1.msra.mxu0 0.0
        %1877 = vmatprep.mubr.f32.mxu0 0.0
        %1878 = vmatmul.mubr.f32.gmra.mrb[0].mxu0 %v1807
        %v1879 = vpop.f32.mrb[0].mxu0
        %v1880 = vadd.f32 %v1804, %v1879
        %v1881 = vpop.f32.mrb[0].mxu0
        %1882 = vdwg.mxu0
        %1883 = vst [vmem:[%s189] sm:$0x1] %v1880
        %s1884 = sand.u32 %s115, 1
        %s1885 = scalar_lea.sflag [#allocation3], %s1884
        %s1886 = sand.u32 %s115, 1
        %s1887 = scalar_lea.vmem [#allocation2], %s1886
        // Predicated region
        $region37: #{motion_attention_64_forward.9} parent=35 // pred_check
          %p1888 = pneg %p125
        $region38: #{motion_attention_64_forward.9} parent=35 // pred_check_branch
          %1890 = sbr.rel (%p1888) target = $region40
        $region39: #{motion_attention_64_forward.9} parent=35 // pred_region
          %s1892 = ssub.s32 16, 16
          %1893 = vsyncadd %s1885, %s1892
          %s1894 = smul.addr %s18, 16
          %s1895 = scalar_lea.hbm %s4, %s1894
          %s1897 = sshll.u32 %s1887, 4
          %s1898 = int_to_ptr.vmem [resolvable:$true] %s1897
          %1900 = dma.vmem_to_hbm [thread:$0]  %s1898, 16, %s1895, %s1885
        $region40: #{motion_attention_64_forward.9} parent=35 // pred_fallthru
          _
      $region36: #{motion_attention_64_forward.9} parent=5 // pred_fallthru
        _
      %p1901 = scmp.le.s32.totalorder 2, %s13
      // Predicated region
      $region41: #{motion_attention_64_forward.9} parent=5 // pred_check
        %p1902 = pneg %p1901
      $region42: #{motion_attention_64_forward.9} parent=5 // pred_check_branch
        %1904 = sbr.rel (%p1902) target = $region44
      $region43: #{motion_attention_64_forward.9} parent=5 // pred_region
        %s1905 = ssub.s32 %s13, 2
        // Predicated region
        $region45: #{motion_attention_64_forward.9} parent=43 // pred_check
          %p1906 = pneg %p131
        $region46: #{motion_attention_64_forward.9} parent=43 // pred_check_branch
          %1908 = sbr.rel (%p1906) target = $region48
        $region47: #{motion_attention_64_forward.9} parent=43 // pred_region
          %s1909 = sand.u32 %s116, 1
          %s1910 = scalar_lea.sflag [#allocation3], %s1909
          %s1911 = sand.u32 %s116, 1
          %s1912 = scalar_lea.vmem [#allocation2], %s1911
          %1913 = dma.done %s1910, 16
        $region48: #{motion_attention_64_forward.9} parent=43 // pred_fallthru
          _
      $region44: #{motion_attention_64_forward.9} parent=5 // pred_fallthru
        _
    $region6: #{motion_attention_64_forward.9} parent=1 // loop_footer
      %s17 = sadd.s32 1, %s13
    $region7: #{motion_attention_64_forward.9} parent=1 // loop_footer_branch
      %12 = sbr.rel target = $region3
    $region8: #{motion_attention_64_forward.9} parent=1 // loop_exit
      _
    %1914 = vsyncpa [#allocation3], 1
    %s1915 = scalar_lea.sflag [#allocation3], 1
    %1916 = vsyncpa %s1915, 1

</llo_original>
